<compile_context>
chip_gen: v7x
topology: tpu7x:2x2x1
jax: 0.10.0
libtpu: 0.0.40
codegen_flags: <defaults>
</compile_context>

<pallas_src>
import functools

import jax
import jax.numpy as jnp
from jax import lax
from jax.experimental import pallas as pl
from jax.experimental.pallas import tpu as pltpu

# ----- model hyper-params (small but semantically consistent with the module) -----
N_EMB = 128          # n_embedding_dimensions (PyTorch file uses 384; scaled down)
NUM_HEADS = 4
HEAD_SIZE = N_EMB // NUM_HEADS   # num_heads * head_size must equal n_emb for the projection
BLOCK_SIZE = 64      # sequence length used for the test (module's block_size is 256)

NEG_MASK = -1e30     # large-negative additive mask (no exp(-inf - -inf) NaN hazard)


# --------------------------- fused multi-head attention kernel ---------------------------
def _fused_mha_kernel(x_ref, wq_ref, wk_ref, wv_ref, wp_ref, bp_ref, o_ref,
                      *, num_heads, head_size):
    # x_ref : (Bb, T, C)  slab of Bb batches (f32)
    # w*_ref: (C, C)      packed per-head projection weights, bf16 (C**-0.5 folded into Wq)
    # wp_ref: (C, C)      output projection weight, bf16, stored as (in, out)
    # bp_ref: (1, C)      output projection bias, f32
    # o_ref : (Bb, T, C)  lane-dense output slab
    Bb, T, C = x_ref.shape
    H, Hs = num_heads, head_size
    M = Bb * T

    # Flatten the batch into the matmul M dimension; bf16 operands (MXU-native), f32 accum.
    xb = x_ref[...].reshape(M, C).astype(jnp.bfloat16)

    # Fused all-head Q/K/V projections: (M, C) x (C, C).
    q = jnp.dot(xb, wq_ref[...], preferred_element_type=jnp.float32).astype(jnp.bfloat16)
    k = jnp.dot(xb, wk_ref[...], preferred_element_type=jnp.float32).astype(jnp.bfloat16)
    v = jnp.dot(xb, wv_ref[...], preferred_element_type=jnp.float32).astype(jnp.bfloat16)

    # Heads from lanes -> one leading batch dim: (M, C) -> (Bb*H, T, Hs).
    def to_heads(t):
        return jnp.transpose(t.reshape(Bb, T, H, Hs), (0, 2, 1, 3)).reshape(Bb * H, T, Hs)

    q3, k3, v3 = to_heads(q), to_heads(k), to_heads(v)

    # Scores for every (batch, head) pair in one batched dot_general; score scale already in Wq.
    s = jnp.einsum("bqd,bkd->bqk", q3, k3,
                   preferred_element_type=jnp.float32)               # (Bb*H, T, T) f32

    row = lax.broadcasted_iota(jnp.int32, (T, T), 0)
    col = lax.broadcasted_iota(jnp.int32, (T, T), 1)
    s = jnp.where((col <= row)[None, :, :], s, jnp.float32(NEG_MASK))

    # Numerically-stable softmax, all in f32; exact division (per correctness review).
    m = jnp.max(s, axis=-1, keepdims=True)
    p = jnp.exp(s - m)
    p = p / jnp.sum(p, axis=-1, keepdims=True)
    # attention dropout (p=0.2) is identity in eval mode -> omitted.

    pv = jnp.einsum("bqk,bkd->bqd", p.astype(jnp.bfloat16), v3,
                    preferred_element_type=jnp.float32)               # (Bb*H, T, Hs) f32

    # Heads back into lanes (== concat over heads), then one K=C output projection.
    cat = jnp.transpose(pv.reshape(Bb, H, T, Hs), (0, 2, 1, 3)).reshape(M, C)
    y = jnp.dot(cat.astype(jnp.bfloat16), wp_ref[...],
                preferred_element_type=jnp.float32) + bp_ref[...]
    # output dropout (p=0.2) is identity in eval mode -> omitted.
    o_ref[...] = y.reshape(Bb, T, C).astype(o_ref.dtype)


# --------------------------------- one-time weight prep ---------------------------------
def pack_params(params):
    """Hoisted out of the per-call path (per perf review).

    Packs per-head (H, C, Hs) projection weights into (C, H*Hs) so that
    concat_h(x @ W_h) == x @ W_packed, folds the C**-0.5 score scale into Wq
    (the PyTorch module scales by the embedding dim, not head_size), and casts
    matmul weights to bf16 (MXU-native; halves weight DMA bytes).
    """
    H, C, Hs = params["wq"].shape
    scale = jnp.float32(C ** -0.5)

    def pack(w):                                       # (H, C, Hs) -> (C, H*Hs)
        return jnp.transpose(w, (1, 0, 2)).reshape(C, H * Hs)

    return {
        "wq": (pack(params["wq"]) * scale).astype(jnp.bfloat16),
        "wk": pack(params["wk"]).astype(jnp.bfloat16),
        "wv": pack(params["wv"]).astype(jnp.bfloat16),
        "wp": params["w_proj"].astype(jnp.bfloat16),
        "bp": params["b_proj"].astype(jnp.float32),
    }


def _const_spec(shape):
    """Grid-invariant (weight) spec; single-buffered when the runtime supports it."""
    index_map = lambda *_: (0,) * len(shape)
    buffered = getattr(pl, "Buffered", None)
    if buffered is not None:
        try:
            return pl.BlockSpec(shape, index_map, pipeline_mode=buffered(1))
        except TypeError:               # runtime without pipeline_mode kwarg
            pass
    return pl.BlockSpec(shape, index_map)


# -------------------------------------- wrapper --------------------------------------
def multi_head_attention(x, packed, *, num_heads=NUM_HEADS, batches_per_step=None):
    """Forward pass of MultiHeadAttention (eval mode: dropout = identity).

    x: (B, T, C) f32; packed: output of pack_params().
    batches_per_step: batches per grid step.  Default = B (single grid step: best for the
    single-TensorCore v5e/v6e).  On v7x pass B // 2 so the "parallel" batch-slab axis is
    split across the two TensorCores.
    """
    B, T, C = x.shape
    Hs = C // num_heads
    bpb = B if batches_per_step is None else batches_per_step
    assert B % bpb == 0, "batches_per_step must divide B"

    kernel = functools.partial(_fused_mha_kernel, num_heads=num_heads, head_size=Hs)
    return pl.pallas_call(
        kernel,
        out_shape=jax.ShapeDtypeStruct((B, T, C), x.dtype),
        grid_spec=pltpu.PrefetchScalarGridSpec(
            num_scalar_prefetch=0,
            grid=(B // bpb,),
            in_specs=[
                pl.BlockSpec((bpb, T, C), lambda b: (b, 0, 0)),
                _const_spec((C, C)),       # Wq (scale folded)
                _const_spec((C, C)),       # Wk
                _const_spec((C, C)),       # Wv
                _const_spec((C, C)),       # W_proj
                _const_spec((1, C)),       # b_proj
            ],
            out_specs=pl.BlockSpec((bpb, T, C), lambda b: (b, 0, 0)),
        ),
        compiler_params=pltpu.CompilerParams(
            dimension_semantics=("parallel",)),
    )(x, packed["wq"], packed["wk"], packed["wv"], packed["wp"], packed["bp"])
    # TODO(synk): for the full-size model (C=384, T up to 256+), tile the KV axis with an
    # online (flash-style) softmax and budget VMEM for v7x's 64 MiB instead of materializing
    # the full (B*H, T, T) score tensor.


# ----------------------------------- reference (pure JAX) -----------------------------------
def reference(x, params):
    """Faithful f32 reference of the PyTorch module (HIGHEST matmul precision)."""
    B, T, C = x.shape
    hi = lax.Precision.HIGHEST
    mask = jnp.tril(jnp.ones((T, T), dtype=bool))
    outs = []
    for h in range(params["wq"].shape[0]):
        q = jnp.einsum("btc,cd->btd", x, params["wq"][h], precision=hi)
        k = jnp.einsum("btc,cd->btd", x, params["wk"][h], precision=hi)
        v = jnp.einsum("btc,cd->btd", x, params["wv"][h], precision=hi)
        s = jnp.einsum("bqd,bkd->bqk", q, k, precision=hi) * (C ** -0.5)
        s = jnp.where(mask, s, -jnp.inf)
        w = jax.nn.softmax(s, axis=-1)
        outs.append(jnp.einsum("bqk,bkd->bqd", w, v, precision=hi))
    cat = jnp.concatenate(outs, axis=-1)
    return jnp.einsum("btc,cd->btd", cat, params["w_proj"], precision=hi) + params["b_proj"]


if __name__ == "__main__":
    key = jax.random.PRNGKey(0)
    k_x, k_q, k_k, k_v, k_p, k_b = jax.random.split(key, 6)

    B, T = 2, BLOCK_SIZE
    x = jax.random.normal(k_x, (B, T, N_EMB), dtype=jnp.float32)

    # Deterministic parameter init (synthetic; Linear weights stored as (in, out)).
    scale = 1.0 / (N_EMB ** 0.5)
    params = {
        "wq": jax.random.normal(k_q, (NUM_HEADS, N_EMB, HEAD_SIZE), jnp.float32) * scale,
        "wk": jax.random.normal(k_k, (NUM_HEADS, N_EMB, HEAD_SIZE), jnp.float32) * scale,
        "wv": jax.random.normal(k_v, (NUM_HEADS, N_EMB, HEAD_SIZE), jnp.float32) * scale,
        "w_proj": jax.random.normal(k_p, (N_EMB, N_EMB), jnp.float32) * scale,
        "b_proj": jax.random.normal(k_b, (1, N_EMB), jnp.float32) * 0.01,
    }

    packed = pack_params(params)                # one-time weight prep, outside the call path
    mha = jax.jit(multi_head_attention)
    out = jax.block_until_ready(mha(x, packed))

    ref = reference(x, params)
    assert out.shape == (B, T, N_EMB)
    # bf16 MXU-operand kernel vs f32(HIGHEST) reference: tolerance sized to bf16 operand
    # precision propagated through four matmul stages (rms err ~3e-3, worst-case ~1e-2 here).
    assert jnp.allclose(out, ref, atol=3e-2, rtol=3e-2), "mismatch vs pure-JAX reference"

    print("KERNEL_OK")
</pallas_src>

<mosaic_0001>
module attributes {stable_mosaic.version = 11 : i64} {
  func.func @_fused_mha_kernel(%arg0: i32, %arg1: memref<2x64x128xf32, #tpu.memory_space<vmem>>, %arg2: memref<128x128xbf16, #tpu.memory_space<vmem>>, %arg3: memref<128x128xbf16, #tpu.memory_space<vmem>>, %arg4: memref<128x128xbf16, #tpu.memory_space<vmem>>, %arg5: memref<128x128xbf16, #tpu.memory_space<vmem>>, %arg6: memref<1x128xf32, #tpu.memory_space<vmem>>, %arg7: memref<2x64x128xf32, #tpu.memory_space<vmem>>) attributes {dimension_semantics = [#tpu.dimension_semantics<parallel>], iteration_bounds = array<i64: 1>, scalar_prefetch = 0 : i64, scratch_operands = 0 : i64, tpu.core_type = #tpu.core_type<tc>, window_params = [{transform_indices = @transform_0, window_bounds = array<i64: 2, 64, 128>}, {pipeline_mode = #tpu.pipeline_mode<synchronous>, transform_indices = @transform_1, window_bounds = array<i64: 128, 128>}, {pipeline_mode = #tpu.pipeline_mode<synchronous>, transform_indices = @transform_2, window_bounds = array<i64: 128, 128>}, {pipeline_mode = #tpu.pipeline_mode<synchronous>, transform_indices = @transform_3, window_bounds = array<i64: 128, 128>}, {pipeline_mode = #tpu.pipeline_mode<synchronous>, transform_indices = @transform_4, window_bounds = array<i64: 128, 128>}, {pipeline_mode = #tpu.pipeline_mode<synchronous>, transform_indices = @transform_5, window_bounds = array<i64: 1, 128>}, {transform_indices = @transform_6, window_bounds = array<i64: 2, 64, 128>}]} {
    %c0 = arith.constant 0 : index
    %c0_0 = arith.constant 0 : index
    %c0_1 = arith.constant 0 : index
    %0 = vector.load %arg1[%c0, %c0_0, %c0_1] : memref<2x64x128xf32, #tpu.memory_space<vmem>>, vector<2x64x128xf32>
    %1 = vector.shape_cast %0 : vector<2x64x128xf32> to vector<128x128xf32>
    %2 = arith.truncf %1 : vector<128x128xf32> to vector<128x128xbf16>
    %c0_2 = arith.constant 0 : index
    %c0_3 = arith.constant 0 : index
    %3 = vector.load %arg2[%c0_2, %c0_3] : memref<128x128xbf16, #tpu.memory_space<vmem>>, vector<128x128xbf16>
    %cst = arith.constant dense<0.000000e+00> : vector<128x128xf32>
    %4 = tpu.matmul %2, %3, %cst {dimension_numbers = #tpu.dot_dimension_numbers<[1], [0], [0], [1], [0, 0, 1, 1], [], []>} : vector<128x128xbf16>, vector<128x128xbf16>, vector<128x128xf32> -> vector<128x128xf32>
    %5 = arith.truncf %4 : vector<128x128xf32> to vector<128x128xbf16>
    %c0_4 = arith.constant 0 : index
    %c0_5 = arith.constant 0 : index
    %6 = vector.load %arg3[%c0_4, %c0_5] : memref<128x128xbf16, #tpu.memory_space<vmem>>, vector<128x128xbf16>
    %cst_6 = arith.constant dense<0.000000e+00> : vector<128x128xf32>
    %7 = tpu.matmul %2, %6, %cst_6 {dimension_numbers = #tpu.dot_dimension_numbers<[1], [0], [0], [1], [0, 0, 1, 1], [], []>} : vector<128x128xbf16>, vector<128x128xbf16>, vector<128x128xf32> -> vector<128x128xf32>
    %8 = arith.truncf %7 : vector<128x128xf32> to vector<128x128xbf16>
    %c0_7 = arith.constant 0 : index
    %c0_8 = arith.constant 0 : index
    %9 = vector.load %arg4[%c0_7, %c0_8] : memref<128x128xbf16, #tpu.memory_space<vmem>>, vector<128x128xbf16>
    %cst_9 = arith.constant dense<0.000000e+00> : vector<128x128xf32>
    %10 = tpu.matmul %2, %9, %cst_9 {dimension_numbers = #tpu.dot_dimension_numbers<[1], [0], [0], [1], [0, 0, 1, 1], [], []>} : vector<128x128xbf16>, vector<128x128xbf16>, vector<128x128xf32> -> vector<128x128xf32>
    %11 = arith.truncf %10 : vector<128x128xf32> to vector<128x128xbf16>
    %12 = vector.shape_cast %5 : vector<128x128xbf16> to vector<2x64x4x32xbf16>
    %13 = tpu.transpose %12, [0, 2, 1, 3] : vector<2x64x4x32xbf16> -> vector<2x4x64x32xbf16>
    %14 = vector.shape_cast %13 : vector<2x4x64x32xbf16> to vector<8x64x32xbf16>
    %15 = vector.shape_cast %8 : vector<128x128xbf16> to vector<2x64x4x32xbf16>
    %16 = tpu.transpose %15, [0, 2, 1, 3] : vector<2x64x4x32xbf16> -> vector<2x4x64x32xbf16>
    %17 = vector.shape_cast %16 : vector<2x4x64x32xbf16> to vector<8x64x32xbf16>
    %18 = vector.shape_cast %11 : vector<128x128xbf16> to vector<2x64x4x32xbf16>
    %19 = tpu.transpose %18, [0, 2, 1, 3] : vector<2x64x4x32xbf16> -> vector<2x4x64x32xbf16>
    %20 = vector.shape_cast %19 : vector<2x4x64x32xbf16> to vector<8x64x32xbf16>
    "tpu.trace_start"() <{level = 10 : i32, message = "bqd,bkd->bqk"}> : () -> ()
    %cst_10 = arith.constant dense<0.000000e+00> : vector<8x64x64xf32>
    %21 = tpu.matmul %14, %17, %cst_10 {dimension_numbers = #tpu.dot_dimension_numbers<[2], [2], [1], [1], [0, 0, 0, 1, 1, 1], [0], [0]>} : vector<8x64x32xbf16>, vector<8x64x32xbf16>, vector<8x64x64xf32> -> vector<8x64x64xf32>
    "tpu.trace_stop"() : () -> ()
    %22 = tpu.iota {dimensions = array<i32: 0>} : vector<64x64xi32>
    %23 = tpu.iota {dimensions = array<i32: 1>} : vector<64x64xi32>
    %24 = arith.cmpi sle, %23, %22 : vector<64x64xi32>
    %25 = vector.shape_cast %24 : vector<64x64xi1> to vector<1x64x64xi1>
    %cst_11 = arith.constant -1.000000e+30 : f32
    %26 = vector.shape_cast %25 : vector<1x64x64xi1> to vector<1x64x64xi1>
    %27 = vector.broadcast %26 : vector<1x64x64xi1> to vector<8x64x64xi1>
    %28 = vector.broadcast %cst_11 : f32 to vector<8x64x64xf32>
    %29 = arith.select %27, %21, %28 : vector<8x64x64xi1>, vector<8x64x64xf32>
    %cst_12 = arith.constant dense<0xFF800000> : vector<8x64xf32>
    %30 = vector.multi_reduction <maximumf>, %29, %cst_12 [2] : vector<8x64x64xf32> to vector<8x64xf32>
    %31 = vector.shape_cast %30 : vector<8x64xf32> to vector<8x64x1xf32>
    %32 = vector.broadcast %31 : vector<8x64x1xf32> to vector<8x64x64xf32>
    %33 = arith.subf %29, %32 : vector<8x64x64xf32>
    %34 = math.exp %33 : vector<8x64x64xf32>
    %cst_13 = arith.constant dense<0.000000e+00> : vector<8x64xf32>
    %35 = vector.multi_reduction <add>, %34, %cst_13 [2] : vector<8x64x64xf32> to vector<8x64xf32>
    %36 = vector.shape_cast %35 : vector<8x64xf32> to vector<8x64x1xf32>
    %37 = vector.broadcast %36 : vector<8x64x1xf32> to vector<8x64x64xf32>
    %38 = arith.divf %34, %37 : vector<8x64x64xf32>
    %39 = arith.truncf %38 : vector<8x64x64xf32> to vector<8x64x64xbf16>
    "tpu.trace_start"() <{level = 10 : i32, message = "bqk,bkd->bqd"}> : () -> ()
    %cst_14 = arith.constant dense<0.000000e+00> : vector<8x64x32xf32>
    %40 = tpu.matmul %39, %20, %cst_14 {dimension_numbers = #tpu.dot_dimension_numbers<[2], [1], [1], [2], [0, 0, 0, 1, 1, 2], [0], [0]>} : vector<8x64x64xbf16>, vector<8x64x32xbf16>, vector<8x64x32xf32> -> vector<8x64x32xf32>
    "tpu.trace_stop"() : () -> ()
    %41 = vector.shape_cast %40 : vector<8x64x32xf32> to vector<2x4x64x32xf32>
    %42 = tpu.transpose %41, [0, 2, 1, 3] : vector<2x4x64x32xf32> -> vector<2x64x4x32xf32>
    %43 = vector.shape_cast %42 : vector<2x64x4x32xf32> to vector<128x128xf32>
    %44 = arith.truncf %43 : vector<128x128xf32> to vector<128x128xbf16>
    %c0_15 = arith.constant 0 : index
    %c0_16 = arith.constant 0 : index
    %45 = vector.load %arg5[%c0_15, %c0_16] : memref<128x128xbf16, #tpu.memory_space<vmem>>, vector<128x128xbf16>
    %cst_17 = arith.constant dense<0.000000e+00> : vector<128x128xf32>
    %46 = tpu.matmul %44, %45, %cst_17 {dimension_numbers = #tpu.dot_dimension_numbers<[1], [0], [0], [1], [0, 0, 1, 1], [], []>} : vector<128x128xbf16>, vector<128x128xbf16>, vector<128x128xf32> -> vector<128x128xf32>
    %c0_18 = arith.constant 0 : index
    %c0_19 = arith.constant 0 : index
    %47 = vector.load %arg6[%c0_18, %c0_19] : memref<1x128xf32, #tpu.memory_space<vmem>>, vector<1x128xf32>
    %48 = vector.broadcast %47 : vector<1x128xf32> to vector<128x128xf32>
    %49 = arith.addf %46, %48 : vector<128x128xf32>
    %50 = vector.shape_cast %49 : vector<128x128xf32> to vector<2x64x128xf32>
    %c0_20 = arith.constant 0 : index
    %c0_21 = arith.constant 0 : index
    %c0_22 = arith.constant 0 : index
    %51 = vector.load %arg7[%c0_20, %c0_21, %c0_22] : memref<2x64x128xf32, #tpu.memory_space<vmem>>, vector<2x64x128xf32>
    tpu.vector_store %arg7[%c0_20, %c0_21, %c0_22], %50 {strides = array<i32>} : memref<2x64x128xf32, #tpu.memory_space<vmem>>, vector<2x64x128xf32>,
    return
  }
  func.func @transform_0(%arg0: i32) -> (i32, i32, i32) {
    %c0_i32 = arith.constant 0 : i32
    %c0_i32_0 = arith.constant 0 : i32
    %c0_i32_1 = arith.constant 0 : i32
    return %arg0, %c0_i32, %c0_i32_0 : i32, i32, i32
  }
  func.func @transform_1(%arg0: i32) -> (i32, i32) {
    %c0_i32 = arith.constant 0 : i32
    %c0_i32_0 = arith.constant 0 : i32
    %c0_i32_1 = arith.constant 0 : i32
    return %c0_i32, %c0_i32_0 : i32, i32
  }
  func.func @transform_2(%arg0: i32) -> (i32, i32) {
    %c0_i32 = arith.constant 0 : i32
    %c0_i32_0 = arith.constant 0 : i32
    %c0_i32_1 = arith.constant 0 : i32
    return %c0_i32, %c0_i32_0 : i32, i32
  }
  func.func @transform_3(%arg0: i32) -> (i32, i32) {
    %c0_i32 = arith.constant 0 : i32
    %c0_i32_0 = arith.constant 0 : i32
    %c0_i32_1 = arith.constant 0 : i32
    return %c0_i32, %c0_i32_0 : i32, i32
  }
  func.func @transform_4(%arg0: i32) -> (i32, i32) {
    %c0_i32 = arith.constant 0 : i32
    %c0_i32_0 = arith.constant 0 : i32
    %c0_i32_1 = arith.constant 0 : i32
    return %c0_i32, %c0_i32_0 : i32, i32
  }
  func.func @transform_5(%arg0: i32) -> (i32, i32) {
    %c0_i32 = arith.constant 0 : i32
    %c0_i32_0 = arith.constant 0 : i32
    %c0_i32_1 = arith.constant 0 : i32
    return %c0_i32, %c0_i32_0 : i32, i32
  }
  func.func @transform_6(%arg0: i32) -> (i32, i32, i32) {
    %c0_i32 = arith.constant 0 : i32
    %c0_i32_0 = arith.constant 0 : i32
    %c0_i32_1 = arith.constant 0 : i32
    return %arg0, %c0_i32, %c0_i32_0 : i32, i32, i32
  }
}

</mosaic_0001>

<llo_original>
// kernel: multi_head_attention.1
$region0: #{multi_head_attention.1}
  #allocation0 [shape = 'u32[]', space=smem, size = 0x4, offset = 0x4, fixed_abs, tag = 'smem constant byte address 0x4 - core index']
  #allocation1 [shape = 'u32[144,128]{1,0:T(1,128)}', space=vmem, size = 0x12000, scoped, tag = 'internal scratch']
  %s0 = inlined_call_operand.hbm [shape: f32[2,64,128], index: 0, kind: input, shape index: {}]
  %s1 = inlined_call_operand.hbm [shape: bf16[128,128], index: 1, kind: input, shape index: {}]
  %s2 = inlined_call_operand.hbm [shape: bf16[128,128], index: 2, kind: input, shape index: {}]
  %s3 = inlined_call_operand.hbm [shape: bf16[128,128], index: 3, kind: input, shape index: {}]
  %s4 = inlined_call_operand.hbm [shape: bf16[128,128], index: 4, kind: input, shape index: {}]
  %s5 = inlined_call_operand.vmem [shape: f32[1,128], index: 5, kind: input, shape index: {}]
  %s6 = inlined_call_operand.hbm [shape: f32[2,64,128], index: 6, kind: output, shape index: {}]
  %s7 = sld [smem:[#allocation0]]
  $region54: #{multi_head_attention.1} parent=0
    _
  %s9 = ssub.s32 1, %s7
  %s10 = scalar_select 0, %s9, %s7
  $region1: #{multi_head_attention.1} parent=0
    #allocation2 [shape = 'u8[65536]{0}', space=vmem, size = 0x10000, scoped, tag = 'input window, operand 0, single buffered']
    #allocation3 [shape = 's32[1]{0}', space=sflag, size = 0x4, scoped, tag = 'scoped memory for multi_head_attention.1']
    #allocation4 [shape = 's32[1]{0}', space=sflag, size = 0x4, scoped, tag = 'scoped memory for multi_head_attention.1']
    #allocation5 [shape = 'u8[32768]{0}', space=vmem, size = 0x8000, scoped, tag = 'input window, operand 1, single buffered']
    #allocation6 [shape = 's32[1]{0}', space=sflag, size = 0x4, scoped, tag = 'scoped memory for multi_head_attention.1']
    #allocation7 [shape = 'u8[32768]{0}', space=vmem, size = 0x8000, scoped, tag = 'input window, operand 2, single buffered']
    #allocation8 [shape = 'u8[32768]{0}', space=vmem, size = 0x8000, scoped, tag = 'input window, operand 3, single buffered']
    #allocation9 [shape = 's32[1]{0}', space=sflag, size = 0x4, scoped, tag = 'scoped memory for multi_head_attention.1']
    #allocation10 [shape = 'u8[32768]{0}', space=vmem, size = 0x8000, scoped, tag = 'input window, operand 4, single buffered']
    #allocation11 [shape = 'u8[65536]{0}', space=vmem, size = 0x10000, scoped, tag = 'output window, operand 0, single buffered']
    %11 = vsyncpa [#allocation3], 0
    %12 = vsyncpa [#allocation6], 0
    %13 = vsyncpa [#allocation9], 0
    %14 = vsyncpa [#allocation4], 0
    // Predicated region
    $region2: #{multi_head_attention.1} parent=1 // pred_check
      _
    $region3: #{multi_head_attention.1} parent=1 // pred_check_branch
      %16 = sbr.rel (0) target = $region5
    $region4: #{multi_head_attention.1} parent=1 // pred_region
      %s18 = ssub.s32 2048, 2048
      %19 = vsyncadd [#allocation3], %s18
      %s20 = sshll.u32 [#allocation2], 4
      %s21 = int_to_ptr.vmem [resolvable:$true] %s20
      %26 = dma.hbm_to_vmem [thread:$0]  %s0, 2048, %s21, [#allocation3], 128, 128, 8
    $region5: #{multi_head_attention.1} parent=1 // pred_fallthru
      _
    // Predicated region
    $region6: #{multi_head_attention.1} parent=1 // pred_check
      _
    $region7: #{multi_head_attention.1} parent=1 // pred_check_branch
      %28 = sbr.rel (0) target = $region9
    $region8: #{multi_head_attention.1} parent=1 // pred_region
      %s30 = ssub.s32 1024, 1024
      %31 = vsyncadd [#allocation6], %s30
      %s32 = sshll.u32 [#allocation5], 4
      %s33 = int_to_ptr.vmem [resolvable:$true] %s32
      %38 = dma.hbm_to_vmem [thread:$0]  %s1, 1024, %s33, [#allocation6], 64, 64, 4
    $region9: #{multi_head_attention.1} parent=1 // pred_fallthru
      _
    // Predicated region
    $region10: #{multi_head_attention.1} parent=1 // pred_check
      _
    $region11: #{multi_head_attention.1} parent=1 // pred_check_branch
      %40 = sbr.rel (0) target = $region13
    $region12: #{multi_head_attention.1} parent=1 // pred_region
      %s42 = ssub.s32 1024, 1024
      %43 = vsyncadd [#allocation6], %s42
      %s44 = sshll.u32 [#allocation7], 4
      %s45 = int_to_ptr.vmem [resolvable:$true] %s44
      %50 = dma.hbm_to_vmem [thread:$0]  %s2, 1024, %s45, [#allocation6], 64, 64, 4
    $region13: #{multi_head_attention.1} parent=1 // pred_fallthru
      _
    // Predicated region
    $region14: #{multi_head_attention.1} parent=1 // pred_check
      _
    $region15: #{multi_head_attention.1} parent=1 // pred_check_branch
      %52 = sbr.rel (0) target = $region17
    $region16: #{multi_head_attention.1} parent=1 // pred_region
      %s54 = ssub.s32 1024, 1024
      %55 = vsyncadd [#allocation9], %s54
      %s56 = sshll.u32 [#allocation8], 4
      %s57 = int_to_ptr.vmem [resolvable:$true] %s56
      %62 = dma.hbm_to_vmem [thread:$0]  %s3, 1024, %s57, [#allocation9], 64, 64, 4
    $region17: #{multi_head_attention.1} parent=1 // pred_fallthru
      _
    // Predicated region
    $region18: #{multi_head_attention.1} parent=1 // pred_check
      _
    $region19: #{multi_head_attention.1} parent=1 // pred_check_branch
      %64 = sbr.rel (0) target = $region21
    $region20: #{multi_head_attention.1} parent=1 // pred_region
      %s66 = ssub.s32 1024, 1024
      %67 = vsyncadd [#allocation9], %s66
      %s68 = sshll.u32 [#allocation10], 4
      %s69 = int_to_ptr.vmem [resolvable:$true] %s68
      %74 = dma.hbm_to_vmem [thread:$0]  %s4, 1024, %s69, [#allocation9], 64, 64, 4
    $region21: #{multi_head_attention.1} parent=1 // pred_fallthru
      _
    // Predicated region
    $region22: #{multi_head_attention.1} parent=1 // pred_check
      _
    $region23: #{multi_head_attention.1} parent=1 // pred_check_branch
      %76 = sbr.rel (0) target = $region25
    $region24: #{multi_head_attention.1} parent=1 // pred_region
      _
    $region25: #{multi_head_attention.1} parent=1 // pred_fallthru
      _
    // Predicated region
    $region26: #{multi_head_attention.1} parent=1 // pred_check
      _
    $region27: #{multi_head_attention.1} parent=1 // pred_check_branch
      %78 = sbr.rel (0) target = $region29
    $region28: #{multi_head_attention.1} parent=1 // pred_region
      %79 = dma.done [#allocation3], 2048
    $region29: #{multi_head_attention.1} parent=1 // pred_fallthru
      _
    // Predicated region
    $region30: #{multi_head_attention.1} parent=1 // pred_check
      _
    $region31: #{multi_head_attention.1} parent=1 // pred_check_branch
      %81 = sbr.rel (0) target = $region33
    $region32: #{multi_head_attention.1} parent=1 // pred_region
      %82 = dma.done [#allocation6], 1024
    $region33: #{multi_head_attention.1} parent=1 // pred_fallthru
      _
    // Predicated region
    $region34: #{multi_head_attention.1} parent=1 // pred_check
      _
    $region35: #{multi_head_attention.1} parent=1 // pred_check_branch
      %84 = sbr.rel (0) target = $region37
    $region36: #{multi_head_attention.1} parent=1 // pred_region
      %85 = dma.done [#allocation6], 1024
    $region37: #{multi_head_attention.1} parent=1 // pred_fallthru
      _
    // Predicated region
    $region38: #{multi_head_attention.1} parent=1 // pred_check
      _
    $region39: #{multi_head_attention.1} parent=1 // pred_check_branch
      %87 = sbr.rel (0) target = $region41
    $region40: #{multi_head_attention.1} parent=1 // pred_region
      %88 = dma.done [#allocation9], 1024
    $region41: #{multi_head_attention.1} parent=1 // pred_fallthru
      _
    // Predicated region
    $region42: #{multi_head_attention.1} parent=1 // pred_check
      _
    $region43: #{multi_head_attention.1} parent=1 // pred_check_branch
      %90 = sbr.rel (0) target = $region45
    $region44: #{multi_head_attention.1} parent=1 // pred_region
      %91 = dma.done [#allocation9], 1024
    $region45: #{multi_head_attention.1} parent=1 // pred_fallthru
      _
    %v93 = vld [vmem:[#allocation2] sm:$0xff]
    %v94 = vld [vmem:[#allocation2 + $0x8] sm:$0xff]
    %v95 = vld [vmem:[#allocation2 + $0x10] sm:$0xff]
    %v96 = vld [vmem:[#allocation2 + $0x18] sm:$0xff]
    %v97 = vld [vmem:[#allocation2 + $0x20] sm:$0xff]
    %v98 = vld [vmem:[#allocation2 + $0x28] sm:$0xff]
    %v99 = vld [vmem:[#allocation2 + $0x30] sm:$0xff]
    %v100 = vld [vmem:[#allocation2 + $0x38] sm:$0xff]
    %v101 = vld [vmem:[#allocation2 + $0x40] sm:$0xff]
    %v102 = vld [vmem:[#allocation2 + $0x48] sm:$0xff]
    %v103 = vld [vmem:[#allocation2 + $0x50] sm:$0xff]
    %v104 = vld [vmem:[#allocation2 + $0x58] sm:$0xff]
    %v105 = vld [vmem:[#allocation2 + $0x60] sm:$0xff]
    %v106 = vld [vmem:[#allocation2 + $0x68] sm:$0xff]
    %v107 = vld [vmem:[#allocation2 + $0x70] sm:$0xff]
    %v108 = vld [vmem:[#allocation2 + $0x78] sm:$0xff]
    %v109 = vpack.c.bf16 %v94, %v93
    %v110 = vpack.c.bf16 %v96, %v95
    %v111 = vpack.c.bf16 %v98, %v97
    %v112 = vpack.c.bf16 %v100, %v99
    %v113 = vpack.c.bf16 %v102, %v101
    %v114 = vpack.c.bf16 %v104, %v103
    %v115 = vpack.c.bf16 %v106, %v105
    %v116 = vpack.c.bf16 %v108, %v107
    %v117 = vld [vmem:[#allocation5] sm:$0xf]
    %v118 = vld [vmem:[#allocation5 + $0x4] sm:$0xf]
    %v119 = vld [vmem:[#allocation5 + $0x8] sm:$0xf]
    %v120 = vld [vmem:[#allocation5 + $0xc] sm:$0xf]
    %v121 = vld [vmem:[#allocation5 + $0x10] sm:$0xf]
    %v122 = vld [vmem:[#allocation5 + $0x14] sm:$0xf]
    %v123 = vld [vmem:[#allocation5 + $0x18] sm:$0xf]
    %v124 = vld [vmem:[#allocation5 + $0x1c] sm:$0xf]
    %v125 = vld [vmem:[#allocation5 + $0x20] sm:$0xf]
    %v126 = vld [vmem:[#allocation5 + $0x24] sm:$0xf]
    %v127 = vld [vmem:[#allocation5 + $0x28] sm:$0xf]
    %v128 = vld [vmem:[#allocation5 + $0x2c] sm:$0xf]
    %v129 = vld [vmem:[#allocation5 + $0x30] sm:$0xf]
    %v130 = vld [vmem:[#allocation5 + $0x34] sm:$0xf]
    %v131 = vld [vmem:[#allocation5 + $0x38] sm:$0xf]
    %v132 = vld [vmem:[#allocation5 + $0x3c] sm:$0xf]
    %v149 = vunpack.c.l.b16 %v117
    %v150 = vunpack.c.l.b16 %v118
    %v151 = vunpack.c.l.b16 %v119
    %v152 = vunpack.c.l.b16 %v120
    %v153 = vunpack.c.l.b16 %v121
    %v154 = vunpack.c.l.b16 %v122
    %v155 = vunpack.c.l.b16 %v123
    %v156 = vunpack.c.l.b16 %v124
    %v157 = vunpack.c.l.b16 %v125
    %v158 = vunpack.c.l.b16 %v126
    %v159 = vunpack.c.l.b16 %v127
    %v160 = vunpack.c.l.b16 %v128
    %v161 = vunpack.c.l.b16 %v129
    %v162 = vunpack.c.l.b16 %v130
    %v163 = vunpack.c.l.b16 %v131
    %v164 = vunpack.c.l.b16 %v132
    %v165 = vpack.c.b16 %v150, %v149
    %v166 = vpack.c.b16 %v152, %v151
    %v167 = vpack.c.b16 %v154, %v153
    %v168 = vpack.c.b16 %v156, %v155
    %v169 = vpack.c.b16 %v158, %v157
    %v170 = vpack.c.b16 %v160, %v159
    %v171 = vpack.c.b16 %v162, %v161
    %v172 = vpack.c.b16 %v164, %v163
    %181 = vmatprep.subr.bf16.mxu0 0
    %182 = vmatpush1.bf16.msra.mxu0 %v165
    %183 = vmatprep.subr.bf16.mxu0 0
    %184 = vmatpush1.bf16.msra.mxu0 %v166
    %185 = vmatprep.subr.bf16.mxu0 0
    %186 = vmatpush1.bf16.msra.mxu0 %v167
    %187 = vmatprep.subr.bf16.mxu0 0
    %188 = vmatpush1.bf16.msra.mxu0 %v168
    %189 = vmatprep.subr.bf16.mxu0 0
    %190 = vmatpush1.bf16.msra.mxu0 %v169
    %191 = vmatprep.subr.bf16.mxu0 0
    %192 = vmatpush1.bf16.msra.mxu0 %v170
    %193 = vmatprep.subr.bf16.mxu0 0
    %194 = vmatpush1.bf16.msra.mxu0 %v171
    %195 = vmatprep.subr.bf16.mxu0 0
    %196 = vmatpush1.bf16.msra.mxu0 %v172
    %197 = vmatprep.subr.bf16.mxu0 0
    %198 = vmatpush1.bf16.msra.mxu0 0
    %199 = vmatprep.subr.bf16.mxu0 0
    %200 = vmatpush1.bf16.msra.mxu0 0
    %201 = vmatprep.subr.bf16.mxu0 0
    %202 = vmatpush1.bf16.msra.mxu0 0
    %203 = vmatprep.subr.bf16.mxu0 0
    %204 = vmatpush1.bf16.msra.mxu0 0
    %205 = vmatprep.subr.bf16.mxu0 0
    %206 = vmatpush1.bf16.msra.mxu0 0
    %207 = vmatprep.subr.bf16.mxu0 0
    %208 = vmatpush1.bf16.msra.mxu0 0
    %209 = vmatprep.subr.bf16.mxu0 0
    %210 = vmatpush1.bf16.msra.mxu0 0
    %211 = vmatprep.subr.bf16.mxu0 0
    %212 = vmatpush1.bf16.msra.mxu0 0
    %213 = vmatprep.mubr.bf16.mxu0 0
    %214 = vmatmul.mubr.bf16.gmra.mrb[0].mxu0 %v109
    %v215 = vpop.f32.mrb[0].mxu0
    %v216 = vadd.f32 0.0, %v215
    %v217 = vpop.f32.mrb[0].mxu0
    %v218 = vpop.f32.mrb[0].mxu0
    %v219 = vadd.f32 0.0, %v218
    %v220 = vpop.f32.mrb[0].mxu0
    %221 = vmatprep.mubr.bf16.mxu0 0
    %222 = vmatmul.mubr.bf16.gmra.mrb[0].mxu0 %v110
    %v223 = vpop.f32.mrb[0].mxu0
    %v224 = vadd.f32 0.0, %v223
    %v225 = vpop.f32.mrb[0].mxu0
    %v226 = vpop.f32.mrb[0].mxu0
    %v227 = vadd.f32 0.0, %v226
    %v228 = vpop.f32.mrb[0].mxu0
    %229 = vmatprep.mubr.bf16.mxu0 0
    %230 = vmatmul.mubr.bf16.gmra.mrb[0].mxu0 %v111
    %v231 = vpop.f32.mrb[0].mxu0
    %v232 = vadd.f32 0.0, %v231
    %v233 = vpop.f32.mrb[0].mxu0
    %v234 = vpop.f32.mrb[0].mxu0
    %v235 = vadd.f32 0.0, %v234
    %v236 = vpop.f32.mrb[0].mxu0
    %237 = vmatprep.mubr.bf16.mxu0 0
    %238 = vmatmul.mubr.bf16.gmra.mrb[0].mxu0 %v112
    %v239 = vpop.f32.mrb[0].mxu0
    %v240 = vadd.f32 0.0, %v239
    %v241 = vpop.f32.mrb[0].mxu0
    %v242 = vpop.f32.mrb[0].mxu0
    %v243 = vadd.f32 0.0, %v242
    %v244 = vpop.f32.mrb[0].mxu0
    %245 = vmatprep.mubr.bf16.mxu0 0
    %246 = vmatmul.mubr.bf16.gmra.mrb[0].mxu0 %v113
    %v247 = vpop.f32.mrb[0].mxu0
    %v248 = vadd.f32 0.0, %v247
    %v249 = vpop.f32.mrb[0].mxu0
    %v250 = vpop.f32.mrb[0].mxu0
    %v251 = vadd.f32 0.0, %v250
    %v252 = vpop.f32.mrb[0].mxu0
    %253 = vmatprep.mubr.bf16.mxu0 0
    %254 = vmatmul.mubr.bf16.gmra.mrb[0].mxu0 %v114
    %v255 = vpop.f32.mrb[0].mxu0
    %v256 = vadd.f32 0.0, %v255
    %v257 = vpop.f32.mrb[0].mxu0
    %v258 = vpop.f32.mrb[0].mxu0
    %v259 = vadd.f32 0.0, %v258
    %v260 = vpop.f32.mrb[0].mxu0
    %261 = vmatprep.mubr.bf16.mxu0 0
    %262 = vmatmul.mubr.bf16.gmra.mrb[0].mxu0 %v115
    %v263 = vpop.f32.mrb[0].mxu0
    %v264 = vadd.f32 0.0, %v263
    %v265 = vpop.f32.mrb[0].mxu0
    %v266 = vpop.f32.mrb[0].mxu0
    %v267 = vadd.f32 0.0, %v266
    %v268 = vpop.f32.mrb[0].mxu0
    %269 = vmatprep.mubr.bf16.mxu0 0
    %270 = vmatmul.mubr.bf16.gmra.mrb[0].mxu0 %v116
    %v271 = vpop.f32.mrb[0].mxu0
    %v272 = vadd.f32 0.0, %v271
    %v273 = vpop.f32.mrb[0].mxu0
    %v274 = vpop.f32.mrb[0].mxu0
    %v275 = vadd.f32 0.0, %v274
    %v276 = vpop.f32.mrb[0].mxu0
    %277 = vdwg.mxu0
    %v278 = vpack.c.bf16 %v219, %v216
    %v279 = vpack.c.bf16 %v227, %v224
    %v280 = vpack.c.bf16 %v235, %v232
    %v281 = vpack.c.bf16 %v243, %v240
    %v282 = vpack.c.bf16 %v251, %v248
    %v283 = vpack.c.bf16 %v259, %v256
    %v284 = vpack.c.bf16 %v267, %v264
    %v285 = vpack.c.bf16 %v275, %v272
    %v286 = vld [vmem:[#allocation7] sm:$0xf]
    %v287 = vld [vmem:[#allocation7 + $0x4] sm:$0xf]
    %v288 = vld [vmem:[#allocation7 + $0x8] sm:$0xf]
    %v289 = vld [vmem:[#allocation7 + $0xc] sm:$0xf]
    %v290 = vld [vmem:[#allocation7 + $0x10] sm:$0xf]
    %v291 = vld [vmem:[#allocation7 + $0x14] sm:$0xf]
    %v292 = vld [vmem:[#allocation7 + $0x18] sm:$0xf]
    %v293 = vld [vmem:[#allocation7 + $0x1c] sm:$0xf]
    %v294 = vld [vmem:[#allocation7 + $0x20] sm:$0xf]
    %v295 = vld [vmem:[#allocation7 + $0x24] sm:$0xf]
    %v296 = vld [vmem:[#allocation7 + $0x28] sm:$0xf]
    %v297 = vld [vmem:[#allocation7 + $0x2c] sm:$0xf]
    %v298 = vld [vmem:[#allocation7 + $0x30] sm:$0xf]
    %v299 = vld [vmem:[#allocation7 + $0x34] sm:$0xf]
    %v300 = vld [vmem:[#allocation7 + $0x38] sm:$0xf]
    %v301 = vld [vmem:[#allocation7 + $0x3c] sm:$0xf]
    %v318 = vunpack.c.l.b16 %v286
    %v319 = vunpack.c.l.b16 %v287
    %v320 = vunpack.c.l.b16 %v288
    %v321 = vunpack.c.l.b16 %v289
    %v322 = vunpack.c.l.b16 %v290
    %v323 = vunpack.c.l.b16 %v291
    %v324 = vunpack.c.l.b16 %v292
    %v325 = vunpack.c.l.b16 %v293
    %v326 = vunpack.c.l.b16 %v294
    %v327 = vunpack.c.l.b16 %v295
    %v328 = vunpack.c.l.b16 %v296
    %v329 = vunpack.c.l.b16 %v297
    %v330 = vunpack.c.l.b16 %v298
    %v331 = vunpack.c.l.b16 %v299
    %v332 = vunpack.c.l.b16 %v300
    %v333 = vunpack.c.l.b16 %v301
    %v334 = vpack.c.b16 %v319, %v318
    %v335 = vpack.c.b16 %v321, %v320
    %v336 = vpack.c.b16 %v323, %v322
    %v337 = vpack.c.b16 %v325, %v324
    %v338 = vpack.c.b16 %v327, %v326
    %v339 = vpack.c.b16 %v329, %v328
    %v340 = vpack.c.b16 %v331, %v330
    %v341 = vpack.c.b16 %v333, %v332
    %350 = vmatprep.subr.bf16.mxu0 0
    %351 = vmatpush1.bf16.msra.mxu0 %v334
    %352 = vmatprep.subr.bf16.mxu0 0
    %353 = vmatpush1.bf16.msra.mxu0 %v335
    %354 = vmatprep.subr.bf16.mxu0 0
    %355 = vmatpush1.bf16.msra.mxu0 %v336
    %356 = vmatprep.subr.bf16.mxu0 0
    %357 = vmatpush1.bf16.msra.mxu0 %v337
    %358 = vmatprep.subr.bf16.mxu0 0
    %359 = vmatpush1.bf16.msra.mxu0 %v338
    %360 = vmatprep.subr.bf16.mxu0 0
    %361 = vmatpush1.bf16.msra.mxu0 %v339
    %362 = vmatprep.subr.bf16.mxu0 0
    %363 = vmatpush1.bf16.msra.mxu0 %v340
    %364 = vmatprep.subr.bf16.mxu0 0
    %365 = vmatpush1.bf16.msra.mxu0 %v341
    %366 = vmatprep.subr.bf16.mxu0 0
    %367 = vmatpush1.bf16.msra.mxu0 0
    %368 = vmatprep.subr.bf16.mxu0 0
    %369 = vmatpush1.bf16.msra.mxu0 0
    %370 = vmatprep.subr.bf16.mxu0 0
    %371 = vmatpush1.bf16.msra.mxu0 0
    %372 = vmatprep.subr.bf16.mxu0 0
    %373 = vmatpush1.bf16.msra.mxu0 0
    %374 = vmatprep.subr.bf16.mxu0 0
    %375 = vmatpush1.bf16.msra.mxu0 0
    %376 = vmatprep.subr.bf16.mxu0 0
    %377 = vmatpush1.bf16.msra.mxu0 0
    %378 = vmatprep.subr.bf16.mxu0 0
    %379 = vmatpush1.bf16.msra.mxu0 0
    %380 = vmatprep.subr.bf16.mxu0 0
    %381 = vmatpush1.bf16.msra.mxu0 0
    %382 = vmatprep.mubr.bf16.mxu0 0
    %383 = vmatmul.mubr.bf16.gmra.mrb[0].mxu0 %v109
    %v384 = vpop.f32.mrb[0].mxu0
    %v385 = vadd.f32 0.0, %v384
    %v386 = vpop.f32.mrb[0].mxu0
    %v387 = vpop.f32.mrb[0].mxu0
    %v388 = vadd.f32 0.0, %v387
    %v389 = vpop.f32.mrb[0].mxu0
    %390 = vmatprep.mubr.bf16.mxu0 0
    %391 = vmatmul.mubr.bf16.gmra.mrb[0].mxu0 %v110
    %v392 = vpop.f32.mrb[0].mxu0
    %v393 = vadd.f32 0.0, %v392
    %v394 = vpop.f32.mrb[0].mxu0
    %v395 = vpop.f32.mrb[0].mxu0
    %v396 = vadd.f32 0.0, %v395
    %v397 = vpop.f32.mrb[0].mxu0
    %398 = vmatprep.mubr.bf16.mxu0 0
    %399 = vmatmul.mubr.bf16.gmra.mrb[0].mxu0 %v111
    %v400 = vpop.f32.mrb[0].mxu0
    %v401 = vadd.f32 0.0, %v400
    %v402 = vpop.f32.mrb[0].mxu0
    %v403 = vpop.f32.mrb[0].mxu0
    %v404 = vadd.f32 0.0, %v403
    %v405 = vpop.f32.mrb[0].mxu0
    %406 = vmatprep.mubr.bf16.mxu0 0
    %407 = vmatmul.mubr.bf16.gmra.mrb[0].mxu0 %v112
    %v408 = vpop.f32.mrb[0].mxu0
    %v409 = vadd.f32 0.0, %v408
    %v410 = vpop.f32.mrb[0].mxu0
    %v411 = vpop.f32.mrb[0].mxu0
    %v412 = vadd.f32 0.0, %v411
    %v413 = vpop.f32.mrb[0].mxu0
    %414 = vmatprep.mubr.bf16.mxu0 0
    %415 = vmatmul.mubr.bf16.gmra.mrb[0].mxu0 %v113
    %v416 = vpop.f32.mrb[0].mxu0
    %v417 = vadd.f32 0.0, %v416
    %v418 = vpop.f32.mrb[0].mxu0
    %v419 = vpop.f32.mrb[0].mxu0
    %v420 = vadd.f32 0.0, %v419
    %v421 = vpop.f32.mrb[0].mxu0
    %422 = vmatprep.mubr.bf16.mxu0 0
    %423 = vmatmul.mubr.bf16.gmra.mrb[0].mxu0 %v114
    %v424 = vpop.f32.mrb[0].mxu0
    %v425 = vadd.f32 0.0, %v424
    %v426 = vpop.f32.mrb[0].mxu0
    %v427 = vpop.f32.mrb[0].mxu0
    %v428 = vadd.f32 0.0, %v427
    %v429 = vpop.f32.mrb[0].mxu0
    %430 = vmatprep.mubr.bf16.mxu0 0
    %431 = vmatmul.mubr.bf16.gmra.mrb[0].mxu0 %v115
    %v432 = vpop.f32.mrb[0].mxu0
    %v433 = vadd.f32 0.0, %v432
    %v434 = vpop.f32.mrb[0].mxu0
    %v435 = vpop.f32.mrb[0].mxu0
    %v436 = vadd.f32 0.0, %v435
    %v437 = vpop.f32.mrb[0].mxu0
    %438 = vmatprep.mubr.bf16.mxu0 0
    %439 = vmatmul.mubr.bf16.gmra.mrb[0].mxu0 %v116
    %v440 = vpop.f32.mrb[0].mxu0
    %v441 = vadd.f32 0.0, %v440
    %v442 = vpop.f32.mrb[0].mxu0
    %v443 = vpop.f32.mrb[0].mxu0
    %v444 = vadd.f32 0.0, %v443
    %v445 = vpop.f32.mrb[0].mxu0
    %446 = vdwg.mxu0
    %v447 = vpack.c.bf16 %v388, %v385
    %v448 = vpack.c.bf16 %v396, %v393
    %v449 = vpack.c.bf16 %v404, %v401
    %v450 = vpack.c.bf16 %v412, %v409
    %v451 = vpack.c.bf16 %v420, %v417
    %v452 = vpack.c.bf16 %v428, %v425
    %v453 = vpack.c.bf16 %v436, %v433
    %v454 = vpack.c.bf16 %v444, %v441
    %v455 = vld [vmem:[#allocation8] sm:$0xf]
    %v456 = vld [vmem:[#allocation8 + $0x4] sm:$0xf]
    %v457 = vld [vmem:[#allocation8 + $0x8] sm:$0xf]
    %v458 = vld [vmem:[#allocation8 + $0xc] sm:$0xf]
    %v459 = vld [vmem:[#allocation8 + $0x10] sm:$0xf]
    %v460 = vld [vmem:[#allocation8 + $0x14] sm:$0xf]
    %v461 = vld [vmem:[#allocation8 + $0x18] sm:$0xf]
    %v462 = vld [vmem:[#allocation8 + $0x1c] sm:$0xf]
    %v463 = vld [vmem:[#allocation8 + $0x20] sm:$0xf]
    %v464 = vld [vmem:[#allocation8 + $0x24] sm:$0xf]
    %v465 = vld [vmem:[#allocation8 + $0x28] sm:$0xf]
    %v466 = vld [vmem:[#allocation8 + $0x2c] sm:$0xf]
    %v467 = vld [vmem:[#allocation8 + $0x30] sm:$0xf]
    %v468 = vld [vmem:[#allocation8 + $0x34] sm:$0xf]
    %v469 = vld [vmem:[#allocation8 + $0x38] sm:$0xf]
    %v470 = vld [vmem:[#allocation8 + $0x3c] sm:$0xf]
    %v487 = vunpack.c.l.b16 %v455
    %v488 = vunpack.c.l.b16 %v456
    %v489 = vunpack.c.l.b16 %v457
    %v490 = vunpack.c.l.b16 %v458
    %v491 = vunpack.c.l.b16 %v459
    %v492 = vunpack.c.l.b16 %v460
    %v493 = vunpack.c.l.b16 %v461
    %v494 = vunpack.c.l.b16 %v462
    %v495 = vunpack.c.l.b16 %v463
    %v496 = vunpack.c.l.b16 %v464
    %v497 = vunpack.c.l.b16 %v465
    %v498 = vunpack.c.l.b16 %v466
    %v499 = vunpack.c.l.b16 %v467
    %v500 = vunpack.c.l.b16 %v468
    %v501 = vunpack.c.l.b16 %v469
    %v502 = vunpack.c.l.b16 %v470
    %v503 = vpack.c.b16 %v488, %v487
    %v504 = vpack.c.b16 %v490, %v489
    %v505 = vpack.c.b16 %v492, %v491
    %v506 = vpack.c.b16 %v494, %v493
    %v507 = vpack.c.b16 %v496, %v495
    %v508 = vpack.c.b16 %v498, %v497
    %v509 = vpack.c.b16 %v500, %v499
    %v510 = vpack.c.b16 %v502, %v501
    %519 = vmatprep.subr.bf16.mxu0 0
    %520 = vmatpush1.bf16.msra.mxu0 %v503
    %521 = vmatprep.subr.bf16.mxu0 0
    %522 = vmatpush1.bf16.msra.mxu0 %v504
    %523 = vmatprep.subr.bf16.mxu0 0
    %524 = vmatpush1.bf16.msra.mxu0 %v505
    %525 = vmatprep.subr.bf16.mxu0 0
    %526 = vmatpush1.bf16.msra.mxu0 %v506
    %527 = vmatprep.subr.bf16.mxu0 0
    %528 = vmatpush1.bf16.msra.mxu0 %v507
    %529 = vmatprep.subr.bf16.mxu0 0
    %530 = vmatpush1.bf16.msra.mxu0 %v508
    %531 = vmatprep.subr.bf16.mxu0 0
    %532 = vmatpush1.bf16.msra.mxu0 %v509
    %533 = vmatprep.subr.bf16.mxu0 0
    %534 = vmatpush1.bf16.msra.mxu0 %v510
    %535 = vmatprep.subr.bf16.mxu0 0
    %536 = vmatpush1.bf16.msra.mxu0 0
    %537 = vmatprep.subr.bf16.mxu0 0
    %538 = vmatpush1.bf16.msra.mxu0 0
    %539 = vmatprep.subr.bf16.mxu0 0
    %540 = vmatpush1.bf16.msra.mxu0 0
    %541 = vmatprep.subr.bf16.mxu0 0
    %542 = vmatpush1.bf16.msra.mxu0 0
    %543 = vmatprep.subr.bf16.mxu0 0
    %544 = vmatpush1.bf16.msra.mxu0 0
    %545 = vmatprep.subr.bf16.mxu0 0
    %546 = vmatpush1.bf16.msra.mxu0 0
    %547 = vmatprep.subr.bf16.mxu0 0
    %548 = vmatpush1.bf16.msra.mxu0 0
    %549 = vmatprep.subr.bf16.mxu0 0
    %550 = vmatpush1.bf16.msra.mxu0 0
    %551 = vmatprep.mubr.bf16.mxu0 0
    %552 = vmatmul.mubr.bf16.gmra.mrb[0].mxu0 %v109
    %v553 = vpop.f32.mrb[0].mxu0
    %v554 = vadd.f32 0.0, %v553
    %v555 = vpop.f32.mrb[0].mxu0
    %v556 = vpop.f32.mrb[0].mxu0
    %v557 = vadd.f32 0.0, %v556
    %v558 = vpop.f32.mrb[0].mxu0
    %559 = vmatprep.mubr.bf16.mxu0 0
    %560 = vmatmul.mubr.bf16.gmra.mrb[0].mxu0 %v110
    %v561 = vpop.f32.mrb[0].mxu0
    %v562 = vadd.f32 0.0, %v561
    %v563 = vpop.f32.mrb[0].mxu0
    %v564 = vpop.f32.mrb[0].mxu0
    %v565 = vadd.f32 0.0, %v564
    %v566 = vpop.f32.mrb[0].mxu0
    %567 = vmatprep.mubr.bf16.mxu0 0
    %568 = vmatmul.mubr.bf16.gmra.mrb[0].mxu0 %v111
    %v569 = vpop.f32.mrb[0].mxu0
    %v570 = vadd.f32 0.0, %v569
    %v571 = vpop.f32.mrb[0].mxu0
    %v572 = vpop.f32.mrb[0].mxu0
    %v573 = vadd.f32 0.0, %v572
    %v574 = vpop.f32.mrb[0].mxu0
    %575 = vmatprep.mubr.bf16.mxu0 0
    %576 = vmatmul.mubr.bf16.gmra.mrb[0].mxu0 %v112
    %v577 = vpop.f32.mrb[0].mxu0
    %v578 = vadd.f32 0.0, %v577
    %v579 = vpop.f32.mrb[0].mxu0
    %v580 = vpop.f32.mrb[0].mxu0
    %v581 = vadd.f32 0.0, %v580
    %v582 = vpop.f32.mrb[0].mxu0
    %583 = vmatprep.mubr.bf16.mxu0 0
    %584 = vmatmul.mubr.bf16.gmra.mrb[0].mxu0 %v113
    %v585 = vpop.f32.mrb[0].mxu0
    %v586 = vadd.f32 0.0, %v585
    %v587 = vpop.f32.mrb[0].mxu0
    %v588 = vpop.f32.mrb[0].mxu0
    %v589 = vadd.f32 0.0, %v588
    %v590 = vpop.f32.mrb[0].mxu0
    %591 = vmatprep.mubr.bf16.mxu0 0
    %592 = vmatmul.mubr.bf16.gmra.mrb[0].mxu0 %v114
    %v593 = vpop.f32.mrb[0].mxu0
    %v594 = vadd.f32 0.0, %v593
    %v595 = vpop.f32.mrb[0].mxu0
    %v596 = vpop.f32.mrb[0].mxu0
    %v597 = vadd.f32 0.0, %v596
    %v598 = vpop.f32.mrb[0].mxu0
    %599 = vmatprep.mubr.bf16.mxu0 0
    %600 = vmatmul.mubr.bf16.gmra.mrb[0].mxu0 %v115
    %v601 = vpop.f32.mrb[0].mxu0
    %v602 = vadd.f32 0.0, %v601
    %v603 = vpop.f32.mrb[0].mxu0
    %v604 = vpop.f32.mrb[0].mxu0
    %v605 = vadd.f32 0.0, %v604
    %v606 = vpop.f32.mrb[0].mxu0
    %607 = vmatprep.mubr.bf16.mxu0 0
    %608 = vmatmul.mubr.bf16.gmra.mrb[0].mxu0 %v116
    %v609 = vpop.f32.mrb[0].mxu0
    %v610 = vadd.f32 0.0, %v609
    %v611 = vpop.f32.mrb[0].mxu0
    %v612 = vpop.f32.mrb[0].mxu0
    %v613 = vadd.f32 0.0, %v612
    %v614 = vpop.f32.mrb[0].mxu0
    %615 = vdwg.mxu0
    %v616 = vpack.c.bf16 %v557, %v554
    %v617 = vpack.c.bf16 %v565, %v562
    %v618 = vpack.c.bf16 %v573, %v570
    %v619 = vpack.c.bf16 %v581, %v578
    %v620 = vpack.c.bf16 %v589, %v586
    %v621 = vpack.c.bf16 %v597, %v594
    %v622 = vpack.c.bf16 %v605, %v602
    %v623 = vpack.c.bf16 %v613, %v610
    %632 = vrot.lane.b32.xlu0 %v278, 96
    %v633 = vpop.permute.xlu0 %632
    %634 = vrot.lane.b32.xlu0 %v279, 96
    %v635 = vpop.permute.xlu0 %634
    %636 = vrot.lane.b32.xlu0 %v280, 96
    %v637 = vpop.permute.xlu0 %636
    %638 = vrot.lane.b32.xlu0 %v281, 96
    %v639 = vpop.permute.xlu0 %638
    %640 = vrot.lane.b32.xlu0 %v282, 96
    %v641 = vpop.permute.xlu0 %640
    %642 = vrot.lane.b32.xlu0 %v283, 96
    %v643 = vpop.permute.xlu0 %642
    %644 = vrot.lane.b32.xlu0 %v284, 96
    %v645 = vpop.permute.xlu0 %644
    %646 = vrot.lane.b32.xlu0 %v285, 96
    %v647 = vpop.permute.xlu0 %646
    %648 = vrot.lane.b32.xlu0 %v278, 64
    %v649 = vpop.permute.xlu0 %648
    %650 = vrot.lane.b32.xlu0 %v279, 64
    %v651 = vpop.permute.xlu0 %650
    %652 = vrot.lane.b32.xlu0 %v280, 64
    %v653 = vpop.permute.xlu0 %652
    %654 = vrot.lane.b32.xlu0 %v281, 64
    %v655 = vpop.permute.xlu0 %654
    %656 = vrot.lane.b32.xlu0 %v282, 64
    %v657 = vpop.permute.xlu0 %656
    %658 = vrot.lane.b32.xlu0 %v283, 64
    %v659 = vpop.permute.xlu0 %658
    %660 = vrot.lane.b32.xlu0 %v284, 64
    %v661 = vpop.permute.xlu0 %660
    %662 = vrot.lane.b32.xlu0 %v285, 64
    %v663 = vpop.permute.xlu0 %662
    %664 = vrot.lane.b32.xlu0 %v278, 32
    %v665 = vpop.permute.xlu0 %664
    %666 = vrot.lane.b32.xlu0 %v279, 32
    %v667 = vpop.permute.xlu0 %666
    %668 = vrot.lane.b32.xlu0 %v280, 32
    %v669 = vpop.permute.xlu0 %668
    %670 = vrot.lane.b32.xlu0 %v281, 32
    %v671 = vpop.permute.xlu0 %670
    %672 = vrot.lane.b32.xlu0 %v282, 32
    %v673 = vpop.permute.xlu0 %672
    %674 = vrot.lane.b32.xlu0 %v283, 32
    %v675 = vpop.permute.xlu0 %674
    %676 = vrot.lane.b32.xlu0 %v284, 32
    %v677 = vpop.permute.xlu0 %676
    %678 = vrot.lane.b32.xlu0 %v285, 32
    %v679 = vpop.permute.xlu0 %678
    %v682 = vpack.i.b16 %v633, %v278
    %v684 = vshrl.u32 %v278, 16
    %v685 = vshrl.u32 %v633, 16
    %v686 = vpack.i.b16 %v685, %v684
    %v690 = vpack.i.b16 %v665, %v649
    %v692 = vshrl.u32 %v649, 16
    %v693 = vshrl.u32 %v665, 16
    %v694 = vpack.i.b16 %v693, %v692
    %v697 = vpack.i.b16 0, 0
    %v699 = vshrl.u32 0, 16
    %v700 = vpack.i.b16 %v699, %v699
    %v704 = vpack.i.b16 %v635, %v279
    %v706 = vshrl.u32 %v279, 16
    %v707 = vshrl.u32 %v635, 16
    %v708 = vpack.i.b16 %v707, %v706
    %v712 = vpack.i.b16 %v667, %v651
    %v714 = vshrl.u32 %v651, 16
    %v715 = vshrl.u32 %v667, 16
    %v716 = vpack.i.b16 %v715, %v714
    %v720 = vpack.i.b16 %v637, %v280
    %v722 = vshrl.u32 %v280, 16
    %v723 = vshrl.u32 %v637, 16
    %v724 = vpack.i.b16 %v723, %v722
    %v728 = vpack.i.b16 %v669, %v653
    %v730 = vshrl.u32 %v653, 16
    %v731 = vshrl.u32 %v669, 16
    %v732 = vpack.i.b16 %v731, %v730
    %v736 = vpack.i.b16 %v639, %v281
    %v738 = vshrl.u32 %v281, 16
    %v739 = vshrl.u32 %v639, 16
    %v740 = vpack.i.b16 %v739, %v738
    %v744 = vpack.i.b16 %v671, %v655
    %v746 = vshrl.u32 %v655, 16
    %v747 = vshrl.u32 %v671, 16
    %v748 = vpack.i.b16 %v747, %v746
    %v752 = vpack.i.b16 %v641, %v282
    %v754 = vshrl.u32 %v282, 16
    %v755 = vshrl.u32 %v641, 16
    %v756 = vpack.i.b16 %v755, %v754
    %v760 = vpack.i.b16 %v673, %v657
    %v762 = vshrl.u32 %v657, 16
    %v763 = vshrl.u32 %v673, 16
    %v764 = vpack.i.b16 %v763, %v762
    %v768 = vpack.i.b16 %v643, %v283
    %v770 = vshrl.u32 %v283, 16
    %v771 = vshrl.u32 %v643, 16
    %v772 = vpack.i.b16 %v771, %v770
    %v776 = vpack.i.b16 %v675, %v659
    %v778 = vshrl.u32 %v659, 16
    %v779 = vshrl.u32 %v675, 16
    %v780 = vpack.i.b16 %v779, %v778
    %v784 = vpack.i.b16 %v645, %v284
    %v786 = vshrl.u32 %v284, 16
    %v787 = vshrl.u32 %v645, 16
    %v788 = vpack.i.b16 %v787, %v786
    %v792 = vpack.i.b16 %v677, %v661
    %v794 = vshrl.u32 %v661, 16
    %v795 = vshrl.u32 %v677, 16
    %v796 = vpack.i.b16 %v795, %v794
    %v800 = vpack.i.b16 %v647, %v285
    %v802 = vshrl.u32 %v285, 16
    %v803 = vshrl.u32 %v647, 16
    %v804 = vpack.i.b16 %v803, %v802
    %v808 = vpack.i.b16 %v679, %v663
    %v810 = vshrl.u32 %v663, 16
    %v811 = vshrl.u32 %v679, 16
    %v812 = vpack.i.b16 %v811, %v810
    %v814 = vcombine.high %v682, %v697
    %v816 = vunpack.c.l.s4 1983009808
    %v817 = vunpack.c.0.s8 %v816
    %v818 = vlaneseq
    %v819 = vshrl.u32 %v818, 7
    %v820 = vsub.s32 %v817, %v819
    %v821 = vrot.slane %v682, %v820
    %v823 = vunpack.c.l.s4 1983009808
    %v824 = vunpack.c.0.s8 %v823
    %v825 = vlaneseq
    %v826 = vshrl.u32 %v825, 7
    %v827 = vsub.s32 %v824, %v826
    %v828 = vrot.slane %v814, %v827
    %v829 = vcombine.high %v690, %v697
    %v831 = vunpack.c.l.s4 1983009808
    %v832 = vunpack.c.0.s8 %v831
    %v833 = vlaneseq
    %v834 = vshrl.u32 %v833, 7
    %v835 = vsub.s32 %v832, %v834
    %v836 = vrot.slane %v690, %v835
    %v838 = vunpack.c.l.s4 1983009808
    %v839 = vunpack.c.0.s8 %v838
    %v840 = vlaneseq
    %v841 = vshrl.u32 %v840, 7
    %v842 = vsub.s32 %v839, %v841
    %v843 = vrot.slane %v829, %v842
    %v844 = vcombine.low %v821, %v836
    %v845 = vcombine.high %v821, %v836
    %v847 = vunpack.c.l.s4 1934713408
    %v848 = vunpack.c.0.s8 %v847
    %v849 = vlaneseq
    %v850 = vshrl.u32 %v849, 7
    %v851 = vsub.s32 %v848, %v850
    %v852 = vrot.slane %v844, %v851
    %v854 = vunpack.c.l.s4 1934713408
    %v855 = vunpack.c.0.s8 %v854
    %v856 = vlaneseq
    %v857 = vshrl.u32 %v856, 7
    %v858 = vsub.s32 %v855, %v857
    %v859 = vrot.slane %v845, %v858
    %v860 = vcombine.low %v828, %v843
    %v861 = vcombine.high %v828, %v843
    %v863 = vunpack.c.l.s4 1934713408
    %v864 = vunpack.c.0.s8 %v863
    %v865 = vlaneseq
    %v866 = vshrl.u32 %v865, 7
    %v867 = vsub.s32 %v864, %v866
    %v868 = vrot.slane %v860, %v867
    %v870 = vunpack.c.l.s4 1934713408
    %v871 = vunpack.c.0.s8 %v870
    %v872 = vlaneseq
    %v873 = vshrl.u32 %v872, 7
    %v874 = vsub.s32 %v871, %v873
    %v875 = vrot.slane %v861, %v874
    %v876 = vcombine.high %v852, 0
    %v877 = vcombine.high %v859, 0
    %v878 = vcombine.high %v868, 0
    %v879 = vcombine.high %v875, 0
    %v880 = vcombine.high %v686, %v700
    %v882 = vunpack.c.l.s4 1983009808
    %v883 = vunpack.c.0.s8 %v882
    %v884 = vlaneseq
    %v885 = vshrl.u32 %v884, 7
    %v886 = vsub.s32 %v883, %v885
    %v887 = vrot.slane %v686, %v886
    %v889 = vunpack.c.l.s4 1983009808
    %v890 = vunpack.c.0.s8 %v889
    %v891 = vlaneseq
    %v892 = vshrl.u32 %v891, 7
    %v893 = vsub.s32 %v890, %v892
    %v894 = vrot.slane %v880, %v893
    %v895 = vcombine.high %v694, %v700
    %v897 = vunpack.c.l.s4 1983009808
    %v898 = vunpack.c.0.s8 %v897
    %v899 = vlaneseq
    %v900 = vshrl.u32 %v899, 7
    %v901 = vsub.s32 %v898, %v900
    %v902 = vrot.slane %v694, %v901
    %v904 = vunpack.c.l.s4 1983009808
    %v905 = vunpack.c.0.s8 %v904
    %v906 = vlaneseq
    %v907 = vshrl.u32 %v906, 7
    %v908 = vsub.s32 %v905, %v907
    %v909 = vrot.slane %v895, %v908
    %v910 = vcombine.low %v887, %v902
    %v911 = vcombine.high %v887, %v902
    %v913 = vunpack.c.l.s4 1934713408
    %v914 = vunpack.c.0.s8 %v913
    %v915 = vlaneseq
    %v916 = vshrl.u32 %v915, 7
    %v917 = vsub.s32 %v914, %v916
    %v918 = vrot.slane %v910, %v917
    %v920 = vunpack.c.l.s4 1934713408
    %v921 = vunpack.c.0.s8 %v920
    %v922 = vlaneseq
    %v923 = vshrl.u32 %v922, 7
    %v924 = vsub.s32 %v921, %v923
    %v925 = vrot.slane %v911, %v924
    %v926 = vcombine.low %v894, %v909
    %v927 = vcombine.high %v894, %v909
    %v929 = vunpack.c.l.s4 1934713408
    %v930 = vunpack.c.0.s8 %v929
    %v931 = vlaneseq
    %v932 = vshrl.u32 %v931, 7
    %v933 = vsub.s32 %v930, %v932
    %v934 = vrot.slane %v926, %v933
    %v936 = vunpack.c.l.s4 1934713408
    %v937 = vunpack.c.0.s8 %v936
    %v938 = vlaneseq
    %v939 = vshrl.u32 %v938, 7
    %v940 = vsub.s32 %v937, %v939
    %v941 = vrot.slane %v927, %v940
    %v942 = vcombine.high %v918, 0
    %v943 = vcombine.high %v925, 0
    %v944 = vcombine.high %v934, 0
    %v945 = vcombine.high %v941, 0
    %v946 = vcombine.high %v704, %v697
    %v948 = vunpack.c.l.s4 1983009808
    %v949 = vunpack.c.0.s8 %v948
    %v950 = vlaneseq
    %v951 = vshrl.u32 %v950, 7
    %v952 = vsub.s32 %v949, %v951
    %v953 = vrot.slane %v704, %v952
    %v955 = vunpack.c.l.s4 1983009808
    %v956 = vunpack.c.0.s8 %v955
    %v957 = vlaneseq
    %v958 = vshrl.u32 %v957, 7
    %v959 = vsub.s32 %v956, %v958
    %v960 = vrot.slane %v946, %v959
    %v961 = vcombine.high %v712, %v697
    %v963 = vunpack.c.l.s4 1983009808
    %v964 = vunpack.c.0.s8 %v963
    %v965 = vlaneseq
    %v966 = vshrl.u32 %v965, 7
    %v967 = vsub.s32 %v964, %v966
    %v968 = vrot.slane %v712, %v967
    %v970 = vunpack.c.l.s4 1983009808
    %v971 = vunpack.c.0.s8 %v970
    %v972 = vlaneseq
    %v973 = vshrl.u32 %v972, 7
    %v974 = vsub.s32 %v971, %v973
    %v975 = vrot.slane %v961, %v974
    %v976 = vcombine.low %v953, %v968
    %v977 = vcombine.high %v953, %v968
    %v979 = vunpack.c.l.s4 1934713408
    %v980 = vunpack.c.0.s8 %v979
    %v981 = vlaneseq
    %v982 = vshrl.u32 %v981, 7
    %v983 = vsub.s32 %v980, %v982
    %v984 = vrot.slane %v976, %v983
    %v986 = vunpack.c.l.s4 1934713408
    %v987 = vunpack.c.0.s8 %v986
    %v988 = vlaneseq
    %v989 = vshrl.u32 %v988, 7
    %v990 = vsub.s32 %v987, %v989
    %v991 = vrot.slane %v977, %v990
    %v992 = vcombine.low %v960, %v975
    %v993 = vcombine.high %v960, %v975
    %v995 = vunpack.c.l.s4 1934713408
    %v996 = vunpack.c.0.s8 %v995
    %v997 = vlaneseq
    %v998 = vshrl.u32 %v997, 7
    %v999 = vsub.s32 %v996, %v998
    %v1000 = vrot.slane %v992, %v999
    %v1002 = vunpack.c.l.s4 1934713408
    %v1003 = vunpack.c.0.s8 %v1002
    %v1004 = vlaneseq
    %v1005 = vshrl.u32 %v1004, 7
    %v1006 = vsub.s32 %v1003, %v1005
    %v1007 = vrot.slane %v993, %v1006
    %v1008 = vcombine.high %v984, 0
    %v1009 = vcombine.high %v991, 0
    %v1010 = vcombine.high %v1000, 0
    %v1011 = vcombine.high %v1007, 0
    %v1012 = vcombine.high %v708, %v700
    %v1014 = vunpack.c.l.s4 1983009808
    %v1015 = vunpack.c.0.s8 %v1014
    %v1016 = vlaneseq
    %v1017 = vshrl.u32 %v1016, 7
    %v1018 = vsub.s32 %v1015, %v1017
    %v1019 = vrot.slane %v708, %v1018
    %v1021 = vunpack.c.l.s4 1983009808
    %v1022 = vunpack.c.0.s8 %v1021
    %v1023 = vlaneseq
    %v1024 = vshrl.u32 %v1023, 7
    %v1025 = vsub.s32 %v1022, %v1024
    %v1026 = vrot.slane %v1012, %v1025
    %v1027 = vcombine.high %v716, %v700
    %v1029 = vunpack.c.l.s4 1983009808
    %v1030 = vunpack.c.0.s8 %v1029
    %v1031 = vlaneseq
    %v1032 = vshrl.u32 %v1031, 7
    %v1033 = vsub.s32 %v1030, %v1032
    %v1034 = vrot.slane %v716, %v1033
    %v1036 = vunpack.c.l.s4 1983009808
    %v1037 = vunpack.c.0.s8 %v1036
    %v1038 = vlaneseq
    %v1039 = vshrl.u32 %v1038, 7
    %v1040 = vsub.s32 %v1037, %v1039
    %v1041 = vrot.slane %v1027, %v1040
    %v1042 = vcombine.low %v1019, %v1034
    %v1043 = vcombine.high %v1019, %v1034
    %v1045 = vunpack.c.l.s4 1934713408
    %v1046 = vunpack.c.0.s8 %v1045
    %v1047 = vlaneseq
    %v1048 = vshrl.u32 %v1047, 7
    %v1049 = vsub.s32 %v1046, %v1048
    %v1050 = vrot.slane %v1042, %v1049
    %v1052 = vunpack.c.l.s4 1934713408
    %v1053 = vunpack.c.0.s8 %v1052
    %v1054 = vlaneseq
    %v1055 = vshrl.u32 %v1054, 7
    %v1056 = vsub.s32 %v1053, %v1055
    %v1057 = vrot.slane %v1043, %v1056
    %v1058 = vcombine.low %v1026, %v1041
    %v1059 = vcombine.high %v1026, %v1041
    %v1061 = vunpack.c.l.s4 1934713408
    %v1062 = vunpack.c.0.s8 %v1061
    %v1063 = vlaneseq
    %v1064 = vshrl.u32 %v1063, 7
    %v1065 = vsub.s32 %v1062, %v1064
    %v1066 = vrot.slane %v1058, %v1065
    %v1068 = vunpack.c.l.s4 1934713408
    %v1069 = vunpack.c.0.s8 %v1068
    %v1070 = vlaneseq
    %v1071 = vshrl.u32 %v1070, 7
    %v1072 = vsub.s32 %v1069, %v1071
    %v1073 = vrot.slane %v1059, %v1072
    %v1074 = vcombine.high %v1050, 0
    %v1075 = vcombine.high %v1057, 0
    %v1076 = vcombine.high %v1066, 0
    %v1077 = vcombine.high %v1073, 0
    %v1078 = vcombine.high %v720, %v697
    %v1080 = vunpack.c.l.s4 1983009808
    %v1081 = vunpack.c.0.s8 %v1080
    %v1082 = vlaneseq
    %v1083 = vshrl.u32 %v1082, 7
    %v1084 = vsub.s32 %v1081, %v1083
    %v1085 = vrot.slane %v720, %v1084
    %v1087 = vunpack.c.l.s4 1983009808
    %v1088 = vunpack.c.0.s8 %v1087
    %v1089 = vlaneseq
    %v1090 = vshrl.u32 %v1089, 7
    %v1091 = vsub.s32 %v1088, %v1090
    %v1092 = vrot.slane %v1078, %v1091
    %v1093 = vcombine.high %v728, %v697
    %v1095 = vunpack.c.l.s4 1983009808
    %v1096 = vunpack.c.0.s8 %v1095
    %v1097 = vlaneseq
    %v1098 = vshrl.u32 %v1097, 7
    %v1099 = vsub.s32 %v1096, %v1098
    %v1100 = vrot.slane %v728, %v1099
    %v1102 = vunpack.c.l.s4 1983009808
    %v1103 = vunpack.c.0.s8 %v1102
    %v1104 = vlaneseq
    %v1105 = vshrl.u32 %v1104, 7
    %v1106 = vsub.s32 %v1103, %v1105
    %v1107 = vrot.slane %v1093, %v1106
    %v1108 = vcombine.low %v1085, %v1100
    %v1109 = vcombine.high %v1085, %v1100
    %v1111 = vunpack.c.l.s4 1934713408
    %v1112 = vunpack.c.0.s8 %v1111
    %v1113 = vlaneseq
    %v1114 = vshrl.u32 %v1113, 7
    %v1115 = vsub.s32 %v1112, %v1114
    %v1116 = vrot.slane %v1108, %v1115
    %v1118 = vunpack.c.l.s4 1934713408
    %v1119 = vunpack.c.0.s8 %v1118
    %v1120 = vlaneseq
    %v1121 = vshrl.u32 %v1120, 7
    %v1122 = vsub.s32 %v1119, %v1121
    %v1123 = vrot.slane %v1109, %v1122
    %v1124 = vcombine.low %v1092, %v1107
    %v1125 = vcombine.high %v1092, %v1107
    %v1127 = vunpack.c.l.s4 1934713408
    %v1128 = vunpack.c.0.s8 %v1127
    %v1129 = vlaneseq
    %v1130 = vshrl.u32 %v1129, 7
    %v1131 = vsub.s32 %v1128, %v1130
    %v1132 = vrot.slane %v1124, %v1131
    %v1134 = vunpack.c.l.s4 1934713408
    %v1135 = vunpack.c.0.s8 %v1134
    %v1136 = vlaneseq
    %v1137 = vshrl.u32 %v1136, 7
    %v1138 = vsub.s32 %v1135, %v1137
    %v1139 = vrot.slane %v1125, %v1138
    %v1140 = vcombine.high %v1116, 0
    %v1141 = vcombine.high %v1123, 0
    %v1142 = vcombine.high %v1132, 0
    %v1143 = vcombine.high %v1139, 0
    %v1144 = vcombine.high %v724, %v700
    %v1146 = vunpack.c.l.s4 1983009808
    %v1147 = vunpack.c.0.s8 %v1146
    %v1148 = vlaneseq
    %v1149 = vshrl.u32 %v1148, 7
    %v1150 = vsub.s32 %v1147, %v1149
    %v1151 = vrot.slane %v724, %v1150
    %v1153 = vunpack.c.l.s4 1983009808
    %v1154 = vunpack.c.0.s8 %v1153
    %v1155 = vlaneseq
    %v1156 = vshrl.u32 %v1155, 7
    %v1157 = vsub.s32 %v1154, %v1156
    %v1158 = vrot.slane %v1144, %v1157
    %v1159 = vcombine.high %v732, %v700
    %v1161 = vunpack.c.l.s4 1983009808
    %v1162 = vunpack.c.0.s8 %v1161
    %v1163 = vlaneseq
    %v1164 = vshrl.u32 %v1163, 7
    %v1165 = vsub.s32 %v1162, %v1164
    %v1166 = vrot.slane %v732, %v1165
    %v1168 = vunpack.c.l.s4 1983009808
    %v1169 = vunpack.c.0.s8 %v1168
    %v1170 = vlaneseq
    %v1171 = vshrl.u32 %v1170, 7
    %v1172 = vsub.s32 %v1169, %v1171
    %v1173 = vrot.slane %v1159, %v1172
    %v1174 = vcombine.low %v1151, %v1166
    %v1175 = vcombine.high %v1151, %v1166
    %v1177 = vunpack.c.l.s4 1934713408
    %v1178 = vunpack.c.0.s8 %v1177
    %v1179 = vlaneseq
    %v1180 = vshrl.u32 %v1179, 7
    %v1181 = vsub.s32 %v1178, %v1180
    %v1182 = vrot.slane %v1174, %v1181
    %v1184 = vunpack.c.l.s4 1934713408
    %v1185 = vunpack.c.0.s8 %v1184
    %v1186 = vlaneseq
    %v1187 = vshrl.u32 %v1186, 7
    %v1188 = vsub.s32 %v1185, %v1187
    %v1189 = vrot.slane %v1175, %v1188
    %v1190 = vcombine.low %v1158, %v1173
    %v1191 = vcombine.high %v1158, %v1173
    %v1193 = vunpack.c.l.s4 1934713408
    %v1194 = vunpack.c.0.s8 %v1193
    %v1195 = vlaneseq
    %v1196 = vshrl.u32 %v1195, 7
    %v1197 = vsub.s32 %v1194, %v1196
    %v1198 = vrot.slane %v1190, %v1197
    %v1200 = vunpack.c.l.s4 1934713408
    %v1201 = vunpack.c.0.s8 %v1200
    %v1202 = vlaneseq
    %v1203 = vshrl.u32 %v1202, 7
    %v1204 = vsub.s32 %v1201, %v1203
    %v1205 = vrot.slane %v1191, %v1204
    %v1206 = vcombine.high %v1182, 0
    %v1207 = vcombine.high %v1189, 0
    %v1208 = vcombine.high %v1198, 0
    %v1209 = vcombine.high %v1205, 0
    %v1210 = vcombine.high %v736, %v697
    %v1212 = vunpack.c.l.s4 1983009808
    %v1213 = vunpack.c.0.s8 %v1212
    %v1214 = vlaneseq
    %v1215 = vshrl.u32 %v1214, 7
    %v1216 = vsub.s32 %v1213, %v1215
    %v1217 = vrot.slane %v736, %v1216
    %v1219 = vunpack.c.l.s4 1983009808
    %v1220 = vunpack.c.0.s8 %v1219
    %v1221 = vlaneseq
    %v1222 = vshrl.u32 %v1221, 7
    %v1223 = vsub.s32 %v1220, %v1222
    %v1224 = vrot.slane %v1210, %v1223
    %v1225 = vcombine.high %v744, %v697
    %v1227 = vunpack.c.l.s4 1983009808
    %v1228 = vunpack.c.0.s8 %v1227
    %v1229 = vlaneseq
    %v1230 = vshrl.u32 %v1229, 7
    %v1231 = vsub.s32 %v1228, %v1230
    %v1232 = vrot.slane %v744, %v1231
    %v1234 = vunpack.c.l.s4 1983009808
    %v1235 = vunpack.c.0.s8 %v1234
    %v1236 = vlaneseq
    %v1237 = vshrl.u32 %v1236, 7
    %v1238 = vsub.s32 %v1235, %v1237
    %v1239 = vrot.slane %v1225, %v1238
    %v1240 = vcombine.low %v1217, %v1232
    %v1241 = vcombine.high %v1217, %v1232
    %v1243 = vunpack.c.l.s4 1934713408
    %v1244 = vunpack.c.0.s8 %v1243
    %v1245 = vlaneseq
    %v1246 = vshrl.u32 %v1245, 7
    %v1247 = vsub.s32 %v1244, %v1246
    %v1248 = vrot.slane %v1240, %v1247
    %v1250 = vunpack.c.l.s4 1934713408
    %v1251 = vunpack.c.0.s8 %v1250
    %v1252 = vlaneseq
    %v1253 = vshrl.u32 %v1252, 7
    %v1254 = vsub.s32 %v1251, %v1253
    %v1255 = vrot.slane %v1241, %v1254
    %v1256 = vcombine.low %v1224, %v1239
    %v1257 = vcombine.high %v1224, %v1239
    %v1259 = vunpack.c.l.s4 1934713408
    %v1260 = vunpack.c.0.s8 %v1259
    %v1261 = vlaneseq
    %v1262 = vshrl.u32 %v1261, 7
    %v1263 = vsub.s32 %v1260, %v1262
    %v1264 = vrot.slane %v1256, %v1263
    %v1266 = vunpack.c.l.s4 1934713408
    %v1267 = vunpack.c.0.s8 %v1266
    %v1268 = vlaneseq
    %v1269 = vshrl.u32 %v1268, 7
    %v1270 = vsub.s32 %v1267, %v1269
    %v1271 = vrot.slane %v1257, %v1270
    %v1272 = vcombine.high %v1248, 0
    %v1273 = vcombine.high %v1255, 0
    %v1274 = vcombine.high %v1264, 0
    %v1275 = vcombine.high %v1271, 0
    %v1276 = vcombine.high %v740, %v700
    %v1278 = vunpack.c.l.s4 1983009808
    %v1279 = vunpack.c.0.s8 %v1278
    %v1280 = vlaneseq
    %v1281 = vshrl.u32 %v1280, 7
    %v1282 = vsub.s32 %v1279, %v1281
    %v1283 = vrot.slane %v740, %v1282
    %v1285 = vunpack.c.l.s4 1983009808
    %v1286 = vunpack.c.0.s8 %v1285
    %v1287 = vlaneseq
    %v1288 = vshrl.u32 %v1287, 7
    %v1289 = vsub.s32 %v1286, %v1288
    %v1290 = vrot.slane %v1276, %v1289
    %v1291 = vcombine.high %v748, %v700
    %v1293 = vunpack.c.l.s4 1983009808
    %v1294 = vunpack.c.0.s8 %v1293
    %v1295 = vlaneseq
    %v1296 = vshrl.u32 %v1295, 7
    %v1297 = vsub.s32 %v1294, %v1296
    %v1298 = vrot.slane %v748, %v1297
    %v1300 = vunpack.c.l.s4 1983009808
    %v1301 = vunpack.c.0.s8 %v1300
    %v1302 = vlaneseq
    %v1303 = vshrl.u32 %v1302, 7
    %v1304 = vsub.s32 %v1301, %v1303
    %v1305 = vrot.slane %v1291, %v1304
    %v1306 = vcombine.low %v1283, %v1298
    %v1307 = vcombine.high %v1283, %v1298
    %v1309 = vunpack.c.l.s4 1934713408
    %v1310 = vunpack.c.0.s8 %v1309
    %v1311 = vlaneseq
    %v1312 = vshrl.u32 %v1311, 7
    %v1313 = vsub.s32 %v1310, %v1312
    %v1314 = vrot.slane %v1306, %v1313
    %v1316 = vunpack.c.l.s4 1934713408
    %v1317 = vunpack.c.0.s8 %v1316
    %v1318 = vlaneseq
    %v1319 = vshrl.u32 %v1318, 7
    %v1320 = vsub.s32 %v1317, %v1319
    %v1321 = vrot.slane %v1307, %v1320
    %v1322 = vcombine.low %v1290, %v1305
    %v1323 = vcombine.high %v1290, %v1305
    %v1325 = vunpack.c.l.s4 1934713408
    %v1326 = vunpack.c.0.s8 %v1325
    %v1327 = vlaneseq
    %v1328 = vshrl.u32 %v1327, 7
    %v1329 = vsub.s32 %v1326, %v1328
    %v1330 = vrot.slane %v1322, %v1329
    %v1332 = vunpack.c.l.s4 1934713408
    %v1333 = vunpack.c.0.s8 %v1332
    %v1334 = vlaneseq
    %v1335 = vshrl.u32 %v1334, 7
    %v1336 = vsub.s32 %v1333, %v1335
    %v1337 = vrot.slane %v1323, %v1336
    %v1338 = vcombine.high %v1314, 0
    %v1339 = vcombine.high %v1321, 0
    %v1340 = vcombine.high %v1330, 0
    %v1341 = vcombine.high %v1337, 0
    %v1342 = vcombine.high %v752, %v697
    %v1344 = vunpack.c.l.s4 1983009808
    %v1345 = vunpack.c.0.s8 %v1344
    %v1346 = vlaneseq
    %v1347 = vshrl.u32 %v1346, 7
    %v1348 = vsub.s32 %v1345, %v1347
    %v1349 = vrot.slane %v752, %v1348
    %v1351 = vunpack.c.l.s4 1983009808
    %v1352 = vunpack.c.0.s8 %v1351
    %v1353 = vlaneseq
    %v1354 = vshrl.u32 %v1353, 7
    %v1355 = vsub.s32 %v1352, %v1354
    %v1356 = vrot.slane %v1342, %v1355
    %v1357 = vcombine.high %v760, %v697
    %v1359 = vunpack.c.l.s4 1983009808
    %v1360 = vunpack.c.0.s8 %v1359
    %v1361 = vlaneseq
    %v1362 = vshrl.u32 %v1361, 7
    %v1363 = vsub.s32 %v1360, %v1362
    %v1364 = vrot.slane %v760, %v1363
    %v1366 = vunpack.c.l.s4 1983009808
    %v1367 = vunpack.c.0.s8 %v1366
    %v1368 = vlaneseq
    %v1369 = vshrl.u32 %v1368, 7
    %v1370 = vsub.s32 %v1367, %v1369
    %v1371 = vrot.slane %v1357, %v1370
    %v1372 = vcombine.low %v1349, %v1364
    %v1373 = vcombine.high %v1349, %v1364
    %v1375 = vunpack.c.l.s4 1934713408
    %v1376 = vunpack.c.0.s8 %v1375
    %v1377 = vlaneseq
    %v1378 = vshrl.u32 %v1377, 7
    %v1379 = vsub.s32 %v1376, %v1378
    %v1380 = vrot.slane %v1372, %v1379
    %v1382 = vunpack.c.l.s4 1934713408
    %v1383 = vunpack.c.0.s8 %v1382
    %v1384 = vlaneseq
    %v1385 = vshrl.u32 %v1384, 7
    %v1386 = vsub.s32 %v1383, %v1385
    %v1387 = vrot.slane %v1373, %v1386
    %v1388 = vcombine.low %v1356, %v1371
    %v1389 = vcombine.high %v1356, %v1371
    %v1391 = vunpack.c.l.s4 1934713408
    %v1392 = vunpack.c.0.s8 %v1391
    %v1393 = vlaneseq
    %v1394 = vshrl.u32 %v1393, 7
    %v1395 = vsub.s32 %v1392, %v1394
    %v1396 = vrot.slane %v1388, %v1395
    %v1398 = vunpack.c.l.s4 1934713408
    %v1399 = vunpack.c.0.s8 %v1398
    %v1400 = vlaneseq
    %v1401 = vshrl.u32 %v1400, 7
    %v1402 = vsub.s32 %v1399, %v1401
    %v1403 = vrot.slane %v1389, %v1402
    %v1404 = vcombine.high %v1380, 0
    %v1405 = vcombine.high %v1387, 0
    %v1406 = vcombine.high %v1396, 0
    %v1407 = vcombine.high %v1403, 0
    %v1408 = vcombine.high %v756, %v700
    %v1410 = vunpack.c.l.s4 1983009808
    %v1411 = vunpack.c.0.s8 %v1410
    %v1412 = vlaneseq
    %v1413 = vshrl.u32 %v1412, 7
    %v1414 = vsub.s32 %v1411, %v1413
    %v1415 = vrot.slane %v756, %v1414
    %v1417 = vunpack.c.l.s4 1983009808
    %v1418 = vunpack.c.0.s8 %v1417
    %v1419 = vlaneseq
    %v1420 = vshrl.u32 %v1419, 7
    %v1421 = vsub.s32 %v1418, %v1420
    %v1422 = vrot.slane %v1408, %v1421
    %v1423 = vcombine.high %v764, %v700
    %v1425 = vunpack.c.l.s4 1983009808
    %v1426 = vunpack.c.0.s8 %v1425
    %v1427 = vlaneseq
    %v1428 = vshrl.u32 %v1427, 7
    %v1429 = vsub.s32 %v1426, %v1428
    %v1430 = vrot.slane %v764, %v1429
    %v1432 = vunpack.c.l.s4 1983009808
    %v1433 = vunpack.c.0.s8 %v1432
    %v1434 = vlaneseq
    %v1435 = vshrl.u32 %v1434, 7
    %v1436 = vsub.s32 %v1433, %v1435
    %v1437 = vrot.slane %v1423, %v1436
    %v1438 = vcombine.low %v1415, %v1430
    %v1439 = vcombine.high %v1415, %v1430
    %v1441 = vunpack.c.l.s4 1934713408
    %v1442 = vunpack.c.0.s8 %v1441
    %v1443 = vlaneseq
    %v1444 = vshrl.u32 %v1443, 7
    %v1445 = vsub.s32 %v1442, %v1444
    %v1446 = vrot.slane %v1438, %v1445
    %v1448 = vunpack.c.l.s4 1934713408
    %v1449 = vunpack.c.0.s8 %v1448
    %v1450 = vlaneseq
    %v1451 = vshrl.u32 %v1450, 7
    %v1452 = vsub.s32 %v1449, %v1451
    %v1453 = vrot.slane %v1439, %v1452
    %v1454 = vcombine.low %v1422, %v1437
    %v1455 = vcombine.high %v1422, %v1437
    %v1457 = vunpack.c.l.s4 1934713408
    %v1458 = vunpack.c.0.s8 %v1457
    %v1459 = vlaneseq
    %v1460 = vshrl.u32 %v1459, 7
    %v1461 = vsub.s32 %v1458, %v1460
    %v1462 = vrot.slane %v1454, %v1461
    %v1464 = vunpack.c.l.s4 1934713408
    %v1465 = vunpack.c.0.s8 %v1464
    %v1466 = vlaneseq
    %v1467 = vshrl.u32 %v1466, 7
    %v1468 = vsub.s32 %v1465, %v1467
    %v1469 = vrot.slane %v1455, %v1468
    %v1470 = vcombine.high %v1446, 0
    %v1471 = vcombine.high %v1453, 0
    %v1472 = vcombine.high %v1462, 0
    %v1473 = vcombine.high %v1469, 0
    %v1474 = vcombine.high %v768, %v697
    %v1476 = vunpack.c.l.s4 1983009808
    %v1477 = vunpack.c.0.s8 %v1476
    %v1478 = vlaneseq
    %v1479 = vshrl.u32 %v1478, 7
    %v1480 = vsub.s32 %v1477, %v1479
    %v1481 = vrot.slane %v768, %v1480
    %v1483 = vunpack.c.l.s4 1983009808
    %v1484 = vunpack.c.0.s8 %v1483
    %v1485 = vlaneseq
    %v1486 = vshrl.u32 %v1485, 7
    %v1487 = vsub.s32 %v1484, %v1486
    %v1488 = vrot.slane %v1474, %v1487
    %v1489 = vcombine.high %v776, %v697
    %v1491 = vunpack.c.l.s4 1983009808
    %v1492 = vunpack.c.0.s8 %v1491
    %v1493 = vlaneseq
    %v1494 = vshrl.u32 %v1493, 7
    %v1495 = vsub.s32 %v1492, %v1494
    %v1496 = vrot.slane %v776, %v1495
    %v1498 = vunpack.c.l.s4 1983009808
    %v1499 = vunpack.c.0.s8 %v1498
    %v1500 = vlaneseq
    %v1501 = vshrl.u32 %v1500, 7
    %v1502 = vsub.s32 %v1499, %v1501
    %v1503 = vrot.slane %v1489, %v1502
    %v1504 = vcombine.low %v1481, %v1496
    %v1505 = vcombine.high %v1481, %v1496
    %v1507 = vunpack.c.l.s4 1934713408
    %v1508 = vunpack.c.0.s8 %v1507
    %v1509 = vlaneseq
    %v1510 = vshrl.u32 %v1509, 7
    %v1511 = vsub.s32 %v1508, %v1510
    %v1512 = vrot.slane %v1504, %v1511
    %v1514 = vunpack.c.l.s4 1934713408
    %v1515 = vunpack.c.0.s8 %v1514
    %v1516 = vlaneseq
    %v1517 = vshrl.u32 %v1516, 7
    %v1518 = vsub.s32 %v1515, %v1517
    %v1519 = vrot.slane %v1505, %v1518
    %v1520 = vcombine.low %v1488, %v1503
    %v1521 = vcombine.high %v1488, %v1503
    %v1523 = vunpack.c.l.s4 1934713408
    %v1524 = vunpack.c.0.s8 %v1523
    %v1525 = vlaneseq
    %v1526 = vshrl.u32 %v1525, 7
    %v1527 = vsub.s32 %v1524, %v1526
    %v1528 = vrot.slane %v1520, %v1527
    %v1530 = vunpack.c.l.s4 1934713408
    %v1531 = vunpack.c.0.s8 %v1530
    %v1532 = vlaneseq
    %v1533 = vshrl.u32 %v1532, 7
    %v1534 = vsub.s32 %v1531, %v1533
    %v1535 = vrot.slane %v1521, %v1534
    %v1536 = vcombine.high %v1512, 0
    %v1537 = vcombine.high %v1519, 0
    %v1538 = vcombine.high %v1528, 0
    %v1539 = vcombine.high %v1535, 0
    %v1540 = vcombine.high %v772, %v700
    %v1542 = vunpack.c.l.s4 1983009808
    %v1543 = vunpack.c.0.s8 %v1542
    %v1544 = vlaneseq
    %v1545 = vshrl.u32 %v1544, 7
    %v1546 = vsub.s32 %v1543, %v1545
    %v1547 = vrot.slane %v772, %v1546
    %v1549 = vunpack.c.l.s4 1983009808
    %v1550 = vunpack.c.0.s8 %v1549
    %v1551 = vlaneseq
    %v1552 = vshrl.u32 %v1551, 7
    %v1553 = vsub.s32 %v1550, %v1552
    %v1554 = vrot.slane %v1540, %v1553
    %v1555 = vcombine.high %v780, %v700
    %v1557 = vunpack.c.l.s4 1983009808
    %v1558 = vunpack.c.0.s8 %v1557
    %v1559 = vlaneseq
    %v1560 = vshrl.u32 %v1559, 7
    %v1561 = vsub.s32 %v1558, %v1560
    %v1562 = vrot.slane %v780, %v1561
    %v1564 = vunpack.c.l.s4 1983009808
    %v1565 = vunpack.c.0.s8 %v1564
    %v1566 = vlaneseq
    %v1567 = vshrl.u32 %v1566, 7
    %v1568 = vsub.s32 %v1565, %v1567
    %v1569 = vrot.slane %v1555, %v1568
    %v1570 = vcombine.low %v1547, %v1562
    %v1571 = vcombine.high %v1547, %v1562
    %v1573 = vunpack.c.l.s4 1934713408
    %v1574 = vunpack.c.0.s8 %v1573
    %v1575 = vlaneseq
    %v1576 = vshrl.u32 %v1575, 7
    %v1577 = vsub.s32 %v1574, %v1576
    %v1578 = vrot.slane %v1570, %v1577
    %v1580 = vunpack.c.l.s4 1934713408
    %v1581 = vunpack.c.0.s8 %v1580
    %v1582 = vlaneseq
    %v1583 = vshrl.u32 %v1582, 7
    %v1584 = vsub.s32 %v1581, %v1583
    %v1585 = vrot.slane %v1571, %v1584
    %v1586 = vcombine.low %v1554, %v1569
    %v1587 = vcombine.high %v1554, %v1569
    %v1589 = vunpack.c.l.s4 1934713408
    %v1590 = vunpack.c.0.s8 %v1589
    %v1591 = vlaneseq
    %v1592 = vshrl.u32 %v1591, 7
    %v1593 = vsub.s32 %v1590, %v1592
    %v1594 = vrot.slane %v1586, %v1593
    %v1596 = vunpack.c.l.s4 1934713408
    %v1597 = vunpack.c.0.s8 %v1596
    %v1598 = vlaneseq
    %v1599 = vshrl.u32 %v1598, 7
    %v1600 = vsub.s32 %v1597, %v1599
    %v1601 = vrot.slane %v1587, %v1600
    %v1602 = vcombine.high %v1578, 0
    %v1603 = vcombine.high %v1585, 0
    %v1604 = vcombine.high %v1594, 0
    %v1605 = vcombine.high %v1601, 0
    %v1606 = vcombine.high %v784, %v697
    %v1608 = vunpack.c.l.s4 1983009808
    %v1609 = vunpack.c.0.s8 %v1608
    %v1610 = vlaneseq
    %v1611 = vshrl.u32 %v1610, 7
    %v1612 = vsub.s32 %v1609, %v1611
    %v1613 = vrot.slane %v784, %v1612
    %v1615 = vunpack.c.l.s4 1983009808
    %v1616 = vunpack.c.0.s8 %v1615
    %v1617 = vlaneseq
    %v1618 = vshrl.u32 %v1617, 7
    %v1619 = vsub.s32 %v1616, %v1618
    %v1620 = vrot.slane %v1606, %v1619
    %v1621 = vcombine.high %v792, %v697
    %v1623 = vunpack.c.l.s4 1983009808
    %v1624 = vunpack.c.0.s8 %v1623
    %v1625 = vlaneseq
    %v1626 = vshrl.u32 %v1625, 7
    %v1627 = vsub.s32 %v1624, %v1626
    %v1628 = vrot.slane %v792, %v1627
    %v1630 = vunpack.c.l.s4 1983009808
    %v1631 = vunpack.c.0.s8 %v1630
    %v1632 = vlaneseq
    %v1633 = vshrl.u32 %v1632, 7
    %v1634 = vsub.s32 %v1631, %v1633
    %v1635 = vrot.slane %v1621, %v1634
    %v1636 = vcombine.low %v1613, %v1628
    %v1637 = vcombine.high %v1613, %v1628
    %v1639 = vunpack.c.l.s4 1934713408
    %v1640 = vunpack.c.0.s8 %v1639
    %v1641 = vlaneseq
    %v1642 = vshrl.u32 %v1641, 7
    %v1643 = vsub.s32 %v1640, %v1642
    %v1644 = vrot.slane %v1636, %v1643
    %v1646 = vunpack.c.l.s4 1934713408
    %v1647 = vunpack.c.0.s8 %v1646
    %v1648 = vlaneseq
    %v1649 = vshrl.u32 %v1648, 7
    %v1650 = vsub.s32 %v1647, %v1649
    %v1651 = vrot.slane %v1637, %v1650
    %v1652 = vcombine.low %v1620, %v1635
    %v1653 = vcombine.high %v1620, %v1635
    %v1655 = vunpack.c.l.s4 1934713408
    %v1656 = vunpack.c.0.s8 %v1655
    %v1657 = vlaneseq
    %v1658 = vshrl.u32 %v1657, 7
    %v1659 = vsub.s32 %v1656, %v1658
    %v1660 = vrot.slane %v1652, %v1659
    %v1662 = vunpack.c.l.s4 1934713408
    %v1663 = vunpack.c.0.s8 %v1662
    %v1664 = vlaneseq
    %v1665 = vshrl.u32 %v1664, 7
    %v1666 = vsub.s32 %v1663, %v1665
    %v1667 = vrot.slane %v1653, %v1666
    %v1668 = vcombine.high %v1644, 0
    %v1669 = vcombine.high %v1651, 0
    %v1670 = vcombine.high %v1660, 0
    %v1671 = vcombine.high %v1667, 0
    %v1672 = vcombine.high %v788, %v700
    %v1674 = vunpack.c.l.s4 1983009808
    %v1675 = vunpack.c.0.s8 %v1674
    %v1676 = vlaneseq
    %v1677 = vshrl.u32 %v1676, 7
    %v1678 = vsub.s32 %v1675, %v1677
    %v1679 = vrot.slane %v788, %v1678
    %v1681 = vunpack.c.l.s4 1983009808
    %v1682 = vunpack.c.0.s8 %v1681
    %v1683 = vlaneseq
    %v1684 = vshrl.u32 %v1683, 7
    %v1685 = vsub.s32 %v1682, %v1684
    %v1686 = vrot.slane %v1672, %v1685
    %v1687 = vcombine.high %v796, %v700
    %v1689 = vunpack.c.l.s4 1983009808
    %v1690 = vunpack.c.0.s8 %v1689
    %v1691 = vlaneseq
    %v1692 = vshrl.u32 %v1691, 7
    %v1693 = vsub.s32 %v1690, %v1692
    %v1694 = vrot.slane %v796, %v1693
    %v1696 = vunpack.c.l.s4 1983009808
    %v1697 = vunpack.c.0.s8 %v1696
    %v1698 = vlaneseq
    %v1699 = vshrl.u32 %v1698, 7
    %v1700 = vsub.s32 %v1697, %v1699
    %v1701 = vrot.slane %v1687, %v1700
    %v1702 = vcombine.low %v1679, %v1694
    %v1703 = vcombine.high %v1679, %v1694
    %v1705 = vunpack.c.l.s4 1934713408
    %v1706 = vunpack.c.0.s8 %v1705
    %v1707 = vlaneseq
    %v1708 = vshrl.u32 %v1707, 7
    %v1709 = vsub.s32 %v1706, %v1708
    %v1710 = vrot.slane %v1702, %v1709
    %v1712 = vunpack.c.l.s4 1934713408
    %v1713 = vunpack.c.0.s8 %v1712
    %v1714 = vlaneseq
    %v1715 = vshrl.u32 %v1714, 7
    %v1716 = vsub.s32 %v1713, %v1715
    %v1717 = vrot.slane %v1703, %v1716
    %v1718 = vcombine.low %v1686, %v1701
    %v1719 = vcombine.high %v1686, %v1701
    %v1721 = vunpack.c.l.s4 1934713408
    %v1722 = vunpack.c.0.s8 %v1721
    %v1723 = vlaneseq
    %v1724 = vshrl.u32 %v1723, 7
    %v1725 = vsub.s32 %v1722, %v1724
    %v1726 = vrot.slane %v1718, %v1725
    %v1728 = vunpack.c.l.s4 1934713408
    %v1729 = vunpack.c.0.s8 %v1728
    %v1730 = vlaneseq
    %v1731 = vshrl.u32 %v1730, 7
    %v1732 = vsub.s32 %v1729, %v1731
    %v1733 = vrot.slane %v1719, %v1732
    %v1734 = vcombine.high %v1710, 0
    %v1735 = vcombine.high %v1717, 0
    %v1736 = vcombine.high %v1726, 0
    %v1737 = vcombine.high %v1733, 0
    %v1738 = vcombine.high %v800, %v697
    %v1740 = vunpack.c.l.s4 1983009808
    %v1741 = vunpack.c.0.s8 %v1740
    %v1742 = vlaneseq
    %v1743 = vshrl.u32 %v1742, 7
    %v1744 = vsub.s32 %v1741, %v1743
    %v1745 = vrot.slane %v800, %v1744
    %v1747 = vunpack.c.l.s4 1983009808
    %v1748 = vunpack.c.0.s8 %v1747
    %v1749 = vlaneseq
    %v1750 = vshrl.u32 %v1749, 7
    %v1751 = vsub.s32 %v1748, %v1750
    %v1752 = vrot.slane %v1738, %v1751
    %v1753 = vcombine.high %v808, %v697
    %v1755 = vunpack.c.l.s4 1983009808
    %v1756 = vunpack.c.0.s8 %v1755
    %v1757 = vlaneseq
    %v1758 = vshrl.u32 %v1757, 7
    %v1759 = vsub.s32 %v1756, %v1758
    %v1760 = vrot.slane %v808, %v1759
    %v1762 = vunpack.c.l.s4 1983009808
    %v1763 = vunpack.c.0.s8 %v1762
    %v1764 = vlaneseq
    %v1765 = vshrl.u32 %v1764, 7
    %v1766 = vsub.s32 %v1763, %v1765
    %v1767 = vrot.slane %v1753, %v1766
    %v1768 = vcombine.low %v1745, %v1760
    %v1769 = vcombine.high %v1745, %v1760
    %v1771 = vunpack.c.l.s4 1934713408
    %v1772 = vunpack.c.0.s8 %v1771
    %v1773 = vlaneseq
    %v1774 = vshrl.u32 %v1773, 7
    %v1775 = vsub.s32 %v1772, %v1774
    %v1776 = vrot.slane %v1768, %v1775
    %v1778 = vunpack.c.l.s4 1934713408
    %v1779 = vunpack.c.0.s8 %v1778
    %v1780 = vlaneseq
    %v1781 = vshrl.u32 %v1780, 7
    %v1782 = vsub.s32 %v1779, %v1781
    %v1783 = vrot.slane %v1769, %v1782
    %v1784 = vcombine.low %v1752, %v1767
    %v1785 = vcombine.high %v1752, %v1767
    %v1787 = vunpack.c.l.s4 1934713408
    %v1788 = vunpack.c.0.s8 %v1787
    %v1789 = vlaneseq
    %v1790 = vshrl.u32 %v1789, 7
    %v1791 = vsub.s32 %v1788, %v1790
    %v1792 = vrot.slane %v1784, %v1791
    %v1794 = vunpack.c.l.s4 1934713408
    %v1795 = vunpack.c.0.s8 %v1794
    %v1796 = vlaneseq
    %v1797 = vshrl.u32 %v1796, 7
    %v1798 = vsub.s32 %v1795, %v1797
    %v1799 = vrot.slane %v1785, %v1798
    %v1800 = vcombine.high %v1776, 0
    %v1801 = vcombine.high %v1783, 0
    %v1802 = vcombine.high %v1792, 0
    %v1803 = vcombine.high %v1799, 0
    %v1804 = vcombine.high %v804, %v700
    %v1806 = vunpack.c.l.s4 1983009808
    %v1807 = vunpack.c.0.s8 %v1806
    %v1808 = vlaneseq
    %v1809 = vshrl.u32 %v1808, 7
    %v1810 = vsub.s32 %v1807, %v1809
    %v1811 = vrot.slane %v804, %v1810
    %v1813 = vunpack.c.l.s4 1983009808
    %v1814 = vunpack.c.0.s8 %v1813
    %v1815 = vlaneseq
    %v1816 = vshrl.u32 %v1815, 7
    %v1817 = vsub.s32 %v1814, %v1816
    %v1818 = vrot.slane %v1804, %v1817
    %v1819 = vcombine.high %v812, %v700
    %v1821 = vunpack.c.l.s4 1983009808
    %v1822 = vunpack.c.0.s8 %v1821
    %v1823 = vlaneseq
    %v1824 = vshrl.u32 %v1823, 7
    %v1825 = vsub.s32 %v1822, %v1824
    %v1826 = vrot.slane %v812, %v1825
    %v1828 = vunpack.c.l.s4 1983009808
    %v1829 = vunpack.c.0.s8 %v1828
    %v1830 = vlaneseq
    %v1831 = vshrl.u32 %v1830, 7
    %v1832 = vsub.s32 %v1829, %v1831
    %v1833 = vrot.slane %v1819, %v1832
    %v1834 = vcombine.low %v1811, %v1826
    %v1835 = vcombine.high %v1811, %v1826
    %v1837 = vunpack.c.l.s4 1934713408
    %v1838 = vunpack.c.0.s8 %v1837
    %v1839 = vlaneseq
    %v1840 = vshrl.u32 %v1839, 7
    %v1841 = vsub.s32 %v1838, %v1840
    %v1842 = vrot.slane %v1834, %v1841
    %v1844 = vunpack.c.l.s4 1934713408
    %v1845 = vunpack.c.0.s8 %v1844
    %v1846 = vlaneseq
    %v1847 = vshrl.u32 %v1846, 7
    %v1848 = vsub.s32 %v1845, %v1847
    %v1849 = vrot.slane %v1835, %v1848
    %v1850 = vcombine.low %v1818, %v1833
    %v1851 = vcombine.high %v1818, %v1833
    %v1853 = vunpack.c.l.s4 1934713408
    %v1854 = vunpack.c.0.s8 %v1853
    %v1855 = vlaneseq
    %v1856 = vshrl.u32 %v1855, 7
    %v1857 = vsub.s32 %v1854, %v1856
    %v1858 = vrot.slane %v1850, %v1857
    %v1860 = vunpack.c.l.s4 1934713408
    %v1861 = vunpack.c.0.s8 %v1860
    %v1862 = vlaneseq
    %v1863 = vshrl.u32 %v1862, 7
    %v1864 = vsub.s32 %v1861, %v1863
    %v1865 = vrot.slane %v1851, %v1864
    %v1866 = vcombine.high %v1842, 0
    %v1867 = vcombine.high %v1849, 0
    %v1868 = vcombine.high %v1858, 0
    %v1869 = vcombine.high %v1865, 0
    %v1870 = vcombine.low %v852, %v859
    %v1872 = vunpack.c.l.s4 1983009808
    %v1873 = vunpack.c.0.s8 %v1872
    %v1874 = vlaneseq
    %v1875 = vshrl.u32 %v1874, 7
    %v1876 = vsub.s32 %v1873, %v1875
    %v1877 = vrot.slane %v1870, %v1876
    %v1878 = vcombine.low %v876, %v877
    %v1880 = vunpack.c.l.s4 1983009808
    %v1881 = vunpack.c.0.s8 %v1880
    %v1882 = vlaneseq
    %v1883 = vshrl.u32 %v1882, 7
    %v1884 = vsub.s32 %v1881, %v1883
    %v1885 = vrot.slane %v1878, %v1884
    %v1886 = vcombine.low %v868, %v875
    %v1888 = vunpack.c.l.s4 1983009808
    %v1889 = vunpack.c.0.s8 %v1888
    %v1890 = vlaneseq
    %v1891 = vshrl.u32 %v1890, 7
    %v1892 = vsub.s32 %v1889, %v1891
    %v1893 = vrot.slane %v1886, %v1892
    %v1894 = vcombine.low %v878, %v879
    %v1896 = vunpack.c.l.s4 1983009808
    %v1897 = vunpack.c.0.s8 %v1896
    %v1898 = vlaneseq
    %v1899 = vshrl.u32 %v1898, 7
    %v1900 = vsub.s32 %v1897, %v1899
    %v1901 = vrot.slane %v1894, %v1900
    %v1902 = vcombine.low %v1877, %v1885
    %v1904 = vunpack.c.l.s4 1934713408
    %v1905 = vunpack.c.0.s8 %v1904
    %v1906 = vlaneseq
    %v1907 = vshrl.u32 %v1906, 7
    %v1908 = vsub.s32 %v1905, %v1907
    %v1909 = vrot.slane %v1902, %v1908
    %v1910 = vcombine.low %v1893, %v1901
    %v1912 = vunpack.c.l.s4 1934713408
    %v1913 = vunpack.c.0.s8 %v1912
    %v1914 = vlaneseq
    %v1915 = vshrl.u32 %v1914, 7
    %v1916 = vsub.s32 %v1913, %v1915
    %v1917 = vrot.slane %v1910, %v1916
    %v1918 = vcombine.low %v1909, %v1917
    %v1919 = vcombine.high %v1909, %v1917
    %v1920 = vcombine.low %v918, %v925
    %v1922 = vunpack.c.l.s4 1983009808
    %v1923 = vunpack.c.0.s8 %v1922
    %v1924 = vlaneseq
    %v1925 = vshrl.u32 %v1924, 7
    %v1926 = vsub.s32 %v1923, %v1925
    %v1927 = vrot.slane %v1920, %v1926
    %v1928 = vcombine.low %v942, %v943
    %v1930 = vunpack.c.l.s4 1983009808
    %v1931 = vunpack.c.0.s8 %v1930
    %v1932 = vlaneseq
    %v1933 = vshrl.u32 %v1932, 7
    %v1934 = vsub.s32 %v1931, %v1933
    %v1935 = vrot.slane %v1928, %v1934
    %v1936 = vcombine.low %v934, %v941
    %v1938 = vunpack.c.l.s4 1983009808
    %v1939 = vunpack.c.0.s8 %v1938
    %v1940 = vlaneseq
    %v1941 = vshrl.u32 %v1940, 7
    %v1942 = vsub.s32 %v1939, %v1941
    %v1943 = vrot.slane %v1936, %v1942
    %v1944 = vcombine.low %v944, %v945
    %v1946 = vunpack.c.l.s4 1983009808
    %v1947 = vunpack.c.0.s8 %v1946
    %v1948 = vlaneseq
    %v1949 = vshrl.u32 %v1948, 7
    %v1950 = vsub.s32 %v1947, %v1949
    %v1951 = vrot.slane %v1944, %v1950
    %v1952 = vcombine.low %v1927, %v1935
    %v1954 = vunpack.c.l.s4 1934713408
    %v1955 = vunpack.c.0.s8 %v1954
    %v1956 = vlaneseq
    %v1957 = vshrl.u32 %v1956, 7
    %v1958 = vsub.s32 %v1955, %v1957
    %v1959 = vrot.slane %v1952, %v1958
    %v1960 = vcombine.low %v1943, %v1951
    %v1962 = vunpack.c.l.s4 1934713408
    %v1963 = vunpack.c.0.s8 %v1962
    %v1964 = vlaneseq
    %v1965 = vshrl.u32 %v1964, 7
    %v1966 = vsub.s32 %v1963, %v1965
    %v1967 = vrot.slane %v1960, %v1966
    %v1968 = vcombine.low %v1959, %v1967
    %v1969 = vcombine.high %v1959, %v1967
    %v1970 = vcombine.low %v984, %v991
    %v1972 = vunpack.c.l.s4 1983009808
    %v1973 = vunpack.c.0.s8 %v1972
    %v1974 = vlaneseq
    %v1975 = vshrl.u32 %v1974, 7
    %v1976 = vsub.s32 %v1973, %v1975
    %v1977 = vrot.slane %v1970, %v1976
    %v1978 = vcombine.low %v1008, %v1009
    %v1980 = vunpack.c.l.s4 1983009808
    %v1981 = vunpack.c.0.s8 %v1980
    %v1982 = vlaneseq
    %v1983 = vshrl.u32 %v1982, 7
    %v1984 = vsub.s32 %v1981, %v1983
    %v1985 = vrot.slane %v1978, %v1984
    %v1986 = vcombine.low %v1000, %v1007
    %v1988 = vunpack.c.l.s4 1983009808
    %v1989 = vunpack.c.0.s8 %v1988
    %v1990 = vlaneseq
    %v1991 = vshrl.u32 %v1990, 7
    %v1992 = vsub.s32 %v1989, %v1991
    %v1993 = vrot.slane %v1986, %v1992
    %v1994 = vcombine.low %v1010, %v1011
    %v1996 = vunpack.c.l.s4 1983009808
    %v1997 = vunpack.c.0.s8 %v1996
    %v1998 = vlaneseq
    %v1999 = vshrl.u32 %v1998, 7
    %v2000 = vsub.s32 %v1997, %v1999
    %v2001 = vrot.slane %v1994, %v2000
    %v2002 = vcombine.low %v1977, %v1985
    %v2004 = vunpack.c.l.s4 1934713408
    %v2005 = vunpack.c.0.s8 %v2004
    %v2006 = vlaneseq
    %v2007 = vshrl.u32 %v2006, 7
    %v2008 = vsub.s32 %v2005, %v2007
    %v2009 = vrot.slane %v2002, %v2008
    %v2010 = vcombine.low %v1993, %v2001
    %v2012 = vunpack.c.l.s4 1934713408
    %v2013 = vunpack.c.0.s8 %v2012
    %v2014 = vlaneseq
    %v2015 = vshrl.u32 %v2014, 7
    %v2016 = vsub.s32 %v2013, %v2015
    %v2017 = vrot.slane %v2010, %v2016
    %v2018 = vcombine.low %v2009, %v2017
    %v2019 = vcombine.high %v2009, %v2017
    %v2020 = vcombine.low %v1050, %v1057
    %v2022 = vunpack.c.l.s4 1983009808
    %v2023 = vunpack.c.0.s8 %v2022
    %v2024 = vlaneseq
    %v2025 = vshrl.u32 %v2024, 7
    %v2026 = vsub.s32 %v2023, %v2025
    %v2027 = vrot.slane %v2020, %v2026
    %v2028 = vcombine.low %v1074, %v1075
    %v2030 = vunpack.c.l.s4 1983009808
    %v2031 = vunpack.c.0.s8 %v2030
    %v2032 = vlaneseq
    %v2033 = vshrl.u32 %v2032, 7
    %v2034 = vsub.s32 %v2031, %v2033
    %v2035 = vrot.slane %v2028, %v2034
    %v2036 = vcombine.low %v1066, %v1073
    %v2038 = vunpack.c.l.s4 1983009808
    %v2039 = vunpack.c.0.s8 %v2038
    %v2040 = vlaneseq
    %v2041 = vshrl.u32 %v2040, 7
    %v2042 = vsub.s32 %v2039, %v2041
    %v2043 = vrot.slane %v2036, %v2042
    %v2044 = vcombine.low %v1076, %v1077
    %v2046 = vunpack.c.l.s4 1983009808
    %v2047 = vunpack.c.0.s8 %v2046
    %v2048 = vlaneseq
    %v2049 = vshrl.u32 %v2048, 7
    %v2050 = vsub.s32 %v2047, %v2049
    %v2051 = vrot.slane %v2044, %v2050
    %v2052 = vcombine.low %v2027, %v2035
    %v2054 = vunpack.c.l.s4 1934713408
    %v2055 = vunpack.c.0.s8 %v2054
    %v2056 = vlaneseq
    %v2057 = vshrl.u32 %v2056, 7
    %v2058 = vsub.s32 %v2055, %v2057
    %v2059 = vrot.slane %v2052, %v2058
    %v2060 = vcombine.low %v2043, %v2051
    %v2062 = vunpack.c.l.s4 1934713408
    %v2063 = vunpack.c.0.s8 %v2062
    %v2064 = vlaneseq
    %v2065 = vshrl.u32 %v2064, 7
    %v2066 = vsub.s32 %v2063, %v2065
    %v2067 = vrot.slane %v2060, %v2066
    %v2068 = vcombine.low %v2059, %v2067
    %v2069 = vcombine.high %v2059, %v2067
    %v2070 = vcombine.low %v1116, %v1123
    %v2072 = vunpack.c.l.s4 1983009808
    %v2073 = vunpack.c.0.s8 %v2072
    %v2074 = vlaneseq
    %v2075 = vshrl.u32 %v2074, 7
    %v2076 = vsub.s32 %v2073, %v2075
    %v2077 = vrot.slane %v2070, %v2076
    %v2078 = vcombine.low %v1140, %v1141
    %v2080 = vunpack.c.l.s4 1983009808
    %v2081 = vunpack.c.0.s8 %v2080
    %v2082 = vlaneseq
    %v2083 = vshrl.u32 %v2082, 7
    %v2084 = vsub.s32 %v2081, %v2083
    %v2085 = vrot.slane %v2078, %v2084
    %v2086 = vcombine.low %v1132, %v1139
    %v2088 = vunpack.c.l.s4 1983009808
    %v2089 = vunpack.c.0.s8 %v2088
    %v2090 = vlaneseq
    %v2091 = vshrl.u32 %v2090, 7
    %v2092 = vsub.s32 %v2089, %v2091
    %v2093 = vrot.slane %v2086, %v2092
    %v2094 = vcombine.low %v1142, %v1143
    %v2096 = vunpack.c.l.s4 1983009808
    %v2097 = vunpack.c.0.s8 %v2096
    %v2098 = vlaneseq
    %v2099 = vshrl.u32 %v2098, 7
    %v2100 = vsub.s32 %v2097, %v2099
    %v2101 = vrot.slane %v2094, %v2100
    %v2102 = vcombine.low %v2077, %v2085
    %v2104 = vunpack.c.l.s4 1934713408
    %v2105 = vunpack.c.0.s8 %v2104
    %v2106 = vlaneseq
    %v2107 = vshrl.u32 %v2106, 7
    %v2108 = vsub.s32 %v2105, %v2107
    %v2109 = vrot.slane %v2102, %v2108
    %v2110 = vcombine.low %v2093, %v2101
    %v2112 = vunpack.c.l.s4 1934713408
    %v2113 = vunpack.c.0.s8 %v2112
    %v2114 = vlaneseq
    %v2115 = vshrl.u32 %v2114, 7
    %v2116 = vsub.s32 %v2113, %v2115
    %v2117 = vrot.slane %v2110, %v2116
    %v2118 = vcombine.low %v2109, %v2117
    %v2119 = vcombine.high %v2109, %v2117
    %v2120 = vcombine.low %v1182, %v1189
    %v2122 = vunpack.c.l.s4 1983009808
    %v2123 = vunpack.c.0.s8 %v2122
    %v2124 = vlaneseq
    %v2125 = vshrl.u32 %v2124, 7
    %v2126 = vsub.s32 %v2123, %v2125
    %v2127 = vrot.slane %v2120, %v2126
    %v2128 = vcombine.low %v1206, %v1207
    %v2130 = vunpack.c.l.s4 1983009808
    %v2131 = vunpack.c.0.s8 %v2130
    %v2132 = vlaneseq
    %v2133 = vshrl.u32 %v2132, 7
    %v2134 = vsub.s32 %v2131, %v2133
    %v2135 = vrot.slane %v2128, %v2134
    %v2136 = vcombine.low %v1198, %v1205
    %v2138 = vunpack.c.l.s4 1983009808
    %v2139 = vunpack.c.0.s8 %v2138
    %v2140 = vlaneseq
    %v2141 = vshrl.u32 %v2140, 7
    %v2142 = vsub.s32 %v2139, %v2141
    %v2143 = vrot.slane %v2136, %v2142
    %v2144 = vcombine.low %v1208, %v1209
    %v2146 = vunpack.c.l.s4 1983009808
    %v2147 = vunpack.c.0.s8 %v2146
    %v2148 = vlaneseq
    %v2149 = vshrl.u32 %v2148, 7
    %v2150 = vsub.s32 %v2147, %v2149
    %v2151 = vrot.slane %v2144, %v2150
    %v2152 = vcombine.low %v2127, %v2135
    %v2154 = vunpack.c.l.s4 1934713408
    %v2155 = vunpack.c.0.s8 %v2154
    %v2156 = vlaneseq
    %v2157 = vshrl.u32 %v2156, 7
    %v2158 = vsub.s32 %v2155, %v2157
    %v2159 = vrot.slane %v2152, %v2158
    %v2160 = vcombine.low %v2143, %v2151
    %v2162 = vunpack.c.l.s4 1934713408
    %v2163 = vunpack.c.0.s8 %v2162
    %v2164 = vlaneseq
    %v2165 = vshrl.u32 %v2164, 7
    %v2166 = vsub.s32 %v2163, %v2165
    %v2167 = vrot.slane %v2160, %v2166
    %v2168 = vcombine.low %v2159, %v2167
    %v2169 = vcombine.high %v2159, %v2167
    %v2170 = vcombine.low %v1248, %v1255
    %v2172 = vunpack.c.l.s4 1983009808
    %v2173 = vunpack.c.0.s8 %v2172
    %v2174 = vlaneseq
    %v2175 = vshrl.u32 %v2174, 7
    %v2176 = vsub.s32 %v2173, %v2175
    %v2177 = vrot.slane %v2170, %v2176
    %v2178 = vcombine.low %v1272, %v1273
    %v2180 = vunpack.c.l.s4 1983009808
    %v2181 = vunpack.c.0.s8 %v2180
    %v2182 = vlaneseq
    %v2183 = vshrl.u32 %v2182, 7
    %v2184 = vsub.s32 %v2181, %v2183
    %v2185 = vrot.slane %v2178, %v2184
    %v2186 = vcombine.low %v1264, %v1271
    %v2188 = vunpack.c.l.s4 1983009808
    %v2189 = vunpack.c.0.s8 %v2188
    %v2190 = vlaneseq
    %v2191 = vshrl.u32 %v2190, 7
    %v2192 = vsub.s32 %v2189, %v2191
    %v2193 = vrot.slane %v2186, %v2192
    %v2194 = vcombine.low %v1274, %v1275
    %v2196 = vunpack.c.l.s4 1983009808
    %v2197 = vunpack.c.0.s8 %v2196
    %v2198 = vlaneseq
    %v2199 = vshrl.u32 %v2198, 7
    %v2200 = vsub.s32 %v2197, %v2199
    %v2201 = vrot.slane %v2194, %v2200
    %v2202 = vcombine.low %v2177, %v2185
    %v2204 = vunpack.c.l.s4 1934713408
    %v2205 = vunpack.c.0.s8 %v2204
    %v2206 = vlaneseq
    %v2207 = vshrl.u32 %v2206, 7
    %v2208 = vsub.s32 %v2205, %v2207
    %v2209 = vrot.slane %v2202, %v2208
    %v2210 = vcombine.low %v2193, %v2201
    %v2212 = vunpack.c.l.s4 1934713408
    %v2213 = vunpack.c.0.s8 %v2212
    %v2214 = vlaneseq
    %v2215 = vshrl.u32 %v2214, 7
    %v2216 = vsub.s32 %v2213, %v2215
    %v2217 = vrot.slane %v2210, %v2216
    %v2218 = vcombine.low %v2209, %v2217
    %v2219 = vcombine.high %v2209, %v2217
    %v2220 = vcombine.low %v1314, %v1321
    %v2222 = vunpack.c.l.s4 1983009808
    %v2223 = vunpack.c.0.s8 %v2222
    %v2224 = vlaneseq
    %v2225 = vshrl.u32 %v2224, 7
    %v2226 = vsub.s32 %v2223, %v2225
    %v2227 = vrot.slane %v2220, %v2226
    %v2228 = vcombine.low %v1338, %v1339
    %v2230 = vunpack.c.l.s4 1983009808
    %v2231 = vunpack.c.0.s8 %v2230
    %v2232 = vlaneseq
    %v2233 = vshrl.u32 %v2232, 7
    %v2234 = vsub.s32 %v2231, %v2233
    %v2235 = vrot.slane %v2228, %v2234
    %v2236 = vcombine.low %v1330, %v1337
    %v2238 = vunpack.c.l.s4 1983009808
    %v2239 = vunpack.c.0.s8 %v2238
    %v2240 = vlaneseq
    %v2241 = vshrl.u32 %v2240, 7
    %v2242 = vsub.s32 %v2239, %v2241
    %v2243 = vrot.slane %v2236, %v2242
    %v2244 = vcombine.low %v1340, %v1341
    %v2246 = vunpack.c.l.s4 1983009808
    %v2247 = vunpack.c.0.s8 %v2246
    %v2248 = vlaneseq
    %v2249 = vshrl.u32 %v2248, 7
    %v2250 = vsub.s32 %v2247, %v2249
    %v2251 = vrot.slane %v2244, %v2250
    %v2252 = vcombine.low %v2227, %v2235
    %v2254 = vunpack.c.l.s4 1934713408
    %v2255 = vunpack.c.0.s8 %v2254
    %v2256 = vlaneseq
    %v2257 = vshrl.u32 %v2256, 7
    %v2258 = vsub.s32 %v2255, %v2257
    %v2259 = vrot.slane %v2252, %v2258
    %v2260 = vcombine.low %v2243, %v2251
    %v2262 = vunpack.c.l.s4 1934713408
    %v2263 = vunpack.c.0.s8 %v2262
    %v2264 = vlaneseq
    %v2265 = vshrl.u32 %v2264, 7
    %v2266 = vsub.s32 %v2263, %v2265
    %v2267 = vrot.slane %v2260, %v2266
    %v2268 = vcombine.low %v2259, %v2267
    %v2269 = vcombine.high %v2259, %v2267
    %v2270 = vcombine.low %v1380, %v1387
    %v2272 = vunpack.c.l.s4 1983009808
    %v2273 = vunpack.c.0.s8 %v2272
    %v2274 = vlaneseq
    %v2275 = vshrl.u32 %v2274, 7
    %v2276 = vsub.s32 %v2273, %v2275
    %v2277 = vrot.slane %v2270, %v2276
    %v2278 = vcombine.low %v1404, %v1405
    %v2280 = vunpack.c.l.s4 1983009808
    %v2281 = vunpack.c.0.s8 %v2280
    %v2282 = vlaneseq
    %v2283 = vshrl.u32 %v2282, 7
    %v2284 = vsub.s32 %v2281, %v2283
    %v2285 = vrot.slane %v2278, %v2284
    %v2286 = vcombine.low %v1396, %v1403
    %v2288 = vunpack.c.l.s4 1983009808
    %v2289 = vunpack.c.0.s8 %v2288
    %v2290 = vlaneseq
    %v2291 = vshrl.u32 %v2290, 7
    %v2292 = vsub.s32 %v2289, %v2291
    %v2293 = vrot.slane %v2286, %v2292
    %v2294 = vcombine.low %v1406, %v1407
    %v2296 = vunpack.c.l.s4 1983009808
    %v2297 = vunpack.c.0.s8 %v2296
    %v2298 = vlaneseq
    %v2299 = vshrl.u32 %v2298, 7
    %v2300 = vsub.s32 %v2297, %v2299
    %v2301 = vrot.slane %v2294, %v2300
    %v2302 = vcombine.low %v2277, %v2285
    %v2304 = vunpack.c.l.s4 1934713408
    %v2305 = vunpack.c.0.s8 %v2304
    %v2306 = vlaneseq
    %v2307 = vshrl.u32 %v2306, 7
    %v2308 = vsub.s32 %v2305, %v2307
    %v2309 = vrot.slane %v2302, %v2308
    %v2310 = vcombine.low %v2293, %v2301
    %v2312 = vunpack.c.l.s4 1934713408
    %v2313 = vunpack.c.0.s8 %v2312
    %v2314 = vlaneseq
    %v2315 = vshrl.u32 %v2314, 7
    %v2316 = vsub.s32 %v2313, %v2315
    %v2317 = vrot.slane %v2310, %v2316
    %v2318 = vcombine.low %v2309, %v2317
    %v2319 = vcombine.high %v2309, %v2317
    %v2320 = vcombine.low %v1446, %v1453
    %v2322 = vunpack.c.l.s4 1983009808
    %v2323 = vunpack.c.0.s8 %v2322
    %v2324 = vlaneseq
    %v2325 = vshrl.u32 %v2324, 7
    %v2326 = vsub.s32 %v2323, %v2325
    %v2327 = vrot.slane %v2320, %v2326
    %v2328 = vcombine.low %v1470, %v1471
    %v2330 = vunpack.c.l.s4 1983009808
    %v2331 = vunpack.c.0.s8 %v2330
    %v2332 = vlaneseq
    %v2333 = vshrl.u32 %v2332, 7
    %v2334 = vsub.s32 %v2331, %v2333
    %v2335 = vrot.slane %v2328, %v2334
    %v2336 = vcombine.low %v1462, %v1469
    %v2338 = vunpack.c.l.s4 1983009808
    %v2339 = vunpack.c.0.s8 %v2338
    %v2340 = vlaneseq
    %v2341 = vshrl.u32 %v2340, 7
    %v2342 = vsub.s32 %v2339, %v2341
    %v2343 = vrot.slane %v2336, %v2342
    %v2344 = vcombine.low %v1472, %v1473
    %v2346 = vunpack.c.l.s4 1983009808
    %v2347 = vunpack.c.0.s8 %v2346
    %v2348 = vlaneseq
    %v2349 = vshrl.u32 %v2348, 7
    %v2350 = vsub.s32 %v2347, %v2349
    %v2351 = vrot.slane %v2344, %v2350
    %v2352 = vcombine.low %v2327, %v2335
    %v2354 = vunpack.c.l.s4 1934713408
    %v2355 = vunpack.c.0.s8 %v2354
    %v2356 = vlaneseq
    %v2357 = vshrl.u32 %v2356, 7
    %v2358 = vsub.s32 %v2355, %v2357
    %v2359 = vrot.slane %v2352, %v2358
    %v2360 = vcombine.low %v2343, %v2351
    %v2362 = vunpack.c.l.s4 1934713408
    %v2363 = vunpack.c.0.s8 %v2362
    %v2364 = vlaneseq
    %v2365 = vshrl.u32 %v2364, 7
    %v2366 = vsub.s32 %v2363, %v2365
    %v2367 = vrot.slane %v2360, %v2366
    %v2368 = vcombine.low %v2359, %v2367
    %v2369 = vcombine.high %v2359, %v2367
    %v2370 = vcombine.low %v1512, %v1519
    %v2372 = vunpack.c.l.s4 1983009808
    %v2373 = vunpack.c.0.s8 %v2372
    %v2374 = vlaneseq
    %v2375 = vshrl.u32 %v2374, 7
    %v2376 = vsub.s32 %v2373, %v2375
    %v2377 = vrot.slane %v2370, %v2376
    %v2378 = vcombine.low %v1536, %v1537
    %v2380 = vunpack.c.l.s4 1983009808
    %v2381 = vunpack.c.0.s8 %v2380
    %v2382 = vlaneseq
    %v2383 = vshrl.u32 %v2382, 7
    %v2384 = vsub.s32 %v2381, %v2383
    %v2385 = vrot.slane %v2378, %v2384
    %v2386 = vcombine.low %v1528, %v1535
    %v2388 = vunpack.c.l.s4 1983009808
    %v2389 = vunpack.c.0.s8 %v2388
    %v2390 = vlaneseq
    %v2391 = vshrl.u32 %v2390, 7
    %v2392 = vsub.s32 %v2389, %v2391
    %v2393 = vrot.slane %v2386, %v2392
    %v2394 = vcombine.low %v1538, %v1539
    %v2396 = vunpack.c.l.s4 1983009808
    %v2397 = vunpack.c.0.s8 %v2396
    %v2398 = vlaneseq
    %v2399 = vshrl.u32 %v2398, 7
    %v2400 = vsub.s32 %v2397, %v2399
    %v2401 = vrot.slane %v2394, %v2400
    %v2402 = vcombine.low %v2377, %v2385
    %v2404 = vunpack.c.l.s4 1934713408
    %v2405 = vunpack.c.0.s8 %v2404
    %v2406 = vlaneseq
    %v2407 = vshrl.u32 %v2406, 7
    %v2408 = vsub.s32 %v2405, %v2407
    %v2409 = vrot.slane %v2402, %v2408
    %v2410 = vcombine.low %v2393, %v2401
    %v2412 = vunpack.c.l.s4 1934713408
    %v2413 = vunpack.c.0.s8 %v2412
    %v2414 = vlaneseq
    %v2415 = vshrl.u32 %v2414, 7
    %v2416 = vsub.s32 %v2413, %v2415
    %v2417 = vrot.slane %v2410, %v2416
    %v2418 = vcombine.low %v2409, %v2417
    %v2419 = vcombine.high %v2409, %v2417
    %v2420 = vcombine.low %v1578, %v1585
    %v2422 = vunpack.c.l.s4 1983009808
    %v2423 = vunpack.c.0.s8 %v2422
    %v2424 = vlaneseq
    %v2425 = vshrl.u32 %v2424, 7
    %v2426 = vsub.s32 %v2423, %v2425
    %v2427 = vrot.slane %v2420, %v2426
    %v2428 = vcombine.low %v1602, %v1603
    %v2430 = vunpack.c.l.s4 1983009808
    %v2431 = vunpack.c.0.s8 %v2430
    %v2432 = vlaneseq
    %v2433 = vshrl.u32 %v2432, 7
    %v2434 = vsub.s32 %v2431, %v2433
    %v2435 = vrot.slane %v2428, %v2434
    %v2436 = vcombine.low %v1594, %v1601
    %v2438 = vunpack.c.l.s4 1983009808
    %v2439 = vunpack.c.0.s8 %v2438
    %v2440 = vlaneseq
    %v2441 = vshrl.u32 %v2440, 7
    %v2442 = vsub.s32 %v2439, %v2441
    %v2443 = vrot.slane %v2436, %v2442
    %v2444 = vcombine.low %v1604, %v1605
    %v2446 = vunpack.c.l.s4 1983009808
    %v2447 = vunpack.c.0.s8 %v2446
    %v2448 = vlaneseq
    %v2449 = vshrl.u32 %v2448, 7
    %v2450 = vsub.s32 %v2447, %v2449
    %v2451 = vrot.slane %v2444, %v2450
    %v2452 = vcombine.low %v2427, %v2435
    %v2454 = vunpack.c.l.s4 1934713408
    %v2455 = vunpack.c.0.s8 %v2454
    %v2456 = vlaneseq
    %v2457 = vshrl.u32 %v2456, 7
    %v2458 = vsub.s32 %v2455, %v2457
    %v2459 = vrot.slane %v2452, %v2458
    %v2460 = vcombine.low %v2443, %v2451
    %v2462 = vunpack.c.l.s4 1934713408
    %v2463 = vunpack.c.0.s8 %v2462
    %v2464 = vlaneseq
    %v2465 = vshrl.u32 %v2464, 7
    %v2466 = vsub.s32 %v2463, %v2465
    %v2467 = vrot.slane %v2460, %v2466
    %v2468 = vcombine.low %v2459, %v2467
    %v2469 = vcombine.high %v2459, %v2467
    %v2470 = vcombine.low %v1644, %v1651
    %v2472 = vunpack.c.l.s4 1983009808
    %v2473 = vunpack.c.0.s8 %v2472
    %v2474 = vlaneseq
    %v2475 = vshrl.u32 %v2474, 7
    %v2476 = vsub.s32 %v2473, %v2475
    %v2477 = vrot.slane %v2470, %v2476
    %v2478 = vcombine.low %v1668, %v1669
    %v2480 = vunpack.c.l.s4 1983009808
    %v2481 = vunpack.c.0.s8 %v2480
    %v2482 = vlaneseq
    %v2483 = vshrl.u32 %v2482, 7
    %v2484 = vsub.s32 %v2481, %v2483
    %v2485 = vrot.slane %v2478, %v2484
    %v2486 = vcombine.low %v1660, %v1667
    %v2488 = vunpack.c.l.s4 1983009808
    %v2489 = vunpack.c.0.s8 %v2488
    %v2490 = vlaneseq
    %v2491 = vshrl.u32 %v2490, 7
    %v2492 = vsub.s32 %v2489, %v2491
    %v2493 = vrot.slane %v2486, %v2492
    %v2494 = vcombine.low %v1670, %v1671
    %v2496 = vunpack.c.l.s4 1983009808
    %v2497 = vunpack.c.0.s8 %v2496
    %v2498 = vlaneseq
    %v2499 = vshrl.u32 %v2498, 7
    %v2500 = vsub.s32 %v2497, %v2499
    %v2501 = vrot.slane %v2494, %v2500
    %v2502 = vcombine.low %v2477, %v2485
    %v2504 = vunpack.c.l.s4 1934713408
    %v2505 = vunpack.c.0.s8 %v2504
    %v2506 = vlaneseq
    %v2507 = vshrl.u32 %v2506, 7
    %v2508 = vsub.s32 %v2505, %v2507
    %v2509 = vrot.slane %v2502, %v2508
    %v2510 = vcombine.low %v2493, %v2501
    %v2512 = vunpack.c.l.s4 1934713408
    %v2513 = vunpack.c.0.s8 %v2512
    %v2514 = vlaneseq
    %v2515 = vshrl.u32 %v2514, 7
    %v2516 = vsub.s32 %v2513, %v2515
    %v2517 = vrot.slane %v2510, %v2516
    %v2518 = vcombine.low %v2509, %v2517
    %v2519 = vcombine.high %v2509, %v2517
    %v2520 = vcombine.low %v1710, %v1717
    %v2522 = vunpack.c.l.s4 1983009808
    %v2523 = vunpack.c.0.s8 %v2522
    %v2524 = vlaneseq
    %v2525 = vshrl.u32 %v2524, 7
    %v2526 = vsub.s32 %v2523, %v2525
    %v2527 = vrot.slane %v2520, %v2526
    %v2528 = vcombine.low %v1734, %v1735
    %v2530 = vunpack.c.l.s4 1983009808
    %v2531 = vunpack.c.0.s8 %v2530
    %v2532 = vlaneseq
    %v2533 = vshrl.u32 %v2532, 7
    %v2534 = vsub.s32 %v2531, %v2533
    %v2535 = vrot.slane %v2528, %v2534
    %v2536 = vcombine.low %v1726, %v1733
    %v2538 = vunpack.c.l.s4 1983009808
    %v2539 = vunpack.c.0.s8 %v2538
    %v2540 = vlaneseq
    %v2541 = vshrl.u32 %v2540, 7
    %v2542 = vsub.s32 %v2539, %v2541
    %v2543 = vrot.slane %v2536, %v2542
    %v2544 = vcombine.low %v1736, %v1737
    %v2546 = vunpack.c.l.s4 1983009808
    %v2547 = vunpack.c.0.s8 %v2546
    %v2548 = vlaneseq
    %v2549 = vshrl.u32 %v2548, 7
    %v2550 = vsub.s32 %v2547, %v2549
    %v2551 = vrot.slane %v2544, %v2550
    %v2552 = vcombine.low %v2527, %v2535
    %v2554 = vunpack.c.l.s4 1934713408
    %v2555 = vunpack.c.0.s8 %v2554
    %v2556 = vlaneseq
    %v2557 = vshrl.u32 %v2556, 7
    %v2558 = vsub.s32 %v2555, %v2557
    %v2559 = vrot.slane %v2552, %v2558
    %v2560 = vcombine.low %v2543, %v2551
    %v2562 = vunpack.c.l.s4 1934713408
    %v2563 = vunpack.c.0.s8 %v2562
    %v2564 = vlaneseq
    %v2565 = vshrl.u32 %v2564, 7
    %v2566 = vsub.s32 %v2563, %v2565
    %v2567 = vrot.slane %v2560, %v2566
    %v2568 = vcombine.low %v2559, %v2567
    %v2569 = vcombine.high %v2559, %v2567
    %v2570 = vcombine.low %v1776, %v1783
    %v2572 = vunpack.c.l.s4 1983009808
    %v2573 = vunpack.c.0.s8 %v2572
    %v2574 = vlaneseq
    %v2575 = vshrl.u32 %v2574, 7
    %v2576 = vsub.s32 %v2573, %v2575
    %v2577 = vrot.slane %v2570, %v2576
    %v2578 = vcombine.low %v1800, %v1801
    %v2580 = vunpack.c.l.s4 1983009808
    %v2581 = vunpack.c.0.s8 %v2580
    %v2582 = vlaneseq
    %v2583 = vshrl.u32 %v2582, 7
    %v2584 = vsub.s32 %v2581, %v2583
    %v2585 = vrot.slane %v2578, %v2584
    %v2586 = vcombine.low %v1792, %v1799
    %v2588 = vunpack.c.l.s4 1983009808
    %v2589 = vunpack.c.0.s8 %v2588
    %v2590 = vlaneseq
    %v2591 = vshrl.u32 %v2590, 7
    %v2592 = vsub.s32 %v2589, %v2591
    %v2593 = vrot.slane %v2586, %v2592
    %v2594 = vcombine.low %v1802, %v1803
    %v2596 = vunpack.c.l.s4 1983009808
    %v2597 = vunpack.c.0.s8 %v2596
    %v2598 = vlaneseq
    %v2599 = vshrl.u32 %v2598, 7
    %v2600 = vsub.s32 %v2597, %v2599
    %v2601 = vrot.slane %v2594, %v2600
    %v2602 = vcombine.low %v2577, %v2585
    %v2604 = vunpack.c.l.s4 1934713408
    %v2605 = vunpack.c.0.s8 %v2604
    %v2606 = vlaneseq
    %v2607 = vshrl.u32 %v2606, 7
    %v2608 = vsub.s32 %v2605, %v2607
    %v2609 = vrot.slane %v2602, %v2608
    %v2610 = vcombine.low %v2593, %v2601
    %v2612 = vunpack.c.l.s4 1934713408
    %v2613 = vunpack.c.0.s8 %v2612
    %v2614 = vlaneseq
    %v2615 = vshrl.u32 %v2614, 7
    %v2616 = vsub.s32 %v2613, %v2615
    %v2617 = vrot.slane %v2610, %v2616
    %v2618 = vcombine.low %v2609, %v2617
    %v2619 = vcombine.high %v2609, %v2617
    %v2620 = vcombine.low %v1842, %v1849
    %v2622 = vunpack.c.l.s4 1983009808
    %v2623 = vunpack.c.0.s8 %v2622
    %v2624 = vlaneseq
    %v2625 = vshrl.u32 %v2624, 7
    %v2626 = vsub.s32 %v2623, %v2625
    %v2627 = vrot.slane %v2620, %v2626
    %v2628 = vcombine.low %v1866, %v1867
    %v2630 = vunpack.c.l.s4 1983009808
    %v2631 = vunpack.c.0.s8 %v2630
    %v2632 = vlaneseq
    %v2633 = vshrl.u32 %v2632, 7
    %v2634 = vsub.s32 %v2631, %v2633
    %v2635 = vrot.slane %v2628, %v2634
    %v2636 = vcombine.low %v1858, %v1865
    %v2638 = vunpack.c.l.s4 1983009808
    %v2639 = vunpack.c.0.s8 %v2638
    %v2640 = vlaneseq
    %v2641 = vshrl.u32 %v2640, 7
    %v2642 = vsub.s32 %v2639, %v2641
    %v2643 = vrot.slane %v2636, %v2642
    %v2644 = vcombine.low %v1868, %v1869
    %v2646 = vunpack.c.l.s4 1983009808
    %v2647 = vunpack.c.0.s8 %v2646
    %v2648 = vlaneseq
    %v2649 = vshrl.u32 %v2648, 7
    %v2650 = vsub.s32 %v2647, %v2649
    %v2651 = vrot.slane %v2644, %v2650
    %v2652 = vcombine.low %v2627, %v2635
    %v2654 = vunpack.c.l.s4 1934713408
    %v2655 = vunpack.c.0.s8 %v2654
    %v2656 = vlaneseq
    %v2657 = vshrl.u32 %v2656, 7
    %v2658 = vsub.s32 %v2655, %v2657
    %v2659 = vrot.slane %v2652, %v2658
    %v2660 = vcombine.low %v2643, %v2651
    %v2662 = vunpack.c.l.s4 1934713408
    %v2663 = vunpack.c.0.s8 %v2662
    %v2664 = vlaneseq
    %v2665 = vshrl.u32 %v2664, 7
    %v2666 = vsub.s32 %v2663, %v2665
    %v2667 = vrot.slane %v2660, %v2666
    %v2668 = vcombine.low %v2659, %v2667
    %v2669 = vcombine.high %v2659, %v2667
    %v2672 = vpack.i.b16 %v1968, %v1918
    %v2673 = vshrl.u32 %v1918, 16
    %v2674 = vshrl.u32 %v1968, 16
    %v2675 = vpack.i.b16 %v2674, %v2673
    %v2678 = vpack.i.b16 %v1969, %v1919
    %v2679 = vshrl.u32 %v1919, 16
    %v2680 = vshrl.u32 %v1969, 16
    %v2681 = vpack.i.b16 %v2680, %v2679
    %v2684 = vpack.i.b16 %v2068, %v2018
    %v2685 = vshrl.u32 %v2018, 16
    %v2686 = vshrl.u32 %v2068, 16
    %v2687 = vpack.i.b16 %v2686, %v2685
    %v2690 = vpack.i.b16 %v2069, %v2019
    %v2691 = vshrl.u32 %v2019, 16
    %v2692 = vshrl.u32 %v2069, 16
    %v2693 = vpack.i.b16 %v2692, %v2691
    %v2696 = vpack.i.b16 %v2168, %v2118
    %v2697 = vshrl.u32 %v2118, 16
    %v2698 = vshrl.u32 %v2168, 16
    %v2699 = vpack.i.b16 %v2698, %v2697
    %v2702 = vpack.i.b16 %v2169, %v2119
    %v2703 = vshrl.u32 %v2119, 16
    %v2704 = vshrl.u32 %v2169, 16
    %v2705 = vpack.i.b16 %v2704, %v2703
    %v2708 = vpack.i.b16 %v2268, %v2218
    %v2709 = vshrl.u32 %v2218, 16
    %v2710 = vshrl.u32 %v2268, 16
    %v2711 = vpack.i.b16 %v2710, %v2709
    %v2714 = vpack.i.b16 %v2269, %v2219
    %v2715 = vshrl.u32 %v2219, 16
    %v2716 = vshrl.u32 %v2269, 16
    %v2717 = vpack.i.b16 %v2716, %v2715
    %v2720 = vpack.i.b16 %v2368, %v2318
    %v2721 = vshrl.u32 %v2318, 16
    %v2722 = vshrl.u32 %v2368, 16
    %v2723 = vpack.i.b16 %v2722, %v2721
    %v2726 = vpack.i.b16 %v2369, %v2319
    %v2727 = vshrl.u32 %v2319, 16
    %v2728 = vshrl.u32 %v2369, 16
    %v2729 = vpack.i.b16 %v2728, %v2727
    %v2732 = vpack.i.b16 %v2468, %v2418
    %v2733 = vshrl.u32 %v2418, 16
    %v2734 = vshrl.u32 %v2468, 16
    %v2735 = vpack.i.b16 %v2734, %v2733
    %v2738 = vpack.i.b16 %v2469, %v2419
    %v2739 = vshrl.u32 %v2419, 16
    %v2740 = vshrl.u32 %v2469, 16
    %v2741 = vpack.i.b16 %v2740, %v2739
    %v2744 = vpack.i.b16 %v2568, %v2518
    %v2745 = vshrl.u32 %v2518, 16
    %v2746 = vshrl.u32 %v2568, 16
    %v2747 = vpack.i.b16 %v2746, %v2745
    %v2750 = vpack.i.b16 %v2569, %v2519
    %v2751 = vshrl.u32 %v2519, 16
    %v2752 = vshrl.u32 %v2569, 16
    %v2753 = vpack.i.b16 %v2752, %v2751
    %v2756 = vpack.i.b16 %v2668, %v2618
    %v2757 = vshrl.u32 %v2618, 16
    %v2758 = vshrl.u32 %v2668, 16
    %v2759 = vpack.i.b16 %v2758, %v2757
    %v2762 = vpack.i.b16 %v2669, %v2619
    %v2763 = vshrl.u32 %v2619, 16
    %v2764 = vshrl.u32 %v2669, 16
    %v2765 = vpack.i.b16 %v2764, %v2763
    %2774 = vrot.lane.b32.xlu0 %v447, 96
    %v2775 = vpop.permute.xlu0 %2774
    %2776 = vrot.lane.b32.xlu0 %v448, 96
    %v2777 = vpop.permute.xlu0 %2776
    %2778 = vrot.lane.b32.xlu0 %v449, 96
    %v2779 = vpop.permute.xlu0 %2778
    %2780 = vrot.lane.b32.xlu0 %v450, 96
    %v2781 = vpop.permute.xlu0 %2780
    %2782 = vrot.lane.b32.xlu0 %v451, 96
    %v2783 = vpop.permute.xlu0 %2782
    %2784 = vrot.lane.b32.xlu0 %v452, 96
    %v2785 = vpop.permute.xlu0 %2784
    %2786 = vrot.lane.b32.xlu0 %v453, 96
    %v2787 = vpop.permute.xlu0 %2786
    %2788 = vrot.lane.b32.xlu0 %v454, 96
    %v2789 = vpop.permute.xlu0 %2788
    %2790 = vrot.lane.b32.xlu0 %v447, 64
    %v2791 = vpop.permute.xlu0 %2790
    %2792 = vrot.lane.b32.xlu0 %v448, 64
    %v2793 = vpop.permute.xlu0 %2792
    %2794 = vrot.lane.b32.xlu0 %v449, 64
    %v2795 = vpop.permute.xlu0 %2794
    %2796 = vrot.lane.b32.xlu0 %v450, 64
    %v2797 = vpop.permute.xlu0 %2796
    %2798 = vrot.lane.b32.xlu0 %v451, 64
    %v2799 = vpop.permute.xlu0 %2798
    %2800 = vrot.lane.b32.xlu0 %v452, 64
    %v2801 = vpop.permute.xlu0 %2800
    %2802 = vrot.lane.b32.xlu0 %v453, 64
    %v2803 = vpop.permute.xlu0 %2802
    %2804 = vrot.lane.b32.xlu0 %v454, 64
    %v2805 = vpop.permute.xlu0 %2804
    %2806 = vrot.lane.b32.xlu0 %v447, 32
    %v2807 = vpop.permute.xlu0 %2806
    %2808 = vrot.lane.b32.xlu0 %v448, 32
    %v2809 = vpop.permute.xlu0 %2808
    %2810 = vrot.lane.b32.xlu0 %v449, 32
    %v2811 = vpop.permute.xlu0 %2810
    %2812 = vrot.lane.b32.xlu0 %v450, 32
    %v2813 = vpop.permute.xlu0 %2812
    %2814 = vrot.lane.b32.xlu0 %v451, 32
    %v2815 = vpop.permute.xlu0 %2814
    %2816 = vrot.lane.b32.xlu0 %v452, 32
    %v2817 = vpop.permute.xlu0 %2816
    %2818 = vrot.lane.b32.xlu0 %v453, 32
    %v2819 = vpop.permute.xlu0 %2818
    %2820 = vrot.lane.b32.xlu0 %v454, 32
    %v2821 = vpop.permute.xlu0 %2820
    %v2824 = vpack.i.b16 %v2775, %v447
    %v2826 = vshrl.u32 %v447, 16
    %v2827 = vshrl.u32 %v2775, 16
    %v2828 = vpack.i.b16 %v2827, %v2826
    %v2832 = vpack.i.b16 %v2807, %v2791
    %v2834 = vshrl.u32 %v2791, 16
    %v2835 = vshrl.u32 %v2807, 16
    %v2836 = vpack.i.b16 %v2835, %v2834
    %v2840 = vpack.i.b16 %v2777, %v448
    %v2842 = vshrl.u32 %v448, 16
    %v2843 = vshrl.u32 %v2777, 16
    %v2844 = vpack.i.b16 %v2843, %v2842
    %v2848 = vpack.i.b16 %v2809, %v2793
    %v2850 = vshrl.u32 %v2793, 16
    %v2851 = vshrl.u32 %v2809, 16
    %v2852 = vpack.i.b16 %v2851, %v2850
    %v2856 = vpack.i.b16 %v2779, %v449
    %v2858 = vshrl.u32 %v449, 16
    %v2859 = vshrl.u32 %v2779, 16
    %v2860 = vpack.i.b16 %v2859, %v2858
    %v2864 = vpack.i.b16 %v2811, %v2795
    %v2866 = vshrl.u32 %v2795, 16
    %v2867 = vshrl.u32 %v2811, 16
    %v2868 = vpack.i.b16 %v2867, %v2866
    %v2872 = vpack.i.b16 %v2781, %v450
    %v2874 = vshrl.u32 %v450, 16
    %v2875 = vshrl.u32 %v2781, 16
    %v2876 = vpack.i.b16 %v2875, %v2874
    %v2880 = vpack.i.b16 %v2813, %v2797
    %v2882 = vshrl.u32 %v2797, 16
    %v2883 = vshrl.u32 %v2813, 16
    %v2884 = vpack.i.b16 %v2883, %v2882
    %v2888 = vpack.i.b16 %v2783, %v451
    %v2890 = vshrl.u32 %v451, 16
    %v2891 = vshrl.u32 %v2783, 16
    %v2892 = vpack.i.b16 %v2891, %v2890
    %v2896 = vpack.i.b16 %v2815, %v2799
    %v2898 = vshrl.u32 %v2799, 16
    %v2899 = vshrl.u32 %v2815, 16
    %v2900 = vpack.i.b16 %v2899, %v2898
    %v2904 = vpack.i.b16 %v2785, %v452
    %v2906 = vshrl.u32 %v452, 16
    %v2907 = vshrl.u32 %v2785, 16
    %v2908 = vpack.i.b16 %v2907, %v2906
    %v2912 = vpack.i.b16 %v2817, %v2801
    %v2914 = vshrl.u32 %v2801, 16
    %v2915 = vshrl.u32 %v2817, 16
    %v2916 = vpack.i.b16 %v2915, %v2914
    %v2920 = vpack.i.b16 %v2787, %v453
    %v2922 = vshrl.u32 %v453, 16
    %v2923 = vshrl.u32 %v2787, 16
    %v2924 = vpack.i.b16 %v2923, %v2922
    %v2928 = vpack.i.b16 %v2819, %v2803
    %v2930 = vshrl.u32 %v2803, 16
    %v2931 = vshrl.u32 %v2819, 16
    %v2932 = vpack.i.b16 %v2931, %v2930
    %v2936 = vpack.i.b16 %v2789, %v454
    %v2938 = vshrl.u32 %v454, 16
    %v2939 = vshrl.u32 %v2789, 16
    %v2940 = vpack.i.b16 %v2939, %v2938
    %v2944 = vpack.i.b16 %v2821, %v2805
    %v2946 = vshrl.u32 %v2805, 16
    %v2947 = vshrl.u32 %v2821, 16
    %v2948 = vpack.i.b16 %v2947, %v2946
    %v2950 = vcombine.high %v2824, %v697
    %v2952 = vunpack.c.l.s4 1983009808
    %v2953 = vunpack.c.0.s8 %v2952
    %v2954 = vlaneseq
    %v2955 = vshrl.u32 %v2954, 7
    %v2956 = vsub.s32 %v2953, %v2955
    %v2957 = vrot.slane %v2824, %v2956
    %v2959 = vunpack.c.l.s4 1983009808
    %v2960 = vunpack.c.0.s8 %v2959
    %v2961 = vlaneseq
    %v2962 = vshrl.u32 %v2961, 7
    %v2963 = vsub.s32 %v2960, %v2962
    %v2964 = vrot.slane %v2950, %v2963
    %v2965 = vcombine.high %v2832, %v697
    %v2967 = vunpack.c.l.s4 1983009808
    %v2968 = vunpack.c.0.s8 %v2967
    %v2969 = vlaneseq
    %v2970 = vshrl.u32 %v2969, 7
    %v2971 = vsub.s32 %v2968, %v2970
    %v2972 = vrot.slane %v2832, %v2971
    %v2974 = vunpack.c.l.s4 1983009808
    %v2975 = vunpack.c.0.s8 %v2974
    %v2976 = vlaneseq
    %v2977 = vshrl.u32 %v2976, 7
    %v2978 = vsub.s32 %v2975, %v2977
    %v2979 = vrot.slane %v2965, %v2978
    %v2980 = vcombine.low %v2957, %v2972
    %v2981 = vcombine.high %v2957, %v2972
    %v2983 = vunpack.c.l.s4 1934713408
    %v2984 = vunpack.c.0.s8 %v2983
    %v2985 = vlaneseq
    %v2986 = vshrl.u32 %v2985, 7
    %v2987 = vsub.s32 %v2984, %v2986
    %v2988 = vrot.slane %v2980, %v2987
    %v2990 = vunpack.c.l.s4 1934713408
    %v2991 = vunpack.c.0.s8 %v2990
    %v2992 = vlaneseq
    %v2993 = vshrl.u32 %v2992, 7
    %v2994 = vsub.s32 %v2991, %v2993
    %v2995 = vrot.slane %v2981, %v2994
    %v2996 = vcombine.low %v2964, %v2979
    %v2997 = vcombine.high %v2964, %v2979
    %v2999 = vunpack.c.l.s4 1934713408
    %v3000 = vunpack.c.0.s8 %v2999
    %v3001 = vlaneseq
    %v3002 = vshrl.u32 %v3001, 7
    %v3003 = vsub.s32 %v3000, %v3002
    %v3004 = vrot.slane %v2996, %v3003
    %v3006 = vunpack.c.l.s4 1934713408
    %v3007 = vunpack.c.0.s8 %v3006
    %v3008 = vlaneseq
    %v3009 = vshrl.u32 %v3008, 7
    %v3010 = vsub.s32 %v3007, %v3009
    %v3011 = vrot.slane %v2997, %v3010
    %v3012 = vcombine.high %v2988, 0
    %v3013 = vcombine.high %v2995, 0
    %v3014 = vcombine.high %v3004, 0
    %v3015 = vcombine.high %v3011, 0
    %v3016 = vcombine.high %v2828, %v700
    %v3018 = vunpack.c.l.s4 1983009808
    %v3019 = vunpack.c.0.s8 %v3018
    %v3020 = vlaneseq
    %v3021 = vshrl.u32 %v3020, 7
    %v3022 = vsub.s32 %v3019, %v3021
    %v3023 = vrot.slane %v2828, %v3022
    %v3025 = vunpack.c.l.s4 1983009808
    %v3026 = vunpack.c.0.s8 %v3025
    %v3027 = vlaneseq
    %v3028 = vshrl.u32 %v3027, 7
    %v3029 = vsub.s32 %v3026, %v3028
    %v3030 = vrot.slane %v3016, %v3029
    %v3031 = vcombine.high %v2836, %v700
    %v3033 = vunpack.c.l.s4 1983009808
    %v3034 = vunpack.c.0.s8 %v3033
    %v3035 = vlaneseq
    %v3036 = vshrl.u32 %v3035, 7
    %v3037 = vsub.s32 %v3034, %v3036
    %v3038 = vrot.slane %v2836, %v3037
    %v3040 = vunpack.c.l.s4 1983009808
    %v3041 = vunpack.c.0.s8 %v3040
    %v3042 = vlaneseq
    %v3043 = vshrl.u32 %v3042, 7
    %v3044 = vsub.s32 %v3041, %v3043
    %v3045 = vrot.slane %v3031, %v3044
    %v3046 = vcombine.low %v3023, %v3038
    %v3047 = vcombine.high %v3023, %v3038
    %v3049 = vunpack.c.l.s4 1934713408
    %v3050 = vunpack.c.0.s8 %v3049
    %v3051 = vlaneseq
    %v3052 = vshrl.u32 %v3051, 7
    %v3053 = vsub.s32 %v3050, %v3052
    %v3054 = vrot.slane %v3046, %v3053
    %v3056 = vunpack.c.l.s4 1934713408
    %v3057 = vunpack.c.0.s8 %v3056
    %v3058 = vlaneseq
    %v3059 = vshrl.u32 %v3058, 7
    %v3060 = vsub.s32 %v3057, %v3059
    %v3061 = vrot.slane %v3047, %v3060
    %v3062 = vcombine.low %v3030, %v3045
    %v3063 = vcombine.high %v3030, %v3045
    %v3065 = vunpack.c.l.s4 1934713408
    %v3066 = vunpack.c.0.s8 %v3065
    %v3067 = vlaneseq
    %v3068 = vshrl.u32 %v3067, 7
    %v3069 = vsub.s32 %v3066, %v3068
    %v3070 = vrot.slane %v3062, %v3069
    %v3072 = vunpack.c.l.s4 1934713408
    %v3073 = vunpack.c.0.s8 %v3072
    %v3074 = vlaneseq
    %v3075 = vshrl.u32 %v3074, 7
    %v3076 = vsub.s32 %v3073, %v3075
    %v3077 = vrot.slane %v3063, %v3076
    %v3078 = vcombine.high %v3054, 0
    %v3079 = vcombine.high %v3061, 0
    %v3080 = vcombine.high %v3070, 0
    %v3081 = vcombine.high %v3077, 0
    %v3082 = vcombine.high %v2840, %v697
    %v3084 = vunpack.c.l.s4 1983009808
    %v3085 = vunpack.c.0.s8 %v3084
    %v3086 = vlaneseq
    %v3087 = vshrl.u32 %v3086, 7
    %v3088 = vsub.s32 %v3085, %v3087
    %v3089 = vrot.slane %v2840, %v3088
    %v3091 = vunpack.c.l.s4 1983009808
    %v3092 = vunpack.c.0.s8 %v3091
    %v3093 = vlaneseq
    %v3094 = vshrl.u32 %v3093, 7
    %v3095 = vsub.s32 %v3092, %v3094
    %v3096 = vrot.slane %v3082, %v3095
    %v3097 = vcombine.high %v2848, %v697
    %v3099 = vunpack.c.l.s4 1983009808
    %v3100 = vunpack.c.0.s8 %v3099
    %v3101 = vlaneseq
    %v3102 = vshrl.u32 %v3101, 7
    %v3103 = vsub.s32 %v3100, %v3102
    %v3104 = vrot.slane %v2848, %v3103
    %v3106 = vunpack.c.l.s4 1983009808
    %v3107 = vunpack.c.0.s8 %v3106
    %v3108 = vlaneseq
    %v3109 = vshrl.u32 %v3108, 7
    %v3110 = vsub.s32 %v3107, %v3109
    %v3111 = vrot.slane %v3097, %v3110
    %v3112 = vcombine.low %v3089, %v3104
    %v3113 = vcombine.high %v3089, %v3104
    %v3115 = vunpack.c.l.s4 1934713408
    %v3116 = vunpack.c.0.s8 %v3115
    %v3117 = vlaneseq
    %v3118 = vshrl.u32 %v3117, 7
    %v3119 = vsub.s32 %v3116, %v3118
    %v3120 = vrot.slane %v3112, %v3119
    %v3122 = vunpack.c.l.s4 1934713408
    %v3123 = vunpack.c.0.s8 %v3122
    %v3124 = vlaneseq
    %v3125 = vshrl.u32 %v3124, 7
    %v3126 = vsub.s32 %v3123, %v3125
    %v3127 = vrot.slane %v3113, %v3126
    %v3128 = vcombine.low %v3096, %v3111
    %v3129 = vcombine.high %v3096, %v3111
    %v3131 = vunpack.c.l.s4 1934713408
    %v3132 = vunpack.c.0.s8 %v3131
    %v3133 = vlaneseq
    %v3134 = vshrl.u32 %v3133, 7
    %v3135 = vsub.s32 %v3132, %v3134
    %v3136 = vrot.slane %v3128, %v3135
    %v3138 = vunpack.c.l.s4 1934713408
    %v3139 = vunpack.c.0.s8 %v3138
    %v3140 = vlaneseq
    %v3141 = vshrl.u32 %v3140, 7
    %v3142 = vsub.s32 %v3139, %v3141
    %v3143 = vrot.slane %v3129, %v3142
    %v3144 = vcombine.high %v3120, 0
    %v3145 = vcombine.high %v3127, 0
    %v3146 = vcombine.high %v3136, 0
    %v3147 = vcombine.high %v3143, 0
    %v3148 = vcombine.high %v2844, %v700
    %v3150 = vunpack.c.l.s4 1983009808
    %v3151 = vunpack.c.0.s8 %v3150
    %v3152 = vlaneseq
    %v3153 = vshrl.u32 %v3152, 7
    %v3154 = vsub.s32 %v3151, %v3153
    %v3155 = vrot.slane %v2844, %v3154
    %v3157 = vunpack.c.l.s4 1983009808
    %v3158 = vunpack.c.0.s8 %v3157
    %v3159 = vlaneseq
    %v3160 = vshrl.u32 %v3159, 7
    %v3161 = vsub.s32 %v3158, %v3160
    %v3162 = vrot.slane %v3148, %v3161
    %v3163 = vcombine.high %v2852, %v700
    %v3165 = vunpack.c.l.s4 1983009808
    %v3166 = vunpack.c.0.s8 %v3165
    %v3167 = vlaneseq
    %v3168 = vshrl.u32 %v3167, 7
    %v3169 = vsub.s32 %v3166, %v3168
    %v3170 = vrot.slane %v2852, %v3169
    %v3172 = vunpack.c.l.s4 1983009808
    %v3173 = vunpack.c.0.s8 %v3172
    %v3174 = vlaneseq
    %v3175 = vshrl.u32 %v3174, 7
    %v3176 = vsub.s32 %v3173, %v3175
    %v3177 = vrot.slane %v3163, %v3176
    %v3178 = vcombine.low %v3155, %v3170
    %v3179 = vcombine.high %v3155, %v3170
    %v3181 = vunpack.c.l.s4 1934713408
    %v3182 = vunpack.c.0.s8 %v3181
    %v3183 = vlaneseq
    %v3184 = vshrl.u32 %v3183, 7
    %v3185 = vsub.s32 %v3182, %v3184
    %v3186 = vrot.slane %v3178, %v3185
    %v3188 = vunpack.c.l.s4 1934713408
    %v3189 = vunpack.c.0.s8 %v3188
    %v3190 = vlaneseq
    %v3191 = vshrl.u32 %v3190, 7
    %v3192 = vsub.s32 %v3189, %v3191
    %v3193 = vrot.slane %v3179, %v3192
    %v3194 = vcombine.low %v3162, %v3177
    %v3195 = vcombine.high %v3162, %v3177
    %v3197 = vunpack.c.l.s4 1934713408
    %v3198 = vunpack.c.0.s8 %v3197
    %v3199 = vlaneseq
    %v3200 = vshrl.u32 %v3199, 7
    %v3201 = vsub.s32 %v3198, %v3200
    %v3202 = vrot.slane %v3194, %v3201
    %v3204 = vunpack.c.l.s4 1934713408
    %v3205 = vunpack.c.0.s8 %v3204
    %v3206 = vlaneseq
    %v3207 = vshrl.u32 %v3206, 7
    %v3208 = vsub.s32 %v3205, %v3207
    %v3209 = vrot.slane %v3195, %v3208
    %v3210 = vcombine.high %v3186, 0
    %v3211 = vcombine.high %v3193, 0
    %v3212 = vcombine.high %v3202, 0
    %v3213 = vcombine.high %v3209, 0
    %v3214 = vcombine.high %v2856, %v697
    %v3216 = vunpack.c.l.s4 1983009808
    %v3217 = vunpack.c.0.s8 %v3216
    %v3218 = vlaneseq
    %v3219 = vshrl.u32 %v3218, 7
    %v3220 = vsub.s32 %v3217, %v3219
    %v3221 = vrot.slane %v2856, %v3220
    %v3223 = vunpack.c.l.s4 1983009808
    %v3224 = vunpack.c.0.s8 %v3223
    %v3225 = vlaneseq
    %v3226 = vshrl.u32 %v3225, 7
    %v3227 = vsub.s32 %v3224, %v3226
    %v3228 = vrot.slane %v3214, %v3227
    %v3229 = vcombine.high %v2864, %v697
    %v3231 = vunpack.c.l.s4 1983009808
    %v3232 = vunpack.c.0.s8 %v3231
    %v3233 = vlaneseq
    %v3234 = vshrl.u32 %v3233, 7
    %v3235 = vsub.s32 %v3232, %v3234
    %v3236 = vrot.slane %v2864, %v3235
    %v3238 = vunpack.c.l.s4 1983009808
    %v3239 = vunpack.c.0.s8 %v3238
    %v3240 = vlaneseq
    %v3241 = vshrl.u32 %v3240, 7
    %v3242 = vsub.s32 %v3239, %v3241
    %v3243 = vrot.slane %v3229, %v3242
    %v3244 = vcombine.low %v3221, %v3236
    %v3245 = vcombine.high %v3221, %v3236
    %v3247 = vunpack.c.l.s4 1934713408
    %v3248 = vunpack.c.0.s8 %v3247
    %v3249 = vlaneseq
    %v3250 = vshrl.u32 %v3249, 7
    %v3251 = vsub.s32 %v3248, %v3250
    %v3252 = vrot.slane %v3244, %v3251
    %v3254 = vunpack.c.l.s4 1934713408
    %v3255 = vunpack.c.0.s8 %v3254
    %v3256 = vlaneseq
    %v3257 = vshrl.u32 %v3256, 7
    %v3258 = vsub.s32 %v3255, %v3257
    %v3259 = vrot.slane %v3245, %v3258
    %v3260 = vcombine.low %v3228, %v3243
    %v3261 = vcombine.high %v3228, %v3243
    %v3263 = vunpack.c.l.s4 1934713408
    %v3264 = vunpack.c.0.s8 %v3263
    %v3265 = vlaneseq
    %v3266 = vshrl.u32 %v3265, 7
    %v3267 = vsub.s32 %v3264, %v3266
    %v3268 = vrot.slane %v3260, %v3267
    %v3270 = vunpack.c.l.s4 1934713408
    %v3271 = vunpack.c.0.s8 %v3270
    %v3272 = vlaneseq
    %v3273 = vshrl.u32 %v3272, 7
    %v3274 = vsub.s32 %v3271, %v3273
    %v3275 = vrot.slane %v3261, %v3274
    %v3276 = vcombine.high %v3252, 0
    %v3277 = vcombine.high %v3259, 0
    %v3278 = vcombine.high %v3268, 0
    %v3279 = vcombine.high %v3275, 0
    %v3280 = vcombine.high %v2860, %v700
    %v3282 = vunpack.c.l.s4 1983009808
    %v3283 = vunpack.c.0.s8 %v3282
    %v3284 = vlaneseq
    %v3285 = vshrl.u32 %v3284, 7
    %v3286 = vsub.s32 %v3283, %v3285
    %v3287 = vrot.slane %v2860, %v3286
    %v3289 = vunpack.c.l.s4 1983009808
    %v3290 = vunpack.c.0.s8 %v3289
    %v3291 = vlaneseq
    %v3292 = vshrl.u32 %v3291, 7
    %v3293 = vsub.s32 %v3290, %v3292
    %v3294 = vrot.slane %v3280, %v3293
    %v3295 = vcombine.high %v2868, %v700
    %v3297 = vunpack.c.l.s4 1983009808
    %v3298 = vunpack.c.0.s8 %v3297
    %v3299 = vlaneseq
    %v3300 = vshrl.u32 %v3299, 7
    %v3301 = vsub.s32 %v3298, %v3300
    %v3302 = vrot.slane %v2868, %v3301
    %v3304 = vunpack.c.l.s4 1983009808
    %v3305 = vunpack.c.0.s8 %v3304
    %v3306 = vlaneseq
    %v3307 = vshrl.u32 %v3306, 7
    %v3308 = vsub.s32 %v3305, %v3307
    %v3309 = vrot.slane %v3295, %v3308
    %v3310 = vcombine.low %v3287, %v3302
    %v3311 = vcombine.high %v3287, %v3302
    %v3313 = vunpack.c.l.s4 1934713408
    %v3314 = vunpack.c.0.s8 %v3313
    %v3315 = vlaneseq
    %v3316 = vshrl.u32 %v3315, 7
    %v3317 = vsub.s32 %v3314, %v3316
    %v3318 = vrot.slane %v3310, %v3317
    %v3320 = vunpack.c.l.s4 1934713408
    %v3321 = vunpack.c.0.s8 %v3320
    %v3322 = vlaneseq
    %v3323 = vshrl.u32 %v3322, 7
    %v3324 = vsub.s32 %v3321, %v3323
    %v3325 = vrot.slane %v3311, %v3324
    %v3326 = vcombine.low %v3294, %v3309
    %v3327 = vcombine.high %v3294, %v3309
    %v3329 = vunpack.c.l.s4 1934713408
    %v3330 = vunpack.c.0.s8 %v3329
    %v3331 = vlaneseq
    %v3332 = vshrl.u32 %v3331, 7
    %v3333 = vsub.s32 %v3330, %v3332
    %v3334 = vrot.slane %v3326, %v3333
    %v3336 = vunpack.c.l.s4 1934713408
    %v3337 = vunpack.c.0.s8 %v3336
    %v3338 = vlaneseq
    %v3339 = vshrl.u32 %v3338, 7
    %v3340 = vsub.s32 %v3337, %v3339
    %v3341 = vrot.slane %v3327, %v3340
    %v3342 = vcombine.high %v3318, 0
    %v3343 = vcombine.high %v3325, 0
    %v3344 = vcombine.high %v3334, 0
    %v3345 = vcombine.high %v3341, 0
    %v3346 = vcombine.high %v2872, %v697
    %v3348 = vunpack.c.l.s4 1983009808
    %v3349 = vunpack.c.0.s8 %v3348
    %v3350 = vlaneseq
    %v3351 = vshrl.u32 %v3350, 7
    %v3352 = vsub.s32 %v3349, %v3351
    %v3353 = vrot.slane %v2872, %v3352
    %v3355 = vunpack.c.l.s4 1983009808
    %v3356 = vunpack.c.0.s8 %v3355
    %v3357 = vlaneseq
    %v3358 = vshrl.u32 %v3357, 7
    %v3359 = vsub.s32 %v3356, %v3358
    %v3360 = vrot.slane %v3346, %v3359
    %v3361 = vcombine.high %v2880, %v697
    %v3363 = vunpack.c.l.s4 1983009808
    %v3364 = vunpack.c.0.s8 %v3363
    %v3365 = vlaneseq
    %v3366 = vshrl.u32 %v3365, 7
    %v3367 = vsub.s32 %v3364, %v3366
    %v3368 = vrot.slane %v2880, %v3367
    %v3370 = vunpack.c.l.s4 1983009808
    %v3371 = vunpack.c.0.s8 %v3370
    %v3372 = vlaneseq
    %v3373 = vshrl.u32 %v3372, 7
    %v3374 = vsub.s32 %v3371, %v3373
    %v3375 = vrot.slane %v3361, %v3374
    %v3376 = vcombine.low %v3353, %v3368
    %v3377 = vcombine.high %v3353, %v3368
    %v3379 = vunpack.c.l.s4 1934713408
    %v3380 = vunpack.c.0.s8 %v3379
    %v3381 = vlaneseq
    %v3382 = vshrl.u32 %v3381, 7
    %v3383 = vsub.s32 %v3380, %v3382
    %v3384 = vrot.slane %v3376, %v3383
    %v3386 = vunpack.c.l.s4 1934713408
    %v3387 = vunpack.c.0.s8 %v3386
    %v3388 = vlaneseq
    %v3389 = vshrl.u32 %v3388, 7
    %v3390 = vsub.s32 %v3387, %v3389
    %v3391 = vrot.slane %v3377, %v3390
    %v3392 = vcombine.low %v3360, %v3375
    %v3393 = vcombine.high %v3360, %v3375
    %v3395 = vunpack.c.l.s4 1934713408
    %v3396 = vunpack.c.0.s8 %v3395
    %v3397 = vlaneseq
    %v3398 = vshrl.u32 %v3397, 7
    %v3399 = vsub.s32 %v3396, %v3398
    %v3400 = vrot.slane %v3392, %v3399
    %v3402 = vunpack.c.l.s4 1934713408
    %v3403 = vunpack.c.0.s8 %v3402
    %v3404 = vlaneseq
    %v3405 = vshrl.u32 %v3404, 7
    %v3406 = vsub.s32 %v3403, %v3405
    %v3407 = vrot.slane %v3393, %v3406
    %v3408 = vcombine.high %v3384, 0
    %v3409 = vcombine.high %v3391, 0
    %v3410 = vcombine.high %v3400, 0
    %v3411 = vcombine.high %v3407, 0
    %v3412 = vcombine.high %v2876, %v700
    %v3414 = vunpack.c.l.s4 1983009808
    %v3415 = vunpack.c.0.s8 %v3414
    %v3416 = vlaneseq
    %v3417 = vshrl.u32 %v3416, 7
    %v3418 = vsub.s32 %v3415, %v3417
    %v3419 = vrot.slane %v2876, %v3418
    %v3421 = vunpack.c.l.s4 1983009808
    %v3422 = vunpack.c.0.s8 %v3421
    %v3423 = vlaneseq
    %v3424 = vshrl.u32 %v3423, 7
    %v3425 = vsub.s32 %v3422, %v3424
    %v3426 = vrot.slane %v3412, %v3425
    %v3427 = vcombine.high %v2884, %v700
    %v3429 = vunpack.c.l.s4 1983009808
    %v3430 = vunpack.c.0.s8 %v3429
    %v3431 = vlaneseq
    %v3432 = vshrl.u32 %v3431, 7
    %v3433 = vsub.s32 %v3430, %v3432
    %v3434 = vrot.slane %v2884, %v3433
    %v3436 = vunpack.c.l.s4 1983009808
    %v3437 = vunpack.c.0.s8 %v3436
    %v3438 = vlaneseq
    %v3439 = vshrl.u32 %v3438, 7
    %v3440 = vsub.s32 %v3437, %v3439
    %v3441 = vrot.slane %v3427, %v3440
    %v3442 = vcombine.low %v3419, %v3434
    %v3443 = vcombine.high %v3419, %v3434
    %v3445 = vunpack.c.l.s4 1934713408
    %v3446 = vunpack.c.0.s8 %v3445
    %v3447 = vlaneseq
    %v3448 = vshrl.u32 %v3447, 7
    %v3449 = vsub.s32 %v3446, %v3448
    %v3450 = vrot.slane %v3442, %v3449
    %v3452 = vunpack.c.l.s4 1934713408
    %v3453 = vunpack.c.0.s8 %v3452
    %v3454 = vlaneseq
    %v3455 = vshrl.u32 %v3454, 7
    %v3456 = vsub.s32 %v3453, %v3455
    %v3457 = vrot.slane %v3443, %v3456
    %v3458 = vcombine.low %v3426, %v3441
    %v3459 = vcombine.high %v3426, %v3441
    %v3461 = vunpack.c.l.s4 1934713408
    %v3462 = vunpack.c.0.s8 %v3461
    %v3463 = vlaneseq
    %v3464 = vshrl.u32 %v3463, 7
    %v3465 = vsub.s32 %v3462, %v3464
    %v3466 = vrot.slane %v3458, %v3465
    %v3468 = vunpack.c.l.s4 1934713408
    %v3469 = vunpack.c.0.s8 %v3468
    %v3470 = vlaneseq
    %v3471 = vshrl.u32 %v3470, 7
    %v3472 = vsub.s32 %v3469, %v3471
    %v3473 = vrot.slane %v3459, %v3472
    %v3474 = vcombine.high %v3450, 0
    %v3475 = vcombine.high %v3457, 0
    %v3476 = vcombine.high %v3466, 0
    %v3477 = vcombine.high %v3473, 0
    %v3478 = vcombine.high %v2888, %v697
    %v3480 = vunpack.c.l.s4 1983009808
    %v3481 = vunpack.c.0.s8 %v3480
    %v3482 = vlaneseq
    %v3483 = vshrl.u32 %v3482, 7
    %v3484 = vsub.s32 %v3481, %v3483
    %v3485 = vrot.slane %v2888, %v3484
    %v3487 = vunpack.c.l.s4 1983009808
    %v3488 = vunpack.c.0.s8 %v3487
    %v3489 = vlaneseq
    %v3490 = vshrl.u32 %v3489, 7
    %v3491 = vsub.s32 %v3488, %v3490
    %v3492 = vrot.slane %v3478, %v3491
    %v3493 = vcombine.high %v2896, %v697
    %v3495 = vunpack.c.l.s4 1983009808
    %v3496 = vunpack.c.0.s8 %v3495
    %v3497 = vlaneseq
    %v3498 = vshrl.u32 %v3497, 7
    %v3499 = vsub.s32 %v3496, %v3498
    %v3500 = vrot.slane %v2896, %v3499
    %v3502 = vunpack.c.l.s4 1983009808
    %v3503 = vunpack.c.0.s8 %v3502
    %v3504 = vlaneseq
    %v3505 = vshrl.u32 %v3504, 7
    %v3506 = vsub.s32 %v3503, %v3505
    %v3507 = vrot.slane %v3493, %v3506
    %v3508 = vcombine.low %v3485, %v3500
    %v3509 = vcombine.high %v3485, %v3500
    %v3511 = vunpack.c.l.s4 1934713408
    %v3512 = vunpack.c.0.s8 %v3511
    %v3513 = vlaneseq
    %v3514 = vshrl.u32 %v3513, 7
    %v3515 = vsub.s32 %v3512, %v3514
    %v3516 = vrot.slane %v3508, %v3515
    %v3518 = vunpack.c.l.s4 1934713408
    %v3519 = vunpack.c.0.s8 %v3518
    %v3520 = vlaneseq
    %v3521 = vshrl.u32 %v3520, 7
    %v3522 = vsub.s32 %v3519, %v3521
    %v3523 = vrot.slane %v3509, %v3522
    %v3524 = vcombine.low %v3492, %v3507
    %v3525 = vcombine.high %v3492, %v3507
    %v3527 = vunpack.c.l.s4 1934713408
    %v3528 = vunpack.c.0.s8 %v3527
    %v3529 = vlaneseq
    %v3530 = vshrl.u32 %v3529, 7
    %v3531 = vsub.s32 %v3528, %v3530
    %v3532 = vrot.slane %v3524, %v3531
    %v3534 = vunpack.c.l.s4 1934713408
    %v3535 = vunpack.c.0.s8 %v3534
    %v3536 = vlaneseq
    %v3537 = vshrl.u32 %v3536, 7
    %v3538 = vsub.s32 %v3535, %v3537
    %v3539 = vrot.slane %v3525, %v3538
    %v3540 = vcombine.high %v3516, 0
    %v3541 = vcombine.high %v3523, 0
    %v3542 = vcombine.high %v3532, 0
    %v3543 = vcombine.high %v3539, 0
    %v3544 = vcombine.high %v2892, %v700
    %v3546 = vunpack.c.l.s4 1983009808
    %v3547 = vunpack.c.0.s8 %v3546
    %v3548 = vlaneseq
    %v3549 = vshrl.u32 %v3548, 7
    %v3550 = vsub.s32 %v3547, %v3549
    %v3551 = vrot.slane %v2892, %v3550
    %v3553 = vunpack.c.l.s4 1983009808
    %v3554 = vunpack.c.0.s8 %v3553
    %v3555 = vlaneseq
    %v3556 = vshrl.u32 %v3555, 7
    %v3557 = vsub.s32 %v3554, %v3556
    %v3558 = vrot.slane %v3544, %v3557
    %v3559 = vcombine.high %v2900, %v700
    %v3561 = vunpack.c.l.s4 1983009808
    %v3562 = vunpack.c.0.s8 %v3561
    %v3563 = vlaneseq
    %v3564 = vshrl.u32 %v3563, 7
    %v3565 = vsub.s32 %v3562, %v3564
    %v3566 = vrot.slane %v2900, %v3565
    %v3568 = vunpack.c.l.s4 1983009808
    %v3569 = vunpack.c.0.s8 %v3568
    %v3570 = vlaneseq
    %v3571 = vshrl.u32 %v3570, 7
    %v3572 = vsub.s32 %v3569, %v3571
    %v3573 = vrot.slane %v3559, %v3572
    %v3574 = vcombine.low %v3551, %v3566
    %v3575 = vcombine.high %v3551, %v3566
    %v3577 = vunpack.c.l.s4 1934713408
    %v3578 = vunpack.c.0.s8 %v3577
    %v3579 = vlaneseq
    %v3580 = vshrl.u32 %v3579, 7
    %v3581 = vsub.s32 %v3578, %v3580
    %v3582 = vrot.slane %v3574, %v3581
    %v3584 = vunpack.c.l.s4 1934713408
    %v3585 = vunpack.c.0.s8 %v3584
    %v3586 = vlaneseq
    %v3587 = vshrl.u32 %v3586, 7
    %v3588 = vsub.s32 %v3585, %v3587
    %v3589 = vrot.slane %v3575, %v3588
    %v3590 = vcombine.low %v3558, %v3573
    %v3591 = vcombine.high %v3558, %v3573
    %v3593 = vunpack.c.l.s4 1934713408
    %v3594 = vunpack.c.0.s8 %v3593
    %v3595 = vlaneseq
    %v3596 = vshrl.u32 %v3595, 7
    %v3597 = vsub.s32 %v3594, %v3596
    %v3598 = vrot.slane %v3590, %v3597
    %v3600 = vunpack.c.l.s4 1934713408
    %v3601 = vunpack.c.0.s8 %v3600
    %v3602 = vlaneseq
    %v3603 = vshrl.u32 %v3602, 7
    %v3604 = vsub.s32 %v3601, %v3603
    %v3605 = vrot.slane %v3591, %v3604
    %v3606 = vcombine.high %v3582, 0
    %v3607 = vcombine.high %v3589, 0
    %v3608 = vcombine.high %v3598, 0
    %v3609 = vcombine.high %v3605, 0
    %v3610 = vcombine.high %v2904, %v697
    %v3612 = vunpack.c.l.s4 1983009808
    %v3613 = vunpack.c.0.s8 %v3612
    %v3614 = vlaneseq
    %v3615 = vshrl.u32 %v3614, 7
    %v3616 = vsub.s32 %v3613, %v3615
    %v3617 = vrot.slane %v2904, %v3616
    %v3619 = vunpack.c.l.s4 1983009808
    %v3620 = vunpack.c.0.s8 %v3619
    %v3621 = vlaneseq
    %v3622 = vshrl.u32 %v3621, 7
    %v3623 = vsub.s32 %v3620, %v3622
    %v3624 = vrot.slane %v3610, %v3623
    %v3625 = vcombine.high %v2912, %v697
    %v3627 = vunpack.c.l.s4 1983009808
    %v3628 = vunpack.c.0.s8 %v3627
    %v3629 = vlaneseq
    %v3630 = vshrl.u32 %v3629, 7
    %v3631 = vsub.s32 %v3628, %v3630
    %v3632 = vrot.slane %v2912, %v3631
    %v3634 = vunpack.c.l.s4 1983009808
    %v3635 = vunpack.c.0.s8 %v3634
    %v3636 = vlaneseq
    %v3637 = vshrl.u32 %v3636, 7
    %v3638 = vsub.s32 %v3635, %v3637
    %v3639 = vrot.slane %v3625, %v3638
    %v3640 = vcombine.low %v3617, %v3632
    %v3641 = vcombine.high %v3617, %v3632
    %v3643 = vunpack.c.l.s4 1934713408
    %v3644 = vunpack.c.0.s8 %v3643
    %v3645 = vlaneseq
    %v3646 = vshrl.u32 %v3645, 7
    %v3647 = vsub.s32 %v3644, %v3646
    %v3648 = vrot.slane %v3640, %v3647
    %v3650 = vunpack.c.l.s4 1934713408
    %v3651 = vunpack.c.0.s8 %v3650
    %v3652 = vlaneseq
    %v3653 = vshrl.u32 %v3652, 7
    %v3654 = vsub.s32 %v3651, %v3653
    %v3655 = vrot.slane %v3641, %v3654
    %v3656 = vcombine.low %v3624, %v3639
    %v3657 = vcombine.high %v3624, %v3639
    %v3659 = vunpack.c.l.s4 1934713408
    %v3660 = vunpack.c.0.s8 %v3659
    %v3661 = vlaneseq
    %v3662 = vshrl.u32 %v3661, 7
    %v3663 = vsub.s32 %v3660, %v3662
    %v3664 = vrot.slane %v3656, %v3663
    %v3666 = vunpack.c.l.s4 1934713408
    %v3667 = vunpack.c.0.s8 %v3666
    %v3668 = vlaneseq
    %v3669 = vshrl.u32 %v3668, 7
    %v3670 = vsub.s32 %v3667, %v3669
    %v3671 = vrot.slane %v3657, %v3670
    %v3672 = vcombine.high %v3648, 0
    %v3673 = vcombine.high %v3655, 0
    %v3674 = vcombine.high %v3664, 0
    %v3675 = vcombine.high %v3671, 0
    %v3676 = vcombine.high %v2908, %v700
    %v3678 = vunpack.c.l.s4 1983009808
    %v3679 = vunpack.c.0.s8 %v3678
    %v3680 = vlaneseq
    %v3681 = vshrl.u32 %v3680, 7
    %v3682 = vsub.s32 %v3679, %v3681
    %v3683 = vrot.slane %v2908, %v3682
    %v3685 = vunpack.c.l.s4 1983009808
    %v3686 = vunpack.c.0.s8 %v3685
    %v3687 = vlaneseq
    %v3688 = vshrl.u32 %v3687, 7
    %v3689 = vsub.s32 %v3686, %v3688
    %v3690 = vrot.slane %v3676, %v3689
    %v3691 = vcombine.high %v2916, %v700
    %v3693 = vunpack.c.l.s4 1983009808
    %v3694 = vunpack.c.0.s8 %v3693
    %v3695 = vlaneseq
    %v3696 = vshrl.u32 %v3695, 7
    %v3697 = vsub.s32 %v3694, %v3696
    %v3698 = vrot.slane %v2916, %v3697
    %v3700 = vunpack.c.l.s4 1983009808
    %v3701 = vunpack.c.0.s8 %v3700
    %v3702 = vlaneseq
    %v3703 = vshrl.u32 %v3702, 7
    %v3704 = vsub.s32 %v3701, %v3703
    %v3705 = vrot.slane %v3691, %v3704
    %v3706 = vcombine.low %v3683, %v3698
    %v3707 = vcombine.high %v3683, %v3698
    %v3709 = vunpack.c.l.s4 1934713408
    %v3710 = vunpack.c.0.s8 %v3709
    %v3711 = vlaneseq
    %v3712 = vshrl.u32 %v3711, 7
    %v3713 = vsub.s32 %v3710, %v3712
    %v3714 = vrot.slane %v3706, %v3713
    %v3716 = vunpack.c.l.s4 1934713408
    %v3717 = vunpack.c.0.s8 %v3716
    %v3718 = vlaneseq
    %v3719 = vshrl.u32 %v3718, 7
    %v3720 = vsub.s32 %v3717, %v3719
    %v3721 = vrot.slane %v3707, %v3720
    %v3722 = vcombine.low %v3690, %v3705
    %v3723 = vcombine.high %v3690, %v3705
    %v3725 = vunpack.c.l.s4 1934713408
    %v3726 = vunpack.c.0.s8 %v3725
    %v3727 = vlaneseq
    %v3728 = vshrl.u32 %v3727, 7
    %v3729 = vsub.s32 %v3726, %v3728
    %v3730 = vrot.slane %v3722, %v3729
    %v3732 = vunpack.c.l.s4 1934713408
    %v3733 = vunpack.c.0.s8 %v3732
    %v3734 = vlaneseq
    %v3735 = vshrl.u32 %v3734, 7
    %v3736 = vsub.s32 %v3733, %v3735
    %v3737 = vrot.slane %v3723, %v3736
    %v3738 = vcombine.high %v3714, 0
    %v3739 = vcombine.high %v3721, 0
    %v3740 = vcombine.high %v3730, 0
    %v3741 = vcombine.high %v3737, 0
    %v3742 = vcombine.high %v2920, %v697
    %v3744 = vunpack.c.l.s4 1983009808
    %v3745 = vunpack.c.0.s8 %v3744
    %v3746 = vlaneseq
    %v3747 = vshrl.u32 %v3746, 7
    %v3748 = vsub.s32 %v3745, %v3747
    %v3749 = vrot.slane %v2920, %v3748
    %v3751 = vunpack.c.l.s4 1983009808
    %v3752 = vunpack.c.0.s8 %v3751
    %v3753 = vlaneseq
    %v3754 = vshrl.u32 %v3753, 7
    %v3755 = vsub.s32 %v3752, %v3754
    %v3756 = vrot.slane %v3742, %v3755
    %v3757 = vcombine.high %v2928, %v697
    %v3759 = vunpack.c.l.s4 1983009808
    %v3760 = vunpack.c.0.s8 %v3759
    %v3761 = vlaneseq
    %v3762 = vshrl.u32 %v3761, 7
    %v3763 = vsub.s32 %v3760, %v3762
    %v3764 = vrot.slane %v2928, %v3763
    %v3766 = vunpack.c.l.s4 1983009808
    %v3767 = vunpack.c.0.s8 %v3766
    %v3768 = vlaneseq
    %v3769 = vshrl.u32 %v3768, 7
    %v3770 = vsub.s32 %v3767, %v3769
    %v3771 = vrot.slane %v3757, %v3770
    %v3772 = vcombine.low %v3749, %v3764
    %v3773 = vcombine.high %v3749, %v3764
    %v3775 = vunpack.c.l.s4 1934713408
    %v3776 = vunpack.c.0.s8 %v3775
    %v3777 = vlaneseq
    %v3778 = vshrl.u32 %v3777, 7
    %v3779 = vsub.s32 %v3776, %v3778
    %v3780 = vrot.slane %v3772, %v3779
    %v3782 = vunpack.c.l.s4 1934713408
    %v3783 = vunpack.c.0.s8 %v3782
    %v3784 = vlaneseq
    %v3785 = vshrl.u32 %v3784, 7
    %v3786 = vsub.s32 %v3783, %v3785
    %v3787 = vrot.slane %v3773, %v3786
    %v3788 = vcombine.low %v3756, %v3771
    %v3789 = vcombine.high %v3756, %v3771
    %v3791 = vunpack.c.l.s4 1934713408
    %v3792 = vunpack.c.0.s8 %v3791
    %v3793 = vlaneseq
    %v3794 = vshrl.u32 %v3793, 7
    %v3795 = vsub.s32 %v3792, %v3794
    %v3796 = vrot.slane %v3788, %v3795
    %v3798 = vunpack.c.l.s4 1934713408
    %v3799 = vunpack.c.0.s8 %v3798
    %v3800 = vlaneseq
    %v3801 = vshrl.u32 %v3800, 7
    %v3802 = vsub.s32 %v3799, %v3801
    %v3803 = vrot.slane %v3789, %v3802
    %v3804 = vcombine.high %v3780, 0
    %v3805 = vcombine.high %v3787, 0
    %v3806 = vcombine.high %v3796, 0
    %v3807 = vcombine.high %v3803, 0
    %v3808 = vcombine.high %v2924, %v700
    %v3810 = vunpack.c.l.s4 1983009808
    %v3811 = vunpack.c.0.s8 %v3810
    %v3812 = vlaneseq
    %v3813 = vshrl.u32 %v3812, 7
    %v3814 = vsub.s32 %v3811, %v3813
    %v3815 = vrot.slane %v2924, %v3814
    %v3817 = vunpack.c.l.s4 1983009808
    %v3818 = vunpack.c.0.s8 %v3817
    %v3819 = vlaneseq
    %v3820 = vshrl.u32 %v3819, 7
    %v3821 = vsub.s32 %v3818, %v3820
    %v3822 = vrot.slane %v3808, %v3821
    %v3823 = vcombine.high %v2932, %v700
    %v3825 = vunpack.c.l.s4 1983009808
    %v3826 = vunpack.c.0.s8 %v3825
    %v3827 = vlaneseq
    %v3828 = vshrl.u32 %v3827, 7
    %v3829 = vsub.s32 %v3826, %v3828
    %v3830 = vrot.slane %v2932, %v3829
    %v3832 = vunpack.c.l.s4 1983009808
    %v3833 = vunpack.c.0.s8 %v3832
    %v3834 = vlaneseq
    %v3835 = vshrl.u32 %v3834, 7
    %v3836 = vsub.s32 %v3833, %v3835
    %v3837 = vrot.slane %v3823, %v3836
    %v3838 = vcombine.low %v3815, %v3830
    %v3839 = vcombine.high %v3815, %v3830
    %v3841 = vunpack.c.l.s4 1934713408
    %v3842 = vunpack.c.0.s8 %v3841
    %v3843 = vlaneseq
    %v3844 = vshrl.u32 %v3843, 7
    %v3845 = vsub.s32 %v3842, %v3844
    %v3846 = vrot.slane %v3838, %v3845
    %v3848 = vunpack.c.l.s4 1934713408
    %v3849 = vunpack.c.0.s8 %v3848
    %v3850 = vlaneseq
    %v3851 = vshrl.u32 %v3850, 7
    %v3852 = vsub.s32 %v3849, %v3851
    %v3853 = vrot.slane %v3839, %v3852
    %v3854 = vcombine.low %v3822, %v3837
    %v3855 = vcombine.high %v3822, %v3837
    %v3857 = vunpack.c.l.s4 1934713408
    %v3858 = vunpack.c.0.s8 %v3857
    %v3859 = vlaneseq
    %v3860 = vshrl.u32 %v3859, 7
    %v3861 = vsub.s32 %v3858, %v3860
    %v3862 = vrot.slane %v3854, %v3861
    %v3864 = vunpack.c.l.s4 1934713408
    %v3865 = vunpack.c.0.s8 %v3864
    %v3866 = vlaneseq
    %v3867 = vshrl.u32 %v3866, 7
    %v3868 = vsub.s32 %v3865, %v3867
    %v3869 = vrot.slane %v3855, %v3868
    %v3870 = vcombine.high %v3846, 0
    %v3871 = vcombine.high %v3853, 0
    %v3872 = vcombine.high %v3862, 0
    %v3873 = vcombine.high %v3869, 0
    %v3874 = vcombine.high %v2936, %v697
    %v3876 = vunpack.c.l.s4 1983009808
    %v3877 = vunpack.c.0.s8 %v3876
    %v3878 = vlaneseq
    %v3879 = vshrl.u32 %v3878, 7
    %v3880 = vsub.s32 %v3877, %v3879
    %v3881 = vrot.slane %v2936, %v3880
    %v3883 = vunpack.c.l.s4 1983009808
    %v3884 = vunpack.c.0.s8 %v3883
    %v3885 = vlaneseq
    %v3886 = vshrl.u32 %v3885, 7
    %v3887 = vsub.s32 %v3884, %v3886
    %v3888 = vrot.slane %v3874, %v3887
    %v3889 = vcombine.high %v2944, %v697
    %v3891 = vunpack.c.l.s4 1983009808
    %v3892 = vunpack.c.0.s8 %v3891
    %v3893 = vlaneseq
    %v3894 = vshrl.u32 %v3893, 7
    %v3895 = vsub.s32 %v3892, %v3894
    %v3896 = vrot.slane %v2944, %v3895
    %v3898 = vunpack.c.l.s4 1983009808
    %v3899 = vunpack.c.0.s8 %v3898
    %v3900 = vlaneseq
    %v3901 = vshrl.u32 %v3900, 7
    %v3902 = vsub.s32 %v3899, %v3901
    %v3903 = vrot.slane %v3889, %v3902
    %v3904 = vcombine.low %v3881, %v3896
    %v3905 = vcombine.high %v3881, %v3896
    %v3907 = vunpack.c.l.s4 1934713408
    %v3908 = vunpack.c.0.s8 %v3907
    %v3909 = vlaneseq
    %v3910 = vshrl.u32 %v3909, 7
    %v3911 = vsub.s32 %v3908, %v3910
    %v3912 = vrot.slane %v3904, %v3911
    %v3914 = vunpack.c.l.s4 1934713408
    %v3915 = vunpack.c.0.s8 %v3914
    %v3916 = vlaneseq
    %v3917 = vshrl.u32 %v3916, 7
    %v3918 = vsub.s32 %v3915, %v3917
    %v3919 = vrot.slane %v3905, %v3918
    %v3920 = vcombine.low %v3888, %v3903
    %v3921 = vcombine.high %v3888, %v3903
    %v3923 = vunpack.c.l.s4 1934713408
    %v3924 = vunpack.c.0.s8 %v3923
    %v3925 = vlaneseq
    %v3926 = vshrl.u32 %v3925, 7
    %v3927 = vsub.s32 %v3924, %v3926
    %v3928 = vrot.slane %v3920, %v3927
    %v3930 = vunpack.c.l.s4 1934713408
    %v3931 = vunpack.c.0.s8 %v3930
    %v3932 = vlaneseq
    %v3933 = vshrl.u32 %v3932, 7
    %v3934 = vsub.s32 %v3931, %v3933
    %v3935 = vrot.slane %v3921, %v3934
    %v3936 = vcombine.high %v3912, 0
    %v3937 = vcombine.high %v3919, 0
    %v3938 = vcombine.high %v3928, 0
    %v3939 = vcombine.high %v3935, 0
    %v3940 = vcombine.high %v2940, %v700
    %v3942 = vunpack.c.l.s4 1983009808
    %v3943 = vunpack.c.0.s8 %v3942
    %v3944 = vlaneseq
    %v3945 = vshrl.u32 %v3944, 7
    %v3946 = vsub.s32 %v3943, %v3945
    %v3947 = vrot.slane %v2940, %v3946
    %v3949 = vunpack.c.l.s4 1983009808
    %v3950 = vunpack.c.0.s8 %v3949
    %v3951 = vlaneseq
    %v3952 = vshrl.u32 %v3951, 7
    %v3953 = vsub.s32 %v3950, %v3952
    %v3954 = vrot.slane %v3940, %v3953
    %v3955 = vcombine.high %v2948, %v700
    %v3957 = vunpack.c.l.s4 1983009808
    %v3958 = vunpack.c.0.s8 %v3957
    %v3959 = vlaneseq
    %v3960 = vshrl.u32 %v3959, 7
    %v3961 = vsub.s32 %v3958, %v3960
    %v3962 = vrot.slane %v2948, %v3961
    %v3964 = vunpack.c.l.s4 1983009808
    %v3965 = vunpack.c.0.s8 %v3964
    %v3966 = vlaneseq
    %v3967 = vshrl.u32 %v3966, 7
    %v3968 = vsub.s32 %v3965, %v3967
    %v3969 = vrot.slane %v3955, %v3968
    %v3970 = vcombine.low %v3947, %v3962
    %v3971 = vcombine.high %v3947, %v3962
    %v3973 = vunpack.c.l.s4 1934713408
    %v3974 = vunpack.c.0.s8 %v3973
    %v3975 = vlaneseq
    %v3976 = vshrl.u32 %v3975, 7
    %v3977 = vsub.s32 %v3974, %v3976
    %v3978 = vrot.slane %v3970, %v3977
    %v3980 = vunpack.c.l.s4 1934713408
    %v3981 = vunpack.c.0.s8 %v3980
    %v3982 = vlaneseq
    %v3983 = vshrl.u32 %v3982, 7
    %v3984 = vsub.s32 %v3981, %v3983
    %v3985 = vrot.slane %v3971, %v3984
    %v3986 = vcombine.low %v3954, %v3969
    %v3987 = vcombine.high %v3954, %v3969
    %v3989 = vunpack.c.l.s4 1934713408
    %v3990 = vunpack.c.0.s8 %v3989
    %v3991 = vlaneseq
    %v3992 = vshrl.u32 %v3991, 7
    %v3993 = vsub.s32 %v3990, %v3992
    %v3994 = vrot.slane %v3986, %v3993
    %v3996 = vunpack.c.l.s4 1934713408
    %v3997 = vunpack.c.0.s8 %v3996
    %v3998 = vlaneseq
    %v3999 = vshrl.u32 %v3998, 7
    %v4000 = vsub.s32 %v3997, %v3999
    %v4001 = vrot.slane %v3987, %v4000
    %v4002 = vcombine.high %v3978, 0
    %v4003 = vcombine.high %v3985, 0
    %v4004 = vcombine.high %v3994, 0
    %v4005 = vcombine.high %v4001, 0
    %v4006 = vcombine.low %v2988, %v2995
    %v4008 = vunpack.c.l.s4 1983009808
    %v4009 = vunpack.c.0.s8 %v4008
    %v4010 = vlaneseq
    %v4011 = vshrl.u32 %v4010, 7
    %v4012 = vsub.s32 %v4009, %v4011
    %v4013 = vrot.slane %v4006, %v4012
    %v4014 = vcombine.low %v3012, %v3013
    %v4016 = vunpack.c.l.s4 1983009808
    %v4017 = vunpack.c.0.s8 %v4016
    %v4018 = vlaneseq
    %v4019 = vshrl.u32 %v4018, 7
    %v4020 = vsub.s32 %v4017, %v4019
    %v4021 = vrot.slane %v4014, %v4020
    %v4022 = vcombine.low %v3004, %v3011
    %v4024 = vunpack.c.l.s4 1983009808
    %v4025 = vunpack.c.0.s8 %v4024
    %v4026 = vlaneseq
    %v4027 = vshrl.u32 %v4026, 7
    %v4028 = vsub.s32 %v4025, %v4027
    %v4029 = vrot.slane %v4022, %v4028
    %v4030 = vcombine.low %v3014, %v3015
    %v4032 = vunpack.c.l.s4 1983009808
    %v4033 = vunpack.c.0.s8 %v4032
    %v4034 = vlaneseq
    %v4035 = vshrl.u32 %v4034, 7
    %v4036 = vsub.s32 %v4033, %v4035
    %v4037 = vrot.slane %v4030, %v4036
    %v4038 = vcombine.low %v4013, %v4021
    %v4040 = vunpack.c.l.s4 1934713408
    %v4041 = vunpack.c.0.s8 %v4040
    %v4042 = vlaneseq
    %v4043 = vshrl.u32 %v4042, 7
    %v4044 = vsub.s32 %v4041, %v4043
    %v4045 = vrot.slane %v4038, %v4044
    %v4046 = vcombine.low %v4029, %v4037
    %v4048 = vunpack.c.l.s4 1934713408
    %v4049 = vunpack.c.0.s8 %v4048
    %v4050 = vlaneseq
    %v4051 = vshrl.u32 %v4050, 7
    %v4052 = vsub.s32 %v4049, %v4051
    %v4053 = vrot.slane %v4046, %v4052
    %v4054 = vcombine.low %v4045, %v4053
    %v4055 = vcombine.high %v4045, %v4053
    %v4056 = vcombine.low %v3054, %v3061
    %v4058 = vunpack.c.l.s4 1983009808
    %v4059 = vunpack.c.0.s8 %v4058
    %v4060 = vlaneseq
    %v4061 = vshrl.u32 %v4060, 7
    %v4062 = vsub.s32 %v4059, %v4061
    %v4063 = vrot.slane %v4056, %v4062
    %v4064 = vcombine.low %v3078, %v3079
    %v4066 = vunpack.c.l.s4 1983009808
    %v4067 = vunpack.c.0.s8 %v4066
    %v4068 = vlaneseq
    %v4069 = vshrl.u32 %v4068, 7
    %v4070 = vsub.s32 %v4067, %v4069
    %v4071 = vrot.slane %v4064, %v4070
    %v4072 = vcombine.low %v3070, %v3077
    %v4074 = vunpack.c.l.s4 1983009808
    %v4075 = vunpack.c.0.s8 %v4074
    %v4076 = vlaneseq
    %v4077 = vshrl.u32 %v4076, 7
    %v4078 = vsub.s32 %v4075, %v4077
    %v4079 = vrot.slane %v4072, %v4078
    %v4080 = vcombine.low %v3080, %v3081
    %v4082 = vunpack.c.l.s4 1983009808
    %v4083 = vunpack.c.0.s8 %v4082
    %v4084 = vlaneseq
    %v4085 = vshrl.u32 %v4084, 7
    %v4086 = vsub.s32 %v4083, %v4085
    %v4087 = vrot.slane %v4080, %v4086
    %v4088 = vcombine.low %v4063, %v4071
    %v4090 = vunpack.c.l.s4 1934713408
    %v4091 = vunpack.c.0.s8 %v4090
    %v4092 = vlaneseq
    %v4093 = vshrl.u32 %v4092, 7
    %v4094 = vsub.s32 %v4091, %v4093
    %v4095 = vrot.slane %v4088, %v4094
    %v4096 = vcombine.low %v4079, %v4087
    %v4098 = vunpack.c.l.s4 1934713408
    %v4099 = vunpack.c.0.s8 %v4098
    %v4100 = vlaneseq
    %v4101 = vshrl.u32 %v4100, 7
    %v4102 = vsub.s32 %v4099, %v4101
    %v4103 = vrot.slane %v4096, %v4102
    %v4104 = vcombine.low %v4095, %v4103
    %v4105 = vcombine.high %v4095, %v4103
    %v4106 = vcombine.low %v3120, %v3127
    %v4108 = vunpack.c.l.s4 1983009808
    %v4109 = vunpack.c.0.s8 %v4108
    %v4110 = vlaneseq
    %v4111 = vshrl.u32 %v4110, 7
    %v4112 = vsub.s32 %v4109, %v4111
    %v4113 = vrot.slane %v4106, %v4112
    %v4114 = vcombine.low %v3144, %v3145
    %v4116 = vunpack.c.l.s4 1983009808
    %v4117 = vunpack.c.0.s8 %v4116
    %v4118 = vlaneseq
    %v4119 = vshrl.u32 %v4118, 7
    %v4120 = vsub.s32 %v4117, %v4119
    %v4121 = vrot.slane %v4114, %v4120
    %v4122 = vcombine.low %v3136, %v3143
    %v4124 = vunpack.c.l.s4 1983009808
    %v4125 = vunpack.c.0.s8 %v4124
    %v4126 = vlaneseq
    %v4127 = vshrl.u32 %v4126, 7
    %v4128 = vsub.s32 %v4125, %v4127
    %v4129 = vrot.slane %v4122, %v4128
    %v4130 = vcombine.low %v3146, %v3147
    %v4132 = vunpack.c.l.s4 1983009808
    %v4133 = vunpack.c.0.s8 %v4132
    %v4134 = vlaneseq
    %v4135 = vshrl.u32 %v4134, 7
    %v4136 = vsub.s32 %v4133, %v4135
    %v4137 = vrot.slane %v4130, %v4136
    %v4138 = vcombine.low %v4113, %v4121
    %v4140 = vunpack.c.l.s4 1934713408
    %v4141 = vunpack.c.0.s8 %v4140
    %v4142 = vlaneseq
    %v4143 = vshrl.u32 %v4142, 7
    %v4144 = vsub.s32 %v4141, %v4143
    %v4145 = vrot.slane %v4138, %v4144
    %v4146 = vcombine.low %v4129, %v4137
    %v4148 = vunpack.c.l.s4 1934713408
    %v4149 = vunpack.c.0.s8 %v4148
    %v4150 = vlaneseq
    %v4151 = vshrl.u32 %v4150, 7
    %v4152 = vsub.s32 %v4149, %v4151
    %v4153 = vrot.slane %v4146, %v4152
    %v4154 = vcombine.low %v4145, %v4153
    %v4155 = vcombine.high %v4145, %v4153
    %v4156 = vcombine.low %v3186, %v3193
    %v4158 = vunpack.c.l.s4 1983009808
    %v4159 = vunpack.c.0.s8 %v4158
    %v4160 = vlaneseq
    %v4161 = vshrl.u32 %v4160, 7
    %v4162 = vsub.s32 %v4159, %v4161
    %v4163 = vrot.slane %v4156, %v4162
    %v4164 = vcombine.low %v3210, %v3211
    %v4166 = vunpack.c.l.s4 1983009808
    %v4167 = vunpack.c.0.s8 %v4166
    %v4168 = vlaneseq
    %v4169 = vshrl.u32 %v4168, 7
    %v4170 = vsub.s32 %v4167, %v4169
    %v4171 = vrot.slane %v4164, %v4170
    %v4172 = vcombine.low %v3202, %v3209
    %v4174 = vunpack.c.l.s4 1983009808
    %v4175 = vunpack.c.0.s8 %v4174
    %v4176 = vlaneseq
    %v4177 = vshrl.u32 %v4176, 7
    %v4178 = vsub.s32 %v4175, %v4177
    %v4179 = vrot.slane %v4172, %v4178
    %v4180 = vcombine.low %v3212, %v3213
    %v4182 = vunpack.c.l.s4 1983009808
    %v4183 = vunpack.c.0.s8 %v4182
    %v4184 = vlaneseq
    %v4185 = vshrl.u32 %v4184, 7
    %v4186 = vsub.s32 %v4183, %v4185
    %v4187 = vrot.slane %v4180, %v4186
    %v4188 = vcombine.low %v4163, %v4171
    %v4190 = vunpack.c.l.s4 1934713408
    %v4191 = vunpack.c.0.s8 %v4190
    %v4192 = vlaneseq
    %v4193 = vshrl.u32 %v4192, 7
    %v4194 = vsub.s32 %v4191, %v4193
    %v4195 = vrot.slane %v4188, %v4194
    %v4196 = vcombine.low %v4179, %v4187
    %v4198 = vunpack.c.l.s4 1934713408
    %v4199 = vunpack.c.0.s8 %v4198
    %v4200 = vlaneseq
    %v4201 = vshrl.u32 %v4200, 7
    %v4202 = vsub.s32 %v4199, %v4201
    %v4203 = vrot.slane %v4196, %v4202
    %v4204 = vcombine.low %v4195, %v4203
    %v4205 = vcombine.high %v4195, %v4203
    %v4206 = vcombine.low %v3252, %v3259
    %v4208 = vunpack.c.l.s4 1983009808
    %v4209 = vunpack.c.0.s8 %v4208
    %v4210 = vlaneseq
    %v4211 = vshrl.u32 %v4210, 7
    %v4212 = vsub.s32 %v4209, %v4211
    %v4213 = vrot.slane %v4206, %v4212
    %v4214 = vcombine.low %v3276, %v3277
    %v4216 = vunpack.c.l.s4 1983009808
    %v4217 = vunpack.c.0.s8 %v4216
    %v4218 = vlaneseq
    %v4219 = vshrl.u32 %v4218, 7
    %v4220 = vsub.s32 %v4217, %v4219
    %v4221 = vrot.slane %v4214, %v4220
    %v4222 = vcombine.low %v3268, %v3275
    %v4224 = vunpack.c.l.s4 1983009808
    %v4225 = vunpack.c.0.s8 %v4224
    %v4226 = vlaneseq
    %v4227 = vshrl.u32 %v4226, 7
    %v4228 = vsub.s32 %v4225, %v4227
    %v4229 = vrot.slane %v4222, %v4228
    %v4230 = vcombine.low %v3278, %v3279
    %v4232 = vunpack.c.l.s4 1983009808
    %v4233 = vunpack.c.0.s8 %v4232
    %v4234 = vlaneseq
    %v4235 = vshrl.u32 %v4234, 7
    %v4236 = vsub.s32 %v4233, %v4235
    %v4237 = vrot.slane %v4230, %v4236
    %v4238 = vcombine.low %v4213, %v4221
    %v4240 = vunpack.c.l.s4 1934713408
    %v4241 = vunpack.c.0.s8 %v4240
    %v4242 = vlaneseq
    %v4243 = vshrl.u32 %v4242, 7
    %v4244 = vsub.s32 %v4241, %v4243
    %v4245 = vrot.slane %v4238, %v4244
    %v4246 = vcombine.low %v4229, %v4237
    %v4248 = vunpack.c.l.s4 1934713408
    %v4249 = vunpack.c.0.s8 %v4248
    %v4250 = vlaneseq
    %v4251 = vshrl.u32 %v4250, 7
    %v4252 = vsub.s32 %v4249, %v4251
    %v4253 = vrot.slane %v4246, %v4252
    %v4254 = vcombine.low %v4245, %v4253
    %v4255 = vcombine.high %v4245, %v4253
    %v4256 = vcombine.low %v3318, %v3325
    %v4258 = vunpack.c.l.s4 1983009808
    %v4259 = vunpack.c.0.s8 %v4258
    %v4260 = vlaneseq
    %v4261 = vshrl.u32 %v4260, 7
    %v4262 = vsub.s32 %v4259, %v4261
    %v4263 = vrot.slane %v4256, %v4262
    %v4264 = vcombine.low %v3342, %v3343
    %v4266 = vunpack.c.l.s4 1983009808
    %v4267 = vunpack.c.0.s8 %v4266
    %v4268 = vlaneseq
    %v4269 = vshrl.u32 %v4268, 7
    %v4270 = vsub.s32 %v4267, %v4269
    %v4271 = vrot.slane %v4264, %v4270
    %v4272 = vcombine.low %v3334, %v3341
    %v4274 = vunpack.c.l.s4 1983009808
    %v4275 = vunpack.c.0.s8 %v4274
    %v4276 = vlaneseq
    %v4277 = vshrl.u32 %v4276, 7
    %v4278 = vsub.s32 %v4275, %v4277
    %v4279 = vrot.slane %v4272, %v4278
    %v4280 = vcombine.low %v3344, %v3345
    %v4282 = vunpack.c.l.s4 1983009808
    %v4283 = vunpack.c.0.s8 %v4282
    %v4284 = vlaneseq
    %v4285 = vshrl.u32 %v4284, 7
    %v4286 = vsub.s32 %v4283, %v4285
    %v4287 = vrot.slane %v4280, %v4286
    %v4288 = vcombine.low %v4263, %v4271
    %v4290 = vunpack.c.l.s4 1934713408
    %v4291 = vunpack.c.0.s8 %v4290
    %v4292 = vlaneseq
    %v4293 = vshrl.u32 %v4292, 7
    %v4294 = vsub.s32 %v4291, %v4293
    %v4295 = vrot.slane %v4288, %v4294
    %v4296 = vcombine.low %v4279, %v4287
    %v4298 = vunpack.c.l.s4 1934713408
    %v4299 = vunpack.c.0.s8 %v4298
    %v4300 = vlaneseq
    %v4301 = vshrl.u32 %v4300, 7
    %v4302 = vsub.s32 %v4299, %v4301
    %v4303 = vrot.slane %v4296, %v4302
    %v4304 = vcombine.low %v4295, %v4303
    %v4305 = vcombine.high %v4295, %v4303
    %v4306 = vcombine.low %v3384, %v3391
    %v4308 = vunpack.c.l.s4 1983009808
    %v4309 = vunpack.c.0.s8 %v4308
    %v4310 = vlaneseq
    %v4311 = vshrl.u32 %v4310, 7
    %v4312 = vsub.s32 %v4309, %v4311
    %v4313 = vrot.slane %v4306, %v4312
    %v4314 = vcombine.low %v3408, %v3409
    %v4316 = vunpack.c.l.s4 1983009808
    %v4317 = vunpack.c.0.s8 %v4316
    %v4318 = vlaneseq
    %v4319 = vshrl.u32 %v4318, 7
    %v4320 = vsub.s32 %v4317, %v4319
    %v4321 = vrot.slane %v4314, %v4320
    %v4322 = vcombine.low %v3400, %v3407
    %v4324 = vunpack.c.l.s4 1983009808
    %v4325 = vunpack.c.0.s8 %v4324
    %v4326 = vlaneseq
    %v4327 = vshrl.u32 %v4326, 7
    %v4328 = vsub.s32 %v4325, %v4327
    %v4329 = vrot.slane %v4322, %v4328
    %v4330 = vcombine.low %v3410, %v3411
    %v4332 = vunpack.c.l.s4 1983009808
    %v4333 = vunpack.c.0.s8 %v4332
    %v4334 = vlaneseq
    %v4335 = vshrl.u32 %v4334, 7
    %v4336 = vsub.s32 %v4333, %v4335
    %v4337 = vrot.slane %v4330, %v4336
    %v4338 = vcombine.low %v4313, %v4321
    %v4340 = vunpack.c.l.s4 1934713408
    %v4341 = vunpack.c.0.s8 %v4340
    %v4342 = vlaneseq
    %v4343 = vshrl.u32 %v4342, 7
    %v4344 = vsub.s32 %v4341, %v4343
    %v4345 = vrot.slane %v4338, %v4344
    %v4346 = vcombine.low %v4329, %v4337
    %v4348 = vunpack.c.l.s4 1934713408
    %v4349 = vunpack.c.0.s8 %v4348
    %v4350 = vlaneseq
    %v4351 = vshrl.u32 %v4350, 7
    %v4352 = vsub.s32 %v4349, %v4351
    %v4353 = vrot.slane %v4346, %v4352
    %v4354 = vcombine.low %v4345, %v4353
    %v4355 = vcombine.high %v4345, %v4353
    %v4356 = vcombine.low %v3450, %v3457
    %v4358 = vunpack.c.l.s4 1983009808
    %v4359 = vunpack.c.0.s8 %v4358
    %v4360 = vlaneseq
    %v4361 = vshrl.u32 %v4360, 7
    %v4362 = vsub.s32 %v4359, %v4361
    %v4363 = vrot.slane %v4356, %v4362
    %v4364 = vcombine.low %v3474, %v3475
    %v4366 = vunpack.c.l.s4 1983009808
    %v4367 = vunpack.c.0.s8 %v4366
    %v4368 = vlaneseq
    %v4369 = vshrl.u32 %v4368, 7
    %v4370 = vsub.s32 %v4367, %v4369
    %v4371 = vrot.slane %v4364, %v4370
    %v4372 = vcombine.low %v3466, %v3473
    %v4374 = vunpack.c.l.s4 1983009808
    %v4375 = vunpack.c.0.s8 %v4374
    %v4376 = vlaneseq
    %v4377 = vshrl.u32 %v4376, 7
    %v4378 = vsub.s32 %v4375, %v4377
    %v4379 = vrot.slane %v4372, %v4378
    %v4380 = vcombine.low %v3476, %v3477
    %v4382 = vunpack.c.l.s4 1983009808
    %v4383 = vunpack.c.0.s8 %v4382
    %v4384 = vlaneseq
    %v4385 = vshrl.u32 %v4384, 7
    %v4386 = vsub.s32 %v4383, %v4385
    %v4387 = vrot.slane %v4380, %v4386
    %v4388 = vcombine.low %v4363, %v4371
    %v4390 = vunpack.c.l.s4 1934713408
    %v4391 = vunpack.c.0.s8 %v4390
    %v4392 = vlaneseq
    %v4393 = vshrl.u32 %v4392, 7
    %v4394 = vsub.s32 %v4391, %v4393
    %v4395 = vrot.slane %v4388, %v4394
    %v4396 = vcombine.low %v4379, %v4387
    %v4398 = vunpack.c.l.s4 1934713408
    %v4399 = vunpack.c.0.s8 %v4398
    %v4400 = vlaneseq
    %v4401 = vshrl.u32 %v4400, 7
    %v4402 = vsub.s32 %v4399, %v4401
    %v4403 = vrot.slane %v4396, %v4402
    %v4404 = vcombine.low %v4395, %v4403
    %v4405 = vcombine.high %v4395, %v4403
    %v4406 = vcombine.low %v3516, %v3523
    %v4408 = vunpack.c.l.s4 1983009808
    %v4409 = vunpack.c.0.s8 %v4408
    %v4410 = vlaneseq
    %v4411 = vshrl.u32 %v4410, 7
    %v4412 = vsub.s32 %v4409, %v4411
    %v4413 = vrot.slane %v4406, %v4412
    %v4414 = vcombine.low %v3540, %v3541
    %v4416 = vunpack.c.l.s4 1983009808
    %v4417 = vunpack.c.0.s8 %v4416
    %v4418 = vlaneseq
    %v4419 = vshrl.u32 %v4418, 7
    %v4420 = vsub.s32 %v4417, %v4419
    %v4421 = vrot.slane %v4414, %v4420
    %v4422 = vcombine.low %v3532, %v3539
    %v4424 = vunpack.c.l.s4 1983009808
    %v4425 = vunpack.c.0.s8 %v4424
    %v4426 = vlaneseq
    %v4427 = vshrl.u32 %v4426, 7
    %v4428 = vsub.s32 %v4425, %v4427
    %v4429 = vrot.slane %v4422, %v4428
    %v4430 = vcombine.low %v3542, %v3543
    %v4432 = vunpack.c.l.s4 1983009808
    %v4433 = vunpack.c.0.s8 %v4432
    %v4434 = vlaneseq
    %v4435 = vshrl.u32 %v4434, 7
    %v4436 = vsub.s32 %v4433, %v4435
    %v4437 = vrot.slane %v4430, %v4436
    %v4438 = vcombine.low %v4413, %v4421
    %v4440 = vunpack.c.l.s4 1934713408
    %v4441 = vunpack.c.0.s8 %v4440
    %v4442 = vlaneseq
    %v4443 = vshrl.u32 %v4442, 7
    %v4444 = vsub.s32 %v4441, %v4443
    %v4445 = vrot.slane %v4438, %v4444
    %v4446 = vcombine.low %v4429, %v4437
    %v4448 = vunpack.c.l.s4 1934713408
    %v4449 = vunpack.c.0.s8 %v4448
    %v4450 = vlaneseq
    %v4451 = vshrl.u32 %v4450, 7
    %v4452 = vsub.s32 %v4449, %v4451
    %v4453 = vrot.slane %v4446, %v4452
    %v4454 = vcombine.low %v4445, %v4453
    %v4455 = vcombine.high %v4445, %v4453
    %v4456 = vcombine.low %v3582, %v3589
    %v4458 = vunpack.c.l.s4 1983009808
    %v4459 = vunpack.c.0.s8 %v4458
    %v4460 = vlaneseq
    %v4461 = vshrl.u32 %v4460, 7
    %v4462 = vsub.s32 %v4459, %v4461
    %v4463 = vrot.slane %v4456, %v4462
    %v4464 = vcombine.low %v3606, %v3607
    %v4466 = vunpack.c.l.s4 1983009808
    %v4467 = vunpack.c.0.s8 %v4466
    %v4468 = vlaneseq
    %v4469 = vshrl.u32 %v4468, 7
    %v4470 = vsub.s32 %v4467, %v4469
    %v4471 = vrot.slane %v4464, %v4470
    %v4472 = vcombine.low %v3598, %v3605
    %v4474 = vunpack.c.l.s4 1983009808
    %v4475 = vunpack.c.0.s8 %v4474
    %v4476 = vlaneseq
    %v4477 = vshrl.u32 %v4476, 7
    %v4478 = vsub.s32 %v4475, %v4477
    %v4479 = vrot.slane %v4472, %v4478
    %v4480 = vcombine.low %v3608, %v3609
    %v4482 = vunpack.c.l.s4 1983009808
    %v4483 = vunpack.c.0.s8 %v4482
    %v4484 = vlaneseq
    %v4485 = vshrl.u32 %v4484, 7
    %v4486 = vsub.s32 %v4483, %v4485
    %v4487 = vrot.slane %v4480, %v4486
    %v4488 = vcombine.low %v4463, %v4471
    %v4490 = vunpack.c.l.s4 1934713408
    %v4491 = vunpack.c.0.s8 %v4490
    %v4492 = vlaneseq
    %v4493 = vshrl.u32 %v4492, 7
    %v4494 = vsub.s32 %v4491, %v4493
    %v4495 = vrot.slane %v4488, %v4494
    %v4496 = vcombine.low %v4479, %v4487
    %v4498 = vunpack.c.l.s4 1934713408
    %v4499 = vunpack.c.0.s8 %v4498
    %v4500 = vlaneseq
    %v4501 = vshrl.u32 %v4500, 7
    %v4502 = vsub.s32 %v4499, %v4501
    %v4503 = vrot.slane %v4496, %v4502
    %v4504 = vcombine.low %v4495, %v4503
    %v4505 = vcombine.high %v4495, %v4503
    %v4506 = vcombine.low %v3648, %v3655
    %v4508 = vunpack.c.l.s4 1983009808
    %v4509 = vunpack.c.0.s8 %v4508
    %v4510 = vlaneseq
    %v4511 = vshrl.u32 %v4510, 7
    %v4512 = vsub.s32 %v4509, %v4511
    %v4513 = vrot.slane %v4506, %v4512
    %v4514 = vcombine.low %v3672, %v3673
    %v4516 = vunpack.c.l.s4 1983009808
    %v4517 = vunpack.c.0.s8 %v4516
    %v4518 = vlaneseq
    %v4519 = vshrl.u32 %v4518, 7
    %v4520 = vsub.s32 %v4517, %v4519
    %v4521 = vrot.slane %v4514, %v4520
    %v4522 = vcombine.low %v3664, %v3671
    %v4524 = vunpack.c.l.s4 1983009808
    %v4525 = vunpack.c.0.s8 %v4524
    %v4526 = vlaneseq
    %v4527 = vshrl.u32 %v4526, 7
    %v4528 = vsub.s32 %v4525, %v4527
    %v4529 = vrot.slane %v4522, %v4528
    %v4530 = vcombine.low %v3674, %v3675
    %v4532 = vunpack.c.l.s4 1983009808
    %v4533 = vunpack.c.0.s8 %v4532
    %v4534 = vlaneseq
    %v4535 = vshrl.u32 %v4534, 7
    %v4536 = vsub.s32 %v4533, %v4535
    %v4537 = vrot.slane %v4530, %v4536
    %v4538 = vcombine.low %v4513, %v4521
    %v4540 = vunpack.c.l.s4 1934713408
    %v4541 = vunpack.c.0.s8 %v4540
    %v4542 = vlaneseq
    %v4543 = vshrl.u32 %v4542, 7
    %v4544 = vsub.s32 %v4541, %v4543
    %v4545 = vrot.slane %v4538, %v4544
    %v4546 = vcombine.low %v4529, %v4537
    %v4548 = vunpack.c.l.s4 1934713408
    %v4549 = vunpack.c.0.s8 %v4548
    %v4550 = vlaneseq
    %v4551 = vshrl.u32 %v4550, 7
    %v4552 = vsub.s32 %v4549, %v4551
    %v4553 = vrot.slane %v4546, %v4552
    %v4554 = vcombine.low %v4545, %v4553
    %v4555 = vcombine.high %v4545, %v4553
    %v4556 = vcombine.low %v3714, %v3721
    %v4558 = vunpack.c.l.s4 1983009808
    %v4559 = vunpack.c.0.s8 %v4558
    %v4560 = vlaneseq
    %v4561 = vshrl.u32 %v4560, 7
    %v4562 = vsub.s32 %v4559, %v4561
    %v4563 = vrot.slane %v4556, %v4562
    %v4564 = vcombine.low %v3738, %v3739
    %v4566 = vunpack.c.l.s4 1983009808
    %v4567 = vunpack.c.0.s8 %v4566
    %v4568 = vlaneseq
    %v4569 = vshrl.u32 %v4568, 7
    %v4570 = vsub.s32 %v4567, %v4569
    %v4571 = vrot.slane %v4564, %v4570
    %v4572 = vcombine.low %v3730, %v3737
    %v4574 = vunpack.c.l.s4 1983009808
    %v4575 = vunpack.c.0.s8 %v4574
    %v4576 = vlaneseq
    %v4577 = vshrl.u32 %v4576, 7
    %v4578 = vsub.s32 %v4575, %v4577
    %v4579 = vrot.slane %v4572, %v4578
    %v4580 = vcombine.low %v3740, %v3741
    %v4582 = vunpack.c.l.s4 1983009808
    %v4583 = vunpack.c.0.s8 %v4582
    %v4584 = vlaneseq
    %v4585 = vshrl.u32 %v4584, 7
    %v4586 = vsub.s32 %v4583, %v4585
    %v4587 = vrot.slane %v4580, %v4586
    %v4588 = vcombine.low %v4563, %v4571
    %v4590 = vunpack.c.l.s4 1934713408
    %v4591 = vunpack.c.0.s8 %v4590
    %v4592 = vlaneseq
    %v4593 = vshrl.u32 %v4592, 7
    %v4594 = vsub.s32 %v4591, %v4593
    %v4595 = vrot.slane %v4588, %v4594
    %v4596 = vcombine.low %v4579, %v4587
    %v4598 = vunpack.c.l.s4 1934713408
    %v4599 = vunpack.c.0.s8 %v4598
    %v4600 = vlaneseq
    %v4601 = vshrl.u32 %v4600, 7
    %v4602 = vsub.s32 %v4599, %v4601
    %v4603 = vrot.slane %v4596, %v4602
    %v4604 = vcombine.low %v4595, %v4603
    %v4605 = vcombine.high %v4595, %v4603
    %v4606 = vcombine.low %v3780, %v3787
    %v4608 = vunpack.c.l.s4 1983009808
    %v4609 = vunpack.c.0.s8 %v4608
    %v4610 = vlaneseq
    %v4611 = vshrl.u32 %v4610, 7
    %v4612 = vsub.s32 %v4609, %v4611
    %v4613 = vrot.slane %v4606, %v4612
    %v4614 = vcombine.low %v3804, %v3805
    %v4616 = vunpack.c.l.s4 1983009808
    %v4617 = vunpack.c.0.s8 %v4616
    %v4618 = vlaneseq
    %v4619 = vshrl.u32 %v4618, 7
    %v4620 = vsub.s32 %v4617, %v4619
    %v4621 = vrot.slane %v4614, %v4620
    %v4622 = vcombine.low %v3796, %v3803
    %v4624 = vunpack.c.l.s4 1983009808
    %v4625 = vunpack.c.0.s8 %v4624
    %v4626 = vlaneseq
    %v4627 = vshrl.u32 %v4626, 7
    %v4628 = vsub.s32 %v4625, %v4627
    %v4629 = vrot.slane %v4622, %v4628
    %v4630 = vcombine.low %v3806, %v3807
    %v4632 = vunpack.c.l.s4 1983009808
    %v4633 = vunpack.c.0.s8 %v4632
    %v4634 = vlaneseq
    %v4635 = vshrl.u32 %v4634, 7
    %v4636 = vsub.s32 %v4633, %v4635
    %v4637 = vrot.slane %v4630, %v4636
    %v4638 = vcombine.low %v4613, %v4621
    %v4640 = vunpack.c.l.s4 1934713408
    %v4641 = vunpack.c.0.s8 %v4640
    %v4642 = vlaneseq
    %v4643 = vshrl.u32 %v4642, 7
    %v4644 = vsub.s32 %v4641, %v4643
    %v4645 = vrot.slane %v4638, %v4644
    %v4646 = vcombine.low %v4629, %v4637
    %v4648 = vunpack.c.l.s4 1934713408
    %v4649 = vunpack.c.0.s8 %v4648
    %v4650 = vlaneseq
    %v4651 = vshrl.u32 %v4650, 7
    %v4652 = vsub.s32 %v4649, %v4651
    %v4653 = vrot.slane %v4646, %v4652
    %v4654 = vcombine.low %v4645, %v4653
    %v4655 = vcombine.high %v4645, %v4653
    %v4656 = vcombine.low %v3846, %v3853
    %v4658 = vunpack.c.l.s4 1983009808
    %v4659 = vunpack.c.0.s8 %v4658
    %v4660 = vlaneseq
    %v4661 = vshrl.u32 %v4660, 7
    %v4662 = vsub.s32 %v4659, %v4661
    %v4663 = vrot.slane %v4656, %v4662
    %v4664 = vcombine.low %v3870, %v3871
    %v4666 = vunpack.c.l.s4 1983009808
    %v4667 = vunpack.c.0.s8 %v4666
    %v4668 = vlaneseq
    %v4669 = vshrl.u32 %v4668, 7
    %v4670 = vsub.s32 %v4667, %v4669
    %v4671 = vrot.slane %v4664, %v4670
    %v4672 = vcombine.low %v3862, %v3869
    %v4674 = vunpack.c.l.s4 1983009808
    %v4675 = vunpack.c.0.s8 %v4674
    %v4676 = vlaneseq
    %v4677 = vshrl.u32 %v4676, 7
    %v4678 = vsub.s32 %v4675, %v4677
    %v4679 = vrot.slane %v4672, %v4678
    %v4680 = vcombine.low %v3872, %v3873
    %v4682 = vunpack.c.l.s4 1983009808
    %v4683 = vunpack.c.0.s8 %v4682
    %v4684 = vlaneseq
    %v4685 = vshrl.u32 %v4684, 7
    %v4686 = vsub.s32 %v4683, %v4685
    %v4687 = vrot.slane %v4680, %v4686
    %v4688 = vcombine.low %v4663, %v4671
    %v4690 = vunpack.c.l.s4 1934713408
    %v4691 = vunpack.c.0.s8 %v4690
    %v4692 = vlaneseq
    %v4693 = vshrl.u32 %v4692, 7
    %v4694 = vsub.s32 %v4691, %v4693
    %v4695 = vrot.slane %v4688, %v4694
    %v4696 = vcombine.low %v4679, %v4687
    %v4698 = vunpack.c.l.s4 1934713408
    %v4699 = vunpack.c.0.s8 %v4698
    %v4700 = vlaneseq
    %v4701 = vshrl.u32 %v4700, 7
    %v4702 = vsub.s32 %v4699, %v4701
    %v4703 = vrot.slane %v4696, %v4702
    %v4704 = vcombine.low %v4695, %v4703
    %v4705 = vcombine.high %v4695, %v4703
    %v4706 = vcombine.low %v3912, %v3919
    %v4708 = vunpack.c.l.s4 1983009808
    %v4709 = vunpack.c.0.s8 %v4708
    %v4710 = vlaneseq
    %v4711 = vshrl.u32 %v4710, 7
    %v4712 = vsub.s32 %v4709, %v4711
    %v4713 = vrot.slane %v4706, %v4712
    %v4714 = vcombine.low %v3936, %v3937
    %v4716 = vunpack.c.l.s4 1983009808
    %v4717 = vunpack.c.0.s8 %v4716
    %v4718 = vlaneseq
    %v4719 = vshrl.u32 %v4718, 7
    %v4720 = vsub.s32 %v4717, %v4719
    %v4721 = vrot.slane %v4714, %v4720
    %v4722 = vcombine.low %v3928, %v3935
    %v4724 = vunpack.c.l.s4 1983009808
    %v4725 = vunpack.c.0.s8 %v4724
    %v4726 = vlaneseq
    %v4727 = vshrl.u32 %v4726, 7
    %v4728 = vsub.s32 %v4725, %v4727
    %v4729 = vrot.slane %v4722, %v4728
    %v4730 = vcombine.low %v3938, %v3939
    %v4732 = vunpack.c.l.s4 1983009808
    %v4733 = vunpack.c.0.s8 %v4732
    %v4734 = vlaneseq
    %v4735 = vshrl.u32 %v4734, 7
    %v4736 = vsub.s32 %v4733, %v4735
    %v4737 = vrot.slane %v4730, %v4736
    %v4738 = vcombine.low %v4713, %v4721
    %v4740 = vunpack.c.l.s4 1934713408
    %v4741 = vunpack.c.0.s8 %v4740
    %v4742 = vlaneseq
    %v4743 = vshrl.u32 %v4742, 7
    %v4744 = vsub.s32 %v4741, %v4743
    %v4745 = vrot.slane %v4738, %v4744
    %v4746 = vcombine.low %v4729, %v4737
    %v4748 = vunpack.c.l.s4 1934713408
    %v4749 = vunpack.c.0.s8 %v4748
    %v4750 = vlaneseq
    %v4751 = vshrl.u32 %v4750, 7
    %v4752 = vsub.s32 %v4749, %v4751
    %v4753 = vrot.slane %v4746, %v4752
    %v4754 = vcombine.low %v4745, %v4753
    %v4755 = vcombine.high %v4745, %v4753
    %v4756 = vcombine.low %v3978, %v3985
    %v4758 = vunpack.c.l.s4 1983009808
    %v4759 = vunpack.c.0.s8 %v4758
    %v4760 = vlaneseq
    %v4761 = vshrl.u32 %v4760, 7
    %v4762 = vsub.s32 %v4759, %v4761
    %v4763 = vrot.slane %v4756, %v4762
    %v4764 = vcombine.low %v4002, %v4003
    %v4766 = vunpack.c.l.s4 1983009808
    %v4767 = vunpack.c.0.s8 %v4766
    %v4768 = vlaneseq
    %v4769 = vshrl.u32 %v4768, 7
    %v4770 = vsub.s32 %v4767, %v4769
    %v4771 = vrot.slane %v4764, %v4770
    %v4772 = vcombine.low %v3994, %v4001
    %v4774 = vunpack.c.l.s4 1983009808
    %v4775 = vunpack.c.0.s8 %v4774
    %v4776 = vlaneseq
    %v4777 = vshrl.u32 %v4776, 7
    %v4778 = vsub.s32 %v4775, %v4777
    %v4779 = vrot.slane %v4772, %v4778
    %v4780 = vcombine.low %v4004, %v4005
    %v4782 = vunpack.c.l.s4 1983009808
    %v4783 = vunpack.c.0.s8 %v4782
    %v4784 = vlaneseq
    %v4785 = vshrl.u32 %v4784, 7
    %v4786 = vsub.s32 %v4783, %v4785
    %v4787 = vrot.slane %v4780, %v4786
    %v4788 = vcombine.low %v4763, %v4771
    %v4790 = vunpack.c.l.s4 1934713408
    %v4791 = vunpack.c.0.s8 %v4790
    %v4792 = vlaneseq
    %v4793 = vshrl.u32 %v4792, 7
    %v4794 = vsub.s32 %v4791, %v4793
    %v4795 = vrot.slane %v4788, %v4794
    %v4796 = vcombine.low %v4779, %v4787
    %v4798 = vunpack.c.l.s4 1934713408
    %v4799 = vunpack.c.0.s8 %v4798
    %v4800 = vlaneseq
    %v4801 = vshrl.u32 %v4800, 7
    %v4802 = vsub.s32 %v4799, %v4801
    %v4803 = vrot.slane %v4796, %v4802
    %v4804 = vcombine.low %v4795, %v4803
    %v4805 = vcombine.high %v4795, %v4803
    %v4808 = vpack.i.b16 %v4104, %v4054
    %v4809 = vshrl.u32 %v4054, 16
    %v4810 = vshrl.u32 %v4104, 16
    %v4811 = vpack.i.b16 %v4810, %v4809
    %v4814 = vpack.i.b16 %v4105, %v4055
    %v4815 = vshrl.u32 %v4055, 16
    %v4816 = vshrl.u32 %v4105, 16
    %v4817 = vpack.i.b16 %v4816, %v4815
    %v4820 = vpack.i.b16 %v4204, %v4154
    %v4821 = vshrl.u32 %v4154, 16
    %v4822 = vshrl.u32 %v4204, 16
    %v4823 = vpack.i.b16 %v4822, %v4821
    %v4826 = vpack.i.b16 %v4205, %v4155
    %v4827 = vshrl.u32 %v4155, 16
    %v4828 = vshrl.u32 %v4205, 16
    %v4829 = vpack.i.b16 %v4828, %v4827
    %v4832 = vpack.i.b16 %v4304, %v4254
    %v4833 = vshrl.u32 %v4254, 16
    %v4834 = vshrl.u32 %v4304, 16
    %v4835 = vpack.i.b16 %v4834, %v4833
    %v4838 = vpack.i.b16 %v4305, %v4255
    %v4839 = vshrl.u32 %v4255, 16
    %v4840 = vshrl.u32 %v4305, 16
    %v4841 = vpack.i.b16 %v4840, %v4839
    %v4844 = vpack.i.b16 %v4404, %v4354
    %v4845 = vshrl.u32 %v4354, 16
    %v4846 = vshrl.u32 %v4404, 16
    %v4847 = vpack.i.b16 %v4846, %v4845
    %v4850 = vpack.i.b16 %v4405, %v4355
    %v4851 = vshrl.u32 %v4355, 16
    %v4852 = vshrl.u32 %v4405, 16
    %v4853 = vpack.i.b16 %v4852, %v4851
    %v4856 = vpack.i.b16 %v4504, %v4454
    %v4857 = vshrl.u32 %v4454, 16
    %v4858 = vshrl.u32 %v4504, 16
    %v4859 = vpack.i.b16 %v4858, %v4857
    %v4862 = vpack.i.b16 %v4505, %v4455
    %v4863 = vshrl.u32 %v4455, 16
    %v4864 = vshrl.u32 %v4505, 16
    %v4865 = vpack.i.b16 %v4864, %v4863
    %v4868 = vpack.i.b16 %v4604, %v4554
    %v4869 = vshrl.u32 %v4554, 16
    %v4870 = vshrl.u32 %v4604, 16
    %v4871 = vpack.i.b16 %v4870, %v4869
    %v4874 = vpack.i.b16 %v4605, %v4555
    %v4875 = vshrl.u32 %v4555, 16
    %v4876 = vshrl.u32 %v4605, 16
    %v4877 = vpack.i.b16 %v4876, %v4875
    %v4880 = vpack.i.b16 %v4704, %v4654
    %v4881 = vshrl.u32 %v4654, 16
    %v4882 = vshrl.u32 %v4704, 16
    %v4883 = vpack.i.b16 %v4882, %v4881
    %v4886 = vpack.i.b16 %v4705, %v4655
    %v4887 = vshrl.u32 %v4655, 16
    %v4888 = vshrl.u32 %v4705, 16
    %v4889 = vpack.i.b16 %v4888, %v4887
    %v4892 = vpack.i.b16 %v4804, %v4754
    %v4893 = vshrl.u32 %v4754, 16
    %v4894 = vshrl.u32 %v4804, 16
    %v4895 = vpack.i.b16 %v4894, %v4893
    %v4898 = vpack.i.b16 %v4805, %v4755
    %v4899 = vshrl.u32 %v4755, 16
    %v4900 = vshrl.u32 %v4805, 16
    %v4901 = vpack.i.b16 %v4900, %v4899
    %4910 = vrot.lane.b32.xlu0 %v616, 96
    %v4911 = vpop.permute.xlu0 %4910
    %4912 = vrot.lane.b32.xlu0 %v617, 96
    %v4913 = vpop.permute.xlu0 %4912
    %4914 = vrot.lane.b32.xlu0 %v618, 96
    %v4915 = vpop.permute.xlu0 %4914
    %4916 = vrot.lane.b32.xlu0 %v619, 96
    %v4917 = vpop.permute.xlu0 %4916
    %4918 = vrot.lane.b32.xlu0 %v620, 96
    %v4919 = vpop.permute.xlu0 %4918
    %4920 = vrot.lane.b32.xlu0 %v621, 96
    %v4921 = vpop.permute.xlu0 %4920
    %4922 = vrot.lane.b32.xlu0 %v622, 96
    %v4923 = vpop.permute.xlu0 %4922
    %4924 = vrot.lane.b32.xlu0 %v623, 96
    %v4925 = vpop.permute.xlu0 %4924
    %4926 = vrot.lane.b32.xlu0 %v616, 64
    %v4927 = vpop.permute.xlu0 %4926
    %4928 = vrot.lane.b32.xlu0 %v617, 64
    %v4929 = vpop.permute.xlu0 %4928
    %4930 = vrot.lane.b32.xlu0 %v618, 64
    %v4931 = vpop.permute.xlu0 %4930
    %4932 = vrot.lane.b32.xlu0 %v619, 64
    %v4933 = vpop.permute.xlu0 %4932
    %4934 = vrot.lane.b32.xlu0 %v620, 64
    %v4935 = vpop.permute.xlu0 %4934
    %4936 = vrot.lane.b32.xlu0 %v621, 64
    %v4937 = vpop.permute.xlu0 %4936
    %4938 = vrot.lane.b32.xlu0 %v622, 64
    %v4939 = vpop.permute.xlu0 %4938
    %4940 = vrot.lane.b32.xlu0 %v623, 64
    %v4941 = vpop.permute.xlu0 %4940
    %4942 = vrot.lane.b32.xlu0 %v616, 32
    %v4943 = vpop.permute.xlu0 %4942
    %4944 = vrot.lane.b32.xlu0 %v617, 32
    %v4945 = vpop.permute.xlu0 %4944
    %4946 = vrot.lane.b32.xlu0 %v618, 32
    %v4947 = vpop.permute.xlu0 %4946
    %4948 = vrot.lane.b32.xlu0 %v619, 32
    %v4949 = vpop.permute.xlu0 %4948
    %4950 = vrot.lane.b32.xlu0 %v620, 32
    %v4951 = vpop.permute.xlu0 %4950
    %4952 = vrot.lane.b32.xlu0 %v621, 32
    %v4953 = vpop.permute.xlu0 %4952
    %4954 = vrot.lane.b32.xlu0 %v622, 32
    %v4955 = vpop.permute.xlu0 %4954
    %4956 = vrot.lane.b32.xlu0 %v623, 32
    %v4957 = vpop.permute.xlu0 %4956
    %v4960 = vpack.i.b16 %v4911, %v616
    %v4962 = vshrl.u32 %v616, 16
    %v4963 = vshrl.u32 %v4911, 16
    %v4964 = vpack.i.b16 %v4963, %v4962
    %v4968 = vpack.i.b16 %v4943, %v4927
    %v4970 = vshrl.u32 %v4927, 16
    %v4971 = vshrl.u32 %v4943, 16
    %v4972 = vpack.i.b16 %v4971, %v4970
    %v4976 = vpack.i.b16 %v4913, %v617
    %v4978 = vshrl.u32 %v617, 16
    %v4979 = vshrl.u32 %v4913, 16
    %v4980 = vpack.i.b16 %v4979, %v4978
    %v4984 = vpack.i.b16 %v4945, %v4929
    %v4986 = vshrl.u32 %v4929, 16
    %v4987 = vshrl.u32 %v4945, 16
    %v4988 = vpack.i.b16 %v4987, %v4986
    %v4992 = vpack.i.b16 %v4915, %v618
    %v4994 = vshrl.u32 %v618, 16
    %v4995 = vshrl.u32 %v4915, 16
    %v4996 = vpack.i.b16 %v4995, %v4994
    %v5000 = vpack.i.b16 %v4947, %v4931
    %v5002 = vshrl.u32 %v4931, 16
    %v5003 = vshrl.u32 %v4947, 16
    %v5004 = vpack.i.b16 %v5003, %v5002
    %v5008 = vpack.i.b16 %v4917, %v619
    %v5010 = vshrl.u32 %v619, 16
    %v5011 = vshrl.u32 %v4917, 16
    %v5012 = vpack.i.b16 %v5011, %v5010
    %v5016 = vpack.i.b16 %v4949, %v4933
    %v5018 = vshrl.u32 %v4933, 16
    %v5019 = vshrl.u32 %v4949, 16
    %v5020 = vpack.i.b16 %v5019, %v5018
    %v5024 = vpack.i.b16 %v4919, %v620
    %v5026 = vshrl.u32 %v620, 16
    %v5027 = vshrl.u32 %v4919, 16
    %v5028 = vpack.i.b16 %v5027, %v5026
    %v5032 = vpack.i.b16 %v4951, %v4935
    %v5034 = vshrl.u32 %v4935, 16
    %v5035 = vshrl.u32 %v4951, 16
    %v5036 = vpack.i.b16 %v5035, %v5034
    %v5040 = vpack.i.b16 %v4921, %v621
    %v5042 = vshrl.u32 %v621, 16
    %v5043 = vshrl.u32 %v4921, 16
    %v5044 = vpack.i.b16 %v5043, %v5042
    %v5048 = vpack.i.b16 %v4953, %v4937
    %v5050 = vshrl.u32 %v4937, 16
    %v5051 = vshrl.u32 %v4953, 16
    %v5052 = vpack.i.b16 %v5051, %v5050
    %v5056 = vpack.i.b16 %v4923, %v622
    %v5058 = vshrl.u32 %v622, 16
    %v5059 = vshrl.u32 %v4923, 16
    %v5060 = vpack.i.b16 %v5059, %v5058
    %v5064 = vpack.i.b16 %v4955, %v4939
    %v5066 = vshrl.u32 %v4939, 16
    %v5067 = vshrl.u32 %v4955, 16
    %v5068 = vpack.i.b16 %v5067, %v5066
    %v5072 = vpack.i.b16 %v4925, %v623
    %v5074 = vshrl.u32 %v623, 16
    %v5075 = vshrl.u32 %v4925, 16
    %v5076 = vpack.i.b16 %v5075, %v5074
    %v5080 = vpack.i.b16 %v4957, %v4941
    %v5082 = vshrl.u32 %v4941, 16
    %v5083 = vshrl.u32 %v4957, 16
    %v5084 = vpack.i.b16 %v5083, %v5082
    %v5086 = vcombine.high %v4960, %v697
    %v5088 = vunpack.c.l.s4 1983009808
    %v5089 = vunpack.c.0.s8 %v5088
    %v5090 = vlaneseq
    %v5091 = vshrl.u32 %v5090, 7
    %v5092 = vsub.s32 %v5089, %v5091
    %v5093 = vrot.slane %v4960, %v5092
    %v5095 = vunpack.c.l.s4 1983009808
    %v5096 = vunpack.c.0.s8 %v5095
    %v5097 = vlaneseq
    %v5098 = vshrl.u32 %v5097, 7
    %v5099 = vsub.s32 %v5096, %v5098
    %v5100 = vrot.slane %v5086, %v5099
    %v5101 = vcombine.high %v4968, %v697
    %v5103 = vunpack.c.l.s4 1983009808
    %v5104 = vunpack.c.0.s8 %v5103
    %v5105 = vlaneseq
    %v5106 = vshrl.u32 %v5105, 7
    %v5107 = vsub.s32 %v5104, %v5106
    %v5108 = vrot.slane %v4968, %v5107
    %v5110 = vunpack.c.l.s4 1983009808
    %v5111 = vunpack.c.0.s8 %v5110
    %v5112 = vlaneseq
    %v5113 = vshrl.u32 %v5112, 7
    %v5114 = vsub.s32 %v5111, %v5113
    %v5115 = vrot.slane %v5101, %v5114
    %v5116 = vcombine.low %v5093, %v5108
    %v5117 = vcombine.high %v5093, %v5108
    %v5119 = vunpack.c.l.s4 1934713408
    %v5120 = vunpack.c.0.s8 %v5119
    %v5121 = vlaneseq
    %v5122 = vshrl.u32 %v5121, 7
    %v5123 = vsub.s32 %v5120, %v5122
    %v5124 = vrot.slane %v5116, %v5123
    %v5126 = vunpack.c.l.s4 1934713408
    %v5127 = vunpack.c.0.s8 %v5126
    %v5128 = vlaneseq
    %v5129 = vshrl.u32 %v5128, 7
    %v5130 = vsub.s32 %v5127, %v5129
    %v5131 = vrot.slane %v5117, %v5130
    %v5132 = vcombine.low %v5100, %v5115
    %v5133 = vcombine.high %v5100, %v5115
    %v5135 = vunpack.c.l.s4 1934713408
    %v5136 = vunpack.c.0.s8 %v5135
    %v5137 = vlaneseq
    %v5138 = vshrl.u32 %v5137, 7
    %v5139 = vsub.s32 %v5136, %v5138
    %v5140 = vrot.slane %v5132, %v5139
    %v5142 = vunpack.c.l.s4 1934713408
    %v5143 = vunpack.c.0.s8 %v5142
    %v5144 = vlaneseq
    %v5145 = vshrl.u32 %v5144, 7
    %v5146 = vsub.s32 %v5143, %v5145
    %v5147 = vrot.slane %v5133, %v5146
    %v5148 = vcombine.high %v5124, 0
    %v5149 = vcombine.high %v5131, 0
    %v5150 = vcombine.high %v5140, 0
    %v5151 = vcombine.high %v5147, 0
    %v5152 = vcombine.high %v4964, %v700
    %v5154 = vunpack.c.l.s4 1983009808
    %v5155 = vunpack.c.0.s8 %v5154
    %v5156 = vlaneseq
    %v5157 = vshrl.u32 %v5156, 7
    %v5158 = vsub.s32 %v5155, %v5157
    %v5159 = vrot.slane %v4964, %v5158
    %v5161 = vunpack.c.l.s4 1983009808
    %v5162 = vunpack.c.0.s8 %v5161
    %v5163 = vlaneseq
    %v5164 = vshrl.u32 %v5163, 7
    %v5165 = vsub.s32 %v5162, %v5164
    %v5166 = vrot.slane %v5152, %v5165
    %v5167 = vcombine.high %v4972, %v700
    %v5169 = vunpack.c.l.s4 1983009808
    %v5170 = vunpack.c.0.s8 %v5169
    %v5171 = vlaneseq
    %v5172 = vshrl.u32 %v5171, 7
    %v5173 = vsub.s32 %v5170, %v5172
    %v5174 = vrot.slane %v4972, %v5173
    %v5176 = vunpack.c.l.s4 1983009808
    %v5177 = vunpack.c.0.s8 %v5176
    %v5178 = vlaneseq
    %v5179 = vshrl.u32 %v5178, 7
    %v5180 = vsub.s32 %v5177, %v5179
    %v5181 = vrot.slane %v5167, %v5180
    %v5182 = vcombine.low %v5159, %v5174
    %v5183 = vcombine.high %v5159, %v5174
    %v5185 = vunpack.c.l.s4 1934713408
    %v5186 = vunpack.c.0.s8 %v5185
    %v5187 = vlaneseq
    %v5188 = vshrl.u32 %v5187, 7
    %v5189 = vsub.s32 %v5186, %v5188
    %v5190 = vrot.slane %v5182, %v5189
    %v5192 = vunpack.c.l.s4 1934713408
    %v5193 = vunpack.c.0.s8 %v5192
    %v5194 = vlaneseq
    %v5195 = vshrl.u32 %v5194, 7
    %v5196 = vsub.s32 %v5193, %v5195
    %v5197 = vrot.slane %v5183, %v5196
    %v5198 = vcombine.low %v5166, %v5181
    %v5199 = vcombine.high %v5166, %v5181
    %v5201 = vunpack.c.l.s4 1934713408
    %v5202 = vunpack.c.0.s8 %v5201
    %v5203 = vlaneseq
    %v5204 = vshrl.u32 %v5203, 7
    %v5205 = vsub.s32 %v5202, %v5204
    %v5206 = vrot.slane %v5198, %v5205
    %v5208 = vunpack.c.l.s4 1934713408
    %v5209 = vunpack.c.0.s8 %v5208
    %v5210 = vlaneseq
    %v5211 = vshrl.u32 %v5210, 7
    %v5212 = vsub.s32 %v5209, %v5211
    %v5213 = vrot.slane %v5199, %v5212
    %v5214 = vcombine.high %v5190, 0
    %v5215 = vcombine.high %v5197, 0
    %v5216 = vcombine.high %v5206, 0
    %v5217 = vcombine.high %v5213, 0
    %v5218 = vcombine.high %v4976, %v697
    %v5220 = vunpack.c.l.s4 1983009808
    %v5221 = vunpack.c.0.s8 %v5220
    %v5222 = vlaneseq
    %v5223 = vshrl.u32 %v5222, 7
    %v5224 = vsub.s32 %v5221, %v5223
    %v5225 = vrot.slane %v4976, %v5224
    %v5227 = vunpack.c.l.s4 1983009808
    %v5228 = vunpack.c.0.s8 %v5227
    %v5229 = vlaneseq
    %v5230 = vshrl.u32 %v5229, 7
    %v5231 = vsub.s32 %v5228, %v5230
    %v5232 = vrot.slane %v5218, %v5231
    %v5233 = vcombine.high %v4984, %v697
    %v5235 = vunpack.c.l.s4 1983009808
    %v5236 = vunpack.c.0.s8 %v5235
    %v5237 = vlaneseq
    %v5238 = vshrl.u32 %v5237, 7
    %v5239 = vsub.s32 %v5236, %v5238
    %v5240 = vrot.slane %v4984, %v5239
    %v5242 = vunpack.c.l.s4 1983009808
    %v5243 = vunpack.c.0.s8 %v5242
    %v5244 = vlaneseq
    %v5245 = vshrl.u32 %v5244, 7
    %v5246 = vsub.s32 %v5243, %v5245
    %v5247 = vrot.slane %v5233, %v5246
    %v5248 = vcombine.low %v5225, %v5240
    %v5249 = vcombine.high %v5225, %v5240
    %v5251 = vunpack.c.l.s4 1934713408
    %v5252 = vunpack.c.0.s8 %v5251
    %v5253 = vlaneseq
    %v5254 = vshrl.u32 %v5253, 7
    %v5255 = vsub.s32 %v5252, %v5254
    %v5256 = vrot.slane %v5248, %v5255
    %v5258 = vunpack.c.l.s4 1934713408
    %v5259 = vunpack.c.0.s8 %v5258
    %v5260 = vlaneseq
    %v5261 = vshrl.u32 %v5260, 7
    %v5262 = vsub.s32 %v5259, %v5261
    %v5263 = vrot.slane %v5249, %v5262
    %v5264 = vcombine.low %v5232, %v5247
    %v5265 = vcombine.high %v5232, %v5247
    %v5267 = vunpack.c.l.s4 1934713408
    %v5268 = vunpack.c.0.s8 %v5267
    %v5269 = vlaneseq
    %v5270 = vshrl.u32 %v5269, 7
    %v5271 = vsub.s32 %v5268, %v5270
    %v5272 = vrot.slane %v5264, %v5271
    %v5274 = vunpack.c.l.s4 1934713408
    %v5275 = vunpack.c.0.s8 %v5274
    %v5276 = vlaneseq
    %v5277 = vshrl.u32 %v5276, 7
    %v5278 = vsub.s32 %v5275, %v5277
    %v5279 = vrot.slane %v5265, %v5278
    %v5280 = vcombine.high %v5256, 0
    %v5281 = vcombine.high %v5263, 0
    %v5282 = vcombine.high %v5272, 0
    %v5283 = vcombine.high %v5279, 0
    %v5284 = vcombine.high %v4980, %v700
    %v5286 = vunpack.c.l.s4 1983009808
    %v5287 = vunpack.c.0.s8 %v5286
    %v5288 = vlaneseq
    %v5289 = vshrl.u32 %v5288, 7
    %v5290 = vsub.s32 %v5287, %v5289
    %v5291 = vrot.slane %v4980, %v5290
    %v5293 = vunpack.c.l.s4 1983009808
    %v5294 = vunpack.c.0.s8 %v5293
    %v5295 = vlaneseq
    %v5296 = vshrl.u32 %v5295, 7
    %v5297 = vsub.s32 %v5294, %v5296
    %v5298 = vrot.slane %v5284, %v5297
    %v5299 = vcombine.high %v4988, %v700
    %v5301 = vunpack.c.l.s4 1983009808
    %v5302 = vunpack.c.0.s8 %v5301
    %v5303 = vlaneseq
    %v5304 = vshrl.u32 %v5303, 7
    %v5305 = vsub.s32 %v5302, %v5304
    %v5306 = vrot.slane %v4988, %v5305
    %v5308 = vunpack.c.l.s4 1983009808
    %v5309 = vunpack.c.0.s8 %v5308
    %v5310 = vlaneseq
    %v5311 = vshrl.u32 %v5310, 7
    %v5312 = vsub.s32 %v5309, %v5311
    %v5313 = vrot.slane %v5299, %v5312
    %v5314 = vcombine.low %v5291, %v5306
    %v5315 = vcombine.high %v5291, %v5306
    %v5317 = vunpack.c.l.s4 1934713408
    %v5318 = vunpack.c.0.s8 %v5317
    %v5319 = vlaneseq
    %v5320 = vshrl.u32 %v5319, 7
    %v5321 = vsub.s32 %v5318, %v5320
    %v5322 = vrot.slane %v5314, %v5321
    %v5324 = vunpack.c.l.s4 1934713408
    %v5325 = vunpack.c.0.s8 %v5324
    %v5326 = vlaneseq
    %v5327 = vshrl.u32 %v5326, 7
    %v5328 = vsub.s32 %v5325, %v5327
    %v5329 = vrot.slane %v5315, %v5328
    %v5330 = vcombine.low %v5298, %v5313
    %v5331 = vcombine.high %v5298, %v5313
    %v5333 = vunpack.c.l.s4 1934713408
    %v5334 = vunpack.c.0.s8 %v5333
    %v5335 = vlaneseq
    %v5336 = vshrl.u32 %v5335, 7
    %v5337 = vsub.s32 %v5334, %v5336
    %v5338 = vrot.slane %v5330, %v5337
    %v5340 = vunpack.c.l.s4 1934713408
    %v5341 = vunpack.c.0.s8 %v5340
    %v5342 = vlaneseq
    %v5343 = vshrl.u32 %v5342, 7
    %v5344 = vsub.s32 %v5341, %v5343
    %v5345 = vrot.slane %v5331, %v5344
    %v5346 = vcombine.high %v5322, 0
    %v5347 = vcombine.high %v5329, 0
    %v5348 = vcombine.high %v5338, 0
    %v5349 = vcombine.high %v5345, 0
    %v5350 = vcombine.high %v4992, %v697
    %v5352 = vunpack.c.l.s4 1983009808
    %v5353 = vunpack.c.0.s8 %v5352
    %v5354 = vlaneseq
    %v5355 = vshrl.u32 %v5354, 7
    %v5356 = vsub.s32 %v5353, %v5355
    %v5357 = vrot.slane %v4992, %v5356
    %v5359 = vunpack.c.l.s4 1983009808
    %v5360 = vunpack.c.0.s8 %v5359
    %v5361 = vlaneseq
    %v5362 = vshrl.u32 %v5361, 7
    %v5363 = vsub.s32 %v5360, %v5362
    %v5364 = vrot.slane %v5350, %v5363
    %v5365 = vcombine.high %v5000, %v697
    %v5367 = vunpack.c.l.s4 1983009808
    %v5368 = vunpack.c.0.s8 %v5367
    %v5369 = vlaneseq
    %v5370 = vshrl.u32 %v5369, 7
    %v5371 = vsub.s32 %v5368, %v5370
    %v5372 = vrot.slane %v5000, %v5371
    %v5374 = vunpack.c.l.s4 1983009808
    %v5375 = vunpack.c.0.s8 %v5374
    %v5376 = vlaneseq
    %v5377 = vshrl.u32 %v5376, 7
    %v5378 = vsub.s32 %v5375, %v5377
    %v5379 = vrot.slane %v5365, %v5378
    %v5380 = vcombine.low %v5357, %v5372
    %v5381 = vcombine.high %v5357, %v5372
    %v5383 = vunpack.c.l.s4 1934713408
    %v5384 = vunpack.c.0.s8 %v5383
    %v5385 = vlaneseq
    %v5386 = vshrl.u32 %v5385, 7
    %v5387 = vsub.s32 %v5384, %v5386
    %v5388 = vrot.slane %v5380, %v5387
    %v5390 = vunpack.c.l.s4 1934713408
    %v5391 = vunpack.c.0.s8 %v5390
    %v5392 = vlaneseq
    %v5393 = vshrl.u32 %v5392, 7
    %v5394 = vsub.s32 %v5391, %v5393
    %v5395 = vrot.slane %v5381, %v5394
    %v5396 = vcombine.low %v5364, %v5379
    %v5397 = vcombine.high %v5364, %v5379
    %v5399 = vunpack.c.l.s4 1934713408
    %v5400 = vunpack.c.0.s8 %v5399
    %v5401 = vlaneseq
    %v5402 = vshrl.u32 %v5401, 7
    %v5403 = vsub.s32 %v5400, %v5402
    %v5404 = vrot.slane %v5396, %v5403
    %v5406 = vunpack.c.l.s4 1934713408
    %v5407 = vunpack.c.0.s8 %v5406
    %v5408 = vlaneseq
    %v5409 = vshrl.u32 %v5408, 7
    %v5410 = vsub.s32 %v5407, %v5409
    %v5411 = vrot.slane %v5397, %v5410
    %v5412 = vcombine.high %v5388, 0
    %v5413 = vcombine.high %v5395, 0
    %v5414 = vcombine.high %v5404, 0
    %v5415 = vcombine.high %v5411, 0
    %v5416 = vcombine.high %v4996, %v700
    %v5418 = vunpack.c.l.s4 1983009808
    %v5419 = vunpack.c.0.s8 %v5418
    %v5420 = vlaneseq
    %v5421 = vshrl.u32 %v5420, 7
    %v5422 = vsub.s32 %v5419, %v5421
    %v5423 = vrot.slane %v4996, %v5422
    %v5425 = vunpack.c.l.s4 1983009808
    %v5426 = vunpack.c.0.s8 %v5425
    %v5427 = vlaneseq
    %v5428 = vshrl.u32 %v5427, 7
    %v5429 = vsub.s32 %v5426, %v5428
    %v5430 = vrot.slane %v5416, %v5429
    %v5431 = vcombine.high %v5004, %v700
    %v5433 = vunpack.c.l.s4 1983009808
    %v5434 = vunpack.c.0.s8 %v5433
    %v5435 = vlaneseq
    %v5436 = vshrl.u32 %v5435, 7
    %v5437 = vsub.s32 %v5434, %v5436
    %v5438 = vrot.slane %v5004, %v5437
    %v5440 = vunpack.c.l.s4 1983009808
    %v5441 = vunpack.c.0.s8 %v5440
    %v5442 = vlaneseq
    %v5443 = vshrl.u32 %v5442, 7
    %v5444 = vsub.s32 %v5441, %v5443
    %v5445 = vrot.slane %v5431, %v5444
    %v5446 = vcombine.low %v5423, %v5438
    %v5447 = vcombine.high %v5423, %v5438
    %v5449 = vunpack.c.l.s4 1934713408
    %v5450 = vunpack.c.0.s8 %v5449
    %v5451 = vlaneseq
    %v5452 = vshrl.u32 %v5451, 7
    %v5453 = vsub.s32 %v5450, %v5452
    %v5454 = vrot.slane %v5446, %v5453
    %v5456 = vunpack.c.l.s4 1934713408
    %v5457 = vunpack.c.0.s8 %v5456
    %v5458 = vlaneseq
    %v5459 = vshrl.u32 %v5458, 7
    %v5460 = vsub.s32 %v5457, %v5459
    %v5461 = vrot.slane %v5447, %v5460
    %v5462 = vcombine.low %v5430, %v5445
    %v5463 = vcombine.high %v5430, %v5445
    %v5465 = vunpack.c.l.s4 1934713408
    %v5466 = vunpack.c.0.s8 %v5465
    %v5467 = vlaneseq
    %v5468 = vshrl.u32 %v5467, 7
    %v5469 = vsub.s32 %v5466, %v5468
    %v5470 = vrot.slane %v5462, %v5469
    %v5472 = vunpack.c.l.s4 1934713408
    %v5473 = vunpack.c.0.s8 %v5472
    %v5474 = vlaneseq
    %v5475 = vshrl.u32 %v5474, 7
    %v5476 = vsub.s32 %v5473, %v5475
    %v5477 = vrot.slane %v5463, %v5476
    %v5478 = vcombine.high %v5454, 0
    %v5479 = vcombine.high %v5461, 0
    %v5480 = vcombine.high %v5470, 0
    %v5481 = vcombine.high %v5477, 0
    %v5482 = vcombine.high %v5008, %v697
    %v5484 = vunpack.c.l.s4 1983009808
    %v5485 = vunpack.c.0.s8 %v5484
    %v5486 = vlaneseq
    %v5487 = vshrl.u32 %v5486, 7
    %v5488 = vsub.s32 %v5485, %v5487
    %v5489 = vrot.slane %v5008, %v5488
    %v5491 = vunpack.c.l.s4 1983009808
    %v5492 = vunpack.c.0.s8 %v5491
    %v5493 = vlaneseq
    %v5494 = vshrl.u32 %v5493, 7
    %v5495 = vsub.s32 %v5492, %v5494
    %v5496 = vrot.slane %v5482, %v5495
    %v5497 = vcombine.high %v5016, %v697
    %v5499 = vunpack.c.l.s4 1983009808
    %v5500 = vunpack.c.0.s8 %v5499
    %v5501 = vlaneseq
    %v5502 = vshrl.u32 %v5501, 7
    %v5503 = vsub.s32 %v5500, %v5502
    %v5504 = vrot.slane %v5016, %v5503
    %v5506 = vunpack.c.l.s4 1983009808
    %v5507 = vunpack.c.0.s8 %v5506
    %v5508 = vlaneseq
    %v5509 = vshrl.u32 %v5508, 7
    %v5510 = vsub.s32 %v5507, %v5509
    %v5511 = vrot.slane %v5497, %v5510
    %v5512 = vcombine.low %v5489, %v5504
    %v5513 = vcombine.high %v5489, %v5504
    %v5515 = vunpack.c.l.s4 1934713408
    %v5516 = vunpack.c.0.s8 %v5515
    %v5517 = vlaneseq
    %v5518 = vshrl.u32 %v5517, 7
    %v5519 = vsub.s32 %v5516, %v5518
    %v5520 = vrot.slane %v5512, %v5519
    %v5522 = vunpack.c.l.s4 1934713408
    %v5523 = vunpack.c.0.s8 %v5522
    %v5524 = vlaneseq
    %v5525 = vshrl.u32 %v5524, 7
    %v5526 = vsub.s32 %v5523, %v5525
    %v5527 = vrot.slane %v5513, %v5526
    %v5528 = vcombine.low %v5496, %v5511
    %v5529 = vcombine.high %v5496, %v5511
    %v5531 = vunpack.c.l.s4 1934713408
    %v5532 = vunpack.c.0.s8 %v5531
    %v5533 = vlaneseq
    %v5534 = vshrl.u32 %v5533, 7
    %v5535 = vsub.s32 %v5532, %v5534
    %v5536 = vrot.slane %v5528, %v5535
    %v5538 = vunpack.c.l.s4 1934713408
    %v5539 = vunpack.c.0.s8 %v5538
    %v5540 = vlaneseq
    %v5541 = vshrl.u32 %v5540, 7
    %v5542 = vsub.s32 %v5539, %v5541
    %v5543 = vrot.slane %v5529, %v5542
    %v5544 = vcombine.high %v5520, 0
    %v5545 = vcombine.high %v5527, 0
    %v5546 = vcombine.high %v5536, 0
    %v5547 = vcombine.high %v5543, 0
    %v5548 = vcombine.high %v5012, %v700
    %v5550 = vunpack.c.l.s4 1983009808
    %v5551 = vunpack.c.0.s8 %v5550
    %v5552 = vlaneseq
    %v5553 = vshrl.u32 %v5552, 7
    %v5554 = vsub.s32 %v5551, %v5553
    %v5555 = vrot.slane %v5012, %v5554
    %v5557 = vunpack.c.l.s4 1983009808
    %v5558 = vunpack.c.0.s8 %v5557
    %v5559 = vlaneseq
    %v5560 = vshrl.u32 %v5559, 7
    %v5561 = vsub.s32 %v5558, %v5560
    %v5562 = vrot.slane %v5548, %v5561
    %v5563 = vcombine.high %v5020, %v700
    %v5565 = vunpack.c.l.s4 1983009808
    %v5566 = vunpack.c.0.s8 %v5565
    %v5567 = vlaneseq
    %v5568 = vshrl.u32 %v5567, 7
    %v5569 = vsub.s32 %v5566, %v5568
    %v5570 = vrot.slane %v5020, %v5569
    %v5572 = vunpack.c.l.s4 1983009808
    %v5573 = vunpack.c.0.s8 %v5572
    %v5574 = vlaneseq
    %v5575 = vshrl.u32 %v5574, 7
    %v5576 = vsub.s32 %v5573, %v5575
    %v5577 = vrot.slane %v5563, %v5576
    %v5578 = vcombine.low %v5555, %v5570
    %v5579 = vcombine.high %v5555, %v5570
    %v5581 = vunpack.c.l.s4 1934713408
    %v5582 = vunpack.c.0.s8 %v5581
    %v5583 = vlaneseq
    %v5584 = vshrl.u32 %v5583, 7
    %v5585 = vsub.s32 %v5582, %v5584
    %v5586 = vrot.slane %v5578, %v5585
    %v5588 = vunpack.c.l.s4 1934713408
    %v5589 = vunpack.c.0.s8 %v5588
    %v5590 = vlaneseq
    %v5591 = vshrl.u32 %v5590, 7
    %v5592 = vsub.s32 %v5589, %v5591
    %v5593 = vrot.slane %v5579, %v5592
    %v5594 = vcombine.low %v5562, %v5577
    %v5595 = vcombine.high %v5562, %v5577
    %v5597 = vunpack.c.l.s4 1934713408
    %v5598 = vunpack.c.0.s8 %v5597
    %v5599 = vlaneseq
    %v5600 = vshrl.u32 %v5599, 7
    %v5601 = vsub.s32 %v5598, %v5600
    %v5602 = vrot.slane %v5594, %v5601
    %v5604 = vunpack.c.l.s4 1934713408
    %v5605 = vunpack.c.0.s8 %v5604
    %v5606 = vlaneseq
    %v5607 = vshrl.u32 %v5606, 7
    %v5608 = vsub.s32 %v5605, %v5607
    %v5609 = vrot.slane %v5595, %v5608
    %v5610 = vcombine.high %v5586, 0
    %v5611 = vcombine.high %v5593, 0
    %v5612 = vcombine.high %v5602, 0
    %v5613 = vcombine.high %v5609, 0
    %v5614 = vcombine.high %v5024, %v697
    %v5616 = vunpack.c.l.s4 1983009808
    %v5617 = vunpack.c.0.s8 %v5616
    %v5618 = vlaneseq
    %v5619 = vshrl.u32 %v5618, 7
    %v5620 = vsub.s32 %v5617, %v5619
    %v5621 = vrot.slane %v5024, %v5620
    %v5623 = vunpack.c.l.s4 1983009808
    %v5624 = vunpack.c.0.s8 %v5623
    %v5625 = vlaneseq
    %v5626 = vshrl.u32 %v5625, 7
    %v5627 = vsub.s32 %v5624, %v5626
    %v5628 = vrot.slane %v5614, %v5627
    %v5629 = vcombine.high %v5032, %v697
    %v5631 = vunpack.c.l.s4 1983009808
    %v5632 = vunpack.c.0.s8 %v5631
    %v5633 = vlaneseq
    %v5634 = vshrl.u32 %v5633, 7
    %v5635 = vsub.s32 %v5632, %v5634
    %v5636 = vrot.slane %v5032, %v5635
    %v5638 = vunpack.c.l.s4 1983009808
    %v5639 = vunpack.c.0.s8 %v5638
    %v5640 = vlaneseq
    %v5641 = vshrl.u32 %v5640, 7
    %v5642 = vsub.s32 %v5639, %v5641
    %v5643 = vrot.slane %v5629, %v5642
    %v5644 = vcombine.low %v5621, %v5636
    %v5645 = vcombine.high %v5621, %v5636
    %v5647 = vunpack.c.l.s4 1934713408
    %v5648 = vunpack.c.0.s8 %v5647
    %v5649 = vlaneseq
    %v5650 = vshrl.u32 %v5649, 7
    %v5651 = vsub.s32 %v5648, %v5650
    %v5652 = vrot.slane %v5644, %v5651
    %v5654 = vunpack.c.l.s4 1934713408
    %v5655 = vunpack.c.0.s8 %v5654
    %v5656 = vlaneseq
    %v5657 = vshrl.u32 %v5656, 7
    %v5658 = vsub.s32 %v5655, %v5657
    %v5659 = vrot.slane %v5645, %v5658
    %v5660 = vcombine.low %v5628, %v5643
    %v5661 = vcombine.high %v5628, %v5643
    %v5663 = vunpack.c.l.s4 1934713408
    %v5664 = vunpack.c.0.s8 %v5663
    %v5665 = vlaneseq
    %v5666 = vshrl.u32 %v5665, 7
    %v5667 = vsub.s32 %v5664, %v5666
    %v5668 = vrot.slane %v5660, %v5667
    %v5670 = vunpack.c.l.s4 1934713408
    %v5671 = vunpack.c.0.s8 %v5670
    %v5672 = vlaneseq
    %v5673 = vshrl.u32 %v5672, 7
    %v5674 = vsub.s32 %v5671, %v5673
    %v5675 = vrot.slane %v5661, %v5674
    %v5676 = vcombine.high %v5652, 0
    %v5677 = vcombine.high %v5659, 0
    %v5678 = vcombine.high %v5668, 0
    %v5679 = vcombine.high %v5675, 0
    %v5680 = vcombine.high %v5028, %v700
    %v5682 = vunpack.c.l.s4 1983009808
    %v5683 = vunpack.c.0.s8 %v5682
    %v5684 = vlaneseq
    %v5685 = vshrl.u32 %v5684, 7
    %v5686 = vsub.s32 %v5683, %v5685
    %v5687 = vrot.slane %v5028, %v5686
    %v5689 = vunpack.c.l.s4 1983009808
    %v5690 = vunpack.c.0.s8 %v5689
    %v5691 = vlaneseq
    %v5692 = vshrl.u32 %v5691, 7
    %v5693 = vsub.s32 %v5690, %v5692
    %v5694 = vrot.slane %v5680, %v5693
    %v5695 = vcombine.high %v5036, %v700
    %v5697 = vunpack.c.l.s4 1983009808
    %v5698 = vunpack.c.0.s8 %v5697
    %v5699 = vlaneseq
    %v5700 = vshrl.u32 %v5699, 7
    %v5701 = vsub.s32 %v5698, %v5700
    %v5702 = vrot.slane %v5036, %v5701
    %v5704 = vunpack.c.l.s4 1983009808
    %v5705 = vunpack.c.0.s8 %v5704
    %v5706 = vlaneseq
    %v5707 = vshrl.u32 %v5706, 7
    %v5708 = vsub.s32 %v5705, %v5707
    %v5709 = vrot.slane %v5695, %v5708
    %v5710 = vcombine.low %v5687, %v5702
    %v5711 = vcombine.high %v5687, %v5702
    %v5713 = vunpack.c.l.s4 1934713408
    %v5714 = vunpack.c.0.s8 %v5713
    %v5715 = vlaneseq
    %v5716 = vshrl.u32 %v5715, 7
    %v5717 = vsub.s32 %v5714, %v5716
    %v5718 = vrot.slane %v5710, %v5717
    %v5720 = vunpack.c.l.s4 1934713408
    %v5721 = vunpack.c.0.s8 %v5720
    %v5722 = vlaneseq
    %v5723 = vshrl.u32 %v5722, 7
    %v5724 = vsub.s32 %v5721, %v5723
    %v5725 = vrot.slane %v5711, %v5724
    %v5726 = vcombine.low %v5694, %v5709
    %v5727 = vcombine.high %v5694, %v5709
    %v5729 = vunpack.c.l.s4 1934713408
    %v5730 = vunpack.c.0.s8 %v5729
    %v5731 = vlaneseq
    %v5732 = vshrl.u32 %v5731, 7
    %v5733 = vsub.s32 %v5730, %v5732
    %v5734 = vrot.slane %v5726, %v5733
    %v5736 = vunpack.c.l.s4 1934713408
    %v5737 = vunpack.c.0.s8 %v5736
    %v5738 = vlaneseq
    %v5739 = vshrl.u32 %v5738, 7
    %v5740 = vsub.s32 %v5737, %v5739
    %v5741 = vrot.slane %v5727, %v5740
    %v5742 = vcombine.high %v5718, 0
    %v5743 = vcombine.high %v5725, 0
    %v5744 = vcombine.high %v5734, 0
    %v5745 = vcombine.high %v5741, 0
    %v5746 = vcombine.high %v5040, %v697
    %v5748 = vunpack.c.l.s4 1983009808
    %v5749 = vunpack.c.0.s8 %v5748
    %v5750 = vlaneseq
    %v5751 = vshrl.u32 %v5750, 7
    %v5752 = vsub.s32 %v5749, %v5751
    %v5753 = vrot.slane %v5040, %v5752
    %v5755 = vunpack.c.l.s4 1983009808
    %v5756 = vunpack.c.0.s8 %v5755
    %v5757 = vlaneseq
    %v5758 = vshrl.u32 %v5757, 7
    %v5759 = vsub.s32 %v5756, %v5758
    %v5760 = vrot.slane %v5746, %v5759
    %v5761 = vcombine.high %v5048, %v697
    %v5763 = vunpack.c.l.s4 1983009808
    %v5764 = vunpack.c.0.s8 %v5763
    %v5765 = vlaneseq
    %v5766 = vshrl.u32 %v5765, 7
    %v5767 = vsub.s32 %v5764, %v5766
    %v5768 = vrot.slane %v5048, %v5767
    %v5770 = vunpack.c.l.s4 1983009808
    %v5771 = vunpack.c.0.s8 %v5770
    %v5772 = vlaneseq
    %v5773 = vshrl.u32 %v5772, 7
    %v5774 = vsub.s32 %v5771, %v5773
    %v5775 = vrot.slane %v5761, %v5774
    %v5776 = vcombine.low %v5753, %v5768
    %v5777 = vcombine.high %v5753, %v5768
    %v5779 = vunpack.c.l.s4 1934713408
    %v5780 = vunpack.c.0.s8 %v5779
    %v5781 = vlaneseq
    %v5782 = vshrl.u32 %v5781, 7
    %v5783 = vsub.s32 %v5780, %v5782
    %v5784 = vrot.slane %v5776, %v5783
    %v5786 = vunpack.c.l.s4 1934713408
    %v5787 = vunpack.c.0.s8 %v5786
    %v5788 = vlaneseq
    %v5789 = vshrl.u32 %v5788, 7
    %v5790 = vsub.s32 %v5787, %v5789
    %v5791 = vrot.slane %v5777, %v5790
    %v5792 = vcombine.low %v5760, %v5775
    %v5793 = vcombine.high %v5760, %v5775
    %v5795 = vunpack.c.l.s4 1934713408
    %v5796 = vunpack.c.0.s8 %v5795
    %v5797 = vlaneseq
    %v5798 = vshrl.u32 %v5797, 7
    %v5799 = vsub.s32 %v5796, %v5798
    %v5800 = vrot.slane %v5792, %v5799
    %v5802 = vunpack.c.l.s4 1934713408
    %v5803 = vunpack.c.0.s8 %v5802
    %v5804 = vlaneseq
    %v5805 = vshrl.u32 %v5804, 7
    %v5806 = vsub.s32 %v5803, %v5805
    %v5807 = vrot.slane %v5793, %v5806
    %v5808 = vcombine.high %v5784, 0
    %v5809 = vcombine.high %v5791, 0
    %v5810 = vcombine.high %v5800, 0
    %v5811 = vcombine.high %v5807, 0
    %v5812 = vcombine.high %v5044, %v700
    %v5814 = vunpack.c.l.s4 1983009808
    %v5815 = vunpack.c.0.s8 %v5814
    %v5816 = vlaneseq
    %v5817 = vshrl.u32 %v5816, 7
    %v5818 = vsub.s32 %v5815, %v5817
    %v5819 = vrot.slane %v5044, %v5818
    %v5821 = vunpack.c.l.s4 1983009808
    %v5822 = vunpack.c.0.s8 %v5821
    %v5823 = vlaneseq
    %v5824 = vshrl.u32 %v5823, 7
    %v5825 = vsub.s32 %v5822, %v5824
    %v5826 = vrot.slane %v5812, %v5825
    %v5827 = vcombine.high %v5052, %v700
    %v5829 = vunpack.c.l.s4 1983009808
    %v5830 = vunpack.c.0.s8 %v5829
    %v5831 = vlaneseq
    %v5832 = vshrl.u32 %v5831, 7
    %v5833 = vsub.s32 %v5830, %v5832
    %v5834 = vrot.slane %v5052, %v5833
    %v5836 = vunpack.c.l.s4 1983009808
    %v5837 = vunpack.c.0.s8 %v5836
    %v5838 = vlaneseq
    %v5839 = vshrl.u32 %v5838, 7
    %v5840 = vsub.s32 %v5837, %v5839
    %v5841 = vrot.slane %v5827, %v5840
    %v5842 = vcombine.low %v5819, %v5834
    %v5843 = vcombine.high %v5819, %v5834
    %v5845 = vunpack.c.l.s4 1934713408
    %v5846 = vunpack.c.0.s8 %v5845
    %v5847 = vlaneseq
    %v5848 = vshrl.u32 %v5847, 7
    %v5849 = vsub.s32 %v5846, %v5848
    %v5850 = vrot.slane %v5842, %v5849
    %v5852 = vunpack.c.l.s4 1934713408
    %v5853 = vunpack.c.0.s8 %v5852
    %v5854 = vlaneseq
    %v5855 = vshrl.u32 %v5854, 7
    %v5856 = vsub.s32 %v5853, %v5855
    %v5857 = vrot.slane %v5843, %v5856
    %v5858 = vcombine.low %v5826, %v5841
    %v5859 = vcombine.high %v5826, %v5841
    %v5861 = vunpack.c.l.s4 1934713408
    %v5862 = vunpack.c.0.s8 %v5861
    %v5863 = vlaneseq
    %v5864 = vshrl.u32 %v5863, 7
    %v5865 = vsub.s32 %v5862, %v5864
    %v5866 = vrot.slane %v5858, %v5865
    %v5868 = vunpack.c.l.s4 1934713408
    %v5869 = vunpack.c.0.s8 %v5868
    %v5870 = vlaneseq
    %v5871 = vshrl.u32 %v5870, 7
    %v5872 = vsub.s32 %v5869, %v5871
    %v5873 = vrot.slane %v5859, %v5872
    %v5874 = vcombine.high %v5850, 0
    %v5875 = vcombine.high %v5857, 0
    %v5876 = vcombine.high %v5866, 0
    %v5877 = vcombine.high %v5873, 0
    %v5878 = vcombine.high %v5056, %v697
    %v5880 = vunpack.c.l.s4 1983009808
    %v5881 = vunpack.c.0.s8 %v5880
    %v5882 = vlaneseq
    %v5883 = vshrl.u32 %v5882, 7
    %v5884 = vsub.s32 %v5881, %v5883
    %v5885 = vrot.slane %v5056, %v5884
    %v5887 = vunpack.c.l.s4 1983009808
    %v5888 = vunpack.c.0.s8 %v5887
    %v5889 = vlaneseq
    %v5890 = vshrl.u32 %v5889, 7
    %v5891 = vsub.s32 %v5888, %v5890
    %v5892 = vrot.slane %v5878, %v5891
    %v5893 = vcombine.high %v5064, %v697
    %v5895 = vunpack.c.l.s4 1983009808
    %v5896 = vunpack.c.0.s8 %v5895
    %v5897 = vlaneseq
    %v5898 = vshrl.u32 %v5897, 7
    %v5899 = vsub.s32 %v5896, %v5898
    %v5900 = vrot.slane %v5064, %v5899
    %v5902 = vunpack.c.l.s4 1983009808
    %v5903 = vunpack.c.0.s8 %v5902
    %v5904 = vlaneseq
    %v5905 = vshrl.u32 %v5904, 7
    %v5906 = vsub.s32 %v5903, %v5905
    %v5907 = vrot.slane %v5893, %v5906
    %v5908 = vcombine.low %v5885, %v5900
    %v5909 = vcombine.high %v5885, %v5900
    %v5911 = vunpack.c.l.s4 1934713408
    %v5912 = vunpack.c.0.s8 %v5911
    %v5913 = vlaneseq
    %v5914 = vshrl.u32 %v5913, 7
    %v5915 = vsub.s32 %v5912, %v5914
    %v5916 = vrot.slane %v5908, %v5915
    %v5918 = vunpack.c.l.s4 1934713408
    %v5919 = vunpack.c.0.s8 %v5918
    %v5920 = vlaneseq
    %v5921 = vshrl.u32 %v5920, 7
    %v5922 = vsub.s32 %v5919, %v5921
    %v5923 = vrot.slane %v5909, %v5922
    %v5924 = vcombine.low %v5892, %v5907
    %v5925 = vcombine.high %v5892, %v5907
    %v5927 = vunpack.c.l.s4 1934713408
    %v5928 = vunpack.c.0.s8 %v5927
    %v5929 = vlaneseq
    %v5930 = vshrl.u32 %v5929, 7
    %v5931 = vsub.s32 %v5928, %v5930
    %v5932 = vrot.slane %v5924, %v5931
    %v5934 = vunpack.c.l.s4 1934713408
    %v5935 = vunpack.c.0.s8 %v5934
    %v5936 = vlaneseq
    %v5937 = vshrl.u32 %v5936, 7
    %v5938 = vsub.s32 %v5935, %v5937
    %v5939 = vrot.slane %v5925, %v5938
    %v5940 = vcombine.high %v5916, 0
    %v5941 = vcombine.high %v5923, 0
    %v5942 = vcombine.high %v5932, 0
    %v5943 = vcombine.high %v5939, 0
    %v5944 = vcombine.high %v5060, %v700
    %v5946 = vunpack.c.l.s4 1983009808
    %v5947 = vunpack.c.0.s8 %v5946
    %v5948 = vlaneseq
    %v5949 = vshrl.u32 %v5948, 7
    %v5950 = vsub.s32 %v5947, %v5949
    %v5951 = vrot.slane %v5060, %v5950
    %v5953 = vunpack.c.l.s4 1983009808
    %v5954 = vunpack.c.0.s8 %v5953
    %v5955 = vlaneseq
    %v5956 = vshrl.u32 %v5955, 7
    %v5957 = vsub.s32 %v5954, %v5956
    %v5958 = vrot.slane %v5944, %v5957
    %v5959 = vcombine.high %v5068, %v700
    %v5961 = vunpack.c.l.s4 1983009808
    %v5962 = vunpack.c.0.s8 %v5961
    %v5963 = vlaneseq
    %v5964 = vshrl.u32 %v5963, 7
    %v5965 = vsub.s32 %v5962, %v5964
    %v5966 = vrot.slane %v5068, %v5965
    %v5968 = vunpack.c.l.s4 1983009808
    %v5969 = vunpack.c.0.s8 %v5968
    %v5970 = vlaneseq
    %v5971 = vshrl.u32 %v5970, 7
    %v5972 = vsub.s32 %v5969, %v5971
    %v5973 = vrot.slane %v5959, %v5972
    %v5974 = vcombine.low %v5951, %v5966
    %v5975 = vcombine.high %v5951, %v5966
    %v5977 = vunpack.c.l.s4 1934713408
    %v5978 = vunpack.c.0.s8 %v5977
    %v5979 = vlaneseq
    %v5980 = vshrl.u32 %v5979, 7
    %v5981 = vsub.s32 %v5978, %v5980
    %v5982 = vrot.slane %v5974, %v5981
    %v5984 = vunpack.c.l.s4 1934713408
    %v5985 = vunpack.c.0.s8 %v5984
    %v5986 = vlaneseq
    %v5987 = vshrl.u32 %v5986, 7
    %v5988 = vsub.s32 %v5985, %v5987
    %v5989 = vrot.slane %v5975, %v5988
    %v5990 = vcombine.low %v5958, %v5973
    %v5991 = vcombine.high %v5958, %v5973
    %v5993 = vunpack.c.l.s4 1934713408
    %v5994 = vunpack.c.0.s8 %v5993
    %v5995 = vlaneseq
    %v5996 = vshrl.u32 %v5995, 7
    %v5997 = vsub.s32 %v5994, %v5996
    %v5998 = vrot.slane %v5990, %v5997
    %v6000 = vunpack.c.l.s4 1934713408
    %v6001 = vunpack.c.0.s8 %v6000
    %v6002 = vlaneseq
    %v6003 = vshrl.u32 %v6002, 7
    %v6004 = vsub.s32 %v6001, %v6003
    %v6005 = vrot.slane %v5991, %v6004
    %v6006 = vcombine.high %v5982, 0
    %v6007 = vcombine.high %v5989, 0
    %v6008 = vcombine.high %v5998, 0
    %v6009 = vcombine.high %v6005, 0
    %v6010 = vcombine.high %v5072, %v697
    %v6012 = vunpack.c.l.s4 1983009808
    %v6013 = vunpack.c.0.s8 %v6012
    %v6014 = vlaneseq
    %v6015 = vshrl.u32 %v6014, 7
    %v6016 = vsub.s32 %v6013, %v6015
    %v6017 = vrot.slane %v5072, %v6016
    %v6019 = vunpack.c.l.s4 1983009808
    %v6020 = vunpack.c.0.s8 %v6019
    %v6021 = vlaneseq
    %v6022 = vshrl.u32 %v6021, 7
    %v6023 = vsub.s32 %v6020, %v6022
    %v6024 = vrot.slane %v6010, %v6023
    %v6025 = vcombine.high %v5080, %v697
    %v6027 = vunpack.c.l.s4 1983009808
    %v6028 = vunpack.c.0.s8 %v6027
    %v6029 = vlaneseq
    %v6030 = vshrl.u32 %v6029, 7
    %v6031 = vsub.s32 %v6028, %v6030
    %v6032 = vrot.slane %v5080, %v6031
    %v6034 = vunpack.c.l.s4 1983009808
    %v6035 = vunpack.c.0.s8 %v6034
    %v6036 = vlaneseq
    %v6037 = vshrl.u32 %v6036, 7
    %v6038 = vsub.s32 %v6035, %v6037
    %v6039 = vrot.slane %v6025, %v6038
    %v6040 = vcombine.low %v6017, %v6032
    %v6041 = vcombine.high %v6017, %v6032
    %v6043 = vunpack.c.l.s4 1934713408
    %v6044 = vunpack.c.0.s8 %v6043
    %v6045 = vlaneseq
    %v6046 = vshrl.u32 %v6045, 7
    %v6047 = vsub.s32 %v6044, %v6046
    %v6048 = vrot.slane %v6040, %v6047
    %v6050 = vunpack.c.l.s4 1934713408
    %v6051 = vunpack.c.0.s8 %v6050
    %v6052 = vlaneseq
    %v6053 = vshrl.u32 %v6052, 7
    %v6054 = vsub.s32 %v6051, %v6053
    %v6055 = vrot.slane %v6041, %v6054
    %v6056 = vcombine.low %v6024, %v6039
    %v6057 = vcombine.high %v6024, %v6039
    %v6059 = vunpack.c.l.s4 1934713408
    %v6060 = vunpack.c.0.s8 %v6059
    %v6061 = vlaneseq
    %v6062 = vshrl.u32 %v6061, 7
    %v6063 = vsub.s32 %v6060, %v6062
    %v6064 = vrot.slane %v6056, %v6063
    %v6066 = vunpack.c.l.s4 1934713408
    %v6067 = vunpack.c.0.s8 %v6066
    %v6068 = vlaneseq
    %v6069 = vshrl.u32 %v6068, 7
    %v6070 = vsub.s32 %v6067, %v6069
    %v6071 = vrot.slane %v6057, %v6070
    %v6072 = vcombine.high %v6048, 0
    %v6073 = vcombine.high %v6055, 0
    %v6074 = vcombine.high %v6064, 0
    %v6075 = vcombine.high %v6071, 0
    %v6076 = vcombine.high %v5076, %v700
    %v6078 = vunpack.c.l.s4 1983009808
    %v6079 = vunpack.c.0.s8 %v6078
    %v6080 = vlaneseq
    %v6081 = vshrl.u32 %v6080, 7
    %v6082 = vsub.s32 %v6079, %v6081
    %v6083 = vrot.slane %v5076, %v6082
    %v6085 = vunpack.c.l.s4 1983009808
    %v6086 = vunpack.c.0.s8 %v6085
    %v6087 = vlaneseq
    %v6088 = vshrl.u32 %v6087, 7
    %v6089 = vsub.s32 %v6086, %v6088
    %v6090 = vrot.slane %v6076, %v6089
    %v6091 = vcombine.high %v5084, %v700
    %v6093 = vunpack.c.l.s4 1983009808
    %v6094 = vunpack.c.0.s8 %v6093
    %v6095 = vlaneseq
    %v6096 = vshrl.u32 %v6095, 7
    %v6097 = vsub.s32 %v6094, %v6096
    %v6098 = vrot.slane %v5084, %v6097
    %v6100 = vunpack.c.l.s4 1983009808
    %v6101 = vunpack.c.0.s8 %v6100
    %v6102 = vlaneseq
    %v6103 = vshrl.u32 %v6102, 7
    %v6104 = vsub.s32 %v6101, %v6103
    %v6105 = vrot.slane %v6091, %v6104
    %v6106 = vcombine.low %v6083, %v6098
    %v6107 = vcombine.high %v6083, %v6098
    %v6109 = vunpack.c.l.s4 1934713408
    %v6110 = vunpack.c.0.s8 %v6109
    %v6111 = vlaneseq
    %v6112 = vshrl.u32 %v6111, 7
    %v6113 = vsub.s32 %v6110, %v6112
    %v6114 = vrot.slane %v6106, %v6113
    %v6116 = vunpack.c.l.s4 1934713408
    %v6117 = vunpack.c.0.s8 %v6116
    %v6118 = vlaneseq
    %v6119 = vshrl.u32 %v6118, 7
    %v6120 = vsub.s32 %v6117, %v6119
    %v6121 = vrot.slane %v6107, %v6120
    %v6122 = vcombine.low %v6090, %v6105
    %v6123 = vcombine.high %v6090, %v6105
    %v6125 = vunpack.c.l.s4 1934713408
    %v6126 = vunpack.c.0.s8 %v6125
    %v6127 = vlaneseq
    %v6128 = vshrl.u32 %v6127, 7
    %v6129 = vsub.s32 %v6126, %v6128
    %v6130 = vrot.slane %v6122, %v6129
    %v6132 = vunpack.c.l.s4 1934713408
    %v6133 = vunpack.c.0.s8 %v6132
    %v6134 = vlaneseq
    %v6135 = vshrl.u32 %v6134, 7
    %v6136 = vsub.s32 %v6133, %v6135
    %v6137 = vrot.slane %v6123, %v6136
    %v6138 = vcombine.high %v6114, 0
    %v6139 = vcombine.high %v6121, 0
    %v6140 = vcombine.high %v6130, 0
    %v6141 = vcombine.high %v6137, 0
    %v6142 = vcombine.low %v5124, %v5131
    %v6144 = vunpack.c.l.s4 1983009808
    %v6145 = vunpack.c.0.s8 %v6144
    %v6146 = vlaneseq
    %v6147 = vshrl.u32 %v6146, 7
    %v6148 = vsub.s32 %v6145, %v6147
    %v6149 = vrot.slane %v6142, %v6148
    %v6150 = vcombine.low %v5148, %v5149
    %v6152 = vunpack.c.l.s4 1983009808
    %v6153 = vunpack.c.0.s8 %v6152
    %v6154 = vlaneseq
    %v6155 = vshrl.u32 %v6154, 7
    %v6156 = vsub.s32 %v6153, %v6155
    %v6157 = vrot.slane %v6150, %v6156
    %v6158 = vcombine.low %v5140, %v5147
    %v6160 = vunpack.c.l.s4 1983009808
    %v6161 = vunpack.c.0.s8 %v6160
    %v6162 = vlaneseq
    %v6163 = vshrl.u32 %v6162, 7
    %v6164 = vsub.s32 %v6161, %v6163
    %v6165 = vrot.slane %v6158, %v6164
    %v6166 = vcombine.low %v5150, %v5151
    %v6168 = vunpack.c.l.s4 1983009808
    %v6169 = vunpack.c.0.s8 %v6168
    %v6170 = vlaneseq
    %v6171 = vshrl.u32 %v6170, 7
    %v6172 = vsub.s32 %v6169, %v6171
    %v6173 = vrot.slane %v6166, %v6172
    %v6174 = vcombine.low %v6149, %v6157
    %v6176 = vunpack.c.l.s4 1934713408
    %v6177 = vunpack.c.0.s8 %v6176
    %v6178 = vlaneseq
    %v6179 = vshrl.u32 %v6178, 7
    %v6180 = vsub.s32 %v6177, %v6179
    %v6181 = vrot.slane %v6174, %v6180
    %v6182 = vcombine.low %v6165, %v6173
    %v6184 = vunpack.c.l.s4 1934713408
    %v6185 = vunpack.c.0.s8 %v6184
    %v6186 = vlaneseq
    %v6187 = vshrl.u32 %v6186, 7
    %v6188 = vsub.s32 %v6185, %v6187
    %v6189 = vrot.slane %v6182, %v6188
    %v6190 = vcombine.low %v6181, %v6189
    %v6191 = vcombine.high %v6181, %v6189
    %v6192 = vcombine.low %v5190, %v5197
    %v6194 = vunpack.c.l.s4 1983009808
    %v6195 = vunpack.c.0.s8 %v6194
    %v6196 = vlaneseq
    %v6197 = vshrl.u32 %v6196, 7
    %v6198 = vsub.s32 %v6195, %v6197
    %v6199 = vrot.slane %v6192, %v6198
    %v6200 = vcombine.low %v5214, %v5215
    %v6202 = vunpack.c.l.s4 1983009808
    %v6203 = vunpack.c.0.s8 %v6202
    %v6204 = vlaneseq
    %v6205 = vshrl.u32 %v6204, 7
    %v6206 = vsub.s32 %v6203, %v6205
    %v6207 = vrot.slane %v6200, %v6206
    %v6208 = vcombine.low %v5206, %v5213
    %v6210 = vunpack.c.l.s4 1983009808
    %v6211 = vunpack.c.0.s8 %v6210
    %v6212 = vlaneseq
    %v6213 = vshrl.u32 %v6212, 7
    %v6214 = vsub.s32 %v6211, %v6213
    %v6215 = vrot.slane %v6208, %v6214
    %v6216 = vcombine.low %v5216, %v5217
    %v6218 = vunpack.c.l.s4 1983009808
    %v6219 = vunpack.c.0.s8 %v6218
    %v6220 = vlaneseq
    %v6221 = vshrl.u32 %v6220, 7
    %v6222 = vsub.s32 %v6219, %v6221
    %v6223 = vrot.slane %v6216, %v6222
    %v6224 = vcombine.low %v6199, %v6207
    %v6226 = vunpack.c.l.s4 1934713408
    %v6227 = vunpack.c.0.s8 %v6226
    %v6228 = vlaneseq
    %v6229 = vshrl.u32 %v6228, 7
    %v6230 = vsub.s32 %v6227, %v6229
    %v6231 = vrot.slane %v6224, %v6230
    %v6232 = vcombine.low %v6215, %v6223
    %v6234 = vunpack.c.l.s4 1934713408
    %v6235 = vunpack.c.0.s8 %v6234
    %v6236 = vlaneseq
    %v6237 = vshrl.u32 %v6236, 7
    %v6238 = vsub.s32 %v6235, %v6237
    %v6239 = vrot.slane %v6232, %v6238
    %v6240 = vcombine.low %v6231, %v6239
    %v6241 = vcombine.high %v6231, %v6239
    %v6242 = vcombine.low %v5256, %v5263
    %v6244 = vunpack.c.l.s4 1983009808
    %v6245 = vunpack.c.0.s8 %v6244
    %v6246 = vlaneseq
    %v6247 = vshrl.u32 %v6246, 7
    %v6248 = vsub.s32 %v6245, %v6247
    %v6249 = vrot.slane %v6242, %v6248
    %v6250 = vcombine.low %v5280, %v5281
    %v6252 = vunpack.c.l.s4 1983009808
    %v6253 = vunpack.c.0.s8 %v6252
    %v6254 = vlaneseq
    %v6255 = vshrl.u32 %v6254, 7
    %v6256 = vsub.s32 %v6253, %v6255
    %v6257 = vrot.slane %v6250, %v6256
    %v6258 = vcombine.low %v5272, %v5279
    %v6260 = vunpack.c.l.s4 1983009808
    %v6261 = vunpack.c.0.s8 %v6260
    %v6262 = vlaneseq
    %v6263 = vshrl.u32 %v6262, 7
    %v6264 = vsub.s32 %v6261, %v6263
    %v6265 = vrot.slane %v6258, %v6264
    %v6266 = vcombine.low %v5282, %v5283
    %v6268 = vunpack.c.l.s4 1983009808
    %v6269 = vunpack.c.0.s8 %v6268
    %v6270 = vlaneseq
    %v6271 = vshrl.u32 %v6270, 7
    %v6272 = vsub.s32 %v6269, %v6271
    %v6273 = vrot.slane %v6266, %v6272
    %v6274 = vcombine.low %v6249, %v6257
    %v6276 = vunpack.c.l.s4 1934713408
    %v6277 = vunpack.c.0.s8 %v6276
    %v6278 = vlaneseq
    %v6279 = vshrl.u32 %v6278, 7
    %v6280 = vsub.s32 %v6277, %v6279
    %v6281 = vrot.slane %v6274, %v6280
    %v6282 = vcombine.low %v6265, %v6273
    %v6284 = vunpack.c.l.s4 1934713408
    %v6285 = vunpack.c.0.s8 %v6284
    %v6286 = vlaneseq
    %v6287 = vshrl.u32 %v6286, 7
    %v6288 = vsub.s32 %v6285, %v6287
    %v6289 = vrot.slane %v6282, %v6288
    %v6290 = vcombine.low %v6281, %v6289
    %v6291 = vcombine.high %v6281, %v6289
    %v6292 = vcombine.low %v5322, %v5329
    %v6294 = vunpack.c.l.s4 1983009808
    %v6295 = vunpack.c.0.s8 %v6294
    %v6296 = vlaneseq
    %v6297 = vshrl.u32 %v6296, 7
    %v6298 = vsub.s32 %v6295, %v6297
    %v6299 = vrot.slane %v6292, %v6298
    %v6300 = vcombine.low %v5346, %v5347
    %v6302 = vunpack.c.l.s4 1983009808
    %v6303 = vunpack.c.0.s8 %v6302
    %v6304 = vlaneseq
    %v6305 = vshrl.u32 %v6304, 7
    %v6306 = vsub.s32 %v6303, %v6305
    %v6307 = vrot.slane %v6300, %v6306
    %v6308 = vcombine.low %v5338, %v5345
    %v6310 = vunpack.c.l.s4 1983009808
    %v6311 = vunpack.c.0.s8 %v6310
    %v6312 = vlaneseq
    %v6313 = vshrl.u32 %v6312, 7
    %v6314 = vsub.s32 %v6311, %v6313
    %v6315 = vrot.slane %v6308, %v6314
    %v6316 = vcombine.low %v5348, %v5349
    %v6318 = vunpack.c.l.s4 1983009808
    %v6319 = vunpack.c.0.s8 %v6318
    %v6320 = vlaneseq
    %v6321 = vshrl.u32 %v6320, 7
    %v6322 = vsub.s32 %v6319, %v6321
    %v6323 = vrot.slane %v6316, %v6322
    %v6324 = vcombine.low %v6299, %v6307
    %v6326 = vunpack.c.l.s4 1934713408
    %v6327 = vunpack.c.0.s8 %v6326
    %v6328 = vlaneseq
    %v6329 = vshrl.u32 %v6328, 7
    %v6330 = vsub.s32 %v6327, %v6329
    %v6331 = vrot.slane %v6324, %v6330
    %v6332 = vcombine.low %v6315, %v6323
    %v6334 = vunpack.c.l.s4 1934713408
    %v6335 = vunpack.c.0.s8 %v6334
    %v6336 = vlaneseq
    %v6337 = vshrl.u32 %v6336, 7
    %v6338 = vsub.s32 %v6335, %v6337
    %v6339 = vrot.slane %v6332, %v6338
    %v6340 = vcombine.low %v6331, %v6339
    %v6341 = vcombine.high %v6331, %v6339
    %v6342 = vcombine.low %v5388, %v5395
    %v6344 = vunpack.c.l.s4 1983009808
    %v6345 = vunpack.c.0.s8 %v6344
    %v6346 = vlaneseq
    %v6347 = vshrl.u32 %v6346, 7
    %v6348 = vsub.s32 %v6345, %v6347
    %v6349 = vrot.slane %v6342, %v6348
    %v6350 = vcombine.low %v5412, %v5413
    %v6352 = vunpack.c.l.s4 1983009808
    %v6353 = vunpack.c.0.s8 %v6352
    %v6354 = vlaneseq
    %v6355 = vshrl.u32 %v6354, 7
    %v6356 = vsub.s32 %v6353, %v6355
    %v6357 = vrot.slane %v6350, %v6356
    %v6358 = vcombine.low %v5404, %v5411
    %v6360 = vunpack.c.l.s4 1983009808
    %v6361 = vunpack.c.0.s8 %v6360
    %v6362 = vlaneseq
    %v6363 = vshrl.u32 %v6362, 7
    %v6364 = vsub.s32 %v6361, %v6363
    %v6365 = vrot.slane %v6358, %v6364
    %v6366 = vcombine.low %v5414, %v5415
    %v6368 = vunpack.c.l.s4 1983009808
    %v6369 = vunpack.c.0.s8 %v6368
    %v6370 = vlaneseq
    %v6371 = vshrl.u32 %v6370, 7
    %v6372 = vsub.s32 %v6369, %v6371
    %v6373 = vrot.slane %v6366, %v6372
    %v6374 = vcombine.low %v6349, %v6357
    %v6376 = vunpack.c.l.s4 1934713408
    %v6377 = vunpack.c.0.s8 %v6376
    %v6378 = vlaneseq
    %v6379 = vshrl.u32 %v6378, 7
    %v6380 = vsub.s32 %v6377, %v6379
    %v6381 = vrot.slane %v6374, %v6380
    %v6382 = vcombine.low %v6365, %v6373
    %v6384 = vunpack.c.l.s4 1934713408
    %v6385 = vunpack.c.0.s8 %v6384
    %v6386 = vlaneseq
    %v6387 = vshrl.u32 %v6386, 7
    %v6388 = vsub.s32 %v6385, %v6387
    %v6389 = vrot.slane %v6382, %v6388
    %v6390 = vcombine.low %v6381, %v6389
    %v6391 = vcombine.high %v6381, %v6389
    %v6392 = vcombine.low %v5454, %v5461
    %v6394 = vunpack.c.l.s4 1983009808
    %v6395 = vunpack.c.0.s8 %v6394
    %v6396 = vlaneseq
    %v6397 = vshrl.u32 %v6396, 7
    %v6398 = vsub.s32 %v6395, %v6397
    %v6399 = vrot.slane %v6392, %v6398
    %v6400 = vcombine.low %v5478, %v5479
    %v6402 = vunpack.c.l.s4 1983009808
    %v6403 = vunpack.c.0.s8 %v6402
    %v6404 = vlaneseq
    %v6405 = vshrl.u32 %v6404, 7
    %v6406 = vsub.s32 %v6403, %v6405
    %v6407 = vrot.slane %v6400, %v6406
    %v6408 = vcombine.low %v5470, %v5477
    %v6410 = vunpack.c.l.s4 1983009808
    %v6411 = vunpack.c.0.s8 %v6410
    %v6412 = vlaneseq
    %v6413 = vshrl.u32 %v6412, 7
    %v6414 = vsub.s32 %v6411, %v6413
    %v6415 = vrot.slane %v6408, %v6414
    %v6416 = vcombine.low %v5480, %v5481
    %v6418 = vunpack.c.l.s4 1983009808
    %v6419 = vunpack.c.0.s8 %v6418
    %v6420 = vlaneseq
    %v6421 = vshrl.u32 %v6420, 7
    %v6422 = vsub.s32 %v6419, %v6421
    %v6423 = vrot.slane %v6416, %v6422
    %v6424 = vcombine.low %v6399, %v6407
    %v6426 = vunpack.c.l.s4 1934713408
    %v6427 = vunpack.c.0.s8 %v6426
    %v6428 = vlaneseq
    %v6429 = vshrl.u32 %v6428, 7
    %v6430 = vsub.s32 %v6427, %v6429
    %v6431 = vrot.slane %v6424, %v6430
    %v6432 = vcombine.low %v6415, %v6423
    %v6434 = vunpack.c.l.s4 1934713408
    %v6435 = vunpack.c.0.s8 %v6434
    %v6436 = vlaneseq
    %v6437 = vshrl.u32 %v6436, 7
    %v6438 = vsub.s32 %v6435, %v6437
    %v6439 = vrot.slane %v6432, %v6438
    %v6440 = vcombine.low %v6431, %v6439
    %v6441 = vcombine.high %v6431, %v6439
    %v6442 = vcombine.low %v5520, %v5527
    %v6444 = vunpack.c.l.s4 1983009808
    %v6445 = vunpack.c.0.s8 %v6444
    %v6446 = vlaneseq
    %v6447 = vshrl.u32 %v6446, 7
    %v6448 = vsub.s32 %v6445, %v6447
    %v6449 = vrot.slane %v6442, %v6448
    %v6450 = vcombine.low %v5544, %v5545
    %v6452 = vunpack.c.l.s4 1983009808
    %v6453 = vunpack.c.0.s8 %v6452
    %v6454 = vlaneseq
    %v6455 = vshrl.u32 %v6454, 7
    %v6456 = vsub.s32 %v6453, %v6455
    %v6457 = vrot.slane %v6450, %v6456
    %v6458 = vcombine.low %v5536, %v5543
    %v6460 = vunpack.c.l.s4 1983009808
    %v6461 = vunpack.c.0.s8 %v6460
    %v6462 = vlaneseq
    %v6463 = vshrl.u32 %v6462, 7
    %v6464 = vsub.s32 %v6461, %v6463
    %v6465 = vrot.slane %v6458, %v6464
    %v6466 = vcombine.low %v5546, %v5547
    %v6468 = vunpack.c.l.s4 1983009808
    %v6469 = vunpack.c.0.s8 %v6468
    %v6470 = vlaneseq
    %v6471 = vshrl.u32 %v6470, 7
    %v6472 = vsub.s32 %v6469, %v6471
    %v6473 = vrot.slane %v6466, %v6472
    %v6474 = vcombine.low %v6449, %v6457
    %v6476 = vunpack.c.l.s4 1934713408
    %v6477 = vunpack.c.0.s8 %v6476
    %v6478 = vlaneseq
    %v6479 = vshrl.u32 %v6478, 7
    %v6480 = vsub.s32 %v6477, %v6479
    %v6481 = vrot.slane %v6474, %v6480
    %v6482 = vcombine.low %v6465, %v6473
    %v6484 = vunpack.c.l.s4 1934713408
    %v6485 = vunpack.c.0.s8 %v6484
    %v6486 = vlaneseq
    %v6487 = vshrl.u32 %v6486, 7
    %v6488 = vsub.s32 %v6485, %v6487
    %v6489 = vrot.slane %v6482, %v6488
    %v6490 = vcombine.low %v6481, %v6489
    %v6491 = vcombine.high %v6481, %v6489
    %v6492 = vcombine.low %v5586, %v5593
    %v6494 = vunpack.c.l.s4 1983009808
    %v6495 = vunpack.c.0.s8 %v6494
    %v6496 = vlaneseq
    %v6497 = vshrl.u32 %v6496, 7
    %v6498 = vsub.s32 %v6495, %v6497
    %v6499 = vrot.slane %v6492, %v6498
    %v6500 = vcombine.low %v5610, %v5611
    %v6502 = vunpack.c.l.s4 1983009808
    %v6503 = vunpack.c.0.s8 %v6502
    %v6504 = vlaneseq
    %v6505 = vshrl.u32 %v6504, 7
    %v6506 = vsub.s32 %v6503, %v6505
    %v6507 = vrot.slane %v6500, %v6506
    %v6508 = vcombine.low %v5602, %v5609
    %v6510 = vunpack.c.l.s4 1983009808
    %v6511 = vunpack.c.0.s8 %v6510
    %v6512 = vlaneseq
    %v6513 = vshrl.u32 %v6512, 7
    %v6514 = vsub.s32 %v6511, %v6513
    %v6515 = vrot.slane %v6508, %v6514
    %v6516 = vcombine.low %v5612, %v5613
    %v6518 = vunpack.c.l.s4 1983009808
    %v6519 = vunpack.c.0.s8 %v6518
    %v6520 = vlaneseq
    %v6521 = vshrl.u32 %v6520, 7
    %v6522 = vsub.s32 %v6519, %v6521
    %v6523 = vrot.slane %v6516, %v6522
    %v6524 = vcombine.low %v6499, %v6507
    %v6526 = vunpack.c.l.s4 1934713408
    %v6527 = vunpack.c.0.s8 %v6526
    %v6528 = vlaneseq
    %v6529 = vshrl.u32 %v6528, 7
    %v6530 = vsub.s32 %v6527, %v6529
    %v6531 = vrot.slane %v6524, %v6530
    %v6532 = vcombine.low %v6515, %v6523
    %v6534 = vunpack.c.l.s4 1934713408
    %v6535 = vunpack.c.0.s8 %v6534
    %v6536 = vlaneseq
    %v6537 = vshrl.u32 %v6536, 7
    %v6538 = vsub.s32 %v6535, %v6537
    %v6539 = vrot.slane %v6532, %v6538
    %v6540 = vcombine.low %v6531, %v6539
    %v6541 = vcombine.high %v6531, %v6539
    %v6542 = vcombine.low %v5652, %v5659
    %v6544 = vunpack.c.l.s4 1983009808
    %v6545 = vunpack.c.0.s8 %v6544
    %v6546 = vlaneseq
    %v6547 = vshrl.u32 %v6546, 7
    %v6548 = vsub.s32 %v6545, %v6547
    %v6549 = vrot.slane %v6542, %v6548
    %v6550 = vcombine.low %v5676, %v5677
    %v6552 = vunpack.c.l.s4 1983009808
    %v6553 = vunpack.c.0.s8 %v6552
    %v6554 = vlaneseq
    %v6555 = vshrl.u32 %v6554, 7
    %v6556 = vsub.s32 %v6553, %v6555
    %v6557 = vrot.slane %v6550, %v6556
    %v6558 = vcombine.low %v5668, %v5675
    %v6560 = vunpack.c.l.s4 1983009808
    %v6561 = vunpack.c.0.s8 %v6560
    %v6562 = vlaneseq
    %v6563 = vshrl.u32 %v6562, 7
    %v6564 = vsub.s32 %v6561, %v6563
    %v6565 = vrot.slane %v6558, %v6564
    %v6566 = vcombine.low %v5678, %v5679
    %v6568 = vunpack.c.l.s4 1983009808
    %v6569 = vunpack.c.0.s8 %v6568
    %v6570 = vlaneseq
    %v6571 = vshrl.u32 %v6570, 7
    %v6572 = vsub.s32 %v6569, %v6571
    %v6573 = vrot.slane %v6566, %v6572
    %v6574 = vcombine.low %v6549, %v6557
    %v6576 = vunpack.c.l.s4 1934713408
    %v6577 = vunpack.c.0.s8 %v6576
    %v6578 = vlaneseq
    %v6579 = vshrl.u32 %v6578, 7
    %v6580 = vsub.s32 %v6577, %v6579
    %v6581 = vrot.slane %v6574, %v6580
    %v6582 = vcombine.low %v6565, %v6573
    %v6584 = vunpack.c.l.s4 1934713408
    %v6585 = vunpack.c.0.s8 %v6584
    %v6586 = vlaneseq
    %v6587 = vshrl.u32 %v6586, 7
    %v6588 = vsub.s32 %v6585, %v6587
    %v6589 = vrot.slane %v6582, %v6588
    %v6590 = vcombine.low %v6581, %v6589
    %v6591 = vcombine.high %v6581, %v6589
    %v6592 = vcombine.low %v5718, %v5725
    %v6594 = vunpack.c.l.s4 1983009808
    %v6595 = vunpack.c.0.s8 %v6594
    %v6596 = vlaneseq
    %v6597 = vshrl.u32 %v6596, 7
    %v6598 = vsub.s32 %v6595, %v6597
    %v6599 = vrot.slane %v6592, %v6598
    %v6600 = vcombine.low %v5742, %v5743
    %v6602 = vunpack.c.l.s4 1983009808
    %v6603 = vunpack.c.0.s8 %v6602
    %v6604 = vlaneseq
    %v6605 = vshrl.u32 %v6604, 7
    %v6606 = vsub.s32 %v6603, %v6605
    %v6607 = vrot.slane %v6600, %v6606
    %v6608 = vcombine.low %v5734, %v5741
    %v6610 = vunpack.c.l.s4 1983009808
    %v6611 = vunpack.c.0.s8 %v6610
    %v6612 = vlaneseq
    %v6613 = vshrl.u32 %v6612, 7
    %v6614 = vsub.s32 %v6611, %v6613
    %v6615 = vrot.slane %v6608, %v6614
    %v6616 = vcombine.low %v5744, %v5745
    %v6618 = vunpack.c.l.s4 1983009808
    %v6619 = vunpack.c.0.s8 %v6618
    %v6620 = vlaneseq
    %v6621 = vshrl.u32 %v6620, 7
    %v6622 = vsub.s32 %v6619, %v6621
    %v6623 = vrot.slane %v6616, %v6622
    %v6624 = vcombine.low %v6599, %v6607
    %v6626 = vunpack.c.l.s4 1934713408
    %v6627 = vunpack.c.0.s8 %v6626
    %v6628 = vlaneseq
    %v6629 = vshrl.u32 %v6628, 7
    %v6630 = vsub.s32 %v6627, %v6629
    %v6631 = vrot.slane %v6624, %v6630
    %v6632 = vcombine.low %v6615, %v6623
    %v6634 = vunpack.c.l.s4 1934713408
    %v6635 = vunpack.c.0.s8 %v6634
    %v6636 = vlaneseq
    %v6637 = vshrl.u32 %v6636, 7
    %v6638 = vsub.s32 %v6635, %v6637
    %v6639 = vrot.slane %v6632, %v6638
    %v6640 = vcombine.low %v6631, %v6639
    %v6641 = vcombine.high %v6631, %v6639
    %v6642 = vcombine.low %v5784, %v5791
    %v6644 = vunpack.c.l.s4 1983009808
    %v6645 = vunpack.c.0.s8 %v6644
    %v6646 = vlaneseq
    %v6647 = vshrl.u32 %v6646, 7
    %v6648 = vsub.s32 %v6645, %v6647
    %v6649 = vrot.slane %v6642, %v6648
    %v6650 = vcombine.low %v5808, %v5809
    %v6652 = vunpack.c.l.s4 1983009808
    %v6653 = vunpack.c.0.s8 %v6652
    %v6654 = vlaneseq
    %v6655 = vshrl.u32 %v6654, 7
    %v6656 = vsub.s32 %v6653, %v6655
    %v6657 = vrot.slane %v6650, %v6656
    %v6658 = vcombine.low %v5800, %v5807
    %v6660 = vunpack.c.l.s4 1983009808
    %v6661 = vunpack.c.0.s8 %v6660
    %v6662 = vlaneseq
    %v6663 = vshrl.u32 %v6662, 7
    %v6664 = vsub.s32 %v6661, %v6663
    %v6665 = vrot.slane %v6658, %v6664
    %v6666 = vcombine.low %v5810, %v5811
    %v6668 = vunpack.c.l.s4 1983009808
    %v6669 = vunpack.c.0.s8 %v6668
    %v6670 = vlaneseq
    %v6671 = vshrl.u32 %v6670, 7
    %v6672 = vsub.s32 %v6669, %v6671
    %v6673 = vrot.slane %v6666, %v6672
    %v6674 = vcombine.low %v6649, %v6657
    %v6676 = vunpack.c.l.s4 1934713408
    %v6677 = vunpack.c.0.s8 %v6676
    %v6678 = vlaneseq
    %v6679 = vshrl.u32 %v6678, 7
    %v6680 = vsub.s32 %v6677, %v6679
    %v6681 = vrot.slane %v6674, %v6680
    %v6682 = vcombine.low %v6665, %v6673
    %v6684 = vunpack.c.l.s4 1934713408
    %v6685 = vunpack.c.0.s8 %v6684
    %v6686 = vlaneseq
    %v6687 = vshrl.u32 %v6686, 7
    %v6688 = vsub.s32 %v6685, %v6687
    %v6689 = vrot.slane %v6682, %v6688
    %v6690 = vcombine.low %v6681, %v6689
    %v6691 = vcombine.high %v6681, %v6689
    %v6692 = vcombine.low %v5850, %v5857
    %v6694 = vunpack.c.l.s4 1983009808
    %v6695 = vunpack.c.0.s8 %v6694
    %v6696 = vlaneseq
    %v6697 = vshrl.u32 %v6696, 7
    %v6698 = vsub.s32 %v6695, %v6697
    %v6699 = vrot.slane %v6692, %v6698
    %v6700 = vcombine.low %v5874, %v5875
    %v6702 = vunpack.c.l.s4 1983009808
    %v6703 = vunpack.c.0.s8 %v6702
    %v6704 = vlaneseq
    %v6705 = vshrl.u32 %v6704, 7
    %v6706 = vsub.s32 %v6703, %v6705
    %v6707 = vrot.slane %v6700, %v6706
    %v6708 = vcombine.low %v5866, %v5873
    %v6710 = vunpack.c.l.s4 1983009808
    %v6711 = vunpack.c.0.s8 %v6710
    %v6712 = vlaneseq
    %v6713 = vshrl.u32 %v6712, 7
    %v6714 = vsub.s32 %v6711, %v6713
    %v6715 = vrot.slane %v6708, %v6714
    %v6716 = vcombine.low %v5876, %v5877
    %v6718 = vunpack.c.l.s4 1983009808
    %v6719 = vunpack.c.0.s8 %v6718
    %v6720 = vlaneseq
    %v6721 = vshrl.u32 %v6720, 7
    %v6722 = vsub.s32 %v6719, %v6721
    %v6723 = vrot.slane %v6716, %v6722
    %v6724 = vcombine.low %v6699, %v6707
    %v6726 = vunpack.c.l.s4 1934713408
    %v6727 = vunpack.c.0.s8 %v6726
    %v6728 = vlaneseq
    %v6729 = vshrl.u32 %v6728, 7
    %v6730 = vsub.s32 %v6727, %v6729
    %v6731 = vrot.slane %v6724, %v6730
    %v6732 = vcombine.low %v6715, %v6723
    %v6734 = vunpack.c.l.s4 1934713408
    %v6735 = vunpack.c.0.s8 %v6734
    %v6736 = vlaneseq
    %v6737 = vshrl.u32 %v6736, 7
    %v6738 = vsub.s32 %v6735, %v6737
    %v6739 = vrot.slane %v6732, %v6738
    %v6740 = vcombine.low %v6731, %v6739
    %v6741 = vcombine.high %v6731, %v6739
    %v6742 = vcombine.low %v5916, %v5923
    %v6744 = vunpack.c.l.s4 1983009808
    %v6745 = vunpack.c.0.s8 %v6744
    %v6746 = vlaneseq
    %v6747 = vshrl.u32 %v6746, 7
    %v6748 = vsub.s32 %v6745, %v6747
    %v6749 = vrot.slane %v6742, %v6748
    %v6750 = vcombine.low %v5940, %v5941
    %v6752 = vunpack.c.l.s4 1983009808
    %v6753 = vunpack.c.0.s8 %v6752
    %v6754 = vlaneseq
    %v6755 = vshrl.u32 %v6754, 7
    %v6756 = vsub.s32 %v6753, %v6755
    %v6757 = vrot.slane %v6750, %v6756
    %v6758 = vcombine.low %v5932, %v5939
    %v6760 = vunpack.c.l.s4 1983009808
    %v6761 = vunpack.c.0.s8 %v6760
    %v6762 = vlaneseq
    %v6763 = vshrl.u32 %v6762, 7
    %v6764 = vsub.s32 %v6761, %v6763
    %v6765 = vrot.slane %v6758, %v6764
    %v6766 = vcombine.low %v5942, %v5943
    %v6768 = vunpack.c.l.s4 1983009808
    %v6769 = vunpack.c.0.s8 %v6768
    %v6770 = vlaneseq
    %v6771 = vshrl.u32 %v6770, 7
    %v6772 = vsub.s32 %v6769, %v6771
    %v6773 = vrot.slane %v6766, %v6772
    %v6774 = vcombine.low %v6749, %v6757
    %v6776 = vunpack.c.l.s4 1934713408
    %v6777 = vunpack.c.0.s8 %v6776
    %v6778 = vlaneseq
    %v6779 = vshrl.u32 %v6778, 7
    %v6780 = vsub.s32 %v6777, %v6779
    %v6781 = vrot.slane %v6774, %v6780
    %v6782 = vcombine.low %v6765, %v6773
    %v6784 = vunpack.c.l.s4 1934713408
    %v6785 = vunpack.c.0.s8 %v6784
    %v6786 = vlaneseq
    %v6787 = vshrl.u32 %v6786, 7
    %v6788 = vsub.s32 %v6785, %v6787
    %v6789 = vrot.slane %v6782, %v6788
    %v6790 = vcombine.low %v6781, %v6789
    %v6791 = vcombine.high %v6781, %v6789
    %v6792 = vcombine.low %v5982, %v5989
    %v6794 = vunpack.c.l.s4 1983009808
    %v6795 = vunpack.c.0.s8 %v6794
    %v6796 = vlaneseq
    %v6797 = vshrl.u32 %v6796, 7
    %v6798 = vsub.s32 %v6795, %v6797
    %v6799 = vrot.slane %v6792, %v6798
    %v6800 = vcombine.low %v6006, %v6007
    %v6802 = vunpack.c.l.s4 1983009808
    %v6803 = vunpack.c.0.s8 %v6802
    %v6804 = vlaneseq
    %v6805 = vshrl.u32 %v6804, 7
    %v6806 = vsub.s32 %v6803, %v6805
    %v6807 = vrot.slane %v6800, %v6806
    %v6808 = vcombine.low %v5998, %v6005
    %v6810 = vunpack.c.l.s4 1983009808
    %v6811 = vunpack.c.0.s8 %v6810
    %v6812 = vlaneseq
    %v6813 = vshrl.u32 %v6812, 7
    %v6814 = vsub.s32 %v6811, %v6813
    %v6815 = vrot.slane %v6808, %v6814
    %v6816 = vcombine.low %v6008, %v6009
    %v6818 = vunpack.c.l.s4 1983009808
    %v6819 = vunpack.c.0.s8 %v6818
    %v6820 = vlaneseq
    %v6821 = vshrl.u32 %v6820, 7
    %v6822 = vsub.s32 %v6819, %v6821
    %v6823 = vrot.slane %v6816, %v6822
    %v6824 = vcombine.low %v6799, %v6807
    %v6826 = vunpack.c.l.s4 1934713408
    %v6827 = vunpack.c.0.s8 %v6826
    %v6828 = vlaneseq
    %v6829 = vshrl.u32 %v6828, 7
    %v6830 = vsub.s32 %v6827, %v6829
    %v6831 = vrot.slane %v6824, %v6830
    %v6832 = vcombine.low %v6815, %v6823
    %v6834 = vunpack.c.l.s4 1934713408
    %v6835 = vunpack.c.0.s8 %v6834
    %v6836 = vlaneseq
    %v6837 = vshrl.u32 %v6836, 7
    %v6838 = vsub.s32 %v6835, %v6837
    %v6839 = vrot.slane %v6832, %v6838
    %v6840 = vcombine.low %v6831, %v6839
    %v6841 = vcombine.high %v6831, %v6839
    %v6842 = vcombine.low %v6048, %v6055
    %v6844 = vunpack.c.l.s4 1983009808
    %v6845 = vunpack.c.0.s8 %v6844
    %v6846 = vlaneseq
    %v6847 = vshrl.u32 %v6846, 7
    %v6848 = vsub.s32 %v6845, %v6847
    %v6849 = vrot.slane %v6842, %v6848
    %v6850 = vcombine.low %v6072, %v6073
    %v6852 = vunpack.c.l.s4 1983009808
    %v6853 = vunpack.c.0.s8 %v6852
    %v6854 = vlaneseq
    %v6855 = vshrl.u32 %v6854, 7
    %v6856 = vsub.s32 %v6853, %v6855
    %v6857 = vrot.slane %v6850, %v6856
    %v6858 = vcombine.low %v6064, %v6071
    %v6860 = vunpack.c.l.s4 1983009808
    %v6861 = vunpack.c.0.s8 %v6860
    %v6862 = vlaneseq
    %v6863 = vshrl.u32 %v6862, 7
    %v6864 = vsub.s32 %v6861, %v6863
    %v6865 = vrot.slane %v6858, %v6864
    %v6866 = vcombine.low %v6074, %v6075
    %v6868 = vunpack.c.l.s4 1983009808
    %v6869 = vunpack.c.0.s8 %v6868
    %v6870 = vlaneseq
    %v6871 = vshrl.u32 %v6870, 7
    %v6872 = vsub.s32 %v6869, %v6871
    %v6873 = vrot.slane %v6866, %v6872
    %v6874 = vcombine.low %v6849, %v6857
    %v6876 = vunpack.c.l.s4 1934713408
    %v6877 = vunpack.c.0.s8 %v6876
    %v6878 = vlaneseq
    %v6879 = vshrl.u32 %v6878, 7
    %v6880 = vsub.s32 %v6877, %v6879
    %v6881 = vrot.slane %v6874, %v6880
    %v6882 = vcombine.low %v6865, %v6873
    %v6884 = vunpack.c.l.s4 1934713408
    %v6885 = vunpack.c.0.s8 %v6884
    %v6886 = vlaneseq
    %v6887 = vshrl.u32 %v6886, 7
    %v6888 = vsub.s32 %v6885, %v6887
    %v6889 = vrot.slane %v6882, %v6888
    %v6890 = vcombine.low %v6881, %v6889
    %v6891 = vcombine.high %v6881, %v6889
    %v6892 = vcombine.low %v6114, %v6121
    %v6894 = vunpack.c.l.s4 1983009808
    %v6895 = vunpack.c.0.s8 %v6894
    %v6896 = vlaneseq
    %v6897 = vshrl.u32 %v6896, 7
    %v6898 = vsub.s32 %v6895, %v6897
    %v6899 = vrot.slane %v6892, %v6898
    %v6900 = vcombine.low %v6138, %v6139
    %v6902 = vunpack.c.l.s4 1983009808
    %v6903 = vunpack.c.0.s8 %v6902
    %v6904 = vlaneseq
    %v6905 = vshrl.u32 %v6904, 7
    %v6906 = vsub.s32 %v6903, %v6905
    %v6907 = vrot.slane %v6900, %v6906
    %v6908 = vcombine.low %v6130, %v6137
    %v6910 = vunpack.c.l.s4 1983009808
    %v6911 = vunpack.c.0.s8 %v6910
    %v6912 = vlaneseq
    %v6913 = vshrl.u32 %v6912, 7
    %v6914 = vsub.s32 %v6911, %v6913
    %v6915 = vrot.slane %v6908, %v6914
    %v6916 = vcombine.low %v6140, %v6141
    %v6918 = vunpack.c.l.s4 1983009808
    %v6919 = vunpack.c.0.s8 %v6918
    %v6920 = vlaneseq
    %v6921 = vshrl.u32 %v6920, 7
    %v6922 = vsub.s32 %v6919, %v6921
    %v6923 = vrot.slane %v6916, %v6922
    %v6924 = vcombine.low %v6899, %v6907
    %v6926 = vunpack.c.l.s4 1934713408
    %v6927 = vunpack.c.0.s8 %v6926
    %v6928 = vlaneseq
    %v6929 = vshrl.u32 %v6928, 7
    %v6930 = vsub.s32 %v6927, %v6929
    %v6931 = vrot.slane %v6924, %v6930
    %v6932 = vcombine.low %v6915, %v6923
    %v6934 = vunpack.c.l.s4 1934713408
    %v6935 = vunpack.c.0.s8 %v6934
    %v6936 = vlaneseq
    %v6937 = vshrl.u32 %v6936, 7
    %v6938 = vsub.s32 %v6935, %v6937
    %v6939 = vrot.slane %v6932, %v6938
    %v6940 = vcombine.low %v6931, %v6939
    %v6941 = vcombine.high %v6931, %v6939
    %v6944 = vpack.i.b16 %v6240, %v6190
    %v6946 = vshrl.u32 %v6190, 16
    %v6947 = vshrl.u32 %v6240, 16
    %v6948 = vpack.i.b16 %v6947, %v6946
    %v6952 = vpack.i.b16 %v6241, %v6191
    %v6954 = vshrl.u32 %v6191, 16
    %v6955 = vshrl.u32 %v6241, 16
    %v6956 = vpack.i.b16 %v6955, %v6954
    %v6960 = vpack.i.b16 %v6340, %v6290
    %v6962 = vshrl.u32 %v6290, 16
    %v6963 = vshrl.u32 %v6340, 16
    %v6964 = vpack.i.b16 %v6963, %v6962
    %v6968 = vpack.i.b16 %v6341, %v6291
    %v6970 = vshrl.u32 %v6291, 16
    %v6971 = vshrl.u32 %v6341, 16
    %v6972 = vpack.i.b16 %v6971, %v6970
    %v6976 = vpack.i.b16 %v6440, %v6390
    %v6978 = vshrl.u32 %v6390, 16
    %v6979 = vshrl.u32 %v6440, 16
    %v6980 = vpack.i.b16 %v6979, %v6978
    %v6984 = vpack.i.b16 %v6441, %v6391
    %v6986 = vshrl.u32 %v6391, 16
    %v6987 = vshrl.u32 %v6441, 16
    %v6988 = vpack.i.b16 %v6987, %v6986
    %v6992 = vpack.i.b16 %v6540, %v6490
    %v6994 = vshrl.u32 %v6490, 16
    %v6995 = vshrl.u32 %v6540, 16
    %v6996 = vpack.i.b16 %v6995, %v6994
    %v7000 = vpack.i.b16 %v6541, %v6491
    %v7002 = vshrl.u32 %v6491, 16
    %v7003 = vshrl.u32 %v6541, 16
    %v7004 = vpack.i.b16 %v7003, %v7002
    %v7008 = vpack.i.b16 %v6640, %v6590
    %v7010 = vshrl.u32 %v6590, 16
    %v7011 = vshrl.u32 %v6640, 16
    %v7012 = vpack.i.b16 %v7011, %v7010
    %v7016 = vpack.i.b16 %v6641, %v6591
    %v7018 = vshrl.u32 %v6591, 16
    %v7019 = vshrl.u32 %v6641, 16
    %v7020 = vpack.i.b16 %v7019, %v7018
    %v7024 = vpack.i.b16 %v6740, %v6690
    %v7026 = vshrl.u32 %v6690, 16
    %v7027 = vshrl.u32 %v6740, 16
    %v7028 = vpack.i.b16 %v7027, %v7026
    %v7032 = vpack.i.b16 %v6741, %v6691
    %v7034 = vshrl.u32 %v6691, 16
    %v7035 = vshrl.u32 %v6741, 16
    %v7036 = vpack.i.b16 %v7035, %v7034
    %v7040 = vpack.i.b16 %v6840, %v6790
    %v7042 = vshrl.u32 %v6790, 16
    %v7043 = vshrl.u32 %v6840, 16
    %v7044 = vpack.i.b16 %v7043, %v7042
    %v7048 = vpack.i.b16 %v6841, %v6791
    %v7050 = vshrl.u32 %v6791, 16
    %v7051 = vshrl.u32 %v6841, 16
    %v7052 = vpack.i.b16 %v7051, %v7050
    %v7056 = vpack.i.b16 %v6940, %v6890
    %v7058 = vshrl.u32 %v6890, 16
    %v7059 = vshrl.u32 %v6940, 16
    %v7060 = vpack.i.b16 %v7059, %v7058
    %v7064 = vpack.i.b16 %v6941, %v6891
    %v7066 = vshrl.u32 %v6891, 16
    %v7067 = vshrl.u32 %v6941, 16
    %v7068 = vpack.i.b16 %v7067, %v7066
    %vm7070 = vcmask 261120
    %v7072 = vsel %vm7070, %v2672, 0
    %v7075 = vsel %vm7070, %v2684, 0
    %v7078 = vsel %vm7070, %v2696, 0
    %v7081 = vsel %vm7070, %v2708, 0
    %v7084 = vsel %vm7070, %v4808, 0
    %v7087 = vsel %vm7070, %v4820, 0
    %v7090 = vsel %vm7070, %v4832, 0
    %v7093 = vsel %vm7070, %v4844, 0
    %7095 = vmatprep.subr.bf16.mxu0 0
    %7096 = vmatpush1.bf16.xpose.msra.mxu0 %v7084
    %7097 = vmatprep.subr.bf16.mxu0 0
    %7098 = vmatpush1.bf16.xpose.msra.mxu0 %v7087
    %7099 = vmatprep.subr.bf16.mxu0 0
    %7100 = vmatpush1.bf16.xpose.msra.mxu0 %v7090
    %7101 = vmatprep.subr.bf16.mxu0 0
    %7102 = vmatpush1.bf16.xpose.msra.mxu0 %v7093
    %7103 = vmatprep.subr.bf16.mxu0 0
    %7104 = vmatpush1.bf16.xpose.msra.mxu0 0
    %7105 = vmatprep.subr.bf16.mxu0 0
    %7106 = vmatpush1.bf16.xpose.msra.mxu0 0
    %7107 = vmatprep.subr.bf16.mxu0 0
    %7108 = vmatpush1.bf16.xpose.msra.mxu0 0
    %7109 = vmatprep.subr.bf16.mxu0 0
    %7110 = vmatpush1.bf16.xpose.msra.mxu0 0
    %7111 = vmatprep.subr.bf16.mxu0 0
    %7112 = vmatpush1.bf16.xpose.msra.mxu0 0
    %7113 = vmatprep.subr.bf16.mxu0 0
    %7114 = vmatpush1.bf16.xpose.msra.mxu0 0
    %7115 = vmatprep.subr.bf16.mxu0 0
    %7116 = vmatpush1.bf16.xpose.msra.mxu0 0
    %7117 = vmatprep.subr.bf16.mxu0 0
    %7118 = vmatpush1.bf16.xpose.msra.mxu0 0
    %7119 = vmatprep.subr.bf16.mxu0 0
    %7120 = vmatpush1.bf16.xpose.msra.mxu0 0
    %7121 = vmatprep.subr.bf16.mxu0 0
    %7122 = vmatpush1.bf16.xpose.msra.mxu0 0
    %7123 = vmatprep.subr.bf16.mxu0 0
    %7124 = vmatpush1.bf16.xpose.msra.mxu0 0
    %7125 = vmatprep.subr.bf16.mxu0 0
    %7126 = vmatpush1.bf16.xpose.msra.mxu0 0
    %7127 = vmatprep.mubr.bf16.mxu0 0
    %7128 = vmatmul.mubr.bf16.gmra.mrb[0].mxu0 %v7072
    %v7129 = vpop.f32.mrb[0].mxu0
    %v7130 = vadd.f32 0.0, %v7129
    %v7131 = vpop.f32.mrb[0].mxu0
    %v7132 = vpop.f32.mrb[0].mxu0
    %v7133 = vadd.f32 0.0, %v7132
    %v7134 = vpop.f32.mrb[0].mxu0
    %7135 = vmatprep.mubr.bf16.mxu0 0
    %7136 = vmatmul.mubr.bf16.gmra.mrb[0].mxu0 %v7075
    %v7137 = vpop.f32.mrb[0].mxu0
    %v7138 = vadd.f32 0.0, %v7137
    %v7139 = vpop.f32.mrb[0].mxu0
    %v7140 = vpop.f32.mrb[0].mxu0
    %v7141 = vadd.f32 0.0, %v7140
    %v7142 = vpop.f32.mrb[0].mxu0
    %7143 = vmatprep.mubr.bf16.mxu0 0
    %7144 = vmatmul.mubr.bf16.gmra.mrb[0].mxu0 %v7078
    %v7145 = vpop.f32.mrb[0].mxu0
    %v7146 = vadd.f32 0.0, %v7145
    %v7147 = vpop.f32.mrb[0].mxu0
    %v7148 = vpop.f32.mrb[0].mxu0
    %v7149 = vadd.f32 0.0, %v7148
    %v7150 = vpop.f32.mrb[0].mxu0
    %7151 = vmatprep.mubr.bf16.mxu0 0
    %7152 = vmatmul.mubr.bf16.gmra.mrb[0].mxu0 %v7081
    %v7153 = vpop.f32.mrb[0].mxu0
    %v7154 = vadd.f32 0.0, %v7153
    %v7155 = vpop.f32.mrb[0].mxu0
    %v7156 = vpop.f32.mrb[0].mxu0
    %v7157 = vadd.f32 0.0, %v7156
    %v7158 = vpop.f32.mrb[0].mxu0
    %7159 = vdwg.mxu0
    %v7161 = vsel %vm7070, %v2675, 0
    %v7164 = vsel %vm7070, %v2687, 0
    %v7167 = vsel %vm7070, %v2699, 0
    %v7170 = vsel %vm7070, %v2711, 0
    %v7173 = vsel %vm7070, %v4811, 0
    %v7176 = vsel %vm7070, %v4823, 0
    %v7179 = vsel %vm7070, %v4835, 0
    %v7182 = vsel %vm7070, %v4847, 0
    %7184 = vmatprep.subr.bf16.mxu0 0
    %7185 = vmatpush1.bf16.xpose.msra.mxu0 %v7173
    %7186 = vmatprep.subr.bf16.mxu0 0
    %7187 = vmatpush1.bf16.xpose.msra.mxu0 %v7176
    %7188 = vmatprep.subr.bf16.mxu0 0
    %7189 = vmatpush1.bf16.xpose.msra.mxu0 %v7179
    %7190 = vmatprep.subr.bf16.mxu0 0
    %7191 = vmatpush1.bf16.xpose.msra.mxu0 %v7182
    %7192 = vmatprep.subr.bf16.mxu0 0
    %7193 = vmatpush1.bf16.xpose.msra.mxu0 0
    %7194 = vmatprep.subr.bf16.mxu0 0
    %7195 = vmatpush1.bf16.xpose.msra.mxu0 0
    %7196 = vmatprep.subr.bf16.mxu0 0
    %7197 = vmatpush1.bf16.xpose.msra.mxu0 0
    %7198 = vmatprep.subr.bf16.mxu0 0
    %7199 = vmatpush1.bf16.xpose.msra.mxu0 0
    %7200 = vmatprep.subr.bf16.mxu0 0
    %7201 = vmatpush1.bf16.xpose.msra.mxu0 0
    %7202 = vmatprep.subr.bf16.mxu0 0
    %7203 = vmatpush1.bf16.xpose.msra.mxu0 0
    %7204 = vmatprep.subr.bf16.mxu0 0
    %7205 = vmatpush1.bf16.xpose.msra.mxu0 0
    %7206 = vmatprep.subr.bf16.mxu0 0
    %7207 = vmatpush1.bf16.xpose.msra.mxu0 0
    %7208 = vmatprep.subr.bf16.mxu0 0
    %7209 = vmatpush1.bf16.xpose.msra.mxu0 0
    %7210 = vmatprep.subr.bf16.mxu0 0
    %7211 = vmatpush1.bf16.xpose.msra.mxu0 0
    %7212 = vmatprep.subr.bf16.mxu0 0
    %7213 = vmatpush1.bf16.xpose.msra.mxu0 0
    %7214 = vmatprep.subr.bf16.mxu0 0
    %7215 = vmatpush1.bf16.xpose.msra.mxu0 0
    %7216 = vmatprep.mubr.bf16.mxu0 0
    %7217 = vmatmul.mubr.bf16.gmra.mrb[0].mxu0 %v7161
    %v7218 = vpop.f32.mrb[0].mxu0
    %v7219 = vadd.f32 0.0, %v7218
    %v7220 = vpop.f32.mrb[0].mxu0
    %v7221 = vpop.f32.mrb[0].mxu0
    %v7222 = vadd.f32 0.0, %v7221
    %v7223 = vpop.f32.mrb[0].mxu0
    %7224 = vmatprep.mubr.bf16.mxu0 0
    %7225 = vmatmul.mubr.bf16.gmra.mrb[0].mxu0 %v7164
    %v7226 = vpop.f32.mrb[0].mxu0
    %v7227 = vadd.f32 0.0, %v7226
    %v7228 = vpop.f32.mrb[0].mxu0
    %v7229 = vpop.f32.mrb[0].mxu0
    %v7230 = vadd.f32 0.0, %v7229
    %v7231 = vpop.f32.mrb[0].mxu0
    %7232 = vmatprep.mubr.bf16.mxu0 0
    %7233 = vmatmul.mubr.bf16.gmra.mrb[0].mxu0 %v7167
    %v7234 = vpop.f32.mrb[0].mxu0
    %v7235 = vadd.f32 0.0, %v7234
    %v7236 = vpop.f32.mrb[0].mxu0
    %v7237 = vpop.f32.mrb[0].mxu0
    %v7238 = vadd.f32 0.0, %v7237
    %v7239 = vpop.f32.mrb[0].mxu0
    %7240 = vmatprep.mubr.bf16.mxu0 0
    %7241 = vmatmul.mubr.bf16.gmra.mrb[0].mxu0 %v7170
    %v7242 = vpop.f32.mrb[0].mxu0
    %v7243 = vadd.f32 0.0, %v7242
    %v7244 = vpop.f32.mrb[0].mxu0
    %v7245 = vpop.f32.mrb[0].mxu0
    %v7246 = vadd.f32 0.0, %v7245
    %v7247 = vpop.f32.mrb[0].mxu0
    %7248 = vdwg.mxu0
    %v7250 = vsel %vm7070, %v2678, 0
    %v7253 = vsel %vm7070, %v2690, 0
    %v7256 = vsel %vm7070, %v2702, 0
    %v7259 = vsel %vm7070, %v2714, 0
    %v7262 = vsel %vm7070, %v4814, 0
    %v7265 = vsel %vm7070, %v4826, 0
    %v7268 = vsel %vm7070, %v4838, 0
    %v7271 = vsel %vm7070, %v4850, 0
    %7273 = vmatprep.subr.bf16.mxu0 0
    %7274 = vmatpush1.bf16.xpose.msra.mxu0 %v7262
    %7275 = vmatprep.subr.bf16.mxu0 0
    %7276 = vmatpush1.bf16.xpose.msra.mxu0 %v7265
    %7277 = vmatprep.subr.bf16.mxu0 0
    %7278 = vmatpush1.bf16.xpose.msra.mxu0 %v7268
    %7279 = vmatprep.subr.bf16.mxu0 0
    %7280 = vmatpush1.bf16.xpose.msra.mxu0 %v7271
    %7281 = vmatprep.subr.bf16.mxu0 0
    %7282 = vmatpush1.bf16.xpose.msra.mxu0 0
    %7283 = vmatprep.subr.bf16.mxu0 0
    %7284 = vmatpush1.bf16.xpose.msra.mxu0 0
    %7285 = vmatprep.subr.bf16.mxu0 0
    %7286 = vmatpush1.bf16.xpose.msra.mxu0 0
    %7287 = vmatprep.subr.bf16.mxu0 0
    %7288 = vmatpush1.bf16.xpose.msra.mxu0 0
    %7289 = vmatprep.subr.bf16.mxu0 0
    %7290 = vmatpush1.bf16.xpose.msra.mxu0 0
    %7291 = vmatprep.subr.bf16.mxu0 0
    %7292 = vmatpush1.bf16.xpose.msra.mxu0 0
    %7293 = vmatprep.subr.bf16.mxu0 0
    %7294 = vmatpush1.bf16.xpose.msra.mxu0 0
    %7295 = vmatprep.subr.bf16.mxu0 0
    %7296 = vmatpush1.bf16.xpose.msra.mxu0 0
    %7297 = vmatprep.subr.bf16.mxu0 0
    %7298 = vmatpush1.bf16.xpose.msra.mxu0 0
    %7299 = vmatprep.subr.bf16.mxu0 0
    %7300 = vmatpush1.bf16.xpose.msra.mxu0 0
    %7301 = vmatprep.subr.bf16.mxu0 0
    %7302 = vmatpush1.bf16.xpose.msra.mxu0 0
    %7303 = vmatprep.subr.bf16.mxu0 0
    %7304 = vmatpush1.bf16.xpose.msra.mxu0 0
    %7305 = vmatprep.mubr.bf16.mxu0 0
    %7306 = vmatmul.mubr.bf16.gmra.mrb[0].mxu0 %v7250
    %v7307 = vpop.f32.mrb[0].mxu0
    %v7308 = vadd.f32 0.0, %v7307
    %v7309 = vpop.f32.mrb[0].mxu0
    %v7310 = vpop.f32.mrb[0].mxu0
    %v7311 = vadd.f32 0.0, %v7310
    %v7312 = vpop.f32.mrb[0].mxu0
    %7313 = vmatprep.mubr.bf16.mxu0 0
    %7314 = vmatmul.mubr.bf16.gmra.mrb[0].mxu0 %v7253
    %v7315 = vpop.f32.mrb[0].mxu0
    %v7316 = vadd.f32 0.0, %v7315
    %v7317 = vpop.f32.mrb[0].mxu0
    %v7318 = vpop.f32.mrb[0].mxu0
    %v7319 = vadd.f32 0.0, %v7318
    %v7320 = vpop.f32.mrb[0].mxu0
    %7321 = vmatprep.mubr.bf16.mxu0 0
    %7322 = vmatmul.mubr.bf16.gmra.mrb[0].mxu0 %v7256
    %v7323 = vpop.f32.mrb[0].mxu0
    %v7324 = vadd.f32 0.0, %v7323
    %v7325 = vpop.f32.mrb[0].mxu0
    %v7326 = vpop.f32.mrb[0].mxu0
    %v7327 = vadd.f32 0.0, %v7326
    %v7328 = vpop.f32.mrb[0].mxu0
    %7329 = vmatprep.mubr.bf16.mxu0 0
    %7330 = vmatmul.mubr.bf16.gmra.mrb[0].mxu0 %v7259
    %v7331 = vpop.f32.mrb[0].mxu0
    %v7332 = vadd.f32 0.0, %v7331
    %v7333 = vpop.f32.mrb[0].mxu0
    %v7334 = vpop.f32.mrb[0].mxu0
    %v7335 = vadd.f32 0.0, %v7334
    %v7336 = vpop.f32.mrb[0].mxu0
    %7337 = vdwg.mxu0
    %v7339 = vsel %vm7070, %v2681, 0
    %v7342 = vsel %vm7070, %v2693, 0
    %v7345 = vsel %vm7070, %v2705, 0
    %v7348 = vsel %vm7070, %v2717, 0
    %v7351 = vsel %vm7070, %v4817, 0
    %v7354 = vsel %vm7070, %v4829, 0
    %v7357 = vsel %vm7070, %v4841, 0
    %v7360 = vsel %vm7070, %v4853, 0
    %7362 = vmatprep.subr.bf16.mxu0 0
    %7363 = vmatpush1.bf16.xpose.msra.mxu0 %v7351
    %7364 = vmatprep.subr.bf16.mxu0 0
    %7365 = vmatpush1.bf16.xpose.msra.mxu0 %v7354
    %7366 = vmatprep.subr.bf16.mxu0 0
    %7367 = vmatpush1.bf16.xpose.msra.mxu0 %v7357
    %7368 = vmatprep.subr.bf16.mxu0 0
    %7369 = vmatpush1.bf16.xpose.msra.mxu0 %v7360
    %7370 = vmatprep.subr.bf16.mxu0 0
    %7371 = vmatpush1.bf16.xpose.msra.mxu0 0
    %7372 = vmatprep.subr.bf16.mxu0 0
    %7373 = vmatpush1.bf16.xpose.msra.mxu0 0
    %7374 = vmatprep.subr.bf16.mxu0 0
    %7375 = vmatpush1.bf16.xpose.msra.mxu0 0
    %7376 = vmatprep.subr.bf16.mxu0 0
    %7377 = vmatpush1.bf16.xpose.msra.mxu0 0
    %7378 = vmatprep.subr.bf16.mxu0 0
    %7379 = vmatpush1.bf16.xpose.msra.mxu0 0
    %7380 = vmatprep.subr.bf16.mxu0 0
    %7381 = vmatpush1.bf16.xpose.msra.mxu0 0
    %7382 = vmatprep.subr.bf16.mxu0 0
    %7383 = vmatpush1.bf16.xpose.msra.mxu0 0
    %7384 = vmatprep.subr.bf16.mxu0 0
    %7385 = vmatpush1.bf16.xpose.msra.mxu0 0
    %7386 = vmatprep.subr.bf16.mxu0 0
    %7387 = vmatpush1.bf16.xpose.msra.mxu0 0
    %7388 = vmatprep.subr.bf16.mxu0 0
    %7389 = vmatpush1.bf16.xpose.msra.mxu0 0
    %7390 = vmatprep.subr.bf16.mxu0 0
    %7391 = vmatpush1.bf16.xpose.msra.mxu0 0
    %7392 = vmatprep.subr.bf16.mxu0 0
    %7393 = vmatpush1.bf16.xpose.msra.mxu0 0
    %7394 = vmatprep.mubr.bf16.mxu0 0
    %7395 = vmatmul.mubr.bf16.gmra.mrb[0].mxu0 %v7339
    %v7396 = vpop.f32.mrb[0].mxu0
    %v7397 = vadd.f32 0.0, %v7396
    %v7398 = vpop.f32.mrb[0].mxu0
    %v7399 = vpop.f32.mrb[0].mxu0
    %v7400 = vadd.f32 0.0, %v7399
    %v7401 = vpop.f32.mrb[0].mxu0
    %7402 = vmatprep.mubr.bf16.mxu0 0
    %7403 = vmatmul.mubr.bf16.gmra.mrb[0].mxu0 %v7342
    %v7404 = vpop.f32.mrb[0].mxu0
    %v7405 = vadd.f32 0.0, %v7404
    %v7406 = vpop.f32.mrb[0].mxu0
    %v7407 = vpop.f32.mrb[0].mxu0
    %v7408 = vadd.f32 0.0, %v7407
    %v7409 = vpop.f32.mrb[0].mxu0
    %7410 = vmatprep.mubr.bf16.mxu0 0
    %7411 = vmatmul.mubr.bf16.gmra.mrb[0].mxu0 %v7345
    %v7412 = vpop.f32.mrb[0].mxu0
    %v7413 = vadd.f32 0.0, %v7412
    %v7414 = vpop.f32.mrb[0].mxu0
    %v7415 = vpop.f32.mrb[0].mxu0
    %v7416 = vadd.f32 0.0, %v7415
    %v7417 = vpop.f32.mrb[0].mxu0
    %7418 = vmatprep.mubr.bf16.mxu0 0
    %7419 = vmatmul.mubr.bf16.gmra.mrb[0].mxu0 %v7348
    %v7420 = vpop.f32.mrb[0].mxu0
    %v7421 = vadd.f32 0.0, %v7420
    %v7422 = vpop.f32.mrb[0].mxu0
    %v7423 = vpop.f32.mrb[0].mxu0
    %v7424 = vadd.f32 0.0, %v7423
    %v7425 = vpop.f32.mrb[0].mxu0
    %7426 = vdwg.mxu0
    %v7428 = vsel %vm7070, %v2720, 0
    %v7431 = vsel %vm7070, %v2732, 0
    %v7434 = vsel %vm7070, %v2744, 0
    %v7437 = vsel %vm7070, %v2756, 0
    %v7440 = vsel %vm7070, %v4856, 0
    %v7443 = vsel %vm7070, %v4868, 0
    %v7446 = vsel %vm7070, %v4880, 0
    %v7449 = vsel %vm7070, %v4892, 0
    %7451 = vmatprep.subr.bf16.mxu0 0
    %7452 = vmatpush1.bf16.xpose.msra.mxu0 %v7440
    %7453 = vmatprep.subr.bf16.mxu0 0
    %7454 = vmatpush1.bf16.xpose.msra.mxu0 %v7443
    %7455 = vmatprep.subr.bf16.mxu0 0
    %7456 = vmatpush1.bf16.xpose.msra.mxu0 %v7446
    %7457 = vmatprep.subr.bf16.mxu0 0
    %7458 = vmatpush1.bf16.xpose.msra.mxu0 %v7449
    %7459 = vmatprep.subr.bf16.mxu0 0
    %7460 = vmatpush1.bf16.xpose.msra.mxu0 0
    %7461 = vmatprep.subr.bf16.mxu0 0
    %7462 = vmatpush1.bf16.xpose.msra.mxu0 0
    %7463 = vmatprep.subr.bf16.mxu0 0
    %7464 = vmatpush1.bf16.xpose.msra.mxu0 0
    %7465 = vmatprep.subr.bf16.mxu0 0
    %7466 = vmatpush1.bf16.xpose.msra.mxu0 0
    %7467 = vmatprep.subr.bf16.mxu0 0
    %7468 = vmatpush1.bf16.xpose.msra.mxu0 0
    %7469 = vmatprep.subr.bf16.mxu0 0
    %7470 = vmatpush1.bf16.xpose.msra.mxu0 0
    %7471 = vmatprep.subr.bf16.mxu0 0
    %7472 = vmatpush1.bf16.xpose.msra.mxu0 0
    %7473 = vmatprep.subr.bf16.mxu0 0
    %7474 = vmatpush1.bf16.xpose.msra.mxu0 0
    %7475 = vmatprep.subr.bf16.mxu0 0
    %7476 = vmatpush1.bf16.xpose.msra.mxu0 0
    %7477 = vmatprep.subr.bf16.mxu0 0
    %7478 = vmatpush1.bf16.xpose.msra.mxu0 0
    %7479 = vmatprep.subr.bf16.mxu0 0
    %7480 = vmatpush1.bf16.xpose.msra.mxu0 0
    %7481 = vmatprep.subr.bf16.mxu0 0
    %7482 = vmatpush1.bf16.xpose.msra.mxu0 0
    %7483 = vmatprep.mubr.bf16.mxu0 0
    %7484 = vmatmul.mubr.bf16.gmra.mrb[0].mxu0 %v7428
    %v7485 = vpop.f32.mrb[0].mxu0
    %v7486 = vadd.f32 0.0, %v7485
    %v7487 = vpop.f32.mrb[0].mxu0
    %v7488 = vpop.f32.mrb[0].mxu0
    %v7489 = vadd.f32 0.0, %v7488
    %v7490 = vpop.f32.mrb[0].mxu0
    %7491 = vmatprep.mubr.bf16.mxu0 0
    %7492 = vmatmul.mubr.bf16.gmra.mrb[0].mxu0 %v7431
    %v7493 = vpop.f32.mrb[0].mxu0
    %v7494 = vadd.f32 0.0, %v7493
    %v7495 = vpop.f32.mrb[0].mxu0
    %v7496 = vpop.f32.mrb[0].mxu0
    %v7497 = vadd.f32 0.0, %v7496
    %v7498 = vpop.f32.mrb[0].mxu0
    %7499 = vmatprep.mubr.bf16.mxu0 0
    %7500 = vmatmul.mubr.bf16.gmra.mrb[0].mxu0 %v7434
    %v7501 = vpop.f32.mrb[0].mxu0
    %v7502 = vadd.f32 0.0, %v7501
    %v7503 = vpop.f32.mrb[0].mxu0
    %v7504 = vpop.f32.mrb[0].mxu0
    %v7505 = vadd.f32 0.0, %v7504
    %v7506 = vpop.f32.mrb[0].mxu0
    %7507 = vmatprep.mubr.bf16.mxu0 0
    %7508 = vmatmul.mubr.bf16.gmra.mrb[0].mxu0 %v7437
    %v7509 = vpop.f32.mrb[0].mxu0
    %v7510 = vadd.f32 0.0, %v7509
    %v7511 = vpop.f32.mrb[0].mxu0
    %v7512 = vpop.f32.mrb[0].mxu0
    %v7513 = vadd.f32 0.0, %v7512
    %v7514 = vpop.f32.mrb[0].mxu0
    %7515 = vdwg.mxu0
    %v7517 = vsel %vm7070, %v2723, 0
    %v7520 = vsel %vm7070, %v2735, 0
    %v7523 = vsel %vm7070, %v2747, 0
    %v7526 = vsel %vm7070, %v2759, 0
    %v7529 = vsel %vm7070, %v4859, 0
    %v7532 = vsel %vm7070, %v4871, 0
    %v7535 = vsel %vm7070, %v4883, 0
    %v7538 = vsel %vm7070, %v4895, 0
    %7540 = vmatprep.subr.bf16.mxu0 0
    %7541 = vmatpush1.bf16.xpose.msra.mxu0 %v7529
    %7542 = vmatprep.subr.bf16.mxu0 0
    %7543 = vmatpush1.bf16.xpose.msra.mxu0 %v7532
    %7544 = vmatprep.subr.bf16.mxu0 0
    %7545 = vmatpush1.bf16.xpose.msra.mxu0 %v7535
    %7546 = vmatprep.subr.bf16.mxu0 0
    %7547 = vmatpush1.bf16.xpose.msra.mxu0 %v7538
    %7548 = vmatprep.subr.bf16.mxu0 0
    %7549 = vmatpush1.bf16.xpose.msra.mxu0 0
    %7550 = vmatprep.subr.bf16.mxu0 0
    %7551 = vmatpush1.bf16.xpose.msra.mxu0 0
    %7552 = vmatprep.subr.bf16.mxu0 0
    %7553 = vmatpush1.bf16.xpose.msra.mxu0 0
    %7554 = vmatprep.subr.bf16.mxu0 0
    %7555 = vmatpush1.bf16.xpose.msra.mxu0 0
    %7556 = vmatprep.subr.bf16.mxu0 0
    %7557 = vmatpush1.bf16.xpose.msra.mxu0 0
    %7558 = vmatprep.subr.bf16.mxu0 0
    %7559 = vmatpush1.bf16.xpose.msra.mxu0 0
    %7560 = vmatprep.subr.bf16.mxu0 0
    %7561 = vmatpush1.bf16.xpose.msra.mxu0 0
    %7562 = vmatprep.subr.bf16.mxu0 0
    %7563 = vmatpush1.bf16.xpose.msra.mxu0 0
    %7564 = vmatprep.subr.bf16.mxu0 0
    %7565 = vmatpush1.bf16.xpose.msra.mxu0 0
    %7566 = vmatprep.subr.bf16.mxu0 0
    %7567 = vmatpush1.bf16.xpose.msra.mxu0 0
    %7568 = vmatprep.subr.bf16.mxu0 0
    %7569 = vmatpush1.bf16.xpose.msra.mxu0 0
    %7570 = vmatprep.subr.bf16.mxu0 0
    %7571 = vmatpush1.bf16.xpose.msra.mxu0 0
    %7572 = vmatprep.mubr.bf16.mxu0 0
    %7573 = vmatmul.mubr.bf16.gmra.mrb[0].mxu0 %v7517
    %v7574 = vpop.f32.mrb[0].mxu0
    %v7575 = vadd.f32 0.0, %v7574
    %v7576 = vpop.f32.mrb[0].mxu0
    %v7577 = vpop.f32.mrb[0].mxu0
    %v7578 = vadd.f32 0.0, %v7577
    %v7579 = vpop.f32.mrb[0].mxu0
    %7580 = vmatprep.mubr.bf16.mxu0 0
    %7581 = vmatmul.mubr.bf16.gmra.mrb[0].mxu0 %v7520
    %v7582 = vpop.f32.mrb[0].mxu0
    %v7583 = vadd.f32 0.0, %v7582
    %v7584 = vpop.f32.mrb[0].mxu0
    %v7585 = vpop.f32.mrb[0].mxu0
    %v7586 = vadd.f32 0.0, %v7585
    %v7587 = vpop.f32.mrb[0].mxu0
    %7588 = vmatprep.mubr.bf16.mxu0 0
    %7589 = vmatmul.mubr.bf16.gmra.mrb[0].mxu0 %v7523
    %v7590 = vpop.f32.mrb[0].mxu0
    %v7591 = vadd.f32 0.0, %v7590
    %v7592 = vpop.f32.mrb[0].mxu0
    %v7593 = vpop.f32.mrb[0].mxu0
    %v7594 = vadd.f32 0.0, %v7593
    %v7595 = vpop.f32.mrb[0].mxu0
    %7596 = vmatprep.mubr.bf16.mxu0 0
    %7597 = vmatmul.mubr.bf16.gmra.mrb[0].mxu0 %v7526
    %v7598 = vpop.f32.mrb[0].mxu0
    %v7599 = vadd.f32 0.0, %v7598
    %v7600 = vpop.f32.mrb[0].mxu0
    %v7601 = vpop.f32.mrb[0].mxu0
    %v7602 = vadd.f32 0.0, %v7601
    %v7603 = vpop.f32.mrb[0].mxu0
    %7604 = vdwg.mxu0
    %v7606 = vsel %vm7070, %v2726, 0
    %v7609 = vsel %vm7070, %v2738, 0
    %v7612 = vsel %vm7070, %v2750, 0
    %v7615 = vsel %vm7070, %v2762, 0
    %v7618 = vsel %vm7070, %v4862, 0
    %v7621 = vsel %vm7070, %v4874, 0
    %v7624 = vsel %vm7070, %v4886, 0
    %v7627 = vsel %vm7070, %v4898, 0
    %7629 = vmatprep.subr.bf16.mxu0 0
    %7630 = vmatpush1.bf16.xpose.msra.mxu0 %v7618
    %7631 = vmatprep.subr.bf16.mxu0 0
    %7632 = vmatpush1.bf16.xpose.msra.mxu0 %v7621
    %7633 = vmatprep.subr.bf16.mxu0 0
    %7634 = vmatpush1.bf16.xpose.msra.mxu0 %v7624
    %7635 = vmatprep.subr.bf16.mxu0 0
    %7636 = vmatpush1.bf16.xpose.msra.mxu0 %v7627
    %7637 = vmatprep.subr.bf16.mxu0 0
    %7638 = vmatpush1.bf16.xpose.msra.mxu0 0
    %7639 = vmatprep.subr.bf16.mxu0 0
    %7640 = vmatpush1.bf16.xpose.msra.mxu0 0
    %7641 = vmatprep.subr.bf16.mxu0 0
    %7642 = vmatpush1.bf16.xpose.msra.mxu0 0
    %7643 = vmatprep.subr.bf16.mxu0 0
    %7644 = vmatpush1.bf16.xpose.msra.mxu0 0
    %7645 = vmatprep.subr.bf16.mxu0 0
    %7646 = vmatpush1.bf16.xpose.msra.mxu0 0
    %7647 = vmatprep.subr.bf16.mxu0 0
    %7648 = vmatpush1.bf16.xpose.msra.mxu0 0
    %7649 = vmatprep.subr.bf16.mxu0 0
    %7650 = vmatpush1.bf16.xpose.msra.mxu0 0
    %7651 = vmatprep.subr.bf16.mxu0 0
    %7652 = vmatpush1.bf16.xpose.msra.mxu0 0
    %7653 = vmatprep.subr.bf16.mxu0 0
    %7654 = vmatpush1.bf16.xpose.msra.mxu0 0
    %7655 = vmatprep.subr.bf16.mxu0 0
    %7656 = vmatpush1.bf16.xpose.msra.mxu0 0
    %7657 = vmatprep.subr.bf16.mxu0 0
    %7658 = vmatpush1.bf16.xpose.msra.mxu0 0
    %7659 = vmatprep.subr.bf16.mxu0 0
    %7660 = vmatpush1.bf16.xpose.msra.mxu0 0
    %7661 = vmatprep.mubr.bf16.mxu0 0
    %7662 = vmatmul.mubr.bf16.gmra.mrb[0].mxu0 %v7606
    %v7663 = vpop.f32.mrb[0].mxu0
    %v7664 = vadd.f32 0.0, %v7663
    %v7665 = vpop.f32.mrb[0].mxu0
    %v7666 = vpop.f32.mrb[0].mxu0
    %v7667 = vadd.f32 0.0, %v7666
    %v7668 = vpop.f32.mrb[0].mxu0
    %7669 = vmatprep.mubr.bf16.mxu0 0
    %7670 = vmatmul.mubr.bf16.gmra.mrb[0].mxu0 %v7609
    %v7671 = vpop.f32.mrb[0].mxu0
    %v7672 = vadd.f32 0.0, %v7671
    %v7673 = vpop.f32.mrb[0].mxu0
    %v7674 = vpop.f32.mrb[0].mxu0
    %v7675 = vadd.f32 0.0, %v7674
    %v7676 = vpop.f32.mrb[0].mxu0
    %7677 = vmatprep.mubr.bf16.mxu0 0
    %7678 = vmatmul.mubr.bf16.gmra.mrb[0].mxu0 %v7612
    %v7679 = vpop.f32.mrb[0].mxu0
    %v7680 = vadd.f32 0.0, %v7679
    %v7681 = vpop.f32.mrb[0].mxu0
    %v7682 = vpop.f32.mrb[0].mxu0
    %v7683 = vadd.f32 0.0, %v7682
    %v7684 = vpop.f32.mrb[0].mxu0
    %7685 = vmatprep.mubr.bf16.mxu0 0
    %7686 = vmatmul.mubr.bf16.gmra.mrb[0].mxu0 %v7615
    %v7687 = vpop.f32.mrb[0].mxu0
    %v7688 = vadd.f32 0.0, %v7687
    %v7689 = vpop.f32.mrb[0].mxu0
    %v7690 = vpop.f32.mrb[0].mxu0
    %v7691 = vadd.f32 0.0, %v7690
    %v7692 = vpop.f32.mrb[0].mxu0
    %7693 = vdwg.mxu0
    %v7695 = vsel %vm7070, %v2729, 0
    %v7698 = vsel %vm7070, %v2741, 0
    %v7701 = vsel %vm7070, %v2753, 0
    %v7704 = vsel %vm7070, %v2765, 0
    %v7707 = vsel %vm7070, %v4865, 0
    %v7710 = vsel %vm7070, %v4877, 0
    %v7713 = vsel %vm7070, %v4889, 0
    %v7716 = vsel %vm7070, %v4901, 0
    %7718 = vmatprep.subr.bf16.mxu0 0
    %7719 = vmatpush1.bf16.xpose.msra.mxu0 %v7707
    %7720 = vmatprep.subr.bf16.mxu0 0
    %7721 = vmatpush1.bf16.xpose.msra.mxu0 %v7710
    %7722 = vmatprep.subr.bf16.mxu0 0
    %7723 = vmatpush1.bf16.xpose.msra.mxu0 %v7713
    %7724 = vmatprep.subr.bf16.mxu0 0
    %7725 = vmatpush1.bf16.xpose.msra.mxu0 %v7716
    %7726 = vmatprep.subr.bf16.mxu0 0
    %7727 = vmatpush1.bf16.xpose.msra.mxu0 0
    %7728 = vmatprep.subr.bf16.mxu0 0
    %7729 = vmatpush1.bf16.xpose.msra.mxu0 0
    %7730 = vmatprep.subr.bf16.mxu0 0
    %7731 = vmatpush1.bf16.xpose.msra.mxu0 0
    %7732 = vmatprep.subr.bf16.mxu0 0
    %7733 = vmatpush1.bf16.xpose.msra.mxu0 0
    %7734 = vmatprep.subr.bf16.mxu0 0
    %7735 = vmatpush1.bf16.xpose.msra.mxu0 0
    %7736 = vmatprep.subr.bf16.mxu0 0
    %7737 = vmatpush1.bf16.xpose.msra.mxu0 0
    %7738 = vmatprep.subr.bf16.mxu0 0
    %7739 = vmatpush1.bf16.xpose.msra.mxu0 0
    %7740 = vmatprep.subr.bf16.mxu0 0
    %7741 = vmatpush1.bf16.xpose.msra.mxu0 0
    %7742 = vmatprep.subr.bf16.mxu0 0
    %7743 = vmatpush1.bf16.xpose.msra.mxu0 0
    %7744 = vmatprep.subr.bf16.mxu0 0
    %7745 = vmatpush1.bf16.xpose.msra.mxu0 0
    %7746 = vmatprep.subr.bf16.mxu0 0
    %7747 = vmatpush1.bf16.xpose.msra.mxu0 0
    %7748 = vmatprep.subr.bf16.mxu0 0
    %7749 = vmatpush1.bf16.xpose.msra.mxu0 0
    %7750 = vmatprep.mubr.bf16.mxu0 0
    %7751 = vmatmul.mubr.bf16.gmra.mrb[0].mxu0 %v7695
    %v7752 = vpop.f32.mrb[0].mxu0
    %v7753 = vadd.f32 0.0, %v7752
    %v7754 = vpop.f32.mrb[0].mxu0
    %v7755 = vpop.f32.mrb[0].mxu0
    %v7756 = vadd.f32 0.0, %v7755
    %v7757 = vpop.f32.mrb[0].mxu0
    %7758 = vmatprep.mubr.bf16.mxu0 0
    %7759 = vmatmul.mubr.bf16.gmra.mrb[0].mxu0 %v7698
    %v7760 = vpop.f32.mrb[0].mxu0
    %v7761 = vadd.f32 0.0, %v7760
    %v7762 = vpop.f32.mrb[0].mxu0
    %v7763 = vpop.f32.mrb[0].mxu0
    %v7764 = vadd.f32 0.0, %v7763
    %v7765 = vpop.f32.mrb[0].mxu0
    %7766 = vmatprep.mubr.bf16.mxu0 0
    %7767 = vmatmul.mubr.bf16.gmra.mrb[0].mxu0 %v7701
    %v7768 = vpop.f32.mrb[0].mxu0
    %v7769 = vadd.f32 0.0, %v7768
    %v7770 = vpop.f32.mrb[0].mxu0
    %v7771 = vpop.f32.mrb[0].mxu0
    %v7772 = vadd.f32 0.0, %v7771
    %v7773 = vpop.f32.mrb[0].mxu0
    %7774 = vmatprep.mubr.bf16.mxu0 0
    %7775 = vmatmul.mubr.bf16.gmra.mrb[0].mxu0 %v7704
    %v7776 = vpop.f32.mrb[0].mxu0
    %v7777 = vadd.f32 0.0, %v7776
    %v7778 = vpop.f32.mrb[0].mxu0
    %v7779 = vpop.f32.mrb[0].mxu0
    %v7780 = vadd.f32 0.0, %v7779
    %v7781 = vpop.f32.mrb[0].mxu0
    %7782 = vdwg.mxu0
    %v7783 = vlaneseq
    %v7784 = vshrl.u32 %v7783, 7
    %v7785 = vadd.s32 %v7784, 8
    %v7786 = vadd.s32 %v7784, 16
    %v7787 = vadd.s32 %v7784, 24
    %v7788 = vadd.s32 %v7784, 32
    %v7789 = vadd.s32 %v7784, 40
    %v7790 = vadd.s32 %v7784, 48
    %v7791 = vadd.s32 %v7784, 56
    %v7792 = vlaneseq
    %v7793 = vand.u32 %v7792, 127
    %vm7794 = vcmp.le.s32.totalorder %v7793, %v7784
    %vm7795 = vcmp.le.s32.totalorder %v7793, %v7785
    %vm7796 = vcmp.le.s32.totalorder %v7793, %v7786
    %vm7797 = vcmp.le.s32.totalorder %v7793, %v7787
    %vm7798 = vcmp.le.s32.totalorder %v7793, %v7788
    %vm7799 = vcmp.le.s32.totalorder %v7793, %v7789
    %vm7800 = vcmp.le.s32.totalorder %v7793, %v7790
    %vm7801 = vcmp.le.s32.totalorder %v7793, %v7791
    %v7802 = vsel %vm7794, 1, 0
    %v7803 = vsel %vm7795, 1, 0
    %v7804 = vsel %vm7796, 1, 0
    %v7805 = vsel %vm7797, 1, 0
    %v7806 = vsel %vm7798, 1, 0
    %v7807 = vsel %vm7799, 1, 0
    %v7808 = vsel %vm7800, 1, 0
    %v7809 = vsel %vm7801, 1, 0
    %vm7810 = vcmp.eq.s32.totalorder %v7802, 1
    %vm7811 = vcmp.eq.s32.totalorder %v7803, 1
    %vm7812 = vcmp.eq.s32.totalorder %v7804, 1
    %vm7813 = vcmp.eq.s32.totalorder %v7805, 1
    %vm7814 = vcmp.eq.s32.totalorder %v7806, 1
    %vm7815 = vcmp.eq.s32.totalorder %v7807, 1
    %vm7816 = vcmp.eq.s32.totalorder %v7808, 1
    %vm7817 = vcmp.eq.s32.totalorder %v7809, 1
    %v7818 = vsel %vm7810, %v7130, -1e+30
    %v7819 = vsel %vm7811, %v7133, -1e+30
    %v7820 = vsel %vm7812, %v7138, -1e+30
    %v7821 = vsel %vm7813, %v7141, -1e+30
    %v7822 = vsel %vm7814, %v7146, -1e+30
    %v7823 = vsel %vm7815, %v7149, -1e+30
    %v7824 = vsel %vm7816, %v7154, -1e+30
    %v7825 = vsel %vm7817, %v7157, -1e+30
    %v7826 = vsel %vm7810, %v7219, -1e+30
    %v7827 = vsel %vm7811, %v7222, -1e+30
    %v7828 = vsel %vm7812, %v7227, -1e+30
    %v7829 = vsel %vm7813, %v7230, -1e+30
    %v7830 = vsel %vm7814, %v7235, -1e+30
    %v7831 = vsel %vm7815, %v7238, -1e+30
    %v7832 = vsel %vm7816, %v7243, -1e+30
    %v7833 = vsel %vm7817, %v7246, -1e+30
    %v7834 = vsel %vm7810, %v7308, -1e+30
    %v7835 = vsel %vm7811, %v7311, -1e+30
    %v7836 = vsel %vm7812, %v7316, -1e+30
    %v7837 = vsel %vm7813, %v7319, -1e+30
    %v7838 = vsel %vm7814, %v7324, -1e+30
    %v7839 = vsel %vm7815, %v7327, -1e+30
    %v7840 = vsel %vm7816, %v7332, -1e+30
    %v7841 = vsel %vm7817, %v7335, -1e+30
    %v7842 = vsel %vm7810, %v7397, -1e+30
    %v7843 = vsel %vm7811, %v7400, -1e+30
    %v7844 = vsel %vm7812, %v7405, -1e+30
    %v7845 = vsel %vm7813, %v7408, -1e+30
    %v7846 = vsel %vm7814, %v7413, -1e+30
    %v7847 = vsel %vm7815, %v7416, -1e+30
    %v7848 = vsel %vm7816, %v7421, -1e+30
    %v7849 = vsel %vm7817, %v7424, -1e+30
    %v7850 = vsel %vm7810, %v7486, -1e+30
    %v7851 = vsel %vm7811, %v7489, -1e+30
    %v7852 = vsel %vm7812, %v7494, -1e+30
    %v7853 = vsel %vm7813, %v7497, -1e+30
    %v7854 = vsel %vm7814, %v7502, -1e+30
    %v7855 = vsel %vm7815, %v7505, -1e+30
    %v7856 = vsel %vm7816, %v7510, -1e+30
    %v7857 = vsel %vm7817, %v7513, -1e+30
    %v7858 = vsel %vm7810, %v7575, -1e+30
    %v7859 = vsel %vm7811, %v7578, -1e+30
    %v7860 = vsel %vm7812, %v7583, -1e+30
    %v7861 = vsel %vm7813, %v7586, -1e+30
    %v7862 = vsel %vm7814, %v7591, -1e+30
    %v7863 = vsel %vm7815, %v7594, -1e+30
    %v7864 = vsel %vm7816, %v7599, -1e+30
    %v7865 = vsel %vm7817, %v7602, -1e+30
    %v7866 = vsel %vm7810, %v7664, -1e+30
    %v7867 = vsel %vm7811, %v7667, -1e+30
    %v7868 = vsel %vm7812, %v7672, -1e+30
    %v7869 = vsel %vm7813, %v7675, -1e+30
    %v7870 = vsel %vm7814, %v7680, -1e+30
    %v7871 = vsel %vm7815, %v7683, -1e+30
    %v7872 = vsel %vm7816, %v7688, -1e+30
    %v7873 = vsel %vm7817, %v7691, -1e+30
    %v7874 = vsel %vm7810, %v7753, -1e+30
    %v7875 = vsel %vm7811, %v7756, -1e+30
    %v7876 = vsel %vm7812, %v7761, -1e+30
    %v7877 = vsel %vm7813, %v7764, -1e+30
    %v7878 = vsel %vm7814, %v7769, -1e+30
    %v7879 = vsel %vm7815, %v7772, -1e+30
    %v7880 = vsel %vm7816, %v7777, -1e+30
    %v7881 = vsel %vm7817, %v7780, -1e+30
    %vm7882 = vcmask 523264
    %v7883 = vsel %vm7882, %v7818, -inf
    %7884 = vmax.xlane.f32.xlu0 %v7883
    %v7885 = vpop.xlane.xlu0 %7884
    %v7886 = vsel %vm7882, %v7819, -inf
    %7887 = vmax.xlane.f32.xlu0 %v7886
    %v7888 = vpop.xlane.xlu0 %7887
    %v7889 = vsel %vm7882, %v7820, -inf
    %7890 = vmax.xlane.f32.xlu0 %v7889
    %v7891 = vpop.xlane.xlu0 %7890
    %v7892 = vsel %vm7882, %v7821, -inf
    %7893 = vmax.xlane.f32.xlu0 %v7892
    %v7894 = vpop.xlane.xlu0 %7893
    %v7895 = vsel %vm7882, %v7822, -inf
    %7896 = vmax.xlane.f32.xlu0 %v7895
    %v7897 = vpop.xlane.xlu0 %7896
    %v7898 = vsel %vm7882, %v7823, -inf
    %7899 = vmax.xlane.f32.xlu0 %v7898
    %v7900 = vpop.xlane.xlu0 %7899
    %v7901 = vsel %vm7882, %v7824, -inf
    %7902 = vmax.xlane.f32.xlu0 %v7901
    %v7903 = vpop.xlane.xlu0 %7902
    %v7904 = vsel %vm7882, %v7825, -inf
    %7905 = vmax.xlane.f32.xlu0 %v7904
    %v7906 = vpop.xlane.xlu0 %7905
    %v7907 = vsel %vm7882, %v7826, -inf
    %7908 = vmax.xlane.f32.xlu0 %v7907
    %v7909 = vpop.xlane.xlu0 %7908
    %v7910 = vsel %vm7882, %v7827, -inf
    %7911 = vmax.xlane.f32.xlu0 %v7910
    %v7912 = vpop.xlane.xlu0 %7911
    %v7913 = vsel %vm7882, %v7828, -inf
    %7914 = vmax.xlane.f32.xlu0 %v7913
    %v7915 = vpop.xlane.xlu0 %7914
    %v7916 = vsel %vm7882, %v7829, -inf
    %7917 = vmax.xlane.f32.xlu0 %v7916
    %v7918 = vpop.xlane.xlu0 %7917
    %v7919 = vsel %vm7882, %v7830, -inf
    %7920 = vmax.xlane.f32.xlu0 %v7919
    %v7921 = vpop.xlane.xlu0 %7920
    %v7922 = vsel %vm7882, %v7831, -inf
    %7923 = vmax.xlane.f32.xlu0 %v7922
    %v7924 = vpop.xlane.xlu0 %7923
    %v7925 = vsel %vm7882, %v7832, -inf
    %7926 = vmax.xlane.f32.xlu0 %v7925
    %v7927 = vpop.xlane.xlu0 %7926
    %v7928 = vsel %vm7882, %v7833, -inf
    %7929 = vmax.xlane.f32.xlu0 %v7928
    %v7930 = vpop.xlane.xlu0 %7929
    %v7931 = vsel %vm7882, %v7834, -inf
    %7932 = vmax.xlane.f32.xlu0 %v7931
    %v7933 = vpop.xlane.xlu0 %7932
    %v7934 = vsel %vm7882, %v7835, -inf
    %7935 = vmax.xlane.f32.xlu0 %v7934
    %v7936 = vpop.xlane.xlu0 %7935
    %v7937 = vsel %vm7882, %v7836, -inf
    %7938 = vmax.xlane.f32.xlu0 %v7937
    %v7939 = vpop.xlane.xlu0 %7938
    %v7940 = vsel %vm7882, %v7837, -inf
    %7941 = vmax.xlane.f32.xlu0 %v7940
    %v7942 = vpop.xlane.xlu0 %7941
    %v7943 = vsel %vm7882, %v7838, -inf
    %7944 = vmax.xlane.f32.xlu0 %v7943
    %v7945 = vpop.xlane.xlu0 %7944
    %v7946 = vsel %vm7882, %v7839, -inf
    %7947 = vmax.xlane.f32.xlu0 %v7946
    %v7948 = vpop.xlane.xlu0 %7947
    %v7949 = vsel %vm7882, %v7840, -inf
    %7950 = vmax.xlane.f32.xlu0 %v7949
    %v7951 = vpop.xlane.xlu0 %7950
    %v7952 = vsel %vm7882, %v7841, -inf
    %7953 = vmax.xlane.f32.xlu0 %v7952
    %v7954 = vpop.xlane.xlu0 %7953
    %v7955 = vsel %vm7882, %v7842, -inf
    %7956 = vmax.xlane.f32.xlu0 %v7955
    %v7957 = vpop.xlane.xlu0 %7956
    %v7958 = vsel %vm7882, %v7843, -inf
    %7959 = vmax.xlane.f32.xlu0 %v7958
    %v7960 = vpop.xlane.xlu0 %7959
    %v7961 = vsel %vm7882, %v7844, -inf
    %7962 = vmax.xlane.f32.xlu0 %v7961
    %v7963 = vpop.xlane.xlu0 %7962
    %v7964 = vsel %vm7882, %v7845, -inf
    %7965 = vmax.xlane.f32.xlu0 %v7964
    %v7966 = vpop.xlane.xlu0 %7965
    %v7967 = vsel %vm7882, %v7846, -inf
    %7968 = vmax.xlane.f32.xlu0 %v7967
    %v7969 = vpop.xlane.xlu0 %7968
    %v7970 = vsel %vm7882, %v7847, -inf
    %7971 = vmax.xlane.f32.xlu0 %v7970
    %v7972 = vpop.xlane.xlu0 %7971
    %v7973 = vsel %vm7882, %v7848, -inf
    %7974 = vmax.xlane.f32.xlu0 %v7973
    %v7975 = vpop.xlane.xlu0 %7974
    %v7976 = vsel %vm7882, %v7849, -inf
    %7977 = vmax.xlane.f32.xlu0 %v7976
    %v7978 = vpop.xlane.xlu0 %7977
    %v7979 = vsel %vm7882, %v7850, -inf
    %7980 = vmax.xlane.f32.xlu0 %v7979
    %v7981 = vpop.xlane.xlu0 %7980
    %v7982 = vsel %vm7882, %v7851, -inf
    %7983 = vmax.xlane.f32.xlu0 %v7982
    %v7984 = vpop.xlane.xlu0 %7983
    %v7985 = vsel %vm7882, %v7852, -inf
    %7986 = vmax.xlane.f32.xlu0 %v7985
    %v7987 = vpop.xlane.xlu0 %7986
    %v7988 = vsel %vm7882, %v7853, -inf
    %7989 = vmax.xlane.f32.xlu0 %v7988
    %v7990 = vpop.xlane.xlu0 %7989
    %v7991 = vsel %vm7882, %v7854, -inf
    %7992 = vmax.xlane.f32.xlu0 %v7991
    %v7993 = vpop.xlane.xlu0 %7992
    %v7994 = vsel %vm7882, %v7855, -inf
    %7995 = vmax.xlane.f32.xlu0 %v7994
    %v7996 = vpop.xlane.xlu0 %7995
    %v7997 = vsel %vm7882, %v7856, -inf
    %7998 = vmax.xlane.f32.xlu0 %v7997
    %v7999 = vpop.xlane.xlu0 %7998
    %v8000 = vsel %vm7882, %v7857, -inf
    %8001 = vmax.xlane.f32.xlu0 %v8000
    %v8002 = vpop.xlane.xlu0 %8001
    %v8003 = vsel %vm7882, %v7858, -inf
    %8004 = vmax.xlane.f32.xlu0 %v8003
    %v8005 = vpop.xlane.xlu0 %8004
    %v8006 = vsel %vm7882, %v7859, -inf
    %8007 = vmax.xlane.f32.xlu0 %v8006
    %v8008 = vpop.xlane.xlu0 %8007
    %v8009 = vsel %vm7882, %v7860, -inf
    %8010 = vmax.xlane.f32.xlu0 %v8009
    %v8011 = vpop.xlane.xlu0 %8010
    %v8012 = vsel %vm7882, %v7861, -inf
    %8013 = vmax.xlane.f32.xlu0 %v8012
    %v8014 = vpop.xlane.xlu0 %8013
    %v8015 = vsel %vm7882, %v7862, -inf
    %8016 = vmax.xlane.f32.xlu0 %v8015
    %v8017 = vpop.xlane.xlu0 %8016
    %v8018 = vsel %vm7882, %v7863, -inf
    %8019 = vmax.xlane.f32.xlu0 %v8018
    %v8020 = vpop.xlane.xlu0 %8019
    %v8021 = vsel %vm7882, %v7864, -inf
    %8022 = vmax.xlane.f32.xlu0 %v8021
    %v8023 = vpop.xlane.xlu0 %8022
    %v8024 = vsel %vm7882, %v7865, -inf
    %8025 = vmax.xlane.f32.xlu0 %v8024
    %v8026 = vpop.xlane.xlu0 %8025
    %v8027 = vsel %vm7882, %v7866, -inf
    %8028 = vmax.xlane.f32.xlu0 %v8027
    %v8029 = vpop.xlane.xlu0 %8028
    %v8030 = vsel %vm7882, %v7867, -inf
    %8031 = vmax.xlane.f32.xlu0 %v8030
    %v8032 = vpop.xlane.xlu0 %8031
    %v8033 = vsel %vm7882, %v7868, -inf
    %8034 = vmax.xlane.f32.xlu0 %v8033
    %v8035 = vpop.xlane.xlu0 %8034
    %v8036 = vsel %vm7882, %v7869, -inf
    %8037 = vmax.xlane.f32.xlu0 %v8036
    %v8038 = vpop.xlane.xlu0 %8037
    %v8039 = vsel %vm7882, %v7870, -inf
    %8040 = vmax.xlane.f32.xlu0 %v8039
    %v8041 = vpop.xlane.xlu0 %8040
    %v8042 = vsel %vm7882, %v7871, -inf
    %8043 = vmax.xlane.f32.xlu0 %v8042
    %v8044 = vpop.xlane.xlu0 %8043
    %v8045 = vsel %vm7882, %v7872, -inf
    %8046 = vmax.xlane.f32.xlu0 %v8045
    %v8047 = vpop.xlane.xlu0 %8046
    %v8048 = vsel %vm7882, %v7873, -inf
    %8049 = vmax.xlane.f32.xlu0 %v8048
    %v8050 = vpop.xlane.xlu0 %8049
    %v8051 = vsel %vm7882, %v7874, -inf
    %8052 = vmax.xlane.f32.xlu0 %v8051
    %v8053 = vpop.xlane.xlu0 %8052
    %v8054 = vsel %vm7882, %v7875, -inf
    %8055 = vmax.xlane.f32.xlu0 %v8054
    %v8056 = vpop.xlane.xlu0 %8055
    %v8057 = vsel %vm7882, %v7876, -inf
    %8058 = vmax.xlane.f32.xlu0 %v8057
    %v8059 = vpop.xlane.xlu0 %8058
    %v8060 = vsel %vm7882, %v7877, -inf
    %8061 = vmax.xlane.f32.xlu0 %v8060
    %v8062 = vpop.xlane.xlu0 %8061
    %v8063 = vsel %vm7882, %v7878, -inf
    %8064 = vmax.xlane.f32.xlu0 %v8063
    %v8065 = vpop.xlane.xlu0 %8064
    %v8066 = vsel %vm7882, %v7879, -inf
    %8067 = vmax.xlane.f32.xlu0 %v8066
    %v8068 = vpop.xlane.xlu0 %8067
    %v8069 = vsel %vm7882, %v7880, -inf
    %8070 = vmax.xlane.f32.xlu0 %v8069
    %v8071 = vpop.xlane.xlu0 %8070
    %v8072 = vsel %vm7882, %v7881, -inf
    %8073 = vmax.xlane.f32.xlu0 %v8072
    %v8074 = vpop.xlane.xlu0 %8073
    %v8075 = vsub.f32 %v7818, %v7885
    %v8076 = vsub.f32 %v7819, %v7888
    %v8077 = vsub.f32 %v7820, %v7891
    %v8078 = vsub.f32 %v7821, %v7894
    %v8079 = vsub.f32 %v7822, %v7897
    %v8080 = vsub.f32 %v7823, %v7900
    %v8081 = vsub.f32 %v7824, %v7903
    %v8082 = vsub.f32 %v7825, %v7906
    %v8083 = vsub.f32 %v7826, %v7909
    %v8084 = vsub.f32 %v7827, %v7912
    %v8085 = vsub.f32 %v7828, %v7915
    %v8086 = vsub.f32 %v7829, %v7918
    %v8087 = vsub.f32 %v7830, %v7921
    %v8088 = vsub.f32 %v7831, %v7924
    %v8089 = vsub.f32 %v7832, %v7927
    %v8090 = vsub.f32 %v7833, %v7930
    %v8091 = vsub.f32 %v7834, %v7933
    %v8092 = vsub.f32 %v7835, %v7936
    %v8093 = vsub.f32 %v7836, %v7939
    %v8094 = vsub.f32 %v7837, %v7942
    %v8095 = vsub.f32 %v7838, %v7945
    %v8096 = vsub.f32 %v7839, %v7948
    %v8097 = vsub.f32 %v7840, %v7951
    %v8098 = vsub.f32 %v7841, %v7954
    %v8099 = vsub.f32 %v7842, %v7957
    %v8100 = vsub.f32 %v7843, %v7960
    %v8101 = vsub.f32 %v7844, %v7963
    %v8102 = vsub.f32 %v7845, %v7966
    %v8103 = vsub.f32 %v7846, %v7969
    %v8104 = vsub.f32 %v7847, %v7972
    %v8105 = vsub.f32 %v7848, %v7975
    %v8106 = vsub.f32 %v7849, %v7978
    %v8107 = vsub.f32 %v7850, %v7981
    %v8108 = vsub.f32 %v7851, %v7984
    %v8109 = vsub.f32 %v7852, %v7987
    %v8110 = vsub.f32 %v7853, %v7990
    %v8111 = vsub.f32 %v7854, %v7993
    %v8112 = vsub.f32 %v7855, %v7996
    %v8113 = vsub.f32 %v7856, %v7999
    %v8114 = vsub.f32 %v7857, %v8002
    %v8115 = vsub.f32 %v7858, %v8005
    %v8116 = vsub.f32 %v7859, %v8008
    %v8117 = vsub.f32 %v7860, %v8011
    %v8118 = vsub.f32 %v7861, %v8014
    %v8119 = vsub.f32 %v7862, %v8017
    %v8120 = vsub.f32 %v7863, %v8020
    %v8121 = vsub.f32 %v7864, %v8023
    %v8122 = vsub.f32 %v7865, %v8026
    %v8123 = vsub.f32 %v7866, %v8029
    %v8124 = vsub.f32 %v7867, %v8032
    %v8125 = vsub.f32 %v7868, %v8035
    %v8126 = vsub.f32 %v7869, %v8038
    %v8127 = vsub.f32 %v7870, %v8041
    %v8128 = vsub.f32 %v7871, %v8044
    %v8129 = vsub.f32 %v7872, %v8047
    %v8130 = vsub.f32 %v7873, %v8050
    %v8131 = vsub.f32 %v7874, %v8053
    %v8132 = vsub.f32 %v7875, %v8056
    %v8133 = vsub.f32 %v7876, %v8059
    %v8134 = vsub.f32 %v7877, %v8062
    %v8135 = vsub.f32 %v7878, %v8065
    %v8136 = vsub.f32 %v7879, %v8068
    %v8137 = vsub.f32 %v7880, %v8071
    %v8138 = vsub.f32 %v7881, %v8074
    %v8139 = vmul.f32 %v8075, 1.442695
    %v8140 = vpow.pop %v8139
    %v8141 = vmul.f32 %v8076, 1.442695
    %v8142 = vpow.pop %v8141
    %v8143 = vmul.f32 %v8077, 1.442695
    %v8144 = vpow.pop %v8143
    %v8145 = vmul.f32 %v8078, 1.442695
    %v8146 = vpow.pop %v8145
    %v8147 = vmul.f32 %v8079, 1.442695
    %v8148 = vpow.pop %v8147
    %v8149 = vmul.f32 %v8080, 1.442695
    %v8150 = vpow.pop %v8149
    %v8151 = vmul.f32 %v8081, 1.442695
    %v8152 = vpow.pop %v8151
    %v8153 = vmul.f32 %v8082, 1.442695
    %v8154 = vpow.pop %v8153
    %v8155 = vmul.f32 %v8083, 1.442695
    %v8156 = vpow.pop %v8155
    %v8157 = vmul.f32 %v8084, 1.442695
    %v8158 = vpow.pop %v8157
    %v8159 = vmul.f32 %v8085, 1.442695
    %v8160 = vpow.pop %v8159
    %v8161 = vmul.f32 %v8086, 1.442695
    %v8162 = vpow.pop %v8161
    %v8163 = vmul.f32 %v8087, 1.442695
    %v8164 = vpow.pop %v8163
    %v8165 = vmul.f32 %v8088, 1.442695
    %v8166 = vpow.pop %v8165
    %v8167 = vmul.f32 %v8089, 1.442695
    %v8168 = vpow.pop %v8167
    %v8169 = vmul.f32 %v8090, 1.442695
    %v8170 = vpow.pop %v8169
    %v8171 = vmul.f32 %v8091, 1.442695
    %v8172 = vpow.pop %v8171
    %v8173 = vmul.f32 %v8092, 1.442695
    %v8174 = vpow.pop %v8173
    %v8175 = vmul.f32 %v8093, 1.442695
    %v8176 = vpow.pop %v8175
    %v8177 = vmul.f32 %v8094, 1.442695
    %v8178 = vpow.pop %v8177
    %v8179 = vmul.f32 %v8095, 1.442695
    %v8180 = vpow.pop %v8179
    %v8181 = vmul.f32 %v8096, 1.442695
    %v8182 = vpow.pop %v8181
    %v8183 = vmul.f32 %v8097, 1.442695
    %v8184 = vpow.pop %v8183
    %v8185 = vmul.f32 %v8098, 1.442695
    %v8186 = vpow.pop %v8185
    %v8187 = vmul.f32 %v8099, 1.442695
    %v8188 = vpow.pop %v8187
    %v8189 = vmul.f32 %v8100, 1.442695
    %v8190 = vpow.pop %v8189
    %v8191 = vmul.f32 %v8101, 1.442695
    %v8192 = vpow.pop %v8191
    %v8193 = vmul.f32 %v8102, 1.442695
    %v8194 = vpow.pop %v8193
    %v8195 = vmul.f32 %v8103, 1.442695
    %v8196 = vpow.pop %v8195
    %v8197 = vmul.f32 %v8104, 1.442695
    %v8198 = vpow.pop %v8197
    %v8199 = vmul.f32 %v8105, 1.442695
    %v8200 = vpow.pop %v8199
    %v8201 = vmul.f32 %v8106, 1.442695
    %v8202 = vpow.pop %v8201
    %v8203 = vmul.f32 %v8107, 1.442695
    %v8204 = vpow.pop %v8203
    %v8205 = vmul.f32 %v8108, 1.442695
    %v8206 = vpow.pop %v8205
    %v8207 = vmul.f32 %v8109, 1.442695
    %v8208 = vpow.pop %v8207
    %v8209 = vmul.f32 %v8110, 1.442695
    %v8210 = vpow.pop %v8209
    %v8211 = vmul.f32 %v8111, 1.442695
    %v8212 = vpow.pop %v8211
    %v8213 = vmul.f32 %v8112, 1.442695
    %v8214 = vpow.pop %v8213
    %v8215 = vmul.f32 %v8113, 1.442695
    %v8216 = vpow.pop %v8215
    %v8217 = vmul.f32 %v8114, 1.442695
    %v8218 = vpow.pop %v8217
    %v8219 = vmul.f32 %v8115, 1.442695
    %v8220 = vpow.pop %v8219
    %v8221 = vmul.f32 %v8116, 1.442695
    %v8222 = vpow.pop %v8221
    %v8223 = vmul.f32 %v8117, 1.442695
    %v8224 = vpow.pop %v8223
    %v8225 = vmul.f32 %v8118, 1.442695
    %v8226 = vpow.pop %v8225
    %v8227 = vmul.f32 %v8119, 1.442695
    %v8228 = vpow.pop %v8227
    %v8229 = vmul.f32 %v8120, 1.442695
    %v8230 = vpow.pop %v8229
    %v8231 = vmul.f32 %v8121, 1.442695
    %v8232 = vpow.pop %v8231
    %v8233 = vmul.f32 %v8122, 1.442695
    %v8234 = vpow.pop %v8233
    %v8235 = vmul.f32 %v8123, 1.442695
    %v8236 = vpow.pop %v8235
    %v8237 = vmul.f32 %v8124, 1.442695
    %v8238 = vpow.pop %v8237
    %v8239 = vmul.f32 %v8125, 1.442695
    %v8240 = vpow.pop %v8239
    %v8241 = vmul.f32 %v8126, 1.442695
    %v8242 = vpow.pop %v8241
    %v8243 = vmul.f32 %v8127, 1.442695
    %v8244 = vpow.pop %v8243
    %v8245 = vmul.f32 %v8128, 1.442695
    %v8246 = vpow.pop %v8245
    %v8247 = vmul.f32 %v8129, 1.442695
    %v8248 = vpow.pop %v8247
    %v8249 = vmul.f32 %v8130, 1.442695
    %v8250 = vpow.pop %v8249
    %v8251 = vmul.f32 %v8131, 1.442695
    %v8252 = vpow.pop %v8251
    %v8253 = vmul.f32 %v8132, 1.442695
    %v8254 = vpow.pop %v8253
    %v8255 = vmul.f32 %v8133, 1.442695
    %v8256 = vpow.pop %v8255
    %v8257 = vmul.f32 %v8134, 1.442695
    %v8258 = vpow.pop %v8257
    %v8259 = vmul.f32 %v8135, 1.442695
    %v8260 = vpow.pop %v8259
    %v8261 = vmul.f32 %v8136, 1.442695
    %v8262 = vpow.pop %v8261
    %v8263 = vmul.f32 %v8137, 1.442695
    %v8264 = vpow.pop %v8263
    %v8265 = vmul.f32 %v8138, 1.442695
    %v8266 = vpow.pop %v8265
    %v8267 = vsel %vm7882, %v8140, 0.0
    %8268 = vadd.xlane.f32.xlu0 %v8267
    %v8269 = vpop.xlane.xlu0 %8268
    %v8270 = vsel %vm7882, %v8142, 0.0
    %8271 = vadd.xlane.f32.xlu0 %v8270
    %v8272 = vpop.xlane.xlu0 %8271
    %v8273 = vsel %vm7882, %v8144, 0.0
    %8274 = vadd.xlane.f32.xlu0 %v8273
    %v8275 = vpop.xlane.xlu0 %8274
    %v8276 = vsel %vm7882, %v8146, 0.0
    %8277 = vadd.xlane.f32.xlu0 %v8276
    %v8278 = vpop.xlane.xlu0 %8277
    %v8279 = vsel %vm7882, %v8148, 0.0
    %8280 = vadd.xlane.f32.xlu0 %v8279
    %v8281 = vpop.xlane.xlu0 %8280
    %v8282 = vsel %vm7882, %v8150, 0.0
    %8283 = vadd.xlane.f32.xlu0 %v8282
    %v8284 = vpop.xlane.xlu0 %8283
    %v8285 = vsel %vm7882, %v8152, 0.0
    %8286 = vadd.xlane.f32.xlu0 %v8285
    %v8287 = vpop.xlane.xlu0 %8286
    %v8288 = vsel %vm7882, %v8154, 0.0
    %8289 = vadd.xlane.f32.xlu0 %v8288
    %v8290 = vpop.xlane.xlu0 %8289
    %v8291 = vsel %vm7882, %v8156, 0.0
    %8292 = vadd.xlane.f32.xlu0 %v8291
    %v8293 = vpop.xlane.xlu0 %8292
    %v8294 = vsel %vm7882, %v8158, 0.0
    %8295 = vadd.xlane.f32.xlu0 %v8294
    %v8296 = vpop.xlane.xlu0 %8295
    %v8297 = vsel %vm7882, %v8160, 0.0
    %8298 = vadd.xlane.f32.xlu0 %v8297
    %v8299 = vpop.xlane.xlu0 %8298
    %v8300 = vsel %vm7882, %v8162, 0.0
    %8301 = vadd.xlane.f32.xlu0 %v8300
    %v8302 = vpop.xlane.xlu0 %8301
    %v8303 = vsel %vm7882, %v8164, 0.0
    %8304 = vadd.xlane.f32.xlu0 %v8303
    %v8305 = vpop.xlane.xlu0 %8304
    %v8306 = vsel %vm7882, %v8166, 0.0
    %8307 = vadd.xlane.f32.xlu0 %v8306
    %v8308 = vpop.xlane.xlu0 %8307
    %v8309 = vsel %vm7882, %v8168, 0.0
    %8310 = vadd.xlane.f32.xlu0 %v8309
    %v8311 = vpop.xlane.xlu0 %8310
    %v8312 = vsel %vm7882, %v8170, 0.0
    %8313 = vadd.xlane.f32.xlu0 %v8312
    %v8314 = vpop.xlane.xlu0 %8313
    %v8315 = vsel %vm7882, %v8172, 0.0
    %8316 = vadd.xlane.f32.xlu0 %v8315
    %v8317 = vpop.xlane.xlu0 %8316
    %v8318 = vsel %vm7882, %v8174, 0.0
    %8319 = vadd.xlane.f32.xlu0 %v8318
    %v8320 = vpop.xlane.xlu0 %8319
    %v8321 = vsel %vm7882, %v8176, 0.0
    %8322 = vadd.xlane.f32.xlu0 %v8321
    %v8323 = vpop.xlane.xlu0 %8322
    %v8324 = vsel %vm7882, %v8178, 0.0
    %8325 = vadd.xlane.f32.xlu0 %v8324
    %v8326 = vpop.xlane.xlu0 %8325
    %v8327 = vsel %vm7882, %v8180, 0.0
    %8328 = vadd.xlane.f32.xlu0 %v8327
    %v8329 = vpop.xlane.xlu0 %8328
    %v8330 = vsel %vm7882, %v8182, 0.0
    %8331 = vadd.xlane.f32.xlu0 %v8330
    %v8332 = vpop.xlane.xlu0 %8331
    %v8333 = vsel %vm7882, %v8184, 0.0
    %8334 = vadd.xlane.f32.xlu0 %v8333
    %v8335 = vpop.xlane.xlu0 %8334
    %v8336 = vsel %vm7882, %v8186, 0.0
    %8337 = vadd.xlane.f32.xlu0 %v8336
    %v8338 = vpop.xlane.xlu0 %8337
    %v8339 = vsel %vm7882, %v8188, 0.0
    %8340 = vadd.xlane.f32.xlu0 %v8339
    %v8341 = vpop.xlane.xlu0 %8340
    %v8342 = vsel %vm7882, %v8190, 0.0
    %8343 = vadd.xlane.f32.xlu0 %v8342
    %v8344 = vpop.xlane.xlu0 %8343
    %v8345 = vsel %vm7882, %v8192, 0.0
    %8346 = vadd.xlane.f32.xlu0 %v8345
    %v8347 = vpop.xlane.xlu0 %8346
    %v8348 = vsel %vm7882, %v8194, 0.0
    %8349 = vadd.xlane.f32.xlu0 %v8348
    %v8350 = vpop.xlane.xlu0 %8349
    %v8351 = vsel %vm7882, %v8196, 0.0
    %8352 = vadd.xlane.f32.xlu0 %v8351
    %v8353 = vpop.xlane.xlu0 %8352
    %v8354 = vsel %vm7882, %v8198, 0.0
    %8355 = vadd.xlane.f32.xlu0 %v8354
    %v8356 = vpop.xlane.xlu0 %8355
    %v8357 = vsel %vm7882, %v8200, 0.0
    %8358 = vadd.xlane.f32.xlu0 %v8357
    %v8359 = vpop.xlane.xlu0 %8358
    %v8360 = vsel %vm7882, %v8202, 0.0
    %8361 = vadd.xlane.f32.xlu0 %v8360
    %v8362 = vpop.xlane.xlu0 %8361
    %v8363 = vsel %vm7882, %v8204, 0.0
    %8364 = vadd.xlane.f32.xlu0 %v8363
    %v8365 = vpop.xlane.xlu0 %8364
    %v8366 = vsel %vm7882, %v8206, 0.0
    %8367 = vadd.xlane.f32.xlu0 %v8366
    %v8368 = vpop.xlane.xlu0 %8367
    %v8369 = vsel %vm7882, %v8208, 0.0
    %8370 = vadd.xlane.f32.xlu0 %v8369
    %v8371 = vpop.xlane.xlu0 %8370
    %v8372 = vsel %vm7882, %v8210, 0.0
    %8373 = vadd.xlane.f32.xlu0 %v8372
    %v8374 = vpop.xlane.xlu0 %8373
    %v8375 = vsel %vm7882, %v8212, 0.0
    %8376 = vadd.xlane.f32.xlu0 %v8375
    %v8377 = vpop.xlane.xlu0 %8376
    %v8378 = vsel %vm7882, %v8214, 0.0
    %8379 = vadd.xlane.f32.xlu0 %v8378
    %v8380 = vpop.xlane.xlu0 %8379
    %v8381 = vsel %vm7882, %v8216, 0.0
    %8382 = vadd.xlane.f32.xlu0 %v8381
    %v8383 = vpop.xlane.xlu0 %8382
    %v8384 = vsel %vm7882, %v8218, 0.0
    %8385 = vadd.xlane.f32.xlu0 %v8384
    %v8386 = vpop.xlane.xlu0 %8385
    %v8387 = vsel %vm7882, %v8220, 0.0
    %8388 = vadd.xlane.f32.xlu0 %v8387
    %v8389 = vpop.xlane.xlu0 %8388
    %v8390 = vsel %vm7882, %v8222, 0.0
    %8391 = vadd.xlane.f32.xlu0 %v8390
    %v8392 = vpop.xlane.xlu0 %8391
    %v8393 = vsel %vm7882, %v8224, 0.0
    %8394 = vadd.xlane.f32.xlu0 %v8393
    %v8395 = vpop.xlane.xlu0 %8394
    %v8396 = vsel %vm7882, %v8226, 0.0
    %8397 = vadd.xlane.f32.xlu0 %v8396
    %v8398 = vpop.xlane.xlu0 %8397
    %v8399 = vsel %vm7882, %v8228, 0.0
    %8400 = vadd.xlane.f32.xlu0 %v8399
    %v8401 = vpop.xlane.xlu0 %8400
    %v8402 = vsel %vm7882, %v8230, 0.0
    %8403 = vadd.xlane.f32.xlu0 %v8402
    %v8404 = vpop.xlane.xlu0 %8403
    %v8405 = vsel %vm7882, %v8232, 0.0
    %8406 = vadd.xlane.f32.xlu0 %v8405
    %v8407 = vpop.xlane.xlu0 %8406
    %v8408 = vsel %vm7882, %v8234, 0.0
    %8409 = vadd.xlane.f32.xlu0 %v8408
    %v8410 = vpop.xlane.xlu0 %8409
    %v8411 = vsel %vm7882, %v8236, 0.0
    %8412 = vadd.xlane.f32.xlu0 %v8411
    %v8413 = vpop.xlane.xlu0 %8412
    %v8414 = vsel %vm7882, %v8238, 0.0
    %8415 = vadd.xlane.f32.xlu0 %v8414
    %v8416 = vpop.xlane.xlu0 %8415
    %v8417 = vsel %vm7882, %v8240, 0.0
    %8418 = vadd.xlane.f32.xlu0 %v8417
    %v8419 = vpop.xlane.xlu0 %8418
    %v8420 = vsel %vm7882, %v8242, 0.0
    %8421 = vadd.xlane.f32.xlu0 %v8420
    %v8422 = vpop.xlane.xlu0 %8421
    %v8423 = vsel %vm7882, %v8244, 0.0
    %8424 = vadd.xlane.f32.xlu0 %v8423
    %v8425 = vpop.xlane.xlu0 %8424
    %v8426 = vsel %vm7882, %v8246, 0.0
    %8427 = vadd.xlane.f32.xlu0 %v8426
    %v8428 = vpop.xlane.xlu0 %8427
    %v8429 = vsel %vm7882, %v8248, 0.0
    %8430 = vadd.xlane.f32.xlu0 %v8429
    %v8431 = vpop.xlane.xlu0 %8430
    %v8432 = vsel %vm7882, %v8250, 0.0
    %8433 = vadd.xlane.f32.xlu0 %v8432
    %v8434 = vpop.xlane.xlu0 %8433
    %v8435 = vsel %vm7882, %v8252, 0.0
    %8436 = vadd.xlane.f32.xlu0 %v8435
    %v8437 = vpop.xlane.xlu0 %8436
    %v8438 = vsel %vm7882, %v8254, 0.0
    %8439 = vadd.xlane.f32.xlu0 %v8438
    %v8440 = vpop.xlane.xlu0 %8439
    %v8441 = vsel %vm7882, %v8256, 0.0
    %8442 = vadd.xlane.f32.xlu0 %v8441
    %v8443 = vpop.xlane.xlu0 %8442
    %v8444 = vsel %vm7882, %v8258, 0.0
    %8445 = vadd.xlane.f32.xlu0 %v8444
    %v8446 = vpop.xlane.xlu0 %8445
    %v8447 = vsel %vm7882, %v8260, 0.0
    %8448 = vadd.xlane.f32.xlu0 %v8447
    %v8449 = vpop.xlane.xlu0 %8448
    %v8450 = vsel %vm7882, %v8262, 0.0
    %8451 = vadd.xlane.f32.xlu0 %v8450
    %v8452 = vpop.xlane.xlu0 %8451
    %v8453 = vsel %vm7882, %v8264, 0.0
    %8454 = vadd.xlane.f32.xlu0 %v8453
    %v8455 = vpop.xlane.xlu0 %8454
    %v8456 = vsel %vm7882, %v8266, 0.0
    %8457 = vadd.xlane.f32.xlu0 %v8456
    %v8458 = vpop.xlane.xlu0 %8457
    %v8459 = vrcp.pop %v8269
    %v8460 = vmul.f32 %v8140, %v8459
    %v8461 = vrcp.pop %v8272
    %v8462 = vmul.f32 %v8142, %v8461
    %v8463 = vrcp.pop %v8275
    %v8464 = vmul.f32 %v8144, %v8463
    %v8465 = vrcp.pop %v8278
    %v8466 = vmul.f32 %v8146, %v8465
    %v8467 = vrcp.pop %v8281
    %v8468 = vmul.f32 %v8148, %v8467
    %v8469 = vrcp.pop %v8284
    %v8470 = vmul.f32 %v8150, %v8469
    %v8471 = vrcp.pop %v8287
    %v8472 = vmul.f32 %v8152, %v8471
    %v8473 = vrcp.pop %v8290
    %v8474 = vmul.f32 %v8154, %v8473
    %v8475 = vrcp.pop %v8293
    %v8476 = vmul.f32 %v8156, %v8475
    %v8477 = vrcp.pop %v8296
    %v8478 = vmul.f32 %v8158, %v8477
    %v8479 = vrcp.pop %v8299
    %v8480 = vmul.f32 %v8160, %v8479
    %v8481 = vrcp.pop %v8302
    %v8482 = vmul.f32 %v8162, %v8481
    %v8483 = vrcp.pop %v8305
    %v8484 = vmul.f32 %v8164, %v8483
    %v8485 = vrcp.pop %v8308
    %v8486 = vmul.f32 %v8166, %v8485
    %v8487 = vrcp.pop %v8311
    %v8488 = vmul.f32 %v8168, %v8487
    %v8489 = vrcp.pop %v8314
    %v8490 = vmul.f32 %v8170, %v8489
    %v8491 = vrcp.pop %v8317
    %v8492 = vmul.f32 %v8172, %v8491
    %v8493 = vrcp.pop %v8320
    %v8494 = vmul.f32 %v8174, %v8493
    %v8495 = vrcp.pop %v8323
    %v8496 = vmul.f32 %v8176, %v8495
    %v8497 = vrcp.pop %v8326
    %v8498 = vmul.f32 %v8178, %v8497
    %v8499 = vrcp.pop %v8329
    %v8500 = vmul.f32 %v8180, %v8499
    %v8501 = vrcp.pop %v8332
    %v8502 = vmul.f32 %v8182, %v8501
    %v8503 = vrcp.pop %v8335
    %v8504 = vmul.f32 %v8184, %v8503
    %v8505 = vrcp.pop %v8338
    %v8506 = vmul.f32 %v8186, %v8505
    %v8507 = vrcp.pop %v8341
    %v8508 = vmul.f32 %v8188, %v8507
    %v8509 = vrcp.pop %v8344
    %v8510 = vmul.f32 %v8190, %v8509
    %v8511 = vrcp.pop %v8347
    %v8512 = vmul.f32 %v8192, %v8511
    %v8513 = vrcp.pop %v8350
    %v8514 = vmul.f32 %v8194, %v8513
    %v8515 = vrcp.pop %v8353
    %v8516 = vmul.f32 %v8196, %v8515
    %v8517 = vrcp.pop %v8356
    %v8518 = vmul.f32 %v8198, %v8517
    %v8519 = vrcp.pop %v8359
    %v8520 = vmul.f32 %v8200, %v8519
    %v8521 = vrcp.pop %v8362
    %v8522 = vmul.f32 %v8202, %v8521
    %v8523 = vrcp.pop %v8365
    %v8524 = vmul.f32 %v8204, %v8523
    %v8525 = vrcp.pop %v8368
    %v8526 = vmul.f32 %v8206, %v8525
    %v8527 = vrcp.pop %v8371
    %v8528 = vmul.f32 %v8208, %v8527
    %v8529 = vrcp.pop %v8374
    %v8530 = vmul.f32 %v8210, %v8529
    %v8531 = vrcp.pop %v8377
    %v8532 = vmul.f32 %v8212, %v8531
    %v8533 = vrcp.pop %v8380
    %v8534 = vmul.f32 %v8214, %v8533
    %v8535 = vrcp.pop %v8383
    %v8536 = vmul.f32 %v8216, %v8535
    %v8537 = vrcp.pop %v8386
    %v8538 = vmul.f32 %v8218, %v8537
    %v8539 = vrcp.pop %v8389
    %v8540 = vmul.f32 %v8220, %v8539
    %v8541 = vrcp.pop %v8392
    %v8542 = vmul.f32 %v8222, %v8541
    %v8543 = vrcp.pop %v8395
    %v8544 = vmul.f32 %v8224, %v8543
    %v8545 = vrcp.pop %v8398
    %v8546 = vmul.f32 %v8226, %v8545
    %v8547 = vrcp.pop %v8401
    %v8548 = vmul.f32 %v8228, %v8547
    %v8549 = vrcp.pop %v8404
    %v8550 = vmul.f32 %v8230, %v8549
    %v8551 = vrcp.pop %v8407
    %v8552 = vmul.f32 %v8232, %v8551
    %v8553 = vrcp.pop %v8410
    %v8554 = vmul.f32 %v8234, %v8553
    %v8555 = vrcp.pop %v8413
    %v8556 = vmul.f32 %v8236, %v8555
    %v8557 = vrcp.pop %v8416
    %v8558 = vmul.f32 %v8238, %v8557
    %v8559 = vrcp.pop %v8419
    %v8560 = vmul.f32 %v8240, %v8559
    %v8561 = vrcp.pop %v8422
    %v8562 = vmul.f32 %v8242, %v8561
    %v8563 = vrcp.pop %v8425
    %v8564 = vmul.f32 %v8244, %v8563
    %v8565 = vrcp.pop %v8428
    %v8566 = vmul.f32 %v8246, %v8565
    %v8567 = vrcp.pop %v8431
    %v8568 = vmul.f32 %v8248, %v8567
    %v8569 = vrcp.pop %v8434
    %v8570 = vmul.f32 %v8250, %v8569
    %v8571 = vrcp.pop %v8437
    %v8572 = vmul.f32 %v8252, %v8571
    %v8573 = vrcp.pop %v8440
    %v8574 = vmul.f32 %v8254, %v8573
    %v8575 = vrcp.pop %v8443
    %v8576 = vmul.f32 %v8256, %v8575
    %v8577 = vrcp.pop %v8446
    %v8578 = vmul.f32 %v8258, %v8577
    %v8579 = vrcp.pop %v8449
    %v8580 = vmul.f32 %v8260, %v8579
    %v8581 = vrcp.pop %v8452
    %v8582 = vmul.f32 %v8262, %v8581
    %v8583 = vrcp.pop %v8455
    %v8584 = vmul.f32 %v8264, %v8583
    %v8585 = vrcp.pop %v8458
    %v8586 = vmul.f32 %v8266, %v8585
    %v8587 = vpack.c.bf16 %v8462, %v8460
    %v8588 = vpack.c.bf16 %v8466, %v8464
    %v8589 = vpack.c.bf16 %v8470, %v8468
    %v8590 = vpack.c.bf16 %v8474, %v8472
    %v8591 = vpack.c.bf16 %v8478, %v8476
    %v8592 = vpack.c.bf16 %v8482, %v8480
    %v8593 = vpack.c.bf16 %v8486, %v8484
    %v8594 = vpack.c.bf16 %v8490, %v8488
    %v8595 = vpack.c.bf16 %v8494, %v8492
    %v8596 = vpack.c.bf16 %v8498, %v8496
    %v8597 = vpack.c.bf16 %v8502, %v8500
    %v8598 = vpack.c.bf16 %v8506, %v8504
    %v8599 = vpack.c.bf16 %v8510, %v8508
    %v8600 = vpack.c.bf16 %v8514, %v8512
    %v8601 = vpack.c.bf16 %v8518, %v8516
    %v8602 = vpack.c.bf16 %v8522, %v8520
    %v8603 = vpack.c.bf16 %v8526, %v8524
    %v8604 = vpack.c.bf16 %v8530, %v8528
    %v8605 = vpack.c.bf16 %v8534, %v8532
    %v8606 = vpack.c.bf16 %v8538, %v8536
    %v8607 = vpack.c.bf16 %v8542, %v8540
    %v8608 = vpack.c.bf16 %v8546, %v8544
    %v8609 = vpack.c.bf16 %v8550, %v8548
    %v8610 = vpack.c.bf16 %v8554, %v8552
    %v8611 = vpack.c.bf16 %v8558, %v8556
    %v8612 = vpack.c.bf16 %v8562, %v8560
    %v8613 = vpack.c.bf16 %v8566, %v8564
    %v8614 = vpack.c.bf16 %v8570, %v8568
    %v8615 = vpack.c.bf16 %v8574, %v8572
    %v8616 = vpack.c.bf16 %v8578, %v8576
    %v8617 = vpack.c.bf16 %v8582, %v8580
    %v8618 = vpack.c.bf16 %v8586, %v8584
    %v8620 = vsel %vm7882, %v8587, 0
    %v8623 = vsel %vm7882, %v8588, 0
    %v8626 = vsel %vm7882, %v8589, 0
    %v8629 = vsel %vm7882, %v8590, 0
    %8631 = vmatprep.subr.bf16.mxu0 0
    %8632 = vmatpush1.bf16.msra.mxu0 %v6944
    %8633 = vmatprep.subr.bf16.mxu0 0
    %8634 = vmatpush1.bf16.msra.mxu0 %v6960
    %8635 = vmatprep.subr.bf16.mxu0 0
    %8636 = vmatpush1.bf16.msra.mxu0 %v6976
    %8637 = vmatprep.subr.bf16.mxu0 0
    %8638 = vmatpush1.bf16.msra.mxu0 %v6992
    %8639 = vmatprep.subr.bf16.mxu0 0
    %8640 = vmatpush1.bf16.msra.mxu0 0
    %8641 = vmatprep.subr.bf16.mxu0 0
    %8642 = vmatpush1.bf16.msra.mxu0 0
    %8643 = vmatprep.subr.bf16.mxu0 0
    %8644 = vmatpush1.bf16.msra.mxu0 0
    %8645 = vmatprep.subr.bf16.mxu0 0
    %8646 = vmatpush1.bf16.msra.mxu0 0
    %8647 = vmatprep.subr.bf16.mxu0 0
    %8648 = vmatpush1.bf16.msra.mxu0 0
    %8649 = vmatprep.subr.bf16.mxu0 0
    %8650 = vmatpush1.bf16.msra.mxu0 0
    %8651 = vmatprep.subr.bf16.mxu0 0
    %8652 = vmatpush1.bf16.msra.mxu0 0
    %8653 = vmatprep.subr.bf16.mxu0 0
    %8654 = vmatpush1.bf16.msra.mxu0 0
    %8655 = vmatprep.subr.bf16.mxu0 0
    %8656 = vmatpush1.bf16.msra.mxu0 0
    %8657 = vmatprep.subr.bf16.mxu0 0
    %8658 = vmatpush1.bf16.msra.mxu0 0
    %8659 = vmatprep.subr.bf16.mxu0 0
    %8660 = vmatpush1.bf16.msra.mxu0 0
    %8661 = vmatprep.subr.bf16.mxu0 0
    %8662 = vmatpush1.bf16.msra.mxu0 0
    %8663 = vmatprep.mubr.bf16.mxu0 0
    %8664 = vmatmul.mubr.bf16.gmra.mrb[0].mxu0 %v8620
    %v8665 = vpop.f32.mrb[0].mxu0
    %v8666 = vadd.f32 0.0, %v8665
    %v8667 = vpop.f32.mrb[0].mxu0
    %v8668 = vpop.f32.mrb[0].mxu0
    %v8669 = vadd.f32 0.0, %v8668
    %v8670 = vpop.f32.mrb[0].mxu0
    %8671 = vmatprep.mubr.bf16.mxu0 0
    %8672 = vmatmul.mubr.bf16.gmra.mrb[0].mxu0 %v8623
    %v8673 = vpop.f32.mrb[0].mxu0
    %v8674 = vadd.f32 0.0, %v8673
    %v8675 = vpop.f32.mrb[0].mxu0
    %v8676 = vpop.f32.mrb[0].mxu0
    %v8677 = vadd.f32 0.0, %v8676
    %v8678 = vpop.f32.mrb[0].mxu0
    %8679 = vmatprep.mubr.bf16.mxu0 0
    %8680 = vmatmul.mubr.bf16.gmra.mrb[0].mxu0 %v8626
    %v8681 = vpop.f32.mrb[0].mxu0
    %v8682 = vadd.f32 0.0, %v8681
    %v8683 = vpop.f32.mrb[0].mxu0
    %v8684 = vpop.f32.mrb[0].mxu0
    %v8685 = vadd.f32 0.0, %v8684
    %v8686 = vpop.f32.mrb[0].mxu0
    %8687 = vmatprep.mubr.bf16.mxu0 0
    %8688 = vmatmul.mubr.bf16.gmra.mrb[0].mxu0 %v8629
    %v8689 = vpop.f32.mrb[0].mxu0
    %v8690 = vadd.f32 0.0, %v8689
    %v8691 = vpop.f32.mrb[0].mxu0
    %v8692 = vpop.f32.mrb[0].mxu0
    %v8693 = vadd.f32 0.0, %v8692
    %v8694 = vpop.f32.mrb[0].mxu0
    %8695 = vdwg.mxu0
    %v8697 = vsel %vm7882, %v8591, 0
    %v8700 = vsel %vm7882, %v8592, 0
    %v8703 = vsel %vm7882, %v8593, 0
    %v8706 = vsel %vm7882, %v8594, 0
    %8708 = vmatprep.subr.bf16.mxu0 0
    %8709 = vmatpush1.bf16.msra.mxu0 %v6948
    %8710 = vmatprep.subr.bf16.mxu0 0
    %8711 = vmatpush1.bf16.msra.mxu0 %v6964
    %8712 = vmatprep.subr.bf16.mxu0 0
    %8713 = vmatpush1.bf16.msra.mxu0 %v6980
    %8714 = vmatprep.subr.bf16.mxu0 0
    %8715 = vmatpush1.bf16.msra.mxu0 %v6996
    %8716 = vmatprep.subr.bf16.mxu0 0
    %8717 = vmatpush1.bf16.msra.mxu0 0
    %8718 = vmatprep.subr.bf16.mxu0 0
    %8719 = vmatpush1.bf16.msra.mxu0 0
    %8720 = vmatprep.subr.bf16.mxu0 0
    %8721 = vmatpush1.bf16.msra.mxu0 0
    %8722 = vmatprep.subr.bf16.mxu0 0
    %8723 = vmatpush1.bf16.msra.mxu0 0
    %8724 = vmatprep.subr.bf16.mxu0 0
    %8725 = vmatpush1.bf16.msra.mxu0 0
    %8726 = vmatprep.subr.bf16.mxu0 0
    %8727 = vmatpush1.bf16.msra.mxu0 0
    %8728 = vmatprep.subr.bf16.mxu0 0
    %8729 = vmatpush1.bf16.msra.mxu0 0
    %8730 = vmatprep.subr.bf16.mxu0 0
    %8731 = vmatpush1.bf16.msra.mxu0 0
    %8732 = vmatprep.subr.bf16.mxu0 0
    %8733 = vmatpush1.bf16.msra.mxu0 0
    %8734 = vmatprep.subr.bf16.mxu0 0
    %8735 = vmatpush1.bf16.msra.mxu0 0
    %8736 = vmatprep.subr.bf16.mxu0 0
    %8737 = vmatpush1.bf16.msra.mxu0 0
    %8738 = vmatprep.subr.bf16.mxu0 0
    %8739 = vmatpush1.bf16.msra.mxu0 0
    %8740 = vmatprep.mubr.bf16.mxu0 0
    %8741 = vmatmul.mubr.bf16.gmra.mrb[0].mxu0 %v8697
    %v8742 = vpop.f32.mrb[0].mxu0
    %v8743 = vadd.f32 0.0, %v8742
    %v8744 = vpop.f32.mrb[0].mxu0
    %v8745 = vpop.f32.mrb[0].mxu0
    %v8746 = vadd.f32 0.0, %v8745
    %v8747 = vpop.f32.mrb[0].mxu0
    %8748 = vmatprep.mubr.bf16.mxu0 0
    %8749 = vmatmul.mubr.bf16.gmra.mrb[0].mxu0 %v8700
    %v8750 = vpop.f32.mrb[0].mxu0
    %v8751 = vadd.f32 0.0, %v8750
    %v8752 = vpop.f32.mrb[0].mxu0
    %v8753 = vpop.f32.mrb[0].mxu0
    %v8754 = vadd.f32 0.0, %v8753
    %v8755 = vpop.f32.mrb[0].mxu0
    %8756 = vmatprep.mubr.bf16.mxu0 0
    %8757 = vmatmul.mubr.bf16.gmra.mrb[0].mxu0 %v8703
    %v8758 = vpop.f32.mrb[0].mxu0
    %v8759 = vadd.f32 0.0, %v8758
    %v8760 = vpop.f32.mrb[0].mxu0
    %v8761 = vpop.f32.mrb[0].mxu0
    %v8762 = vadd.f32 0.0, %v8761
    %v8763 = vpop.f32.mrb[0].mxu0
    %8764 = vmatprep.mubr.bf16.mxu0 0
    %8765 = vmatmul.mubr.bf16.gmra.mrb[0].mxu0 %v8706
    %v8766 = vpop.f32.mrb[0].mxu0
    %v8767 = vadd.f32 0.0, %v8766
    %v8768 = vpop.f32.mrb[0].mxu0
    %v8769 = vpop.f32.mrb[0].mxu0
    %v8770 = vadd.f32 0.0, %v8769
    %v8771 = vpop.f32.mrb[0].mxu0
    %8772 = vdwg.mxu0
    %v8774 = vsel %vm7882, %v8595, 0
    %v8777 = vsel %vm7882, %v8596, 0
    %v8780 = vsel %vm7882, %v8597, 0
    %v8783 = vsel %vm7882, %v8598, 0
    %8785 = vmatprep.subr.bf16.mxu0 0
    %8786 = vmatpush1.bf16.msra.mxu0 %v6952
    %8787 = vmatprep.subr.bf16.mxu0 0
    %8788 = vmatpush1.bf16.msra.mxu0 %v6968
    %8789 = vmatprep.subr.bf16.mxu0 0
    %8790 = vmatpush1.bf16.msra.mxu0 %v6984
    %8791 = vmatprep.subr.bf16.mxu0 0
    %8792 = vmatpush1.bf16.msra.mxu0 %v7000
    %8793 = vmatprep.subr.bf16.mxu0 0
    %8794 = vmatpush1.bf16.msra.mxu0 0
    %8795 = vmatprep.subr.bf16.mxu0 0
    %8796 = vmatpush1.bf16.msra.mxu0 0
    %8797 = vmatprep.subr.bf16.mxu0 0
    %8798 = vmatpush1.bf16.msra.mxu0 0
    %8799 = vmatprep.subr.bf16.mxu0 0
    %8800 = vmatpush1.bf16.msra.mxu0 0
    %8801 = vmatprep.subr.bf16.mxu0 0
    %8802 = vmatpush1.bf16.msra.mxu0 0
    %8803 = vmatprep.subr.bf16.mxu0 0
    %8804 = vmatpush1.bf16.msra.mxu0 0
    %8805 = vmatprep.subr.bf16.mxu0 0
    %8806 = vmatpush1.bf16.msra.mxu0 0
    %8807 = vmatprep.subr.bf16.mxu0 0
    %8808 = vmatpush1.bf16.msra.mxu0 0
    %8809 = vmatprep.subr.bf16.mxu0 0
    %8810 = vmatpush1.bf16.msra.mxu0 0
    %8811 = vmatprep.subr.bf16.mxu0 0
    %8812 = vmatpush1.bf16.msra.mxu0 0
    %8813 = vmatprep.subr.bf16.mxu0 0
    %8814 = vmatpush1.bf16.msra.mxu0 0
    %8815 = vmatprep.subr.bf16.mxu0 0
    %8816 = vmatpush1.bf16.msra.mxu0 0
    %8817 = vmatprep.mubr.bf16.mxu0 0
    %8818 = vmatmul.mubr.bf16.gmra.mrb[0].mxu0 %v8774
    %v8819 = vpop.f32.mrb[0].mxu0
    %v8820 = vadd.f32 0.0, %v8819
    %v8821 = vpop.f32.mrb[0].mxu0
    %v8822 = vpop.f32.mrb[0].mxu0
    %v8823 = vadd.f32 0.0, %v8822
    %v8824 = vpop.f32.mrb[0].mxu0
    %8825 = vmatprep.mubr.bf16.mxu0 0
    %8826 = vmatmul.mubr.bf16.gmra.mrb[0].mxu0 %v8777
    %v8827 = vpop.f32.mrb[0].mxu0
    %v8828 = vadd.f32 0.0, %v8827
    %v8829 = vpop.f32.mrb[0].mxu0
    %v8830 = vpop.f32.mrb[0].mxu0
    %v8831 = vadd.f32 0.0, %v8830
    %v8832 = vpop.f32.mrb[0].mxu0
    %8833 = vmatprep.mubr.bf16.mxu0 0
    %8834 = vmatmul.mubr.bf16.gmra.mrb[0].mxu0 %v8780
    %v8835 = vpop.f32.mrb[0].mxu0
    %v8836 = vadd.f32 0.0, %v8835
    %v8837 = vpop.f32.mrb[0].mxu0
    %v8838 = vpop.f32.mrb[0].mxu0
    %v8839 = vadd.f32 0.0, %v8838
    %v8840 = vpop.f32.mrb[0].mxu0
    %8841 = vmatprep.mubr.bf16.mxu0 0
    %8842 = vmatmul.mubr.bf16.gmra.mrb[0].mxu0 %v8783
    %v8843 = vpop.f32.mrb[0].mxu0
    %v8844 = vadd.f32 0.0, %v8843
    %v8845 = vpop.f32.mrb[0].mxu0
    %v8846 = vpop.f32.mrb[0].mxu0
    %v8847 = vadd.f32 0.0, %v8846
    %v8848 = vpop.f32.mrb[0].mxu0
    %8849 = vdwg.mxu0
    %v8851 = vsel %vm7882, %v8599, 0
    %v8854 = vsel %vm7882, %v8600, 0
    %v8857 = vsel %vm7882, %v8601, 0
    %v8860 = vsel %vm7882, %v8602, 0
    %8862 = vmatprep.subr.bf16.mxu0 0
    %8863 = vmatpush1.bf16.msra.mxu0 %v6956
    %8864 = vmatprep.subr.bf16.mxu0 0
    %8865 = vmatpush1.bf16.msra.mxu0 %v6972
    %8866 = vmatprep.subr.bf16.mxu0 0
    %8867 = vmatpush1.bf16.msra.mxu0 %v6988
    %8868 = vmatprep.subr.bf16.mxu0 0
    %8869 = vmatpush1.bf16.msra.mxu0 %v7004
    %8870 = vmatprep.subr.bf16.mxu0 0
    %8871 = vmatpush1.bf16.msra.mxu0 0
    %8872 = vmatprep.subr.bf16.mxu0 0
    %8873 = vmatpush1.bf16.msra.mxu0 0
    %8874 = vmatprep.subr.bf16.mxu0 0
    %8875 = vmatpush1.bf16.msra.mxu0 0
    %8876 = vmatprep.subr.bf16.mxu0 0
    %8877 = vmatpush1.bf16.msra.mxu0 0
    %8878 = vmatprep.subr.bf16.mxu0 0
    %8879 = vmatpush1.bf16.msra.mxu0 0
    %8880 = vmatprep.subr.bf16.mxu0 0
    %8881 = vmatpush1.bf16.msra.mxu0 0
    %8882 = vmatprep.subr.bf16.mxu0 0
    %8883 = vmatpush1.bf16.msra.mxu0 0
    %8884 = vmatprep.subr.bf16.mxu0 0
    %8885 = vmatpush1.bf16.msra.mxu0 0
    %8886 = vmatprep.subr.bf16.mxu0 0
    %8887 = vmatpush1.bf16.msra.mxu0 0
    %8888 = vmatprep.subr.bf16.mxu0 0
    %8889 = vmatpush1.bf16.msra.mxu0 0
    %8890 = vmatprep.subr.bf16.mxu0 0
    %8891 = vmatpush1.bf16.msra.mxu0 0
    %8892 = vmatprep.subr.bf16.mxu0 0
    %8893 = vmatpush1.bf16.msra.mxu0 0
    %8894 = vmatprep.mubr.bf16.mxu0 0
    %8895 = vmatmul.mubr.bf16.gmra.mrb[0].mxu0 %v8851
    %v8896 = vpop.f32.mrb[0].mxu0
    %v8897 = vadd.f32 0.0, %v8896
    %v8898 = vpop.f32.mrb[0].mxu0
    %v8899 = vpop.f32.mrb[0].mxu0
    %v8900 = vadd.f32 0.0, %v8899
    %v8901 = vpop.f32.mrb[0].mxu0
    %8902 = vmatprep.mubr.bf16.mxu0 0
    %8903 = vmatmul.mubr.bf16.gmra.mrb[0].mxu0 %v8854
    %v8904 = vpop.f32.mrb[0].mxu0
    %v8905 = vadd.f32 0.0, %v8904
    %v8906 = vpop.f32.mrb[0].mxu0
    %v8907 = vpop.f32.mrb[0].mxu0
    %v8908 = vadd.f32 0.0, %v8907
    %v8909 = vpop.f32.mrb[0].mxu0
    %8910 = vmatprep.mubr.bf16.mxu0 0
    %8911 = vmatmul.mubr.bf16.gmra.mrb[0].mxu0 %v8857
    %v8912 = vpop.f32.mrb[0].mxu0
    %v8913 = vadd.f32 0.0, %v8912
    %v8914 = vpop.f32.mrb[0].mxu0
    %v8915 = vpop.f32.mrb[0].mxu0
    %v8916 = vadd.f32 0.0, %v8915
    %v8917 = vpop.f32.mrb[0].mxu0
    %8918 = vmatprep.mubr.bf16.mxu0 0
    %8919 = vmatmul.mubr.bf16.gmra.mrb[0].mxu0 %v8860
    %v8920 = vpop.f32.mrb[0].mxu0
    %v8921 = vadd.f32 0.0, %v8920
    %v8922 = vpop.f32.mrb[0].mxu0
    %v8923 = vpop.f32.mrb[0].mxu0
    %v8924 = vadd.f32 0.0, %v8923
    %v8925 = vpop.f32.mrb[0].mxu0
    %8926 = vdwg.mxu0
    %v8928 = vsel %vm7882, %v8603, 0
    %v8931 = vsel %vm7882, %v8604, 0
    %v8934 = vsel %vm7882, %v8605, 0
    %v8937 = vsel %vm7882, %v8606, 0
    %8939 = vmatprep.subr.bf16.mxu0 0
    %8940 = vmatpush1.bf16.msra.mxu0 %v7008
    %8941 = vmatprep.subr.bf16.mxu0 0
    %8942 = vmatpush1.bf16.msra.mxu0 %v7024
    %8943 = vmatprep.subr.bf16.mxu0 0
    %8944 = vmatpush1.bf16.msra.mxu0 %v7040
    %8945 = vmatprep.subr.bf16.mxu0 0
    %8946 = vmatpush1.bf16.msra.mxu0 %v7056
    %8947 = vmatprep.subr.bf16.mxu0 0
    %8948 = vmatpush1.bf16.msra.mxu0 0
    %8949 = vmatprep.subr.bf16.mxu0 0
    %8950 = vmatpush1.bf16.msra.mxu0 0
    %8951 = vmatprep.subr.bf16.mxu0 0
    %8952 = vmatpush1.bf16.msra.mxu0 0
    %8953 = vmatprep.subr.bf16.mxu0 0
    %8954 = vmatpush1.bf16.msra.mxu0 0
    %8955 = vmatprep.subr.bf16.mxu0 0
    %8956 = vmatpush1.bf16.msra.mxu0 0
    %8957 = vmatprep.subr.bf16.mxu0 0
    %8958 = vmatpush1.bf16.msra.mxu0 0
    %8959 = vmatprep.subr.bf16.mxu0 0
    %8960 = vmatpush1.bf16.msra.mxu0 0
    %8961 = vmatprep.subr.bf16.mxu0 0
    %8962 = vmatpush1.bf16.msra.mxu0 0
    %8963 = vmatprep.subr.bf16.mxu0 0
    %8964 = vmatpush1.bf16.msra.mxu0 0
    %8965 = vmatprep.subr.bf16.mxu0 0
    %8966 = vmatpush1.bf16.msra.mxu0 0
    %8967 = vmatprep.subr.bf16.mxu0 0
    %8968 = vmatpush1.bf16.msra.mxu0 0
    %8969 = vmatprep.subr.bf16.mxu0 0
    %8970 = vmatpush1.bf16.msra.mxu0 0
    %8971 = vmatprep.mubr.bf16.mxu0 0
    %8972 = vmatmul.mubr.bf16.gmra.mrb[0].mxu0 %v8928
    %v8973 = vpop.f32.mrb[0].mxu0
    %v8974 = vadd.f32 0.0, %v8973
    %v8975 = vpop.f32.mrb[0].mxu0
    %v8976 = vpop.f32.mrb[0].mxu0
    %v8977 = vadd.f32 0.0, %v8976
    %v8978 = vpop.f32.mrb[0].mxu0
    %8979 = vmatprep.mubr.bf16.mxu0 0
    %8980 = vmatmul.mubr.bf16.gmra.mrb[0].mxu0 %v8931
    %v8981 = vpop.f32.mrb[0].mxu0
    %v8982 = vadd.f32 0.0, %v8981
    %v8983 = vpop.f32.mrb[0].mxu0
    %v8984 = vpop.f32.mrb[0].mxu0
    %v8985 = vadd.f32 0.0, %v8984
    %v8986 = vpop.f32.mrb[0].mxu0
    %8987 = vmatprep.mubr.bf16.mxu0 0
    %8988 = vmatmul.mubr.bf16.gmra.mrb[0].mxu0 %v8934
    %v8989 = vpop.f32.mrb[0].mxu0
    %v8990 = vadd.f32 0.0, %v8989
    %v8991 = vpop.f32.mrb[0].mxu0
    %v8992 = vpop.f32.mrb[0].mxu0
    %v8993 = vadd.f32 0.0, %v8992
    %v8994 = vpop.f32.mrb[0].mxu0
    %8995 = vmatprep.mubr.bf16.mxu0 0
    %8996 = vmatmul.mubr.bf16.gmra.mrb[0].mxu0 %v8937
    %v8997 = vpop.f32.mrb[0].mxu0
    %v8998 = vadd.f32 0.0, %v8997
    %v8999 = vpop.f32.mrb[0].mxu0
    %v9000 = vpop.f32.mrb[0].mxu0
    %v9001 = vadd.f32 0.0, %v9000
    %v9002 = vpop.f32.mrb[0].mxu0
    %9003 = vdwg.mxu0
    %v9005 = vsel %vm7882, %v8607, 0
    %v9008 = vsel %vm7882, %v8608, 0
    %v9011 = vsel %vm7882, %v8609, 0
    %v9014 = vsel %vm7882, %v8610, 0
    %9016 = vmatprep.subr.bf16.mxu0 0
    %9017 = vmatpush1.bf16.msra.mxu0 %v7012
    %9018 = vmatprep.subr.bf16.mxu0 0
    %9019 = vmatpush1.bf16.msra.mxu0 %v7028
    %9020 = vmatprep.subr.bf16.mxu0 0
    %9021 = vmatpush1.bf16.msra.mxu0 %v7044
    %9022 = vmatprep.subr.bf16.mxu0 0
    %9023 = vmatpush1.bf16.msra.mxu0 %v7060
    %9024 = vmatprep.subr.bf16.mxu0 0
    %9025 = vmatpush1.bf16.msra.mxu0 0
    %9026 = vmatprep.subr.bf16.mxu0 0
    %9027 = vmatpush1.bf16.msra.mxu0 0
    %9028 = vmatprep.subr.bf16.mxu0 0
    %9029 = vmatpush1.bf16.msra.mxu0 0
    %9030 = vmatprep.subr.bf16.mxu0 0
    %9031 = vmatpush1.bf16.msra.mxu0 0
    %9032 = vmatprep.subr.bf16.mxu0 0
    %9033 = vmatpush1.bf16.msra.mxu0 0
    %9034 = vmatprep.subr.bf16.mxu0 0
    %9035 = vmatpush1.bf16.msra.mxu0 0
    %9036 = vmatprep.subr.bf16.mxu0 0
    %9037 = vmatpush1.bf16.msra.mxu0 0
    %9038 = vmatprep.subr.bf16.mxu0 0
    %9039 = vmatpush1.bf16.msra.mxu0 0
    %9040 = vmatprep.subr.bf16.mxu0 0
    %9041 = vmatpush1.bf16.msra.mxu0 0
    %9042 = vmatprep.subr.bf16.mxu0 0
    %9043 = vmatpush1.bf16.msra.mxu0 0
    %9044 = vmatprep.subr.bf16.mxu0 0
    %9045 = vmatpush1.bf16.msra.mxu0 0
    %9046 = vmatprep.subr.bf16.mxu0 0
    %9047 = vmatpush1.bf16.msra.mxu0 0
    %9048 = vmatprep.mubr.bf16.mxu0 0
    %9049 = vmatmul.mubr.bf16.gmra.mrb[0].mxu0 %v9005
    %v9050 = vpop.f32.mrb[0].mxu0
    %v9051 = vadd.f32 0.0, %v9050
    %v9052 = vpop.f32.mrb[0].mxu0
    %v9053 = vpop.f32.mrb[0].mxu0
    %v9054 = vadd.f32 0.0, %v9053
    %v9055 = vpop.f32.mrb[0].mxu0
    %9056 = vmatprep.mubr.bf16.mxu0 0
    %9057 = vmatmul.mubr.bf16.gmra.mrb[0].mxu0 %v9008
    %v9058 = vpop.f32.mrb[0].mxu0
    %v9059 = vadd.f32 0.0, %v9058
    %v9060 = vpop.f32.mrb[0].mxu0
    %v9061 = vpop.f32.mrb[0].mxu0
    %v9062 = vadd.f32 0.0, %v9061
    %v9063 = vpop.f32.mrb[0].mxu0
    %9064 = vmatprep.mubr.bf16.mxu0 0
    %9065 = vmatmul.mubr.bf16.gmra.mrb[0].mxu0 %v9011
    %v9066 = vpop.f32.mrb[0].mxu0
    %v9067 = vadd.f32 0.0, %v9066
    %v9068 = vpop.f32.mrb[0].mxu0
    %v9069 = vpop.f32.mrb[0].mxu0
    %v9070 = vadd.f32 0.0, %v9069
    %v9071 = vpop.f32.mrb[0].mxu0
    %9072 = vmatprep.mubr.bf16.mxu0 0
    %9073 = vmatmul.mubr.bf16.gmra.mrb[0].mxu0 %v9014
    %v9074 = vpop.f32.mrb[0].mxu0
    %v9075 = vadd.f32 0.0, %v9074
    %v9076 = vpop.f32.mrb[0].mxu0
    %v9077 = vpop.f32.mrb[0].mxu0
    %v9078 = vadd.f32 0.0, %v9077
    %v9079 = vpop.f32.mrb[0].mxu0
    %9080 = vdwg.mxu0
    %v9082 = vsel %vm7882, %v8611, 0
    %v9085 = vsel %vm7882, %v8612, 0
    %v9088 = vsel %vm7882, %v8613, 0
    %v9091 = vsel %vm7882, %v8614, 0
    %9093 = vmatprep.subr.bf16.mxu0 0
    %9094 = vmatpush1.bf16.msra.mxu0 %v7016
    %9095 = vmatprep.subr.bf16.mxu0 0
    %9096 = vmatpush1.bf16.msra.mxu0 %v7032
    %9097 = vmatprep.subr.bf16.mxu0 0
    %9098 = vmatpush1.bf16.msra.mxu0 %v7048
    %9099 = vmatprep.subr.bf16.mxu0 0
    %9100 = vmatpush1.bf16.msra.mxu0 %v7064
    %9101 = vmatprep.subr.bf16.mxu0 0
    %9102 = vmatpush1.bf16.msra.mxu0 0
    %9103 = vmatprep.subr.bf16.mxu0 0
    %9104 = vmatpush1.bf16.msra.mxu0 0
    %9105 = vmatprep.subr.bf16.mxu0 0
    %9106 = vmatpush1.bf16.msra.mxu0 0
    %9107 = vmatprep.subr.bf16.mxu0 0
    %9108 = vmatpush1.bf16.msra.mxu0 0
    %9109 = vmatprep.subr.bf16.mxu0 0
    %9110 = vmatpush1.bf16.msra.mxu0 0
    %9111 = vmatprep.subr.bf16.mxu0 0
    %9112 = vmatpush1.bf16.msra.mxu0 0
    %9113 = vmatprep.subr.bf16.mxu0 0
    %9114 = vmatpush1.bf16.msra.mxu0 0
    %9115 = vmatprep.subr.bf16.mxu0 0
    %9116 = vmatpush1.bf16.msra.mxu0 0
    %9117 = vmatprep.subr.bf16.mxu0 0
    %9118 = vmatpush1.bf16.msra.mxu0 0
    %9119 = vmatprep.subr.bf16.mxu0 0
    %9120 = vmatpush1.bf16.msra.mxu0 0
    %9121 = vmatprep.subr.bf16.mxu0 0
    %9122 = vmatpush1.bf16.msra.mxu0 0
    %9123 = vmatprep.subr.bf16.mxu0 0
    %9124 = vmatpush1.bf16.msra.mxu0 0
    %9125 = vmatprep.mubr.bf16.mxu0 0
    %9126 = vmatmul.mubr.bf16.gmra.mrb[0].mxu0 %v9082
    %v9127 = vpop.f32.mrb[0].mxu0
    %v9128 = vadd.f32 0.0, %v9127
    %v9129 = vpop.f32.mrb[0].mxu0
    %v9130 = vpop.f32.mrb[0].mxu0
    %v9131 = vadd.f32 0.0, %v9130
    %v9132 = vpop.f32.mrb[0].mxu0
    %9133 = vmatprep.mubr.bf16.mxu0 0
    %9134 = vmatmul.mubr.bf16.gmra.mrb[0].mxu0 %v9085
    %v9135 = vpop.f32.mrb[0].mxu0
    %v9136 = vadd.f32 0.0, %v9135
    %v9137 = vpop.f32.mrb[0].mxu0
    %v9138 = vpop.f32.mrb[0].mxu0
    %v9139 = vadd.f32 0.0, %v9138
    %v9140 = vpop.f32.mrb[0].mxu0
    %9141 = vmatprep.mubr.bf16.mxu0 0
    %9142 = vmatmul.mubr.bf16.gmra.mrb[0].mxu0 %v9088
    %v9143 = vpop.f32.mrb[0].mxu0
    %v9144 = vadd.f32 0.0, %v9143
    %v9145 = vpop.f32.mrb[0].mxu0
    %v9146 = vpop.f32.mrb[0].mxu0
    %v9147 = vadd.f32 0.0, %v9146
    %v9148 = vpop.f32.mrb[0].mxu0
    %9149 = vmatprep.mubr.bf16.mxu0 0
    %9150 = vmatmul.mubr.bf16.gmra.mrb[0].mxu0 %v9091
    %v9151 = vpop.f32.mrb[0].mxu0
    %v9152 = vadd.f32 0.0, %v9151
    %v9153 = vpop.f32.mrb[0].mxu0
    %v9154 = vpop.f32.mrb[0].mxu0
    %v9155 = vadd.f32 0.0, %v9154
    %v9156 = vpop.f32.mrb[0].mxu0
    %9157 = vdwg.mxu0
    %v9159 = vsel %vm7882, %v8615, 0
    %v9162 = vsel %vm7882, %v8616, 0
    %v9165 = vsel %vm7882, %v8617, 0
    %v9168 = vsel %vm7882, %v8618, 0
    %9170 = vmatprep.subr.bf16.mxu0 0
    %9171 = vmatpush1.bf16.msra.mxu0 %v7020
    %9172 = vmatprep.subr.bf16.mxu0 0
    %9173 = vmatpush1.bf16.msra.mxu0 %v7036
    %9174 = vmatprep.subr.bf16.mxu0 0
    %9175 = vmatpush1.bf16.msra.mxu0 %v7052
    %9176 = vmatprep.subr.bf16.mxu0 0
    %9177 = vmatpush1.bf16.msra.mxu0 %v7068
    %9178 = vmatprep.subr.bf16.mxu0 0
    %9179 = vmatpush1.bf16.msra.mxu0 0
    %9180 = vmatprep.subr.bf16.mxu0 0
    %9181 = vmatpush1.bf16.msra.mxu0 0
    %9182 = vmatprep.subr.bf16.mxu0 0
    %9183 = vmatpush1.bf16.msra.mxu0 0
    %9184 = vmatprep.subr.bf16.mxu0 0
    %9185 = vmatpush1.bf16.msra.mxu0 0
    %9186 = vmatprep.subr.bf16.mxu0 0
    %9187 = vmatpush1.bf16.msra.mxu0 0
    %9188 = vmatprep.subr.bf16.mxu0 0
    %9189 = vmatpush1.bf16.msra.mxu0 0
    %9190 = vmatprep.subr.bf16.mxu0 0
    %9191 = vmatpush1.bf16.msra.mxu0 0
    %9192 = vmatprep.subr.bf16.mxu0 0
    %9193 = vmatpush1.bf16.msra.mxu0 0
    %9194 = vmatprep.subr.bf16.mxu0 0
    %9195 = vmatpush1.bf16.msra.mxu0 0
    %9196 = vmatprep.subr.bf16.mxu0 0
    %9197 = vmatpush1.bf16.msra.mxu0 0
    %9198 = vmatprep.subr.bf16.mxu0 0
    %9199 = vmatpush1.bf16.msra.mxu0 0
    %9200 = vmatprep.subr.bf16.mxu0 0
    %9201 = vmatpush1.bf16.msra.mxu0 0
    %9202 = vmatprep.mubr.bf16.mxu0 0
    %9203 = vmatmul.mubr.bf16.gmra.mrb[0].mxu0 %v9159
    %v9204 = vpop.f32.mrb[0].mxu0
    %v9205 = vadd.f32 0.0, %v9204
    %v9206 = vpop.f32.mrb[0].mxu0
    %v9207 = vpop.f32.mrb[0].mxu0
    %v9208 = vadd.f32 0.0, %v9207
    %v9209 = vpop.f32.mrb[0].mxu0
    %9210 = vmatprep.mubr.bf16.mxu0 0
    %9211 = vmatmul.mubr.bf16.gmra.mrb[0].mxu0 %v9162
    %v9212 = vpop.f32.mrb[0].mxu0
    %v9213 = vadd.f32 0.0, %v9212
    %v9214 = vpop.f32.mrb[0].mxu0
    %v9215 = vpop.f32.mrb[0].mxu0
    %v9216 = vadd.f32 0.0, %v9215
    %v9217 = vpop.f32.mrb[0].mxu0
    %9218 = vmatprep.mubr.bf16.mxu0 0
    %9219 = vmatmul.mubr.bf16.gmra.mrb[0].mxu0 %v9165
    %v9220 = vpop.f32.mrb[0].mxu0
    %v9221 = vadd.f32 0.0, %v9220
    %v9222 = vpop.f32.mrb[0].mxu0
    %v9223 = vpop.f32.mrb[0].mxu0
    %v9224 = vadd.f32 0.0, %v9223
    %v9225 = vpop.f32.mrb[0].mxu0
    %9226 = vmatprep.mubr.bf16.mxu0 0
    %9227 = vmatmul.mubr.bf16.gmra.mrb[0].mxu0 %v9168
    %v9228 = vpop.f32.mrb[0].mxu0
    %v9229 = vadd.f32 0.0, %v9228
    %v9230 = vpop.f32.mrb[0].mxu0
    %v9231 = vpop.f32.mrb[0].mxu0
    %v9232 = vadd.f32 0.0, %v9231
    %v9233 = vpop.f32.mrb[0].mxu0
    %9234 = vdwg.mxu0
    %v9235 = vcombine.low %v8666, %v8820
    %v9236 = vcombine.high %v8666, %v8820
    %v9238 = vunpack.c.l.s4 1983009808
    %v9239 = vunpack.c.0.s8 %v9238
    %v9240 = vlaneseq
    %v9241 = vshrl.u32 %v9240, 7
    %v9242 = vsub.s32 %v9239, %v9241
    %v9243 = vrot.slane %v9235, %v9242
    %v9245 = vunpack.c.l.s4 1983009808
    %v9246 = vunpack.c.0.s8 %v9245
    %v9247 = vlaneseq
    %v9248 = vshrl.u32 %v9247, 7
    %v9249 = vsub.s32 %v9246, %v9248
    %v9250 = vrot.slane %v9236, %v9249
    %v9251 = vcombine.low %v8743, %v8897
    %v9252 = vcombine.high %v8743, %v8897
    %v9254 = vunpack.c.l.s4 1983009808
    %v9255 = vunpack.c.0.s8 %v9254
    %v9256 = vlaneseq
    %v9257 = vshrl.u32 %v9256, 7
    %v9258 = vsub.s32 %v9255, %v9257
    %v9259 = vrot.slane %v9251, %v9258
    %v9261 = vunpack.c.l.s4 1983009808
    %v9262 = vunpack.c.0.s8 %v9261
    %v9263 = vlaneseq
    %v9264 = vshrl.u32 %v9263, 7
    %v9265 = vsub.s32 %v9262, %v9264
    %v9266 = vrot.slane %v9252, %v9265
    %v9267 = vcombine.low %v9243, %v9259
    %v9268 = vcombine.high %v9243, %v9259
    %v9270 = vunpack.c.l.s4 1934713408
    %v9271 = vunpack.c.0.s8 %v9270
    %v9272 = vlaneseq
    %v9273 = vshrl.u32 %v9272, 7
    %v9274 = vsub.s32 %v9271, %v9273
    %v9275 = vrot.slane %v9267, %v9274
    %v9277 = vunpack.c.l.s4 1934713408
    %v9278 = vunpack.c.0.s8 %v9277
    %v9279 = vlaneseq
    %v9280 = vshrl.u32 %v9279, 7
    %v9281 = vsub.s32 %v9278, %v9280
    %v9282 = vrot.slane %v9268, %v9281
    %v9283 = vcombine.low %v9250, %v9266
    %v9284 = vcombine.high %v9250, %v9266
    %v9286 = vunpack.c.l.s4 1934713408
    %v9287 = vunpack.c.0.s8 %v9286
    %v9288 = vlaneseq
    %v9289 = vshrl.u32 %v9288, 7
    %v9290 = vsub.s32 %v9287, %v9289
    %v9291 = vrot.slane %v9283, %v9290
    %v9293 = vunpack.c.l.s4 1934713408
    %v9294 = vunpack.c.0.s8 %v9293
    %v9295 = vlaneseq
    %v9296 = vshrl.u32 %v9295, 7
    %v9297 = vsub.s32 %v9294, %v9296
    %v9298 = vrot.slane %v9284, %v9297
    %v9299 = vcombine.high %v9275, 0.0
    %v9300 = vcombine.high %v9282, 0.0
    %v9301 = vcombine.high %v9291, 0.0
    %v9302 = vcombine.high %v9298, 0.0
    %v9303 = vcombine.low %v8669, %v8823
    %v9304 = vcombine.high %v8669, %v8823
    %v9306 = vunpack.c.l.s4 1983009808
    %v9307 = vunpack.c.0.s8 %v9306
    %v9308 = vlaneseq
    %v9309 = vshrl.u32 %v9308, 7
    %v9310 = vsub.s32 %v9307, %v9309
    %v9311 = vrot.slane %v9303, %v9310
    %v9313 = vunpack.c.l.s4 1983009808
    %v9314 = vunpack.c.0.s8 %v9313
    %v9315 = vlaneseq
    %v9316 = vshrl.u32 %v9315, 7
    %v9317 = vsub.s32 %v9314, %v9316
    %v9318 = vrot.slane %v9304, %v9317
    %v9319 = vcombine.low %v8746, %v8900
    %v9320 = vcombine.high %v8746, %v8900
    %v9322 = vunpack.c.l.s4 1983009808
    %v9323 = vunpack.c.0.s8 %v9322
    %v9324 = vlaneseq
    %v9325 = vshrl.u32 %v9324, 7
    %v9326 = vsub.s32 %v9323, %v9325
    %v9327 = vrot.slane %v9319, %v9326
    %v9329 = vunpack.c.l.s4 1983009808
    %v9330 = vunpack.c.0.s8 %v9329
    %v9331 = vlaneseq
    %v9332 = vshrl.u32 %v9331, 7
    %v9333 = vsub.s32 %v9330, %v9332
    %v9334 = vrot.slane %v9320, %v9333
    %v9335 = vcombine.low %v9311, %v9327
    %v9336 = vcombine.high %v9311, %v9327
    %v9338 = vunpack.c.l.s4 1934713408
    %v9339 = vunpack.c.0.s8 %v9338
    %v9340 = vlaneseq
    %v9341 = vshrl.u32 %v9340, 7
    %v9342 = vsub.s32 %v9339, %v9341
    %v9343 = vrot.slane %v9335, %v9342
    %v9345 = vunpack.c.l.s4 1934713408
    %v9346 = vunpack.c.0.s8 %v9345
    %v9347 = vlaneseq
    %v9348 = vshrl.u32 %v9347, 7
    %v9349 = vsub.s32 %v9346, %v9348
    %v9350 = vrot.slane %v9336, %v9349
    %v9351 = vcombine.low %v9318, %v9334
    %v9352 = vcombine.high %v9318, %v9334
    %v9354 = vunpack.c.l.s4 1934713408
    %v9355 = vunpack.c.0.s8 %v9354
    %v9356 = vlaneseq
    %v9357 = vshrl.u32 %v9356, 7
    %v9358 = vsub.s32 %v9355, %v9357
    %v9359 = vrot.slane %v9351, %v9358
    %v9361 = vunpack.c.l.s4 1934713408
    %v9362 = vunpack.c.0.s8 %v9361
    %v9363 = vlaneseq
    %v9364 = vshrl.u32 %v9363, 7
    %v9365 = vsub.s32 %v9362, %v9364
    %v9366 = vrot.slane %v9352, %v9365
    %v9367 = vcombine.high %v9343, 0.0
    %v9368 = vcombine.high %v9350, 0.0
    %v9369 = vcombine.high %v9359, 0.0
    %v9370 = vcombine.high %v9366, 0.0
    %v9371 = vcombine.low %v8674, %v8828
    %v9372 = vcombine.high %v8674, %v8828
    %v9374 = vunpack.c.l.s4 1983009808
    %v9375 = vunpack.c.0.s8 %v9374
    %v9376 = vlaneseq
    %v9377 = vshrl.u32 %v9376, 7
    %v9378 = vsub.s32 %v9375, %v9377
    %v9379 = vrot.slane %v9371, %v9378
    %v9381 = vunpack.c.l.s4 1983009808
    %v9382 = vunpack.c.0.s8 %v9381
    %v9383 = vlaneseq
    %v9384 = vshrl.u32 %v9383, 7
    %v9385 = vsub.s32 %v9382, %v9384
    %v9386 = vrot.slane %v9372, %v9385
    %v9387 = vcombine.low %v8751, %v8905
    %v9388 = vcombine.high %v8751, %v8905
    %v9390 = vunpack.c.l.s4 1983009808
    %v9391 = vunpack.c.0.s8 %v9390
    %v9392 = vlaneseq
    %v9393 = vshrl.u32 %v9392, 7
    %v9394 = vsub.s32 %v9391, %v9393
    %v9395 = vrot.slane %v9387, %v9394
    %v9397 = vunpack.c.l.s4 1983009808
    %v9398 = vunpack.c.0.s8 %v9397
    %v9399 = vlaneseq
    %v9400 = vshrl.u32 %v9399, 7
    %v9401 = vsub.s32 %v9398, %v9400
    %v9402 = vrot.slane %v9388, %v9401
    %v9403 = vcombine.low %v9379, %v9395
    %v9404 = vcombine.high %v9379, %v9395
    %v9406 = vunpack.c.l.s4 1934713408
    %v9407 = vunpack.c.0.s8 %v9406
    %v9408 = vlaneseq
    %v9409 = vshrl.u32 %v9408, 7
    %v9410 = vsub.s32 %v9407, %v9409
    %v9411 = vrot.slane %v9403, %v9410
    %v9413 = vunpack.c.l.s4 1934713408
    %v9414 = vunpack.c.0.s8 %v9413
    %v9415 = vlaneseq
    %v9416 = vshrl.u32 %v9415, 7
    %v9417 = vsub.s32 %v9414, %v9416
    %v9418 = vrot.slane %v9404, %v9417
    %v9419 = vcombine.low %v9386, %v9402
    %v9420 = vcombine.high %v9386, %v9402
    %v9422 = vunpack.c.l.s4 1934713408
    %v9423 = vunpack.c.0.s8 %v9422
    %v9424 = vlaneseq
    %v9425 = vshrl.u32 %v9424, 7
    %v9426 = vsub.s32 %v9423, %v9425
    %v9427 = vrot.slane %v9419, %v9426
    %v9429 = vunpack.c.l.s4 1934713408
    %v9430 = vunpack.c.0.s8 %v9429
    %v9431 = vlaneseq
    %v9432 = vshrl.u32 %v9431, 7
    %v9433 = vsub.s32 %v9430, %v9432
    %v9434 = vrot.slane %v9420, %v9433
    %v9435 = vcombine.high %v9411, 0.0
    %v9436 = vcombine.high %v9418, 0.0
    %v9437 = vcombine.high %v9427, 0.0
    %v9438 = vcombine.high %v9434, 0.0
    %v9439 = vcombine.low %v8677, %v8831
    %v9440 = vcombine.high %v8677, %v8831
    %v9442 = vunpack.c.l.s4 1983009808
    %v9443 = vunpack.c.0.s8 %v9442
    %v9444 = vlaneseq
    %v9445 = vshrl.u32 %v9444, 7
    %v9446 = vsub.s32 %v9443, %v9445
    %v9447 = vrot.slane %v9439, %v9446
    %v9449 = vunpack.c.l.s4 1983009808
    %v9450 = vunpack.c.0.s8 %v9449
    %v9451 = vlaneseq
    %v9452 = vshrl.u32 %v9451, 7
    %v9453 = vsub.s32 %v9450, %v9452
    %v9454 = vrot.slane %v9440, %v9453
    %v9455 = vcombine.low %v8754, %v8908
    %v9456 = vcombine.high %v8754, %v8908
    %v9458 = vunpack.c.l.s4 1983009808
    %v9459 = vunpack.c.0.s8 %v9458
    %v9460 = vlaneseq
    %v9461 = vshrl.u32 %v9460, 7
    %v9462 = vsub.s32 %v9459, %v9461
    %v9463 = vrot.slane %v9455, %v9462
    %v9465 = vunpack.c.l.s4 1983009808
    %v9466 = vunpack.c.0.s8 %v9465
    %v9467 = vlaneseq
    %v9468 = vshrl.u32 %v9467, 7
    %v9469 = vsub.s32 %v9466, %v9468
    %v9470 = vrot.slane %v9456, %v9469
    %v9471 = vcombine.low %v9447, %v9463
    %v9472 = vcombine.high %v9447, %v9463
    %v9474 = vunpack.c.l.s4 1934713408
    %v9475 = vunpack.c.0.s8 %v9474
    %v9476 = vlaneseq
    %v9477 = vshrl.u32 %v9476, 7
    %v9478 = vsub.s32 %v9475, %v9477
    %v9479 = vrot.slane %v9471, %v9478
    %v9481 = vunpack.c.l.s4 1934713408
    %v9482 = vunpack.c.0.s8 %v9481
    %v9483 = vlaneseq
    %v9484 = vshrl.u32 %v9483, 7
    %v9485 = vsub.s32 %v9482, %v9484
    %v9486 = vrot.slane %v9472, %v9485
    %v9487 = vcombine.low %v9454, %v9470
    %v9488 = vcombine.high %v9454, %v9470
    %v9490 = vunpack.c.l.s4 1934713408
    %v9491 = vunpack.c.0.s8 %v9490
    %v9492 = vlaneseq
    %v9493 = vshrl.u32 %v9492, 7
    %v9494 = vsub.s32 %v9491, %v9493
    %v9495 = vrot.slane %v9487, %v9494
    %v9497 = vunpack.c.l.s4 1934713408
    %v9498 = vunpack.c.0.s8 %v9497
    %v9499 = vlaneseq
    %v9500 = vshrl.u32 %v9499, 7
    %v9501 = vsub.s32 %v9498, %v9500
    %v9502 = vrot.slane %v9488, %v9501
    %v9503 = vcombine.high %v9479, 0.0
    %v9504 = vcombine.high %v9486, 0.0
    %v9505 = vcombine.high %v9495, 0.0
    %v9506 = vcombine.high %v9502, 0.0
    %v9507 = vcombine.low %v8682, %v8836
    %v9508 = vcombine.high %v8682, %v8836
    %v9510 = vunpack.c.l.s4 1983009808
    %v9511 = vunpack.c.0.s8 %v9510
    %v9512 = vlaneseq
    %v9513 = vshrl.u32 %v9512, 7
    %v9514 = vsub.s32 %v9511, %v9513
    %v9515 = vrot.slane %v9507, %v9514
    %v9517 = vunpack.c.l.s4 1983009808
    %v9518 = vunpack.c.0.s8 %v9517
    %v9519 = vlaneseq
    %v9520 = vshrl.u32 %v9519, 7
    %v9521 = vsub.s32 %v9518, %v9520
    %v9522 = vrot.slane %v9508, %v9521
    %v9523 = vcombine.low %v8759, %v8913
    %v9524 = vcombine.high %v8759, %v8913
    %v9526 = vunpack.c.l.s4 1983009808
    %v9527 = vunpack.c.0.s8 %v9526
    %v9528 = vlaneseq
    %v9529 = vshrl.u32 %v9528, 7
    %v9530 = vsub.s32 %v9527, %v9529
    %v9531 = vrot.slane %v9523, %v9530
    %v9533 = vunpack.c.l.s4 1983009808
    %v9534 = vunpack.c.0.s8 %v9533
    %v9535 = vlaneseq
    %v9536 = vshrl.u32 %v9535, 7
    %v9537 = vsub.s32 %v9534, %v9536
    %v9538 = vrot.slane %v9524, %v9537
    %v9539 = vcombine.low %v9515, %v9531
    %v9540 = vcombine.high %v9515, %v9531
    %v9542 = vunpack.c.l.s4 1934713408
    %v9543 = vunpack.c.0.s8 %v9542
    %v9544 = vlaneseq
    %v9545 = vshrl.u32 %v9544, 7
    %v9546 = vsub.s32 %v9543, %v9545
    %v9547 = vrot.slane %v9539, %v9546
    %v9549 = vunpack.c.l.s4 1934713408
    %v9550 = vunpack.c.0.s8 %v9549
    %v9551 = vlaneseq
    %v9552 = vshrl.u32 %v9551, 7
    %v9553 = vsub.s32 %v9550, %v9552
    %v9554 = vrot.slane %v9540, %v9553
    %v9555 = vcombine.low %v9522, %v9538
    %v9556 = vcombine.high %v9522, %v9538
    %v9558 = vunpack.c.l.s4 1934713408
    %v9559 = vunpack.c.0.s8 %v9558
    %v9560 = vlaneseq
    %v9561 = vshrl.u32 %v9560, 7
    %v9562 = vsub.s32 %v9559, %v9561
    %v9563 = vrot.slane %v9555, %v9562
    %v9565 = vunpack.c.l.s4 1934713408
    %v9566 = vunpack.c.0.s8 %v9565
    %v9567 = vlaneseq
    %v9568 = vshrl.u32 %v9567, 7
    %v9569 = vsub.s32 %v9566, %v9568
    %v9570 = vrot.slane %v9556, %v9569
    %v9571 = vcombine.high %v9547, 0.0
    %v9572 = vcombine.high %v9554, 0.0
    %v9573 = vcombine.high %v9563, 0.0
    %v9574 = vcombine.high %v9570, 0.0
    %v9575 = vcombine.low %v8685, %v8839
    %v9576 = vcombine.high %v8685, %v8839
    %v9578 = vunpack.c.l.s4 1983009808
    %v9579 = vunpack.c.0.s8 %v9578
    %v9580 = vlaneseq
    %v9581 = vshrl.u32 %v9580, 7
    %v9582 = vsub.s32 %v9579, %v9581
    %v9583 = vrot.slane %v9575, %v9582
    %v9585 = vunpack.c.l.s4 1983009808
    %v9586 = vunpack.c.0.s8 %v9585
    %v9587 = vlaneseq
    %v9588 = vshrl.u32 %v9587, 7
    %v9589 = vsub.s32 %v9586, %v9588
    %v9590 = vrot.slane %v9576, %v9589
    %v9591 = vcombine.low %v8762, %v8916
    %v9592 = vcombine.high %v8762, %v8916
    %v9594 = vunpack.c.l.s4 1983009808
    %v9595 = vunpack.c.0.s8 %v9594
    %v9596 = vlaneseq
    %v9597 = vshrl.u32 %v9596, 7
    %v9598 = vsub.s32 %v9595, %v9597
    %v9599 = vrot.slane %v9591, %v9598
    %v9601 = vunpack.c.l.s4 1983009808
    %v9602 = vunpack.c.0.s8 %v9601
    %v9603 = vlaneseq
    %v9604 = vshrl.u32 %v9603, 7
    %v9605 = vsub.s32 %v9602, %v9604
    %v9606 = vrot.slane %v9592, %v9605
    %v9607 = vcombine.low %v9583, %v9599
    %v9608 = vcombine.high %v9583, %v9599
    %v9610 = vunpack.c.l.s4 1934713408
    %v9611 = vunpack.c.0.s8 %v9610
    %v9612 = vlaneseq
    %v9613 = vshrl.u32 %v9612, 7
    %v9614 = vsub.s32 %v9611, %v9613
    %v9615 = vrot.slane %v9607, %v9614
    %v9617 = vunpack.c.l.s4 1934713408
    %v9618 = vunpack.c.0.s8 %v9617
    %v9619 = vlaneseq
    %v9620 = vshrl.u32 %v9619, 7
    %v9621 = vsub.s32 %v9618, %v9620
    %v9622 = vrot.slane %v9608, %v9621
    %v9623 = vcombine.low %v9590, %v9606
    %v9624 = vcombine.high %v9590, %v9606
    %v9626 = vunpack.c.l.s4 1934713408
    %v9627 = vunpack.c.0.s8 %v9626
    %v9628 = vlaneseq
    %v9629 = vshrl.u32 %v9628, 7
    %v9630 = vsub.s32 %v9627, %v9629
    %v9631 = vrot.slane %v9623, %v9630
    %v9633 = vunpack.c.l.s4 1934713408
    %v9634 = vunpack.c.0.s8 %v9633
    %v9635 = vlaneseq
    %v9636 = vshrl.u32 %v9635, 7
    %v9637 = vsub.s32 %v9634, %v9636
    %v9638 = vrot.slane %v9624, %v9637
    %v9639 = vcombine.high %v9615, 0.0
    %v9640 = vcombine.high %v9622, 0.0
    %v9641 = vcombine.high %v9631, 0.0
    %v9642 = vcombine.high %v9638, 0.0
    %v9643 = vcombine.low %v8690, %v8844
    %v9644 = vcombine.high %v8690, %v8844
    %v9646 = vunpack.c.l.s4 1983009808
    %v9647 = vunpack.c.0.s8 %v9646
    %v9648 = vlaneseq
    %v9649 = vshrl.u32 %v9648, 7
    %v9650 = vsub.s32 %v9647, %v9649
    %v9651 = vrot.slane %v9643, %v9650
    %v9653 = vunpack.c.l.s4 1983009808
    %v9654 = vunpack.c.0.s8 %v9653
    %v9655 = vlaneseq
    %v9656 = vshrl.u32 %v9655, 7
    %v9657 = vsub.s32 %v9654, %v9656
    %v9658 = vrot.slane %v9644, %v9657
    %v9659 = vcombine.low %v8767, %v8921
    %v9660 = vcombine.high %v8767, %v8921
    %v9662 = vunpack.c.l.s4 1983009808
    %v9663 = vunpack.c.0.s8 %v9662
    %v9664 = vlaneseq
    %v9665 = vshrl.u32 %v9664, 7
    %v9666 = vsub.s32 %v9663, %v9665
    %v9667 = vrot.slane %v9659, %v9666
    %v9669 = vunpack.c.l.s4 1983009808
    %v9670 = vunpack.c.0.s8 %v9669
    %v9671 = vlaneseq
    %v9672 = vshrl.u32 %v9671, 7
    %v9673 = vsub.s32 %v9670, %v9672
    %v9674 = vrot.slane %v9660, %v9673
    %v9675 = vcombine.low %v9651, %v9667
    %v9676 = vcombine.high %v9651, %v9667
    %v9678 = vunpack.c.l.s4 1934713408
    %v9679 = vunpack.c.0.s8 %v9678
    %v9680 = vlaneseq
    %v9681 = vshrl.u32 %v9680, 7
    %v9682 = vsub.s32 %v9679, %v9681
    %v9683 = vrot.slane %v9675, %v9682
    %v9685 = vunpack.c.l.s4 1934713408
    %v9686 = vunpack.c.0.s8 %v9685
    %v9687 = vlaneseq
    %v9688 = vshrl.u32 %v9687, 7
    %v9689 = vsub.s32 %v9686, %v9688
    %v9690 = vrot.slane %v9676, %v9689
    %v9691 = vcombine.low %v9658, %v9674
    %v9692 = vcombine.high %v9658, %v9674
    %v9694 = vunpack.c.l.s4 1934713408
    %v9695 = vunpack.c.0.s8 %v9694
    %v9696 = vlaneseq
    %v9697 = vshrl.u32 %v9696, 7
    %v9698 = vsub.s32 %v9695, %v9697
    %v9699 = vrot.slane %v9691, %v9698
    %v9701 = vunpack.c.l.s4 1934713408
    %v9702 = vunpack.c.0.s8 %v9701
    %v9703 = vlaneseq
    %v9704 = vshrl.u32 %v9703, 7
    %v9705 = vsub.s32 %v9702, %v9704
    %v9706 = vrot.slane %v9692, %v9705
    %v9707 = vcombine.high %v9683, 0.0
    %v9708 = vcombine.high %v9690, 0.0
    %v9709 = vcombine.high %v9699, 0.0
    %v9710 = vcombine.high %v9706, 0.0
    %v9711 = vcombine.low %v8693, %v8847
    %v9712 = vcombine.high %v8693, %v8847
    %v9714 = vunpack.c.l.s4 1983009808
    %v9715 = vunpack.c.0.s8 %v9714
    %v9716 = vlaneseq
    %v9717 = vshrl.u32 %v9716, 7
    %v9718 = vsub.s32 %v9715, %v9717
    %v9719 = vrot.slane %v9711, %v9718
    %v9721 = vunpack.c.l.s4 1983009808
    %v9722 = vunpack.c.0.s8 %v9721
    %v9723 = vlaneseq
    %v9724 = vshrl.u32 %v9723, 7
    %v9725 = vsub.s32 %v9722, %v9724
    %v9726 = vrot.slane %v9712, %v9725
    %v9727 = vcombine.low %v8770, %v8924
    %v9728 = vcombine.high %v8770, %v8924
    %v9730 = vunpack.c.l.s4 1983009808
    %v9731 = vunpack.c.0.s8 %v9730
    %v9732 = vlaneseq
    %v9733 = vshrl.u32 %v9732, 7
    %v9734 = vsub.s32 %v9731, %v9733
    %v9735 = vrot.slane %v9727, %v9734
    %v9737 = vunpack.c.l.s4 1983009808
    %v9738 = vunpack.c.0.s8 %v9737
    %v9739 = vlaneseq
    %v9740 = vshrl.u32 %v9739, 7
    %v9741 = vsub.s32 %v9738, %v9740
    %v9742 = vrot.slane %v9728, %v9741
    %v9743 = vcombine.low %v9719, %v9735
    %v9744 = vcombine.high %v9719, %v9735
    %v9746 = vunpack.c.l.s4 1934713408
    %v9747 = vunpack.c.0.s8 %v9746
    %v9748 = vlaneseq
    %v9749 = vshrl.u32 %v9748, 7
    %v9750 = vsub.s32 %v9747, %v9749
    %v9751 = vrot.slane %v9743, %v9750
    %v9753 = vunpack.c.l.s4 1934713408
    %v9754 = vunpack.c.0.s8 %v9753
    %v9755 = vlaneseq
    %v9756 = vshrl.u32 %v9755, 7
    %v9757 = vsub.s32 %v9754, %v9756
    %v9758 = vrot.slane %v9744, %v9757
    %v9759 = vcombine.low %v9726, %v9742
    %v9760 = vcombine.high %v9726, %v9742
    %v9762 = vunpack.c.l.s4 1934713408
    %v9763 = vunpack.c.0.s8 %v9762
    %v9764 = vlaneseq
    %v9765 = vshrl.u32 %v9764, 7
    %v9766 = vsub.s32 %v9763, %v9765
    %v9767 = vrot.slane %v9759, %v9766
    %v9769 = vunpack.c.l.s4 1934713408
    %v9770 = vunpack.c.0.s8 %v9769
    %v9771 = vlaneseq
    %v9772 = vshrl.u32 %v9771, 7
    %v9773 = vsub.s32 %v9770, %v9772
    %v9774 = vrot.slane %v9760, %v9773
    %v9775 = vcombine.high %v9751, 0.0
    %v9776 = vcombine.high %v9758, 0.0
    %v9777 = vcombine.high %v9767, 0.0
    %v9778 = vcombine.high %v9774, 0.0
    %v9779 = vcombine.low %v8974, %v9128
    %v9780 = vcombine.high %v8974, %v9128
    %v9782 = vunpack.c.l.s4 1983009808
    %v9783 = vunpack.c.0.s8 %v9782
    %v9784 = vlaneseq
    %v9785 = vshrl.u32 %v9784, 7
    %v9786 = vsub.s32 %v9783, %v9785
    %v9787 = vrot.slane %v9779, %v9786
    %v9789 = vunpack.c.l.s4 1983009808
    %v9790 = vunpack.c.0.s8 %v9789
    %v9791 = vlaneseq
    %v9792 = vshrl.u32 %v9791, 7
    %v9793 = vsub.s32 %v9790, %v9792
    %v9794 = vrot.slane %v9780, %v9793
    %v9795 = vcombine.low %v9051, %v9205
    %v9796 = vcombine.high %v9051, %v9205
    %v9798 = vunpack.c.l.s4 1983009808
    %v9799 = vunpack.c.0.s8 %v9798
    %v9800 = vlaneseq
    %v9801 = vshrl.u32 %v9800, 7
    %v9802 = vsub.s32 %v9799, %v9801
    %v9803 = vrot.slane %v9795, %v9802
    %v9805 = vunpack.c.l.s4 1983009808
    %v9806 = vunpack.c.0.s8 %v9805
    %v9807 = vlaneseq
    %v9808 = vshrl.u32 %v9807, 7
    %v9809 = vsub.s32 %v9806, %v9808
    %v9810 = vrot.slane %v9796, %v9809
    %v9811 = vcombine.low %v9787, %v9803
    %v9812 = vcombine.high %v9787, %v9803
    %v9814 = vunpack.c.l.s4 1934713408
    %v9815 = vunpack.c.0.s8 %v9814
    %v9816 = vlaneseq
    %v9817 = vshrl.u32 %v9816, 7
    %v9818 = vsub.s32 %v9815, %v9817
    %v9819 = vrot.slane %v9811, %v9818
    %v9821 = vunpack.c.l.s4 1934713408
    %v9822 = vunpack.c.0.s8 %v9821
    %v9823 = vlaneseq
    %v9824 = vshrl.u32 %v9823, 7
    %v9825 = vsub.s32 %v9822, %v9824
    %v9826 = vrot.slane %v9812, %v9825
    %v9827 = vcombine.low %v9794, %v9810
    %v9828 = vcombine.high %v9794, %v9810
    %v9830 = vunpack.c.l.s4 1934713408
    %v9831 = vunpack.c.0.s8 %v9830
    %v9832 = vlaneseq
    %v9833 = vshrl.u32 %v9832, 7
    %v9834 = vsub.s32 %v9831, %v9833
    %v9835 = vrot.slane %v9827, %v9834
    %v9837 = vunpack.c.l.s4 1934713408
    %v9838 = vunpack.c.0.s8 %v9837
    %v9839 = vlaneseq
    %v9840 = vshrl.u32 %v9839, 7
    %v9841 = vsub.s32 %v9838, %v9840
    %v9842 = vrot.slane %v9828, %v9841
    %v9843 = vcombine.high %v9819, 0.0
    %v9844 = vcombine.high %v9826, 0.0
    %v9845 = vcombine.high %v9835, 0.0
    %v9846 = vcombine.high %v9842, 0.0
    %v9847 = vcombine.low %v8977, %v9131
    %v9848 = vcombine.high %v8977, %v9131
    %v9850 = vunpack.c.l.s4 1983009808
    %v9851 = vunpack.c.0.s8 %v9850
    %v9852 = vlaneseq
    %v9853 = vshrl.u32 %v9852, 7
    %v9854 = vsub.s32 %v9851, %v9853
    %v9855 = vrot.slane %v9847, %v9854
    %v9857 = vunpack.c.l.s4 1983009808
    %v9858 = vunpack.c.0.s8 %v9857
    %v9859 = vlaneseq
    %v9860 = vshrl.u32 %v9859, 7
    %v9861 = vsub.s32 %v9858, %v9860
    %v9862 = vrot.slane %v9848, %v9861
    %v9863 = vcombine.low %v9054, %v9208
    %v9864 = vcombine.high %v9054, %v9208
    %v9866 = vunpack.c.l.s4 1983009808
    %v9867 = vunpack.c.0.s8 %v9866
    %v9868 = vlaneseq
    %v9869 = vshrl.u32 %v9868, 7
    %v9870 = vsub.s32 %v9867, %v9869
    %v9871 = vrot.slane %v9863, %v9870
    %v9873 = vunpack.c.l.s4 1983009808
    %v9874 = vunpack.c.0.s8 %v9873
    %v9875 = vlaneseq
    %v9876 = vshrl.u32 %v9875, 7
    %v9877 = vsub.s32 %v9874, %v9876
    %v9878 = vrot.slane %v9864, %v9877
    %v9879 = vcombine.low %v9855, %v9871
    %v9880 = vcombine.high %v9855, %v9871
    %v9882 = vunpack.c.l.s4 1934713408
    %v9883 = vunpack.c.0.s8 %v9882
    %v9884 = vlaneseq
    %v9885 = vshrl.u32 %v9884, 7
    %v9886 = vsub.s32 %v9883, %v9885
    %v9887 = vrot.slane %v9879, %v9886
    %v9889 = vunpack.c.l.s4 1934713408
    %v9890 = vunpack.c.0.s8 %v9889
    %v9891 = vlaneseq
    %v9892 = vshrl.u32 %v9891, 7
    %v9893 = vsub.s32 %v9890, %v9892
    %v9894 = vrot.slane %v9880, %v9893
    %v9895 = vcombine.low %v9862, %v9878
    %v9896 = vcombine.high %v9862, %v9878
    %v9898 = vunpack.c.l.s4 1934713408
    %v9899 = vunpack.c.0.s8 %v9898
    %v9900 = vlaneseq
    %v9901 = vshrl.u32 %v9900, 7
    %v9902 = vsub.s32 %v9899, %v9901
    %v9903 = vrot.slane %v9895, %v9902
    %v9905 = vunpack.c.l.s4 1934713408
    %v9906 = vunpack.c.0.s8 %v9905
    %v9907 = vlaneseq
    %v9908 = vshrl.u32 %v9907, 7
    %v9909 = vsub.s32 %v9906, %v9908
    %v9910 = vrot.slane %v9896, %v9909
    %v9911 = vcombine.high %v9887, 0.0
    %v9912 = vcombine.high %v9894, 0.0
    %v9913 = vcombine.high %v9903, 0.0
    %v9914 = vcombine.high %v9910, 0.0
    %v9915 = vcombine.low %v8982, %v9136
    %v9916 = vcombine.high %v8982, %v9136
    %v9918 = vunpack.c.l.s4 1983009808
    %v9919 = vunpack.c.0.s8 %v9918
    %v9920 = vlaneseq
    %v9921 = vshrl.u32 %v9920, 7
    %v9922 = vsub.s32 %v9919, %v9921
    %v9923 = vrot.slane %v9915, %v9922
    %v9925 = vunpack.c.l.s4 1983009808
    %v9926 = vunpack.c.0.s8 %v9925
    %v9927 = vlaneseq
    %v9928 = vshrl.u32 %v9927, 7
    %v9929 = vsub.s32 %v9926, %v9928
    %v9930 = vrot.slane %v9916, %v9929
    %v9931 = vcombine.low %v9059, %v9213
    %v9932 = vcombine.high %v9059, %v9213
    %v9934 = vunpack.c.l.s4 1983009808
    %v9935 = vunpack.c.0.s8 %v9934
    %v9936 = vlaneseq
    %v9937 = vshrl.u32 %v9936, 7
    %v9938 = vsub.s32 %v9935, %v9937
    %v9939 = vrot.slane %v9931, %v9938
    %v9941 = vunpack.c.l.s4 1983009808
    %v9942 = vunpack.c.0.s8 %v9941
    %v9943 = vlaneseq
    %v9944 = vshrl.u32 %v9943, 7
    %v9945 = vsub.s32 %v9942, %v9944
    %v9946 = vrot.slane %v9932, %v9945
    %v9947 = vcombine.low %v9923, %v9939
    %v9948 = vcombine.high %v9923, %v9939
    %v9950 = vunpack.c.l.s4 1934713408
    %v9951 = vunpack.c.0.s8 %v9950
    %v9952 = vlaneseq
    %v9953 = vshrl.u32 %v9952, 7
    %v9954 = vsub.s32 %v9951, %v9953
    %v9955 = vrot.slane %v9947, %v9954
    %v9957 = vunpack.c.l.s4 1934713408
    %v9958 = vunpack.c.0.s8 %v9957
    %v9959 = vlaneseq
    %v9960 = vshrl.u32 %v9959, 7
    %v9961 = vsub.s32 %v9958, %v9960
    %v9962 = vrot.slane %v9948, %v9961
    %v9963 = vcombine.low %v9930, %v9946
    %v9964 = vcombine.high %v9930, %v9946
    %v9966 = vunpack.c.l.s4 1934713408
    %v9967 = vunpack.c.0.s8 %v9966
    %v9968 = vlaneseq
    %v9969 = vshrl.u32 %v9968, 7
    %v9970 = vsub.s32 %v9967, %v9969
    %v9971 = vrot.slane %v9963, %v9970
    %v9973 = vunpack.c.l.s4 1934713408
    %v9974 = vunpack.c.0.s8 %v9973
    %v9975 = vlaneseq
    %v9976 = vshrl.u32 %v9975, 7
    %v9977 = vsub.s32 %v9974, %v9976
    %v9978 = vrot.slane %v9964, %v9977
    %v9979 = vcombine.high %v9955, 0.0
    %v9980 = vcombine.high %v9962, 0.0
    %v9981 = vcombine.high %v9971, 0.0
    %v9982 = vcombine.high %v9978, 0.0
    %v9983 = vcombine.low %v8985, %v9139
    %v9984 = vcombine.high %v8985, %v9139
    %v9986 = vunpack.c.l.s4 1983009808
    %v9987 = vunpack.c.0.s8 %v9986
    %v9988 = vlaneseq
    %v9989 = vshrl.u32 %v9988, 7
    %v9990 = vsub.s32 %v9987, %v9989
    %v9991 = vrot.slane %v9983, %v9990
    %v9993 = vunpack.c.l.s4 1983009808
    %v9994 = vunpack.c.0.s8 %v9993
    %v9995 = vlaneseq
    %v9996 = vshrl.u32 %v9995, 7
    %v9997 = vsub.s32 %v9994, %v9996
    %v9998 = vrot.slane %v9984, %v9997
    %v9999 = vcombine.low %v9062, %v9216
    %v10000 = vcombine.high %v9062, %v9216
    %v10002 = vunpack.c.l.s4 1983009808
    %v10003 = vunpack.c.0.s8 %v10002
    %v10004 = vlaneseq
    %v10005 = vshrl.u32 %v10004, 7
    %v10006 = vsub.s32 %v10003, %v10005
    %v10007 = vrot.slane %v9999, %v10006
    %v10009 = vunpack.c.l.s4 1983009808
    %v10010 = vunpack.c.0.s8 %v10009
    %v10011 = vlaneseq
    %v10012 = vshrl.u32 %v10011, 7
    %v10013 = vsub.s32 %v10010, %v10012
    %v10014 = vrot.slane %v10000, %v10013
    %v10015 = vcombine.low %v9991, %v10007
    %v10016 = vcombine.high %v9991, %v10007
    %v10018 = vunpack.c.l.s4 1934713408
    %v10019 = vunpack.c.0.s8 %v10018
    %v10020 = vlaneseq
    %v10021 = vshrl.u32 %v10020, 7
    %v10022 = vsub.s32 %v10019, %v10021
    %v10023 = vrot.slane %v10015, %v10022
    %v10025 = vunpack.c.l.s4 1934713408
    %v10026 = vunpack.c.0.s8 %v10025
    %v10027 = vlaneseq
    %v10028 = vshrl.u32 %v10027, 7
    %v10029 = vsub.s32 %v10026, %v10028
    %v10030 = vrot.slane %v10016, %v10029
    %v10031 = vcombine.low %v9998, %v10014
    %v10032 = vcombine.high %v9998, %v10014
    %v10034 = vunpack.c.l.s4 1934713408
    %v10035 = vunpack.c.0.s8 %v10034
    %v10036 = vlaneseq
    %v10037 = vshrl.u32 %v10036, 7
    %v10038 = vsub.s32 %v10035, %v10037
    %v10039 = vrot.slane %v10031, %v10038
    %v10041 = vunpack.c.l.s4 1934713408
    %v10042 = vunpack.c.0.s8 %v10041
    %v10043 = vlaneseq
    %v10044 = vshrl.u32 %v10043, 7
    %v10045 = vsub.s32 %v10042, %v10044
    %v10046 = vrot.slane %v10032, %v10045
    %v10047 = vcombine.high %v10023, 0.0
    %v10048 = vcombine.high %v10030, 0.0
    %v10049 = vcombine.high %v10039, 0.0
    %v10050 = vcombine.high %v10046, 0.0
    %v10051 = vcombine.low %v8990, %v9144
    %v10052 = vcombine.high %v8990, %v9144
    %v10054 = vunpack.c.l.s4 1983009808
    %v10055 = vunpack.c.0.s8 %v10054
    %v10056 = vlaneseq
    %v10057 = vshrl.u32 %v10056, 7
    %v10058 = vsub.s32 %v10055, %v10057
    %v10059 = vrot.slane %v10051, %v10058
    %v10061 = vunpack.c.l.s4 1983009808
    %v10062 = vunpack.c.0.s8 %v10061
    %v10063 = vlaneseq
    %v10064 = vshrl.u32 %v10063, 7
    %v10065 = vsub.s32 %v10062, %v10064
    %v10066 = vrot.slane %v10052, %v10065
    %v10067 = vcombine.low %v9067, %v9221
    %v10068 = vcombine.high %v9067, %v9221
    %v10070 = vunpack.c.l.s4 1983009808
    %v10071 = vunpack.c.0.s8 %v10070
    %v10072 = vlaneseq
    %v10073 = vshrl.u32 %v10072, 7
    %v10074 = vsub.s32 %v10071, %v10073
    %v10075 = vrot.slane %v10067, %v10074
    %v10077 = vunpack.c.l.s4 1983009808
    %v10078 = vunpack.c.0.s8 %v10077
    %v10079 = vlaneseq
    %v10080 = vshrl.u32 %v10079, 7
    %v10081 = vsub.s32 %v10078, %v10080
    %v10082 = vrot.slane %v10068, %v10081
    %v10083 = vcombine.low %v10059, %v10075
    %v10084 = vcombine.high %v10059, %v10075
    %v10086 = vunpack.c.l.s4 1934713408
    %v10087 = vunpack.c.0.s8 %v10086
    %v10088 = vlaneseq
    %v10089 = vshrl.u32 %v10088, 7
    %v10090 = vsub.s32 %v10087, %v10089
    %v10091 = vrot.slane %v10083, %v10090
    %v10093 = vunpack.c.l.s4 1934713408
    %v10094 = vunpack.c.0.s8 %v10093
    %v10095 = vlaneseq
    %v10096 = vshrl.u32 %v10095, 7
    %v10097 = vsub.s32 %v10094, %v10096
    %v10098 = vrot.slane %v10084, %v10097
    %v10099 = vcombine.low %v10066, %v10082
    %v10100 = vcombine.high %v10066, %v10082
    %v10102 = vunpack.c.l.s4 1934713408
    %v10103 = vunpack.c.0.s8 %v10102
    %v10104 = vlaneseq
    %v10105 = vshrl.u32 %v10104, 7
    %v10106 = vsub.s32 %v10103, %v10105
    %v10107 = vrot.slane %v10099, %v10106
    %v10109 = vunpack.c.l.s4 1934713408
    %v10110 = vunpack.c.0.s8 %v10109
    %v10111 = vlaneseq
    %v10112 = vshrl.u32 %v10111, 7
    %v10113 = vsub.s32 %v10110, %v10112
    %v10114 = vrot.slane %v10100, %v10113
    %v10115 = vcombine.high %v10091, 0.0
    %v10116 = vcombine.high %v10098, 0.0
    %v10117 = vcombine.high %v10107, 0.0
    %v10118 = vcombine.high %v10114, 0.0
    %v10119 = vcombine.low %v8993, %v9147
    %v10120 = vcombine.high %v8993, %v9147
    %v10122 = vunpack.c.l.s4 1983009808
    %v10123 = vunpack.c.0.s8 %v10122
    %v10124 = vlaneseq
    %v10125 = vshrl.u32 %v10124, 7
    %v10126 = vsub.s32 %v10123, %v10125
    %v10127 = vrot.slane %v10119, %v10126
    %v10129 = vunpack.c.l.s4 1983009808
    %v10130 = vunpack.c.0.s8 %v10129
    %v10131 = vlaneseq
    %v10132 = vshrl.u32 %v10131, 7
    %v10133 = vsub.s32 %v10130, %v10132
    %v10134 = vrot.slane %v10120, %v10133
    %v10135 = vcombine.low %v9070, %v9224
    %v10136 = vcombine.high %v9070, %v9224
    %v10138 = vunpack.c.l.s4 1983009808
    %v10139 = vunpack.c.0.s8 %v10138
    %v10140 = vlaneseq
    %v10141 = vshrl.u32 %v10140, 7
    %v10142 = vsub.s32 %v10139, %v10141
    %v10143 = vrot.slane %v10135, %v10142
    %v10145 = vunpack.c.l.s4 1983009808
    %v10146 = vunpack.c.0.s8 %v10145
    %v10147 = vlaneseq
    %v10148 = vshrl.u32 %v10147, 7
    %v10149 = vsub.s32 %v10146, %v10148
    %v10150 = vrot.slane %v10136, %v10149
    %v10151 = vcombine.low %v10127, %v10143
    %v10152 = vcombine.high %v10127, %v10143
    %v10154 = vunpack.c.l.s4 1934713408
    %v10155 = vunpack.c.0.s8 %v10154
    %v10156 = vlaneseq
    %v10157 = vshrl.u32 %v10156, 7
    %v10158 = vsub.s32 %v10155, %v10157
    %v10159 = vrot.slane %v10151, %v10158
    %v10161 = vunpack.c.l.s4 1934713408
    %v10162 = vunpack.c.0.s8 %v10161
    %v10163 = vlaneseq
    %v10164 = vshrl.u32 %v10163, 7
    %v10165 = vsub.s32 %v10162, %v10164
    %v10166 = vrot.slane %v10152, %v10165
    %v10167 = vcombine.low %v10134, %v10150
    %v10168 = vcombine.high %v10134, %v10150
    %v10170 = vunpack.c.l.s4 1934713408
    %v10171 = vunpack.c.0.s8 %v10170
    %v10172 = vlaneseq
    %v10173 = vshrl.u32 %v10172, 7
    %v10174 = vsub.s32 %v10171, %v10173
    %v10175 = vrot.slane %v10167, %v10174
    %v10177 = vunpack.c.l.s4 1934713408
    %v10178 = vunpack.c.0.s8 %v10177
    %v10179 = vlaneseq
    %v10180 = vshrl.u32 %v10179, 7
    %v10181 = vsub.s32 %v10178, %v10180
    %v10182 = vrot.slane %v10168, %v10181
    %v10183 = vcombine.high %v10159, 0.0
    %v10184 = vcombine.high %v10166, 0.0
    %v10185 = vcombine.high %v10175, 0.0
    %v10186 = vcombine.high %v10182, 0.0
    %v10187 = vcombine.low %v8998, %v9152
    %v10188 = vcombine.high %v8998, %v9152
    %v10190 = vunpack.c.l.s4 1983009808
    %v10191 = vunpack.c.0.s8 %v10190
    %v10192 = vlaneseq
    %v10193 = vshrl.u32 %v10192, 7
    %v10194 = vsub.s32 %v10191, %v10193
    %v10195 = vrot.slane %v10187, %v10194
    %v10197 = vunpack.c.l.s4 1983009808
    %v10198 = vunpack.c.0.s8 %v10197
    %v10199 = vlaneseq
    %v10200 = vshrl.u32 %v10199, 7
    %v10201 = vsub.s32 %v10198, %v10200
    %v10202 = vrot.slane %v10188, %v10201
    %v10203 = vcombine.low %v9075, %v9229
    %v10204 = vcombine.high %v9075, %v9229
    %v10206 = vunpack.c.l.s4 1983009808
    %v10207 = vunpack.c.0.s8 %v10206
    %v10208 = vlaneseq
    %v10209 = vshrl.u32 %v10208, 7
    %v10210 = vsub.s32 %v10207, %v10209
    %v10211 = vrot.slane %v10203, %v10210
    %v10213 = vunpack.c.l.s4 1983009808
    %v10214 = vunpack.c.0.s8 %v10213
    %v10215 = vlaneseq
    %v10216 = vshrl.u32 %v10215, 7
    %v10217 = vsub.s32 %v10214, %v10216
    %v10218 = vrot.slane %v10204, %v10217
    %v10219 = vcombine.low %v10195, %v10211
    %v10220 = vcombine.high %v10195, %v10211
    %v10222 = vunpack.c.l.s4 1934713408
    %v10223 = vunpack.c.0.s8 %v10222
    %v10224 = vlaneseq
    %v10225 = vshrl.u32 %v10224, 7
    %v10226 = vsub.s32 %v10223, %v10225
    %v10227 = vrot.slane %v10219, %v10226
    %v10229 = vunpack.c.l.s4 1934713408
    %v10230 = vunpack.c.0.s8 %v10229
    %v10231 = vlaneseq
    %v10232 = vshrl.u32 %v10231, 7
    %v10233 = vsub.s32 %v10230, %v10232
    %v10234 = vrot.slane %v10220, %v10233
    %v10235 = vcombine.low %v10202, %v10218
    %v10236 = vcombine.high %v10202, %v10218
    %v10238 = vunpack.c.l.s4 1934713408
    %v10239 = vunpack.c.0.s8 %v10238
    %v10240 = vlaneseq
    %v10241 = vshrl.u32 %v10240, 7
    %v10242 = vsub.s32 %v10239, %v10241
    %v10243 = vrot.slane %v10235, %v10242
    %v10245 = vunpack.c.l.s4 1934713408
    %v10246 = vunpack.c.0.s8 %v10245
    %v10247 = vlaneseq
    %v10248 = vshrl.u32 %v10247, 7
    %v10249 = vsub.s32 %v10246, %v10248
    %v10250 = vrot.slane %v10236, %v10249
    %v10251 = vcombine.high %v10227, 0.0
    %v10252 = vcombine.high %v10234, 0.0
    %v10253 = vcombine.high %v10243, 0.0
    %v10254 = vcombine.high %v10250, 0.0
    %v10255 = vcombine.low %v9001, %v9155
    %v10256 = vcombine.high %v9001, %v9155
    %v10258 = vunpack.c.l.s4 1983009808
    %v10259 = vunpack.c.0.s8 %v10258
    %v10260 = vlaneseq
    %v10261 = vshrl.u32 %v10260, 7
    %v10262 = vsub.s32 %v10259, %v10261
    %v10263 = vrot.slane %v10255, %v10262
    %v10265 = vunpack.c.l.s4 1983009808
    %v10266 = vunpack.c.0.s8 %v10265
    %v10267 = vlaneseq
    %v10268 = vshrl.u32 %v10267, 7
    %v10269 = vsub.s32 %v10266, %v10268
    %v10270 = vrot.slane %v10256, %v10269
    %v10271 = vcombine.low %v9078, %v9232
    %v10272 = vcombine.high %v9078, %v9232
    %v10274 = vunpack.c.l.s4 1983009808
    %v10275 = vunpack.c.0.s8 %v10274
    %v10276 = vlaneseq
    %v10277 = vshrl.u32 %v10276, 7
    %v10278 = vsub.s32 %v10275, %v10277
    %v10279 = vrot.slane %v10271, %v10278
    %v10281 = vunpack.c.l.s4 1983009808
    %v10282 = vunpack.c.0.s8 %v10281
    %v10283 = vlaneseq
    %v10284 = vshrl.u32 %v10283, 7
    %v10285 = vsub.s32 %v10282, %v10284
    %v10286 = vrot.slane %v10272, %v10285
    %v10287 = vcombine.low %v10263, %v10279
    %v10288 = vcombine.high %v10263, %v10279
    %v10290 = vunpack.c.l.s4 1934713408
    %v10291 = vunpack.c.0.s8 %v10290
    %v10292 = vlaneseq
    %v10293 = vshrl.u32 %v10292, 7
    %v10294 = vsub.s32 %v10291, %v10293
    %v10295 = vrot.slane %v10287, %v10294
    %v10297 = vunpack.c.l.s4 1934713408
    %v10298 = vunpack.c.0.s8 %v10297
    %v10299 = vlaneseq
    %v10300 = vshrl.u32 %v10299, 7
    %v10301 = vsub.s32 %v10298, %v10300
    %v10302 = vrot.slane %v10288, %v10301
    %v10303 = vcombine.low %v10270, %v10286
    %v10304 = vcombine.high %v10270, %v10286
    %v10306 = vunpack.c.l.s4 1934713408
    %v10307 = vunpack.c.0.s8 %v10306
    %v10308 = vlaneseq
    %v10309 = vshrl.u32 %v10308, 7
    %v10310 = vsub.s32 %v10307, %v10309
    %v10311 = vrot.slane %v10303, %v10310
    %v10313 = vunpack.c.l.s4 1934713408
    %v10314 = vunpack.c.0.s8 %v10313
    %v10315 = vlaneseq
    %v10316 = vshrl.u32 %v10315, 7
    %v10317 = vsub.s32 %v10314, %v10316
    %v10318 = vrot.slane %v10304, %v10317
    %v10319 = vcombine.high %v10295, 0.0
    %v10320 = vcombine.high %v10302, 0.0
    %v10321 = vcombine.high %v10311, 0.0
    %v10322 = vcombine.high %v10318, 0.0
    %v10323 = vcombine.low %v9275, %v9282
    %v10325 = vunpack.c.l.s4 1983009808
    %v10326 = vunpack.c.0.s8 %v10325
    %v10327 = vlaneseq
    %v10328 = vshrl.u32 %v10327, 7
    %v10329 = vsub.s32 %v10326, %v10328
    %v10330 = vrot.slane %v10323, %v10329
    %v10331 = vcombine.low %v9299, %v9300
    %v10333 = vunpack.c.l.s4 1983009808
    %v10334 = vunpack.c.0.s8 %v10333
    %v10335 = vlaneseq
    %v10336 = vshrl.u32 %v10335, 7
    %v10337 = vsub.s32 %v10334, %v10336
    %v10338 = vrot.slane %v10331, %v10337
    %v10339 = vcombine.low %v9291, %v9298
    %v10341 = vunpack.c.l.s4 1983009808
    %v10342 = vunpack.c.0.s8 %v10341
    %v10343 = vlaneseq
    %v10344 = vshrl.u32 %v10343, 7
    %v10345 = vsub.s32 %v10342, %v10344
    %v10346 = vrot.slane %v10339, %v10345
    %v10347 = vcombine.low %v9301, %v9302
    %v10349 = vunpack.c.l.s4 1983009808
    %v10350 = vunpack.c.0.s8 %v10349
    %v10351 = vlaneseq
    %v10352 = vshrl.u32 %v10351, 7
    %v10353 = vsub.s32 %v10350, %v10352
    %v10354 = vrot.slane %v10347, %v10353
    %v10355 = vcombine.low %v10330, %v10338
    %v10356 = vcombine.high %v10330, %v10338
    %v10358 = vunpack.c.l.s4 1934713408
    %v10359 = vunpack.c.0.s8 %v10358
    %v10360 = vlaneseq
    %v10361 = vshrl.u32 %v10360, 7
    %v10362 = vsub.s32 %v10359, %v10361
    %v10363 = vrot.slane %v10355, %v10362
    %v10365 = vunpack.c.l.s4 1934713408
    %v10366 = vunpack.c.0.s8 %v10365
    %v10367 = vlaneseq
    %v10368 = vshrl.u32 %v10367, 7
    %v10369 = vsub.s32 %v10366, %v10368
    %v10370 = vrot.slane %v10356, %v10369
    %v10371 = vcombine.low %v10346, %v10354
    %v10372 = vcombine.high %v10346, %v10354
    %v10374 = vunpack.c.l.s4 1934713408
    %v10375 = vunpack.c.0.s8 %v10374
    %v10376 = vlaneseq
    %v10377 = vshrl.u32 %v10376, 7
    %v10378 = vsub.s32 %v10375, %v10377
    %v10379 = vrot.slane %v10371, %v10378
    %v10381 = vunpack.c.l.s4 1934713408
    %v10382 = vunpack.c.0.s8 %v10381
    %v10383 = vlaneseq
    %v10384 = vshrl.u32 %v10383, 7
    %v10385 = vsub.s32 %v10382, %v10384
    %v10386 = vrot.slane %v10372, %v10385
    %v10387 = vcombine.low %v10363, %v10379
    %v10388 = vcombine.high %v10363, %v10379
    %v10389 = vcombine.low %v10370, %v10386
    %v10390 = vcombine.high %v10370, %v10386
    %v10391 = vcombine.low %v9343, %v9350
    %v10393 = vunpack.c.l.s4 1983009808
    %v10394 = vunpack.c.0.s8 %v10393
    %v10395 = vlaneseq
    %v10396 = vshrl.u32 %v10395, 7
    %v10397 = vsub.s32 %v10394, %v10396
    %v10398 = vrot.slane %v10391, %v10397
    %v10399 = vcombine.low %v9367, %v9368
    %v10401 = vunpack.c.l.s4 1983009808
    %v10402 = vunpack.c.0.s8 %v10401
    %v10403 = vlaneseq
    %v10404 = vshrl.u32 %v10403, 7
    %v10405 = vsub.s32 %v10402, %v10404
    %v10406 = vrot.slane %v10399, %v10405
    %v10407 = vcombine.low %v9359, %v9366
    %v10409 = vunpack.c.l.s4 1983009808
    %v10410 = vunpack.c.0.s8 %v10409
    %v10411 = vlaneseq
    %v10412 = vshrl.u32 %v10411, 7
    %v10413 = vsub.s32 %v10410, %v10412
    %v10414 = vrot.slane %v10407, %v10413
    %v10415 = vcombine.low %v9369, %v9370
    %v10417 = vunpack.c.l.s4 1983009808
    %v10418 = vunpack.c.0.s8 %v10417
    %v10419 = vlaneseq
    %v10420 = vshrl.u32 %v10419, 7
    %v10421 = vsub.s32 %v10418, %v10420
    %v10422 = vrot.slane %v10415, %v10421
    %v10423 = vcombine.low %v10398, %v10406
    %v10424 = vcombine.high %v10398, %v10406
    %v10426 = vunpack.c.l.s4 1934713408
    %v10427 = vunpack.c.0.s8 %v10426
    %v10428 = vlaneseq
    %v10429 = vshrl.u32 %v10428, 7
    %v10430 = vsub.s32 %v10427, %v10429
    %v10431 = vrot.slane %v10423, %v10430
    %v10433 = vunpack.c.l.s4 1934713408
    %v10434 = vunpack.c.0.s8 %v10433
    %v10435 = vlaneseq
    %v10436 = vshrl.u32 %v10435, 7
    %v10437 = vsub.s32 %v10434, %v10436
    %v10438 = vrot.slane %v10424, %v10437
    %v10439 = vcombine.low %v10414, %v10422
    %v10440 = vcombine.high %v10414, %v10422
    %v10442 = vunpack.c.l.s4 1934713408
    %v10443 = vunpack.c.0.s8 %v10442
    %v10444 = vlaneseq
    %v10445 = vshrl.u32 %v10444, 7
    %v10446 = vsub.s32 %v10443, %v10445
    %v10447 = vrot.slane %v10439, %v10446
    %v10449 = vunpack.c.l.s4 1934713408
    %v10450 = vunpack.c.0.s8 %v10449
    %v10451 = vlaneseq
    %v10452 = vshrl.u32 %v10451, 7
    %v10453 = vsub.s32 %v10450, %v10452
    %v10454 = vrot.slane %v10440, %v10453
    %v10455 = vcombine.low %v10431, %v10447
    %v10456 = vcombine.high %v10431, %v10447
    %v10457 = vcombine.low %v10438, %v10454
    %v10458 = vcombine.high %v10438, %v10454
    %v10459 = vcombine.low %v9411, %v9418
    %v10461 = vunpack.c.l.s4 1983009808
    %v10462 = vunpack.c.0.s8 %v10461
    %v10463 = vlaneseq
    %v10464 = vshrl.u32 %v10463, 7
    %v10465 = vsub.s32 %v10462, %v10464
    %v10466 = vrot.slane %v10459, %v10465
    %v10467 = vcombine.low %v9435, %v9436
    %v10469 = vunpack.c.l.s4 1983009808
    %v10470 = vunpack.c.0.s8 %v10469
    %v10471 = vlaneseq
    %v10472 = vshrl.u32 %v10471, 7
    %v10473 = vsub.s32 %v10470, %v10472
    %v10474 = vrot.slane %v10467, %v10473
    %v10475 = vcombine.low %v9427, %v9434
    %v10477 = vunpack.c.l.s4 1983009808
    %v10478 = vunpack.c.0.s8 %v10477
    %v10479 = vlaneseq
    %v10480 = vshrl.u32 %v10479, 7
    %v10481 = vsub.s32 %v10478, %v10480
    %v10482 = vrot.slane %v10475, %v10481
    %v10483 = vcombine.low %v9437, %v9438
    %v10485 = vunpack.c.l.s4 1983009808
    %v10486 = vunpack.c.0.s8 %v10485
    %v10487 = vlaneseq
    %v10488 = vshrl.u32 %v10487, 7
    %v10489 = vsub.s32 %v10486, %v10488
    %v10490 = vrot.slane %v10483, %v10489
    %v10491 = vcombine.low %v10466, %v10474
    %v10492 = vcombine.high %v10466, %v10474
    %v10494 = vunpack.c.l.s4 1934713408
    %v10495 = vunpack.c.0.s8 %v10494
    %v10496 = vlaneseq
    %v10497 = vshrl.u32 %v10496, 7
    %v10498 = vsub.s32 %v10495, %v10497
    %v10499 = vrot.slane %v10491, %v10498
    %v10501 = vunpack.c.l.s4 1934713408
    %v10502 = vunpack.c.0.s8 %v10501
    %v10503 = vlaneseq
    %v10504 = vshrl.u32 %v10503, 7
    %v10505 = vsub.s32 %v10502, %v10504
    %v10506 = vrot.slane %v10492, %v10505
    %v10507 = vcombine.low %v10482, %v10490
    %v10508 = vcombine.high %v10482, %v10490
    %v10510 = vunpack.c.l.s4 1934713408
    %v10511 = vunpack.c.0.s8 %v10510
    %v10512 = vlaneseq
    %v10513 = vshrl.u32 %v10512, 7
    %v10514 = vsub.s32 %v10511, %v10513
    %v10515 = vrot.slane %v10507, %v10514
    %v10517 = vunpack.c.l.s4 1934713408
    %v10518 = vunpack.c.0.s8 %v10517
    %v10519 = vlaneseq
    %v10520 = vshrl.u32 %v10519, 7
    %v10521 = vsub.s32 %v10518, %v10520
    %v10522 = vrot.slane %v10508, %v10521
    %v10523 = vcombine.low %v10499, %v10515
    %v10524 = vcombine.high %v10499, %v10515
    %v10525 = vcombine.low %v10506, %v10522
    %v10526 = vcombine.high %v10506, %v10522
    %v10527 = vcombine.low %v9479, %v9486
    %v10529 = vunpack.c.l.s4 1983009808
    %v10530 = vunpack.c.0.s8 %v10529
    %v10531 = vlaneseq
    %v10532 = vshrl.u32 %v10531, 7
    %v10533 = vsub.s32 %v10530, %v10532
    %v10534 = vrot.slane %v10527, %v10533
    %v10535 = vcombine.low %v9503, %v9504
    %v10537 = vunpack.c.l.s4 1983009808
    %v10538 = vunpack.c.0.s8 %v10537
    %v10539 = vlaneseq
    %v10540 = vshrl.u32 %v10539, 7
    %v10541 = vsub.s32 %v10538, %v10540
    %v10542 = vrot.slane %v10535, %v10541
    %v10543 = vcombine.low %v9495, %v9502
    %v10545 = vunpack.c.l.s4 1983009808
    %v10546 = vunpack.c.0.s8 %v10545
    %v10547 = vlaneseq
    %v10548 = vshrl.u32 %v10547, 7
    %v10549 = vsub.s32 %v10546, %v10548
    %v10550 = vrot.slane %v10543, %v10549
    %v10551 = vcombine.low %v9505, %v9506
    %v10553 = vunpack.c.l.s4 1983009808
    %v10554 = vunpack.c.0.s8 %v10553
    %v10555 = vlaneseq
    %v10556 = vshrl.u32 %v10555, 7
    %v10557 = vsub.s32 %v10554, %v10556
    %v10558 = vrot.slane %v10551, %v10557
    %v10559 = vcombine.low %v10534, %v10542
    %v10560 = vcombine.high %v10534, %v10542
    %v10562 = vunpack.c.l.s4 1934713408
    %v10563 = vunpack.c.0.s8 %v10562
    %v10564 = vlaneseq
    %v10565 = vshrl.u32 %v10564, 7
    %v10566 = vsub.s32 %v10563, %v10565
    %v10567 = vrot.slane %v10559, %v10566
    %v10569 = vunpack.c.l.s4 1934713408
    %v10570 = vunpack.c.0.s8 %v10569
    %v10571 = vlaneseq
    %v10572 = vshrl.u32 %v10571, 7
    %v10573 = vsub.s32 %v10570, %v10572
    %v10574 = vrot.slane %v10560, %v10573
    %v10575 = vcombine.low %v10550, %v10558
    %v10576 = vcombine.high %v10550, %v10558
    %v10578 = vunpack.c.l.s4 1934713408
    %v10579 = vunpack.c.0.s8 %v10578
    %v10580 = vlaneseq
    %v10581 = vshrl.u32 %v10580, 7
    %v10582 = vsub.s32 %v10579, %v10581
    %v10583 = vrot.slane %v10575, %v10582
    %v10585 = vunpack.c.l.s4 1934713408
    %v10586 = vunpack.c.0.s8 %v10585
    %v10587 = vlaneseq
    %v10588 = vshrl.u32 %v10587, 7
    %v10589 = vsub.s32 %v10586, %v10588
    %v10590 = vrot.slane %v10576, %v10589
    %v10591 = vcombine.low %v10567, %v10583
    %v10592 = vcombine.high %v10567, %v10583
    %v10593 = vcombine.low %v10574, %v10590
    %v10594 = vcombine.high %v10574, %v10590
    %v10595 = vcombine.low %v9547, %v9554
    %v10597 = vunpack.c.l.s4 1983009808
    %v10598 = vunpack.c.0.s8 %v10597
    %v10599 = vlaneseq
    %v10600 = vshrl.u32 %v10599, 7
    %v10601 = vsub.s32 %v10598, %v10600
    %v10602 = vrot.slane %v10595, %v10601
    %v10603 = vcombine.low %v9571, %v9572
    %v10605 = vunpack.c.l.s4 1983009808
    %v10606 = vunpack.c.0.s8 %v10605
    %v10607 = vlaneseq
    %v10608 = vshrl.u32 %v10607, 7
    %v10609 = vsub.s32 %v10606, %v10608
    %v10610 = vrot.slane %v10603, %v10609
    %v10611 = vcombine.low %v9563, %v9570
    %v10613 = vunpack.c.l.s4 1983009808
    %v10614 = vunpack.c.0.s8 %v10613
    %v10615 = vlaneseq
    %v10616 = vshrl.u32 %v10615, 7
    %v10617 = vsub.s32 %v10614, %v10616
    %v10618 = vrot.slane %v10611, %v10617
    %v10619 = vcombine.low %v9573, %v9574
    %v10621 = vunpack.c.l.s4 1983009808
    %v10622 = vunpack.c.0.s8 %v10621
    %v10623 = vlaneseq
    %v10624 = vshrl.u32 %v10623, 7
    %v10625 = vsub.s32 %v10622, %v10624
    %v10626 = vrot.slane %v10619, %v10625
    %v10627 = vcombine.low %v10602, %v10610
    %v10628 = vcombine.high %v10602, %v10610
    %v10630 = vunpack.c.l.s4 1934713408
    %v10631 = vunpack.c.0.s8 %v10630
    %v10632 = vlaneseq
    %v10633 = vshrl.u32 %v10632, 7
    %v10634 = vsub.s32 %v10631, %v10633
    %v10635 = vrot.slane %v10627, %v10634
    %v10637 = vunpack.c.l.s4 1934713408
    %v10638 = vunpack.c.0.s8 %v10637
    %v10639 = vlaneseq
    %v10640 = vshrl.u32 %v10639, 7
    %v10641 = vsub.s32 %v10638, %v10640
    %v10642 = vrot.slane %v10628, %v10641
    %v10643 = vcombine.low %v10618, %v10626
    %v10644 = vcombine.high %v10618, %v10626
    %v10646 = vunpack.c.l.s4 1934713408
    %v10647 = vunpack.c.0.s8 %v10646
    %v10648 = vlaneseq
    %v10649 = vshrl.u32 %v10648, 7
    %v10650 = vsub.s32 %v10647, %v10649
    %v10651 = vrot.slane %v10643, %v10650
    %v10653 = vunpack.c.l.s4 1934713408
    %v10654 = vunpack.c.0.s8 %v10653
    %v10655 = vlaneseq
    %v10656 = vshrl.u32 %v10655, 7
    %v10657 = vsub.s32 %v10654, %v10656
    %v10658 = vrot.slane %v10644, %v10657
    %v10659 = vcombine.low %v10635, %v10651
    %v10660 = vcombine.high %v10635, %v10651
    %v10661 = vcombine.low %v10642, %v10658
    %v10662 = vcombine.high %v10642, %v10658
    %v10663 = vcombine.low %v9615, %v9622
    %v10665 = vunpack.c.l.s4 1983009808
    %v10666 = vunpack.c.0.s8 %v10665
    %v10667 = vlaneseq
    %v10668 = vshrl.u32 %v10667, 7
    %v10669 = vsub.s32 %v10666, %v10668
    %v10670 = vrot.slane %v10663, %v10669
    %v10671 = vcombine.low %v9639, %v9640
    %v10673 = vunpack.c.l.s4 1983009808
    %v10674 = vunpack.c.0.s8 %v10673
    %v10675 = vlaneseq
    %v10676 = vshrl.u32 %v10675, 7
    %v10677 = vsub.s32 %v10674, %v10676
    %v10678 = vrot.slane %v10671, %v10677
    %v10679 = vcombine.low %v9631, %v9638
    %v10681 = vunpack.c.l.s4 1983009808
    %v10682 = vunpack.c.0.s8 %v10681
    %v10683 = vlaneseq
    %v10684 = vshrl.u32 %v10683, 7
    %v10685 = vsub.s32 %v10682, %v10684
    %v10686 = vrot.slane %v10679, %v10685
    %v10687 = vcombine.low %v9641, %v9642
    %v10689 = vunpack.c.l.s4 1983009808
    %v10690 = vunpack.c.0.s8 %v10689
    %v10691 = vlaneseq
    %v10692 = vshrl.u32 %v10691, 7
    %v10693 = vsub.s32 %v10690, %v10692
    %v10694 = vrot.slane %v10687, %v10693
    %v10695 = vcombine.low %v10670, %v10678
    %v10696 = vcombine.high %v10670, %v10678
    %v10698 = vunpack.c.l.s4 1934713408
    %v10699 = vunpack.c.0.s8 %v10698
    %v10700 = vlaneseq
    %v10701 = vshrl.u32 %v10700, 7
    %v10702 = vsub.s32 %v10699, %v10701
    %v10703 = vrot.slane %v10695, %v10702
    %v10705 = vunpack.c.l.s4 1934713408
    %v10706 = vunpack.c.0.s8 %v10705
    %v10707 = vlaneseq
    %v10708 = vshrl.u32 %v10707, 7
    %v10709 = vsub.s32 %v10706, %v10708
    %v10710 = vrot.slane %v10696, %v10709
    %v10711 = vcombine.low %v10686, %v10694
    %v10712 = vcombine.high %v10686, %v10694
    %v10714 = vunpack.c.l.s4 1934713408
    %v10715 = vunpack.c.0.s8 %v10714
    %v10716 = vlaneseq
    %v10717 = vshrl.u32 %v10716, 7
    %v10718 = vsub.s32 %v10715, %v10717
    %v10719 = vrot.slane %v10711, %v10718
    %v10721 = vunpack.c.l.s4 1934713408
    %v10722 = vunpack.c.0.s8 %v10721
    %v10723 = vlaneseq
    %v10724 = vshrl.u32 %v10723, 7
    %v10725 = vsub.s32 %v10722, %v10724
    %v10726 = vrot.slane %v10712, %v10725
    %v10727 = vcombine.low %v10703, %v10719
    %v10728 = vcombine.high %v10703, %v10719
    %v10729 = vcombine.low %v10710, %v10726
    %v10730 = vcombine.high %v10710, %v10726
    %v10731 = vcombine.low %v9683, %v9690
    %v10733 = vunpack.c.l.s4 1983009808
    %v10734 = vunpack.c.0.s8 %v10733
    %v10735 = vlaneseq
    %v10736 = vshrl.u32 %v10735, 7
    %v10737 = vsub.s32 %v10734, %v10736
    %v10738 = vrot.slane %v10731, %v10737
    %v10739 = vcombine.low %v9707, %v9708
    %v10741 = vunpack.c.l.s4 1983009808
    %v10742 = vunpack.c.0.s8 %v10741
    %v10743 = vlaneseq
    %v10744 = vshrl.u32 %v10743, 7
    %v10745 = vsub.s32 %v10742, %v10744
    %v10746 = vrot.slane %v10739, %v10745
    %v10747 = vcombine.low %v9699, %v9706
    %v10749 = vunpack.c.l.s4 1983009808
    %v10750 = vunpack.c.0.s8 %v10749
    %v10751 = vlaneseq
    %v10752 = vshrl.u32 %v10751, 7
    %v10753 = vsub.s32 %v10750, %v10752
    %v10754 = vrot.slane %v10747, %v10753
    %v10755 = vcombine.low %v9709, %v9710
    %v10757 = vunpack.c.l.s4 1983009808
    %v10758 = vunpack.c.0.s8 %v10757
    %v10759 = vlaneseq
    %v10760 = vshrl.u32 %v10759, 7
    %v10761 = vsub.s32 %v10758, %v10760
    %v10762 = vrot.slane %v10755, %v10761
    %v10763 = vcombine.low %v10738, %v10746
    %v10764 = vcombine.high %v10738, %v10746
    %v10766 = vunpack.c.l.s4 1934713408
    %v10767 = vunpack.c.0.s8 %v10766
    %v10768 = vlaneseq
    %v10769 = vshrl.u32 %v10768, 7
    %v10770 = vsub.s32 %v10767, %v10769
    %v10771 = vrot.slane %v10763, %v10770
    %v10773 = vunpack.c.l.s4 1934713408
    %v10774 = vunpack.c.0.s8 %v10773
    %v10775 = vlaneseq
    %v10776 = vshrl.u32 %v10775, 7
    %v10777 = vsub.s32 %v10774, %v10776
    %v10778 = vrot.slane %v10764, %v10777
    %v10779 = vcombine.low %v10754, %v10762
    %v10780 = vcombine.high %v10754, %v10762
    %v10782 = vunpack.c.l.s4 1934713408
    %v10783 = vunpack.c.0.s8 %v10782
    %v10784 = vlaneseq
    %v10785 = vshrl.u32 %v10784, 7
    %v10786 = vsub.s32 %v10783, %v10785
    %v10787 = vrot.slane %v10779, %v10786
    %v10789 = vunpack.c.l.s4 1934713408
    %v10790 = vunpack.c.0.s8 %v10789
    %v10791 = vlaneseq
    %v10792 = vshrl.u32 %v10791, 7
    %v10793 = vsub.s32 %v10790, %v10792
    %v10794 = vrot.slane %v10780, %v10793
    %v10795 = vcombine.low %v10771, %v10787
    %v10796 = vcombine.high %v10771, %v10787
    %v10797 = vcombine.low %v10778, %v10794
    %v10798 = vcombine.high %v10778, %v10794
    %v10799 = vcombine.low %v9751, %v9758
    %v10801 = vunpack.c.l.s4 1983009808
    %v10802 = vunpack.c.0.s8 %v10801
    %v10803 = vlaneseq
    %v10804 = vshrl.u32 %v10803, 7
    %v10805 = vsub.s32 %v10802, %v10804
    %v10806 = vrot.slane %v10799, %v10805
    %v10807 = vcombine.low %v9775, %v9776
    %v10809 = vunpack.c.l.s4 1983009808
    %v10810 = vunpack.c.0.s8 %v10809
    %v10811 = vlaneseq
    %v10812 = vshrl.u32 %v10811, 7
    %v10813 = vsub.s32 %v10810, %v10812
    %v10814 = vrot.slane %v10807, %v10813
    %v10815 = vcombine.low %v9767, %v9774
    %v10817 = vunpack.c.l.s4 1983009808
    %v10818 = vunpack.c.0.s8 %v10817
    %v10819 = vlaneseq
    %v10820 = vshrl.u32 %v10819, 7
    %v10821 = vsub.s32 %v10818, %v10820
    %v10822 = vrot.slane %v10815, %v10821
    %v10823 = vcombine.low %v9777, %v9778
    %v10825 = vunpack.c.l.s4 1983009808
    %v10826 = vunpack.c.0.s8 %v10825
    %v10827 = vlaneseq
    %v10828 = vshrl.u32 %v10827, 7
    %v10829 = vsub.s32 %v10826, %v10828
    %v10830 = vrot.slane %v10823, %v10829
    %v10831 = vcombine.low %v10806, %v10814
    %v10832 = vcombine.high %v10806, %v10814
    %v10834 = vunpack.c.l.s4 1934713408
    %v10835 = vunpack.c.0.s8 %v10834
    %v10836 = vlaneseq
    %v10837 = vshrl.u32 %v10836, 7
    %v10838 = vsub.s32 %v10835, %v10837
    %v10839 = vrot.slane %v10831, %v10838
    %v10841 = vunpack.c.l.s4 1934713408
    %v10842 = vunpack.c.0.s8 %v10841
    %v10843 = vlaneseq
    %v10844 = vshrl.u32 %v10843, 7
    %v10845 = vsub.s32 %v10842, %v10844
    %v10846 = vrot.slane %v10832, %v10845
    %v10847 = vcombine.low %v10822, %v10830
    %v10848 = vcombine.high %v10822, %v10830
    %v10850 = vunpack.c.l.s4 1934713408
    %v10851 = vunpack.c.0.s8 %v10850
    %v10852 = vlaneseq
    %v10853 = vshrl.u32 %v10852, 7
    %v10854 = vsub.s32 %v10851, %v10853
    %v10855 = vrot.slane %v10847, %v10854
    %v10857 = vunpack.c.l.s4 1934713408
    %v10858 = vunpack.c.0.s8 %v10857
    %v10859 = vlaneseq
    %v10860 = vshrl.u32 %v10859, 7
    %v10861 = vsub.s32 %v10858, %v10860
    %v10862 = vrot.slane %v10848, %v10861
    %v10863 = vcombine.low %v10839, %v10855
    %v10864 = vcombine.high %v10839, %v10855
    %v10865 = vcombine.low %v10846, %v10862
    %v10866 = vcombine.high %v10846, %v10862
    %v10867 = vcombine.low %v9819, %v9826
    %v10869 = vunpack.c.l.s4 1983009808
    %v10870 = vunpack.c.0.s8 %v10869
    %v10871 = vlaneseq
    %v10872 = vshrl.u32 %v10871, 7
    %v10873 = vsub.s32 %v10870, %v10872
    %v10874 = vrot.slane %v10867, %v10873
    %v10875 = vcombine.low %v9843, %v9844
    %v10877 = vunpack.c.l.s4 1983009808
    %v10878 = vunpack.c.0.s8 %v10877
    %v10879 = vlaneseq
    %v10880 = vshrl.u32 %v10879, 7
    %v10881 = vsub.s32 %v10878, %v10880
    %v10882 = vrot.slane %v10875, %v10881
    %v10883 = vcombine.low %v9835, %v9842
    %v10885 = vunpack.c.l.s4 1983009808
    %v10886 = vunpack.c.0.s8 %v10885
    %v10887 = vlaneseq
    %v10888 = vshrl.u32 %v10887, 7
    %v10889 = vsub.s32 %v10886, %v10888
    %v10890 = vrot.slane %v10883, %v10889
    %v10891 = vcombine.low %v9845, %v9846
    %v10893 = vunpack.c.l.s4 1983009808
    %v10894 = vunpack.c.0.s8 %v10893
    %v10895 = vlaneseq
    %v10896 = vshrl.u32 %v10895, 7
    %v10897 = vsub.s32 %v10894, %v10896
    %v10898 = vrot.slane %v10891, %v10897
    %v10899 = vcombine.low %v10874, %v10882
    %v10900 = vcombine.high %v10874, %v10882
    %v10902 = vunpack.c.l.s4 1934713408
    %v10903 = vunpack.c.0.s8 %v10902
    %v10904 = vlaneseq
    %v10905 = vshrl.u32 %v10904, 7
    %v10906 = vsub.s32 %v10903, %v10905
    %v10907 = vrot.slane %v10899, %v10906
    %v10909 = vunpack.c.l.s4 1934713408
    %v10910 = vunpack.c.0.s8 %v10909
    %v10911 = vlaneseq
    %v10912 = vshrl.u32 %v10911, 7
    %v10913 = vsub.s32 %v10910, %v10912
    %v10914 = vrot.slane %v10900, %v10913
    %v10915 = vcombine.low %v10890, %v10898
    %v10916 = vcombine.high %v10890, %v10898
    %v10918 = vunpack.c.l.s4 1934713408
    %v10919 = vunpack.c.0.s8 %v10918
    %v10920 = vlaneseq
    %v10921 = vshrl.u32 %v10920, 7
    %v10922 = vsub.s32 %v10919, %v10921
    %v10923 = vrot.slane %v10915, %v10922
    %v10925 = vunpack.c.l.s4 1934713408
    %v10926 = vunpack.c.0.s8 %v10925
    %v10927 = vlaneseq
    %v10928 = vshrl.u32 %v10927, 7
    %v10929 = vsub.s32 %v10926, %v10928
    %v10930 = vrot.slane %v10916, %v10929
    %v10931 = vcombine.low %v10907, %v10923
    %v10932 = vcombine.high %v10907, %v10923
    %v10933 = vcombine.low %v10914, %v10930
    %v10934 = vcombine.high %v10914, %v10930
    %v10935 = vcombine.low %v9887, %v9894
    %v10937 = vunpack.c.l.s4 1983009808
    %v10938 = vunpack.c.0.s8 %v10937
    %v10939 = vlaneseq
    %v10940 = vshrl.u32 %v10939, 7
    %v10941 = vsub.s32 %v10938, %v10940
    %v10942 = vrot.slane %v10935, %v10941
    %v10943 = vcombine.low %v9911, %v9912
    %v10945 = vunpack.c.l.s4 1983009808
    %v10946 = vunpack.c.0.s8 %v10945
    %v10947 = vlaneseq
    %v10948 = vshrl.u32 %v10947, 7
    %v10949 = vsub.s32 %v10946, %v10948
    %v10950 = vrot.slane %v10943, %v10949
    %v10951 = vcombine.low %v9903, %v9910
    %v10953 = vunpack.c.l.s4 1983009808
    %v10954 = vunpack.c.0.s8 %v10953
    %v10955 = vlaneseq
    %v10956 = vshrl.u32 %v10955, 7
    %v10957 = vsub.s32 %v10954, %v10956
    %v10958 = vrot.slane %v10951, %v10957
    %v10959 = vcombine.low %v9913, %v9914
    %v10961 = vunpack.c.l.s4 1983009808
    %v10962 = vunpack.c.0.s8 %v10961
    %v10963 = vlaneseq
    %v10964 = vshrl.u32 %v10963, 7
    %v10965 = vsub.s32 %v10962, %v10964
    %v10966 = vrot.slane %v10959, %v10965
    %v10967 = vcombine.low %v10942, %v10950
    %v10968 = vcombine.high %v10942, %v10950
    %v10970 = vunpack.c.l.s4 1934713408
    %v10971 = vunpack.c.0.s8 %v10970
    %v10972 = vlaneseq
    %v10973 = vshrl.u32 %v10972, 7
    %v10974 = vsub.s32 %v10971, %v10973
    %v10975 = vrot.slane %v10967, %v10974
    %v10977 = vunpack.c.l.s4 1934713408
    %v10978 = vunpack.c.0.s8 %v10977
    %v10979 = vlaneseq
    %v10980 = vshrl.u32 %v10979, 7
    %v10981 = vsub.s32 %v10978, %v10980
    %v10982 = vrot.slane %v10968, %v10981
    %v10983 = vcombine.low %v10958, %v10966
    %v10984 = vcombine.high %v10958, %v10966
    %v10986 = vunpack.c.l.s4 1934713408
    %v10987 = vunpack.c.0.s8 %v10986
    %v10988 = vlaneseq
    %v10989 = vshrl.u32 %v10988, 7
    %v10990 = vsub.s32 %v10987, %v10989
    %v10991 = vrot.slane %v10983, %v10990
    %v10993 = vunpack.c.l.s4 1934713408
    %v10994 = vunpack.c.0.s8 %v10993
    %v10995 = vlaneseq
    %v10996 = vshrl.u32 %v10995, 7
    %v10997 = vsub.s32 %v10994, %v10996
    %v10998 = vrot.slane %v10984, %v10997
    %v10999 = vcombine.low %v10975, %v10991
    %v11000 = vcombine.high %v10975, %v10991
    %v11001 = vcombine.low %v10982, %v10998
    %v11002 = vcombine.high %v10982, %v10998
    %v11003 = vcombine.low %v9955, %v9962
    %v11005 = vunpack.c.l.s4 1983009808
    %v11006 = vunpack.c.0.s8 %v11005
    %v11007 = vlaneseq
    %v11008 = vshrl.u32 %v11007, 7
    %v11009 = vsub.s32 %v11006, %v11008
    %v11010 = vrot.slane %v11003, %v11009
    %v11011 = vcombine.low %v9979, %v9980
    %v11013 = vunpack.c.l.s4 1983009808
    %v11014 = vunpack.c.0.s8 %v11013
    %v11015 = vlaneseq
    %v11016 = vshrl.u32 %v11015, 7
    %v11017 = vsub.s32 %v11014, %v11016
    %v11018 = vrot.slane %v11011, %v11017
    %v11019 = vcombine.low %v9971, %v9978
    %v11021 = vunpack.c.l.s4 1983009808
    %v11022 = vunpack.c.0.s8 %v11021
    %v11023 = vlaneseq
    %v11024 = vshrl.u32 %v11023, 7
    %v11025 = vsub.s32 %v11022, %v11024
    %v11026 = vrot.slane %v11019, %v11025
    %v11027 = vcombine.low %v9981, %v9982
    %v11029 = vunpack.c.l.s4 1983009808
    %v11030 = vunpack.c.0.s8 %v11029
    %v11031 = vlaneseq
    %v11032 = vshrl.u32 %v11031, 7
    %v11033 = vsub.s32 %v11030, %v11032
    %v11034 = vrot.slane %v11027, %v11033
    %v11035 = vcombine.low %v11010, %v11018
    %v11036 = vcombine.high %v11010, %v11018
    %v11038 = vunpack.c.l.s4 1934713408
    %v11039 = vunpack.c.0.s8 %v11038
    %v11040 = vlaneseq
    %v11041 = vshrl.u32 %v11040, 7
    %v11042 = vsub.s32 %v11039, %v11041
    %v11043 = vrot.slane %v11035, %v11042
    %v11045 = vunpack.c.l.s4 1934713408
    %v11046 = vunpack.c.0.s8 %v11045
    %v11047 = vlaneseq
    %v11048 = vshrl.u32 %v11047, 7
    %v11049 = vsub.s32 %v11046, %v11048
    %v11050 = vrot.slane %v11036, %v11049
    %v11051 = vcombine.low %v11026, %v11034
    %v11052 = vcombine.high %v11026, %v11034
    %v11054 = vunpack.c.l.s4 1934713408
    %v11055 = vunpack.c.0.s8 %v11054
    %v11056 = vlaneseq
    %v11057 = vshrl.u32 %v11056, 7
    %v11058 = vsub.s32 %v11055, %v11057
    %v11059 = vrot.slane %v11051, %v11058
    %v11061 = vunpack.c.l.s4 1934713408
    %v11062 = vunpack.c.0.s8 %v11061
    %v11063 = vlaneseq
    %v11064 = vshrl.u32 %v11063, 7
    %v11065 = vsub.s32 %v11062, %v11064
    %v11066 = vrot.slane %v11052, %v11065
    %v11067 = vcombine.low %v11043, %v11059
    %v11068 = vcombine.high %v11043, %v11059
    %v11069 = vcombine.low %v11050, %v11066
    %v11070 = vcombine.high %v11050, %v11066
    %v11071 = vcombine.low %v10023, %v10030
    %v11073 = vunpack.c.l.s4 1983009808
    %v11074 = vunpack.c.0.s8 %v11073
    %v11075 = vlaneseq
    %v11076 = vshrl.u32 %v11075, 7
    %v11077 = vsub.s32 %v11074, %v11076
    %v11078 = vrot.slane %v11071, %v11077
    %v11079 = vcombine.low %v10047, %v10048
    %v11081 = vunpack.c.l.s4 1983009808
    %v11082 = vunpack.c.0.s8 %v11081
    %v11083 = vlaneseq
    %v11084 = vshrl.u32 %v11083, 7
    %v11085 = vsub.s32 %v11082, %v11084
    %v11086 = vrot.slane %v11079, %v11085
    %v11087 = vcombine.low %v10039, %v10046
    %v11089 = vunpack.c.l.s4 1983009808
    %v11090 = vunpack.c.0.s8 %v11089
    %v11091 = vlaneseq
    %v11092 = vshrl.u32 %v11091, 7
    %v11093 = vsub.s32 %v11090, %v11092
    %v11094 = vrot.slane %v11087, %v11093
    %v11095 = vcombine.low %v10049, %v10050
    %v11097 = vunpack.c.l.s4 1983009808
    %v11098 = vunpack.c.0.s8 %v11097
    %v11099 = vlaneseq
    %v11100 = vshrl.u32 %v11099, 7
    %v11101 = vsub.s32 %v11098, %v11100
    %v11102 = vrot.slane %v11095, %v11101
    %v11103 = vcombine.low %v11078, %v11086
    %v11104 = vcombine.high %v11078, %v11086
    %v11106 = vunpack.c.l.s4 1934713408
    %v11107 = vunpack.c.0.s8 %v11106
    %v11108 = vlaneseq
    %v11109 = vshrl.u32 %v11108, 7
    %v11110 = vsub.s32 %v11107, %v11109
    %v11111 = vrot.slane %v11103, %v11110
    %v11113 = vunpack.c.l.s4 1934713408
    %v11114 = vunpack.c.0.s8 %v11113
    %v11115 = vlaneseq
    %v11116 = vshrl.u32 %v11115, 7
    %v11117 = vsub.s32 %v11114, %v11116
    %v11118 = vrot.slane %v11104, %v11117
    %v11119 = vcombine.low %v11094, %v11102
    %v11120 = vcombine.high %v11094, %v11102
    %v11122 = vunpack.c.l.s4 1934713408
    %v11123 = vunpack.c.0.s8 %v11122
    %v11124 = vlaneseq
    %v11125 = vshrl.u32 %v11124, 7
    %v11126 = vsub.s32 %v11123, %v11125
    %v11127 = vrot.slane %v11119, %v11126
    %v11129 = vunpack.c.l.s4 1934713408
    %v11130 = vunpack.c.0.s8 %v11129
    %v11131 = vlaneseq
    %v11132 = vshrl.u32 %v11131, 7
    %v11133 = vsub.s32 %v11130, %v11132
    %v11134 = vrot.slane %v11120, %v11133
    %v11135 = vcombine.low %v11111, %v11127
    %v11136 = vcombine.high %v11111, %v11127
    %v11137 = vcombine.low %v11118, %v11134
    %v11138 = vcombine.high %v11118, %v11134
    %v11139 = vcombine.low %v10091, %v10098
    %v11141 = vunpack.c.l.s4 1983009808
    %v11142 = vunpack.c.0.s8 %v11141
    %v11143 = vlaneseq
    %v11144 = vshrl.u32 %v11143, 7
    %v11145 = vsub.s32 %v11142, %v11144
    %v11146 = vrot.slane %v11139, %v11145
    %v11147 = vcombine.low %v10115, %v10116
    %v11149 = vunpack.c.l.s4 1983009808
    %v11150 = vunpack.c.0.s8 %v11149
    %v11151 = vlaneseq
    %v11152 = vshrl.u32 %v11151, 7
    %v11153 = vsub.s32 %v11150, %v11152
    %v11154 = vrot.slane %v11147, %v11153
    %v11155 = vcombine.low %v10107, %v10114
    %v11157 = vunpack.c.l.s4 1983009808
    %v11158 = vunpack.c.0.s8 %v11157
    %v11159 = vlaneseq
    %v11160 = vshrl.u32 %v11159, 7
    %v11161 = vsub.s32 %v11158, %v11160
    %v11162 = vrot.slane %v11155, %v11161
    %v11163 = vcombine.low %v10117, %v10118
    %v11165 = vunpack.c.l.s4 1983009808
    %v11166 = vunpack.c.0.s8 %v11165
    %v11167 = vlaneseq
    %v11168 = vshrl.u32 %v11167, 7
    %v11169 = vsub.s32 %v11166, %v11168
    %v11170 = vrot.slane %v11163, %v11169
    %v11171 = vcombine.low %v11146, %v11154
    %v11172 = vcombine.high %v11146, %v11154
    %v11174 = vunpack.c.l.s4 1934713408
    %v11175 = vunpack.c.0.s8 %v11174
    %v11176 = vlaneseq
    %v11177 = vshrl.u32 %v11176, 7
    %v11178 = vsub.s32 %v11175, %v11177
    %v11179 = vrot.slane %v11171, %v11178
    %v11181 = vunpack.c.l.s4 1934713408
    %v11182 = vunpack.c.0.s8 %v11181
    %v11183 = vlaneseq
    %v11184 = vshrl.u32 %v11183, 7
    %v11185 = vsub.s32 %v11182, %v11184
    %v11186 = vrot.slane %v11172, %v11185
    %v11187 = vcombine.low %v11162, %v11170
    %v11188 = vcombine.high %v11162, %v11170
    %v11190 = vunpack.c.l.s4 1934713408
    %v11191 = vunpack.c.0.s8 %v11190
    %v11192 = vlaneseq
    %v11193 = vshrl.u32 %v11192, 7
    %v11194 = vsub.s32 %v11191, %v11193
    %v11195 = vrot.slane %v11187, %v11194
    %v11197 = vunpack.c.l.s4 1934713408
    %v11198 = vunpack.c.0.s8 %v11197
    %v11199 = vlaneseq
    %v11200 = vshrl.u32 %v11199, 7
    %v11201 = vsub.s32 %v11198, %v11200
    %v11202 = vrot.slane %v11188, %v11201
    %v11203 = vcombine.low %v11179, %v11195
    %v11204 = vcombine.high %v11179, %v11195
    %v11205 = vcombine.low %v11186, %v11202
    %v11206 = vcombine.high %v11186, %v11202
    %v11207 = vcombine.low %v10159, %v10166
    %v11209 = vunpack.c.l.s4 1983009808
    %v11210 = vunpack.c.0.s8 %v11209
    %v11211 = vlaneseq
    %v11212 = vshrl.u32 %v11211, 7
    %v11213 = vsub.s32 %v11210, %v11212
    %v11214 = vrot.slane %v11207, %v11213
    %v11215 = vcombine.low %v10183, %v10184
    %v11217 = vunpack.c.l.s4 1983009808
    %v11218 = vunpack.c.0.s8 %v11217
    %v11219 = vlaneseq
    %v11220 = vshrl.u32 %v11219, 7
    %v11221 = vsub.s32 %v11218, %v11220
    %v11222 = vrot.slane %v11215, %v11221
    %v11223 = vcombine.low %v10175, %v10182
    %v11225 = vunpack.c.l.s4 1983009808
    %v11226 = vunpack.c.0.s8 %v11225
    %v11227 = vlaneseq
    %v11228 = vshrl.u32 %v11227, 7
    %v11229 = vsub.s32 %v11226, %v11228
    %v11230 = vrot.slane %v11223, %v11229
    %v11231 = vcombine.low %v10185, %v10186
    %v11233 = vunpack.c.l.s4 1983009808
    %v11234 = vunpack.c.0.s8 %v11233
    %v11235 = vlaneseq
    %v11236 = vshrl.u32 %v11235, 7
    %v11237 = vsub.s32 %v11234, %v11236
    %v11238 = vrot.slane %v11231, %v11237
    %v11239 = vcombine.low %v11214, %v11222
    %v11240 = vcombine.high %v11214, %v11222
    %v11242 = vunpack.c.l.s4 1934713408
    %v11243 = vunpack.c.0.s8 %v11242
    %v11244 = vlaneseq
    %v11245 = vshrl.u32 %v11244, 7
    %v11246 = vsub.s32 %v11243, %v11245
    %v11247 = vrot.slane %v11239, %v11246
    %v11249 = vunpack.c.l.s4 1934713408
    %v11250 = vunpack.c.0.s8 %v11249
    %v11251 = vlaneseq
    %v11252 = vshrl.u32 %v11251, 7
    %v11253 = vsub.s32 %v11250, %v11252
    %v11254 = vrot.slane %v11240, %v11253
    %v11255 = vcombine.low %v11230, %v11238
    %v11256 = vcombine.high %v11230, %v11238
    %v11258 = vunpack.c.l.s4 1934713408
    %v11259 = vunpack.c.0.s8 %v11258
    %v11260 = vlaneseq
    %v11261 = vshrl.u32 %v11260, 7
    %v11262 = vsub.s32 %v11259, %v11261
    %v11263 = vrot.slane %v11255, %v11262
    %v11265 = vunpack.c.l.s4 1934713408
    %v11266 = vunpack.c.0.s8 %v11265
    %v11267 = vlaneseq
    %v11268 = vshrl.u32 %v11267, 7
    %v11269 = vsub.s32 %v11266, %v11268
    %v11270 = vrot.slane %v11256, %v11269
    %v11271 = vcombine.low %v11247, %v11263
    %v11272 = vcombine.high %v11247, %v11263
    %v11273 = vcombine.low %v11254, %v11270
    %v11274 = vcombine.high %v11254, %v11270
    %v11275 = vcombine.low %v10227, %v10234
    %v11277 = vunpack.c.l.s4 1983009808
    %v11278 = vunpack.c.0.s8 %v11277
    %v11279 = vlaneseq
    %v11280 = vshrl.u32 %v11279, 7
    %v11281 = vsub.s32 %v11278, %v11280
    %v11282 = vrot.slane %v11275, %v11281
    %v11283 = vcombine.low %v10251, %v10252
    %v11285 = vunpack.c.l.s4 1983009808
    %v11286 = vunpack.c.0.s8 %v11285
    %v11287 = vlaneseq
    %v11288 = vshrl.u32 %v11287, 7
    %v11289 = vsub.s32 %v11286, %v11288
    %v11290 = vrot.slane %v11283, %v11289
    %v11291 = vcombine.low %v10243, %v10250
    %v11293 = vunpack.c.l.s4 1983009808
    %v11294 = vunpack.c.0.s8 %v11293
    %v11295 = vlaneseq
    %v11296 = vshrl.u32 %v11295, 7
    %v11297 = vsub.s32 %v11294, %v11296
    %v11298 = vrot.slane %v11291, %v11297
    %v11299 = vcombine.low %v10253, %v10254
    %v11301 = vunpack.c.l.s4 1983009808
    %v11302 = vunpack.c.0.s8 %v11301
    %v11303 = vlaneseq
    %v11304 = vshrl.u32 %v11303, 7
    %v11305 = vsub.s32 %v11302, %v11304
    %v11306 = vrot.slane %v11299, %v11305
    %v11307 = vcombine.low %v11282, %v11290
    %v11308 = vcombine.high %v11282, %v11290
    %v11310 = vunpack.c.l.s4 1934713408
    %v11311 = vunpack.c.0.s8 %v11310
    %v11312 = vlaneseq
    %v11313 = vshrl.u32 %v11312, 7
    %v11314 = vsub.s32 %v11311, %v11313
    %v11315 = vrot.slane %v11307, %v11314
    %v11317 = vunpack.c.l.s4 1934713408
    %v11318 = vunpack.c.0.s8 %v11317
    %v11319 = vlaneseq
    %v11320 = vshrl.u32 %v11319, 7
    %v11321 = vsub.s32 %v11318, %v11320
    %v11322 = vrot.slane %v11308, %v11321
    %v11323 = vcombine.low %v11298, %v11306
    %v11324 = vcombine.high %v11298, %v11306
    %v11326 = vunpack.c.l.s4 1934713408
    %v11327 = vunpack.c.0.s8 %v11326
    %v11328 = vlaneseq
    %v11329 = vshrl.u32 %v11328, 7
    %v11330 = vsub.s32 %v11327, %v11329
    %v11331 = vrot.slane %v11323, %v11330
    %v11333 = vunpack.c.l.s4 1934713408
    %v11334 = vunpack.c.0.s8 %v11333
    %v11335 = vlaneseq
    %v11336 = vshrl.u32 %v11335, 7
    %v11337 = vsub.s32 %v11334, %v11336
    %v11338 = vrot.slane %v11324, %v11337
    %v11339 = vcombine.low %v11315, %v11331
    %v11340 = vcombine.high %v11315, %v11331
    %v11341 = vcombine.low %v11322, %v11338
    %v11342 = vcombine.high %v11322, %v11338
    %v11343 = vcombine.low %v10295, %v10302
    %v11345 = vunpack.c.l.s4 1983009808
    %v11346 = vunpack.c.0.s8 %v11345
    %v11347 = vlaneseq
    %v11348 = vshrl.u32 %v11347, 7
    %v11349 = vsub.s32 %v11346, %v11348
    %v11350 = vrot.slane %v11343, %v11349
    %v11351 = vcombine.low %v10319, %v10320
    %v11353 = vunpack.c.l.s4 1983009808
    %v11354 = vunpack.c.0.s8 %v11353
    %v11355 = vlaneseq
    %v11356 = vshrl.u32 %v11355, 7
    %v11357 = vsub.s32 %v11354, %v11356
    %v11358 = vrot.slane %v11351, %v11357
    %v11359 = vcombine.low %v10311, %v10318
    %v11361 = vunpack.c.l.s4 1983009808
    %v11362 = vunpack.c.0.s8 %v11361
    %v11363 = vlaneseq
    %v11364 = vshrl.u32 %v11363, 7
    %v11365 = vsub.s32 %v11362, %v11364
    %v11366 = vrot.slane %v11359, %v11365
    %v11367 = vcombine.low %v10321, %v10322
    %v11369 = vunpack.c.l.s4 1983009808
    %v11370 = vunpack.c.0.s8 %v11369
    %v11371 = vlaneseq
    %v11372 = vshrl.u32 %v11371, 7
    %v11373 = vsub.s32 %v11370, %v11372
    %v11374 = vrot.slane %v11367, %v11373
    %v11375 = vcombine.low %v11350, %v11358
    %v11376 = vcombine.high %v11350, %v11358
    %v11378 = vunpack.c.l.s4 1934713408
    %v11379 = vunpack.c.0.s8 %v11378
    %v11380 = vlaneseq
    %v11381 = vshrl.u32 %v11380, 7
    %v11382 = vsub.s32 %v11379, %v11381
    %v11383 = vrot.slane %v11375, %v11382
    %v11385 = vunpack.c.l.s4 1934713408
    %v11386 = vunpack.c.0.s8 %v11385
    %v11387 = vlaneseq
    %v11388 = vshrl.u32 %v11387, 7
    %v11389 = vsub.s32 %v11386, %v11388
    %v11390 = vrot.slane %v11376, %v11389
    %v11391 = vcombine.low %v11366, %v11374
    %v11392 = vcombine.high %v11366, %v11374
    %v11394 = vunpack.c.l.s4 1934713408
    %v11395 = vunpack.c.0.s8 %v11394
    %v11396 = vlaneseq
    %v11397 = vshrl.u32 %v11396, 7
    %v11398 = vsub.s32 %v11395, %v11397
    %v11399 = vrot.slane %v11391, %v11398
    %v11401 = vunpack.c.l.s4 1934713408
    %v11402 = vunpack.c.0.s8 %v11401
    %v11403 = vlaneseq
    %v11404 = vshrl.u32 %v11403, 7
    %v11405 = vsub.s32 %v11402, %v11404
    %v11406 = vrot.slane %v11392, %v11405
    %v11407 = vcombine.low %v11383, %v11399
    %v11408 = vcombine.high %v11383, %v11399
    %v11409 = vcombine.low %v11390, %v11406
    %v11410 = vcombine.high %v11390, %v11406
    %11427 = vrot.lane.b32.xlu0 %v10388, 32
    %v11428 = vpop.permute.xlu0 %11427
    %11429 = vrot.lane.b32.xlu0 %v10456, 32
    %v11430 = vpop.permute.xlu0 %11429
    %11431 = vrot.lane.b32.xlu0 %v10524, 32
    %v11432 = vpop.permute.xlu0 %11431
    %11433 = vrot.lane.b32.xlu0 %v10592, 32
    %v11434 = vpop.permute.xlu0 %11433
    %11435 = vrot.lane.b32.xlu0 %v10660, 32
    %v11436 = vpop.permute.xlu0 %11435
    %11437 = vrot.lane.b32.xlu0 %v10728, 32
    %v11438 = vpop.permute.xlu0 %11437
    %11439 = vrot.lane.b32.xlu0 %v10796, 32
    %v11440 = vpop.permute.xlu0 %11439
    %11441 = vrot.lane.b32.xlu0 %v10864, 32
    %v11442 = vpop.permute.xlu0 %11441
    %11443 = vrot.lane.b32.xlu0 %v10932, 32
    %v11444 = vpop.permute.xlu0 %11443
    %11445 = vrot.lane.b32.xlu0 %v11000, 32
    %v11446 = vpop.permute.xlu0 %11445
    %11447 = vrot.lane.b32.xlu0 %v11068, 32
    %v11448 = vpop.permute.xlu0 %11447
    %11449 = vrot.lane.b32.xlu0 %v11136, 32
    %v11450 = vpop.permute.xlu0 %11449
    %11451 = vrot.lane.b32.xlu0 %v11204, 32
    %v11452 = vpop.permute.xlu0 %11451
    %11453 = vrot.lane.b32.xlu0 %v11272, 32
    %v11454 = vpop.permute.xlu0 %11453
    %11455 = vrot.lane.b32.xlu0 %v11340, 32
    %v11456 = vpop.permute.xlu0 %11455
    %11457 = vrot.lane.b32.xlu0 %v11408, 32
    %v11458 = vpop.permute.xlu0 %11457
    %11491 = vrot.lane.b32.xlu0 %v10389, 64
    %v11492 = vpop.permute.xlu0 %11491
    %11493 = vrot.lane.b32.xlu0 %v10457, 64
    %v11494 = vpop.permute.xlu0 %11493
    %11495 = vrot.lane.b32.xlu0 %v10525, 64
    %v11496 = vpop.permute.xlu0 %11495
    %11497 = vrot.lane.b32.xlu0 %v10593, 64
    %v11498 = vpop.permute.xlu0 %11497
    %11499 = vrot.lane.b32.xlu0 %v10661, 64
    %v11500 = vpop.permute.xlu0 %11499
    %11501 = vrot.lane.b32.xlu0 %v10729, 64
    %v11502 = vpop.permute.xlu0 %11501
    %11503 = vrot.lane.b32.xlu0 %v10797, 64
    %v11504 = vpop.permute.xlu0 %11503
    %11505 = vrot.lane.b32.xlu0 %v10865, 64
    %v11506 = vpop.permute.xlu0 %11505
    %11507 = vrot.lane.b32.xlu0 %v10933, 64
    %v11508 = vpop.permute.xlu0 %11507
    %11509 = vrot.lane.b32.xlu0 %v11001, 64
    %v11510 = vpop.permute.xlu0 %11509
    %11511 = vrot.lane.b32.xlu0 %v11069, 64
    %v11512 = vpop.permute.xlu0 %11511
    %11513 = vrot.lane.b32.xlu0 %v11137, 64
    %v11514 = vpop.permute.xlu0 %11513
    %11515 = vrot.lane.b32.xlu0 %v11205, 64
    %v11516 = vpop.permute.xlu0 %11515
    %11517 = vrot.lane.b32.xlu0 %v11273, 64
    %v11518 = vpop.permute.xlu0 %11517
    %11519 = vrot.lane.b32.xlu0 %v11341, 64
    %v11520 = vpop.permute.xlu0 %11519
    %11521 = vrot.lane.b32.xlu0 %v11409, 64
    %v11522 = vpop.permute.xlu0 %11521
    %11555 = vrot.lane.b32.xlu0 %v10390, 96
    %v11556 = vpop.permute.xlu0 %11555
    %11557 = vrot.lane.b32.xlu0 %v10458, 96
    %v11558 = vpop.permute.xlu0 %11557
    %11559 = vrot.lane.b32.xlu0 %v10526, 96
    %v11560 = vpop.permute.xlu0 %11559
    %11561 = vrot.lane.b32.xlu0 %v10594, 96
    %v11562 = vpop.permute.xlu0 %11561
    %11563 = vrot.lane.b32.xlu0 %v10662, 96
    %v11564 = vpop.permute.xlu0 %11563
    %11565 = vrot.lane.b32.xlu0 %v10730, 96
    %v11566 = vpop.permute.xlu0 %11565
    %11567 = vrot.lane.b32.xlu0 %v10798, 96
    %v11568 = vpop.permute.xlu0 %11567
    %11569 = vrot.lane.b32.xlu0 %v10866, 96
    %v11570 = vpop.permute.xlu0 %11569
    %11571 = vrot.lane.b32.xlu0 %v10934, 96
    %v11572 = vpop.permute.xlu0 %11571
    %11573 = vrot.lane.b32.xlu0 %v11002, 96
    %v11574 = vpop.permute.xlu0 %11573
    %11575 = vrot.lane.b32.xlu0 %v11070, 96
    %v11576 = vpop.permute.xlu0 %11575
    %11577 = vrot.lane.b32.xlu0 %v11138, 96
    %v11578 = vpop.permute.xlu0 %11577
    %11579 = vrot.lane.b32.xlu0 %v11206, 96
    %v11580 = vpop.permute.xlu0 %11579
    %11581 = vrot.lane.b32.xlu0 %v11274, 96
    %v11582 = vpop.permute.xlu0 %11581
    %11583 = vrot.lane.b32.xlu0 %v11342, 96
    %v11584 = vpop.permute.xlu0 %11583
    %11585 = vrot.lane.b32.xlu0 %v11410, 96
    %v11586 = vpop.permute.xlu0 %11585
    %v11603 = vsel %vm7070, %v10387, %v11428
    %v11604 = vsel %vm7070, %v10455, %v11430
    %v11605 = vsel %vm7070, %v10523, %v11432
    %v11606 = vsel %vm7070, %v10591, %v11434
    %v11607 = vsel %vm7070, %v10659, %v11436
    %v11608 = vsel %vm7070, %v10727, %v11438
    %v11609 = vsel %vm7070, %v10795, %v11440
    %v11610 = vsel %vm7070, %v10863, %v11442
    %v11611 = vsel %vm7070, %v10931, %v11444
    %v11612 = vsel %vm7070, %v10999, %v11446
    %v11613 = vsel %vm7070, %v11067, %v11448
    %v11614 = vsel %vm7070, %v11135, %v11450
    %v11615 = vsel %vm7070, %v11203, %v11452
    %v11616 = vsel %vm7070, %v11271, %v11454
    %v11617 = vsel %vm7070, %v11339, %v11456
    %v11618 = vsel %vm7070, %v11407, %v11458
    %v11619 = vsel %vm7882, %v11603, %v11492
    %v11620 = vsel %vm7882, %v11604, %v11494
    %v11621 = vsel %vm7882, %v11605, %v11496
    %v11622 = vsel %vm7882, %v11606, %v11498
    %v11623 = vsel %vm7882, %v11607, %v11500
    %v11624 = vsel %vm7882, %v11608, %v11502
    %v11625 = vsel %vm7882, %v11609, %v11504
    %v11626 = vsel %vm7882, %v11610, %v11506
    %v11627 = vsel %vm7882, %v11611, %v11508
    %v11628 = vsel %vm7882, %v11612, %v11510
    %v11629 = vsel %vm7882, %v11613, %v11512
    %v11630 = vsel %vm7882, %v11614, %v11514
    %v11631 = vsel %vm7882, %v11615, %v11516
    %v11632 = vsel %vm7882, %v11616, %v11518
    %v11633 = vsel %vm7882, %v11617, %v11520
    %v11634 = vsel %vm7882, %v11618, %v11522
    %vm11635 = vcmask 785408
    %v11636 = vsel %vm11635, %v11619, %v11556
    %v11637 = vsel %vm11635, %v11620, %v11558
    %v11638 = vsel %vm11635, %v11621, %v11560
    %v11639 = vsel %vm11635, %v11622, %v11562
    %v11640 = vsel %vm11635, %v11623, %v11564
    %v11641 = vsel %vm11635, %v11624, %v11566
    %v11642 = vsel %vm11635, %v11625, %v11568
    %v11643 = vsel %vm11635, %v11626, %v11570
    %v11644 = vsel %vm11635, %v11627, %v11572
    %v11645 = vsel %vm11635, %v11628, %v11574
    %v11646 = vsel %vm11635, %v11629, %v11576
    %v11647 = vsel %vm11635, %v11630, %v11578
    %v11648 = vsel %vm11635, %v11631, %v11580
    %v11649 = vsel %vm11635, %v11632, %v11582
    %v11650 = vsel %vm11635, %v11633, %v11584
    %v11651 = vsel %vm11635, %v11634, %v11586
    %v11652 = vpack.c.bf16 %v11637, %v11636
    %v11653 = vpack.c.bf16 %v11639, %v11638
    %v11654 = vpack.c.bf16 %v11641, %v11640
    %v11655 = vpack.c.bf16 %v11643, %v11642
    %v11656 = vpack.c.bf16 %v11645, %v11644
    %v11657 = vpack.c.bf16 %v11647, %v11646
    %v11658 = vpack.c.bf16 %v11649, %v11648
    %v11659 = vpack.c.bf16 %v11651, %v11650
    %v11660 = vld [vmem:[#allocation10] sm:$0xf]
    %v11661 = vld [vmem:[#allocation10 + $0x4] sm:$0xf]
    %v11662 = vld [vmem:[#allocation10 + $0x8] sm:$0xf]
    %v11663 = vld [vmem:[#allocation10 + $0xc] sm:$0xf]
    %v11664 = vld [vmem:[#allocation10 + $0x10] sm:$0xf]
    %v11665 = vld [vmem:[#allocation10 + $0x14] sm:$0xf]
    %v11666 = vld [vmem:[#allocation10 + $0x18] sm:$0xf]
    %v11667 = vld [vmem:[#allocation10 + $0x1c] sm:$0xf]
    %v11668 = vld [vmem:[#allocation10 + $0x20] sm:$0xf]
    %v11669 = vld [vmem:[#allocation10 + $0x24] sm:$0xf]
    %v11670 = vld [vmem:[#allocation10 + $0x28] sm:$0xf]
    %v11671 = vld [vmem:[#allocation10 + $0x2c] sm:$0xf]
    %v11672 = vld [vmem:[#allocation10 + $0x30] sm:$0xf]
    %v11673 = vld [vmem:[#allocation10 + $0x34] sm:$0xf]
    %v11674 = vld [vmem:[#allocation10 + $0x38] sm:$0xf]
    %v11675 = vld [vmem:[#allocation10 + $0x3c] sm:$0xf]
    %v11676 = vld [vmem:[%s5] sm:$0x1]
    %v11678 = vlaneseq
    %v11679 = vshrl.u32 %v11678, 7
    %v11680 = vsub.s32 0, %v11679
    %v11681 = vrot.slane %v11676, %v11680
    %v11699 = vunpack.c.l.b16 %v11660
    %v11700 = vunpack.c.l.b16 %v11661
    %v11701 = vunpack.c.l.b16 %v11662
    %v11702 = vunpack.c.l.b16 %v11663
    %v11703 = vunpack.c.l.b16 %v11664
    %v11704 = vunpack.c.l.b16 %v11665
    %v11705 = vunpack.c.l.b16 %v11666
    %v11706 = vunpack.c.l.b16 %v11667
    %v11707 = vunpack.c.l.b16 %v11668
    %v11708 = vunpack.c.l.b16 %v11669
    %v11709 = vunpack.c.l.b16 %v11670
    %v11710 = vunpack.c.l.b16 %v11671
    %v11711 = vunpack.c.l.b16 %v11672
    %v11712 = vunpack.c.l.b16 %v11673
    %v11713 = vunpack.c.l.b16 %v11674
    %v11714 = vunpack.c.l.b16 %v11675
    %v11715 = vpack.c.b16 %v11700, %v11699
    %v11716 = vpack.c.b16 %v11702, %v11701
    %v11717 = vpack.c.b16 %v11704, %v11703
    %v11718 = vpack.c.b16 %v11706, %v11705
    %v11719 = vpack.c.b16 %v11708, %v11707
    %v11720 = vpack.c.b16 %v11710, %v11709
    %v11721 = vpack.c.b16 %v11712, %v11711
    %v11722 = vpack.c.b16 %v11714, %v11713
    %11731 = vmatprep.subr.bf16.mxu0 0
    %11732 = vmatpush1.bf16.msra.mxu0 %v11715
    %11733 = vmatprep.subr.bf16.mxu0 0
    %11734 = vmatpush1.bf16.msra.mxu0 %v11716
    %11735 = vmatprep.subr.bf16.mxu0 0
    %11736 = vmatpush1.bf16.msra.mxu0 %v11717
    %11737 = vmatprep.subr.bf16.mxu0 0
    %11738 = vmatpush1.bf16.msra.mxu0 %v11718
    %11739 = vmatprep.subr.bf16.mxu0 0
    %11740 = vmatpush1.bf16.msra.mxu0 %v11719
    %11741 = vmatprep.subr.bf16.mxu0 0
    %11742 = vmatpush1.bf16.msra.mxu0 %v11720
    %11743 = vmatprep.subr.bf16.mxu0 0
    %11744 = vmatpush1.bf16.msra.mxu0 %v11721
    %11745 = vmatprep.subr.bf16.mxu0 0
    %11746 = vmatpush1.bf16.msra.mxu0 %v11722
    %11747 = vmatprep.subr.bf16.mxu0 0
    %11748 = vmatpush1.bf16.msra.mxu0 0
    %11749 = vmatprep.subr.bf16.mxu0 0
    %11750 = vmatpush1.bf16.msra.mxu0 0
    %11751 = vmatprep.subr.bf16.mxu0 0
    %11752 = vmatpush1.bf16.msra.mxu0 0
    %11753 = vmatprep.subr.bf16.mxu0 0
    %11754 = vmatpush1.bf16.msra.mxu0 0
    %11755 = vmatprep.subr.bf16.mxu0 0
    %11756 = vmatpush1.bf16.msra.mxu0 0
    %11757 = vmatprep.subr.bf16.mxu0 0
    %11758 = vmatpush1.bf16.msra.mxu0 0
    %11759 = vmatprep.subr.bf16.mxu0 0
    %11760 = vmatpush1.bf16.msra.mxu0 0
    %11761 = vmatprep.subr.bf16.mxu0 0
    %11762 = vmatpush1.bf16.msra.mxu0 0
    %11763 = vmatprep.mubr.bf16.mxu0 0
    %11764 = vmatmul.mubr.bf16.gmra.mrb[0].mxu0 %v11652
    %v11765 = vpop.f32.mrb[0].mxu0
    %v11766 = vadd.f32 %v11681, %v11765
    %v11767 = vpop.f32.mrb[0].mxu0
    %v11768 = vpop.f32.mrb[0].mxu0
    %v11769 = vadd.f32 %v11681, %v11768
    %v11770 = vpop.f32.mrb[0].mxu0
    %11771 = vmatprep.mubr.bf16.mxu0 0
    %11772 = vmatmul.mubr.bf16.gmra.mrb[0].mxu0 %v11653
    %v11773 = vpop.f32.mrb[0].mxu0
    %v11774 = vadd.f32 %v11681, %v11773
    %v11775 = vpop.f32.mrb[0].mxu0
    %v11776 = vpop.f32.mrb[0].mxu0
    %v11777 = vadd.f32 %v11681, %v11776
    %v11778 = vpop.f32.mrb[0].mxu0
    %11779 = vmatprep.mubr.bf16.mxu0 0
    %11780 = vmatmul.mubr.bf16.gmra.mrb[0].mxu0 %v11654
    %v11781 = vpop.f32.mrb[0].mxu0
    %v11782 = vadd.f32 %v11681, %v11781
    %v11783 = vpop.f32.mrb[0].mxu0
    %v11784 = vpop.f32.mrb[0].mxu0
    %v11785 = vadd.f32 %v11681, %v11784
    %v11786 = vpop.f32.mrb[0].mxu0
    %11787 = vmatprep.mubr.bf16.mxu0 0
    %11788 = vmatmul.mubr.bf16.gmra.mrb[0].mxu0 %v11655
    %v11789 = vpop.f32.mrb[0].mxu0
    %v11790 = vadd.f32 %v11681, %v11789
    %v11791 = vpop.f32.mrb[0].mxu0
    %v11792 = vpop.f32.mrb[0].mxu0
    %v11793 = vadd.f32 %v11681, %v11792
    %v11794 = vpop.f32.mrb[0].mxu0
    %11795 = vmatprep.mubr.bf16.mxu0 0
    %11796 = vmatmul.mubr.bf16.gmra.mrb[0].mxu0 %v11656
    %v11797 = vpop.f32.mrb[0].mxu0
    %v11798 = vadd.f32 %v11681, %v11797
    %v11799 = vpop.f32.mrb[0].mxu0
    %v11800 = vpop.f32.mrb[0].mxu0
    %v11801 = vadd.f32 %v11681, %v11800
    %v11802 = vpop.f32.mrb[0].mxu0
    %11803 = vmatprep.mubr.bf16.mxu0 0
    %11804 = vmatmul.mubr.bf16.gmra.mrb[0].mxu0 %v11657
    %v11805 = vpop.f32.mrb[0].mxu0
    %v11806 = vadd.f32 %v11681, %v11805
    %v11807 = vpop.f32.mrb[0].mxu0
    %v11808 = vpop.f32.mrb[0].mxu0
    %v11809 = vadd.f32 %v11681, %v11808
    %v11810 = vpop.f32.mrb[0].mxu0
    %11811 = vmatprep.mubr.bf16.mxu0 0
    %11812 = vmatmul.mubr.bf16.gmra.mrb[0].mxu0 %v11658
    %v11813 = vpop.f32.mrb[0].mxu0
    %v11814 = vadd.f32 %v11681, %v11813
    %v11815 = vpop.f32.mrb[0].mxu0
    %v11816 = vpop.f32.mrb[0].mxu0
    %v11817 = vadd.f32 %v11681, %v11816
    %v11818 = vpop.f32.mrb[0].mxu0
    %11819 = vmatprep.mubr.bf16.mxu0 0
    %11820 = vmatmul.mubr.bf16.gmra.mrb[0].mxu0 %v11659
    %v11821 = vpop.f32.mrb[0].mxu0
    %v11822 = vadd.f32 %v11681, %v11821
    %v11823 = vpop.f32.mrb[0].mxu0
    %v11824 = vpop.f32.mrb[0].mxu0
    %v11825 = vadd.f32 %v11681, %v11824
    %v11826 = vpop.f32.mrb[0].mxu0
    %11827 = vdwg.mxu0
    %11828 = vst [vmem:[#allocation11] sm:$0xff] %v11766
    %11829 = vst [vmem:[#allocation11 + $0x8] sm:$0xff] %v11769
    %11830 = vst [vmem:[#allocation11 + $0x10] sm:$0xff] %v11774
    %11831 = vst [vmem:[#allocation11 + $0x18] sm:$0xff] %v11777
    %11832 = vst [vmem:[#allocation11 + $0x20] sm:$0xff] %v11782
    %11833 = vst [vmem:[#allocation11 + $0x28] sm:$0xff] %v11785
    %11834 = vst [vmem:[#allocation11 + $0x30] sm:$0xff] %v11790
    %11835 = vst [vmem:[#allocation11 + $0x38] sm:$0xff] %v11793
    %11836 = vst [vmem:[#allocation11 + $0x40] sm:$0xff] %v11798
    %11837 = vst [vmem:[#allocation11 + $0x48] sm:$0xff] %v11801
    %11838 = vst [vmem:[#allocation11 + $0x50] sm:$0xff] %v11806
    %11839 = vst [vmem:[#allocation11 + $0x58] sm:$0xff] %v11809
    %11840 = vst [vmem:[#allocation11 + $0x60] sm:$0xff] %v11814
    %11841 = vst [vmem:[#allocation11 + $0x68] sm:$0xff] %v11817
    %11842 = vst [vmem:[#allocation11 + $0x70] sm:$0xff] %v11822
    %11843 = vst [vmem:[#allocation11 + $0x78] sm:$0xff] %v11825
    // Predicated region
    $region46: #{multi_head_attention.1} parent=1 // pred_check
      _
    $region47: #{multi_head_attention.1} parent=1 // pred_check_branch
      %11845 = sbr.rel (0) target = $region49
    $region48: #{multi_head_attention.1} parent=1 // pred_region
      %s11847 = ssub.s32 2048, 2048
      %11848 = vsyncadd [#allocation4], %s11847
      %s11849 = sshll.u32 [#allocation11], 4
      %s11850 = int_to_ptr.vmem [resolvable:$true] %s11849
      %11855 = dma.vmem_to_hbm [thread:$0]  %s11850, 2048, %s6, [#allocation4], 128, 128, 8
    $region49: #{multi_head_attention.1} parent=1 // pred_fallthru
      _
    // Predicated region
    $region50: #{multi_head_attention.1} parent=1 // pred_check
      _
    $region51: #{multi_head_attention.1} parent=1 // pred_check_branch
      %11857 = sbr.rel (0) target = $region53
    $region52: #{multi_head_attention.1} parent=1 // pred_region
      %11858 = dma.done [#allocation4], 2048
    $region53: #{multi_head_attention.1} parent=1 // pred_fallthru
      _
    %11859 = vsyncpa [#allocation3], 1
    %11860 = vsyncpa [#allocation6], 1
    %11861 = vsyncpa [#allocation9], 1
    %11862 = vsyncpa [#allocation4], 1

</llo_original>
